<compile_context>
chip_gen: v7x
topology: tpu7x:2x2x1
jax: 0.10.0
libtpu: 0.0.40
codegen_flags: <defaults>
</compile_context>

<pallas_src>
import jax
import jax.numpy as jnp
from jax import lax
from jax.experimental import pallas as pl
from jax.experimental.pallas import tpu as pltpu

EPS = 1e-5  # nn.BatchNorm2d default eps


def _round_up(x, m):
    return ((x + m - 1) // m) * m


def _make_resblock_kernel(N, H, W, Cin, Cout, PAD):
    Hp, Wp = H + 2, W + 2
    Mp = N * Hp * Wp          # padded, flattened pixel count (rows in kernel)
    M = N * H * W             # real pixel count -> BatchNorm divisor
    inv_m = 1.0 / float(M)

    def kernel(xw_ref, xres_ref, mask_ref,
               w1_ref, b1_ref, g1_ref, be1_ref,
               w2_ref, b2_ref, g2_ref, be2_ref,
               out_ref, h1w_ref):
        mask = mask_ref[...]                      # (Mp, 1), 1.0 on real pixels

        def conv3x3(src_ref, w_ref):
            # 3x3 "same" conv as 3 MXU matmuls with K = 3*Ci: the kw taps are
            # folded into the lane dim of src_ref, the kh taps are plain
            # row-shifted slices (true zero padding -> no masking).
            acc = None
            for kh in range(3):
                base = PAD + (kh - 1) * Wp
                term = jnp.dot(src_ref[base:base + Mp, :], w_ref[kh],
                               preferred_element_type=jnp.float32)
                acc = term if acc is None else acc + term
            return acc

        def batchnorm(v, b_ref, g_ref, be_ref):
            # conv bias + training-mode BatchNorm2d, single pass over v; the
            # statistics only see the M real pixels (halo rows masked out).
            v = v + b_ref[...]
            vm = v * mask
            s = jnp.sum(vm, axis=0, keepdims=True)
            ss = jnp.sum(vm * vm, axis=0, keepdims=True)
            mean = s * inv_m
            var = ss * inv_m - mean * mean
            scale = g_ref[...] * lax.rsqrt(var + EPS)
            return (v - mean) * scale + be_ref[...]

        # ---- conv1 + BN1 + ReLU (reads the pre-widened input directly) -----
        h1 = jnp.maximum(
            batchnorm(conv3x3(xw_ref, w1_ref), b1_ref, g1_ref, be1_ref), 0.0)

        # ---- stage h1 for conv2: zero ONLY the halo strips, then write the
        #      three kw-shifted lane blocks of the masked activation ----------
        h1m = (h1 * mask).astype(jnp.bfloat16)    # true zero padding for conv2
        h1w_ref[0:PAD + 1, :] = jnp.zeros((PAD + 1, 3 * Cout), jnp.bfloat16)
        h1w_ref[PAD + Mp - 1:2 * PAD + Mp, :] = jnp.zeros(
            (PAD + 1, 3 * Cout), jnp.bfloat16)
        for kw in range(3):
            h1w_ref[PAD + 1 - kw:PAD + 1 - kw + Mp,
                    kw * Cout:(kw + 1) * Cout] = h1m

        # ---- conv2 + BN2 + residual add + ReLU ------------------------------
        # (center_crop is the identity for padding=1, so the residual is x.)
        h2 = batchnorm(conv3x3(h1w_ref, w2_ref), b2_ref, g2_ref, be2_ref)
        out_ref[...] = jnp.maximum(h2 + xres_ref[...], 0.0)

    return kernel


def unet_res_block(x_nchw, params):
    """Pallas implementation of UNetResBlock.forward (NCHW in / NCHW out)."""
    N, Cin, H, W = x_nchw.shape
    Cout = params["w1"].shape[-1]
    assert Cin == Cout, "residual add requires in_channels == out_channels"
    Hp, Wp = H + 2, W + 2
    Mp = N * Hp * Wp
    PAD = _round_up(Wp, 16)     # >= Wp rows of top/bottom padding (W-derived)

    # NCHW -> NHWC, spatial zero pad, flatten to (Mp, C).
    x_nhwc = jnp.transpose(x_nchw, (0, 2, 3, 1)).astype(jnp.float32)
    x_flat = jnp.pad(x_nhwc, ((0, 0), (1, 1), (1, 1), (0, 0))).reshape(Mp, Cin)

    # Widened conv1 input: lane block kw holds x_flat shifted by (kw-1) rows,
    # with PAD zero rows above/below, so every 3x3 tap in the kernel is a plain
    # row-shifted slice that reads true zeros at all image borders.
    x_w = jnp.concatenate(
        [jnp.pad(x_flat, ((PAD + 1 - kw, PAD - 1 + kw), (0, 0)))
         for kw in range(3)], axis=1).astype(jnp.bfloat16)  # (2*PAD+Mp, 3*Cin)

    # 1.0 on real pixels, 0.0 on the padded halo rows (for BN stats + padding).
    mask = jnp.pad(jnp.ones((N, H, W, 1), jnp.float32),
                   ((0, 0), (1, 1), (1, 1), (0, 0))).reshape(Mp, 1)

    # HWIO (3,3,Ci,Co) -> (3, 3*Ci, Co): row kw*Ci+ci of block kh = w[kh,kw,ci].
    w1 = params["w1"].reshape(3, 3 * Cin, Cout).astype(jnp.bfloat16)
    w2 = params["w2"].reshape(3, 3 * Cout, Cout).astype(jnp.bfloat16)

    kernel = _make_resblock_kernel(N, H, W, Cin, Cout, PAD)
    vspec = lambda: pl.BlockSpec(memory_space=pltpu.MemorySpace.VMEM)

    out2d = pl.pallas_call(
        kernel,
        out_shape=jax.ShapeDtypeStruct((Mp, Cout), jnp.float32),
        in_specs=[vspec() for _ in range(11)],
        out_specs=vspec(),
        scratch_shapes=[
            pltpu.VMEM((2 * PAD + Mp, 3 * Cout), jnp.bfloat16),  # conv2 staging
        ],
        compiler_params=pltpu.CompilerParams(
            vmem_limit_bytes=32 * 1024 * 1024),
    )(x_w, x_flat, mask,
      params["w1"].reshape(3, 3 * Cin, Cout).astype(jnp.bfloat16)
      if False else w1, params["b1"], params["g1"], params["be1"],
      w2, params["b2"], params["g2"], params["be2"])

    # Drop the halo rows and go back to NCHW.
    out = out2d.reshape(N, Hp, Wp, Cout)[:, 1:H + 1, 1:W + 1, :]
    return jnp.transpose(out, (0, 3, 1, 2))


def unet_res_block_reference(x_nchw, params):
    """Plain-JAX reference (bf16 MXU operands, f32 elsewhere) for validation."""
    x = jnp.transpose(x_nchw, (0, 2, 3, 1)).astype(jnp.float32)  # NHWC

    def conv(inp, w, b):
        y = lax.conv_general_dilated(
            inp.astype(jnp.bfloat16), w.astype(jnp.bfloat16),
            window_strides=(1, 1), padding="SAME",
            dimension_numbers=("NHWC", "HWIO", "NHWC"),
            preferred_element_type=jnp.float32)
        return y + b.reshape(1, 1, 1, -1)

    def bn(v, g, be):
        mean = jnp.mean(v, axis=(0, 1, 2), keepdims=True)
        var = jnp.mean((v - mean) ** 2, axis=(0, 1, 2), keepdims=True)
        return ((v - mean) * lax.rsqrt(var + EPS) * g.reshape(1, 1, 1, -1)
                + be.reshape(1, 1, 1, -1))

    h = jnp.maximum(bn(conv(x, params["w1"], params["b1"]),
                       params["g1"], params["be1"]), 0.0)
    h = bn(conv(h, params["w2"], params["b2"]), params["g2"], params["be2"])
    return jnp.transpose(jnp.maximum(h + x, 0.0), (0, 3, 1, 2))


if __name__ == "__main__":
    # in_channels == out_channels is required by the residual add in the module
    N, C, H, W = 2, 16, 16, 16
    key = jax.random.PRNGKey(0)
    keys = jax.random.split(key, 9)
    x = jax.random.normal(keys[0], (N, C, H, W), jnp.float32)  # NCHW, like PyTorch

    fan_in = C * 9
    params = {
        "w1": jax.random.normal(keys[1], (3, 3, C, C), jnp.float32) / jnp.sqrt(fan_in),
        "b1": 0.1 * jax.random.normal(keys[2], (1, C), jnp.float32),
        "g1": 1.0 + 0.1 * jax.random.normal(keys[3], (1, C), jnp.float32),
        "be1": 0.1 * jax.random.normal(keys[4], (1, C), jnp.float32),
        "w2": jax.random.normal(keys[5], (3, 3, C, C), jnp.float32) / jnp.sqrt(fan_in),
        "b2": 0.1 * jax.random.normal(keys[6], (1, C), jnp.float32),
        "g2": 1.0 + 0.1 * jax.random.normal(keys[7], (1, C), jnp.float32),
        "be2": 0.1 * jax.random.normal(keys[8], (1, C), jnp.float32),
    }

    out = jax.block_until_ready(jax.jit(unet_res_block)(x, params))
    ref = jax.block_until_ready(jax.jit(unet_res_block_reference)(x, params))

    assert out.shape == (N, C, H, W) and out.dtype == jnp.float32
    err = float(jnp.max(jnp.abs(out - ref)))
    # Tolerance reflects bf16 MXU operands (per perf feedback) on two
    # independent code paths (Pallas im2col matmuls vs XLA conv).
    assert jnp.allclose(out, ref, rtol=1e-2, atol=5e-3), err
    print("KERNEL_OK")
</pallas_src>

<mosaic_0001>
module attributes {stable_mosaic.version = 11 : i64} {
  func.func @kernel(%arg0: memref<712x48xbf16, #tpu.memory_space<vmem>>, %arg1: memref<648x16xf32, #tpu.memory_space<vmem>>, %arg2: memref<648x1xf32, #tpu.memory_space<vmem>>, %arg3: memref<3x48x16xbf16, #tpu.memory_space<vmem>>, %arg4: memref<1x16xf32, #tpu.memory_space<vmem>>, %arg5: memref<1x16xf32, #tpu.memory_space<vmem>>, %arg6: memref<1x16xf32, #tpu.memory_space<vmem>>, %arg7: memref<3x48x16xbf16, #tpu.memory_space<vmem>>, %arg8: memref<1x16xf32, #tpu.memory_space<vmem>>, %arg9: memref<1x16xf32, #tpu.memory_space<vmem>>, %arg10: memref<1x16xf32, #tpu.memory_space<vmem>>, %arg11: memref<648x16xf32, #tpu.memory_space<vmem>>, %arg12: memref<712x48xbf16, #tpu.memory_space<vmem>>) attributes {dimension_semantics = [], scalar_prefetch = 0 : i64, scratch_operands = 1 : i64, tpu.core_type = #tpu.core_type<tc>} {
    %c0 = arith.constant 0 : index
    %c0_0 = arith.constant 0 : index
    %0 = vector.load %arg2[%c0, %c0_0] : memref<648x1xf32, #tpu.memory_space<vmem>>, vector<648x1xf32>
    %c14 = arith.constant 14 : index
    %c0_1 = arith.constant 0 : index
    %1 = vector.load %arg0[%c14, %c0_1] : memref<712x48xbf16, #tpu.memory_space<vmem>>, vector<648x48xbf16>
    %c0_2 = arith.constant 0 : index
    %c0_3 = arith.constant 0 : index
    %c0_4 = arith.constant 0 : index
    %2 = vector.load %arg3[%c0_2, %c0_3, %c0_4] : memref<3x48x16xbf16, #tpu.memory_space<vmem>>, vector<1x48x16xbf16>
    %3 = vector.shape_cast %2 : vector<1x48x16xbf16> to vector<48x16xbf16>
    %cst = arith.constant dense<0.000000e+00> : vector<648x16xf32>
    %4 = tpu.matmul %1, %3, %cst {dimension_numbers = #tpu.dot_dimension_numbers<[1], [0], [0], [1], [0, 0, 1, 1], [], []>} : vector<648x48xbf16>, vector<48x16xbf16>, vector<648x16xf32> -> vector<648x16xf32>
    %c32 = arith.constant 32 : index
    %c0_5 = arith.constant 0 : index
    %5 = vector.load %arg0[%c32, %c0_5] : memref<712x48xbf16, #tpu.memory_space<vmem>>, vector<648x48xbf16>
    %c1 = arith.constant 1 : index
    %c0_6 = arith.constant 0 : index
    %c0_7 = arith.constant 0 : index
    %6 = vector.load %arg3[%c1, %c0_6, %c0_7] : memref<3x48x16xbf16, #tpu.memory_space<vmem>>, vector<1x48x16xbf16>
    %7 = vector.shape_cast %6 : vector<1x48x16xbf16> to vector<48x16xbf16>
    %cst_8 = arith.constant dense<0.000000e+00> : vector<648x16xf32>
    %8 = tpu.matmul %5, %7, %cst_8 {dimension_numbers = #tpu.dot_dimension_numbers<[1], [0], [0], [1], [0, 0, 1, 1], [], []>} : vector<648x48xbf16>, vector<48x16xbf16>, vector<648x16xf32> -> vector<648x16xf32>
    %9 = arith.addf %4, %8 : vector<648x16xf32>
    %c50 = arith.constant 50 : index
    %c0_9 = arith.constant 0 : index
    %10 = vector.load %arg0[%c50, %c0_9] : memref<712x48xbf16, #tpu.memory_space<vmem>>, vector<648x48xbf16>
    %c2 = arith.constant 2 : index
    %c0_10 = arith.constant 0 : index
    %c0_11 = arith.constant 0 : index
    %11 = vector.load %arg3[%c2, %c0_10, %c0_11] : memref<3x48x16xbf16, #tpu.memory_space<vmem>>, vector<1x48x16xbf16>
    %12 = vector.shape_cast %11 : vector<1x48x16xbf16> to vector<48x16xbf16>
    %cst_12 = arith.constant dense<0.000000e+00> : vector<648x16xf32>
    %13 = tpu.matmul %10, %12, %cst_12 {dimension_numbers = #tpu.dot_dimension_numbers<[1], [0], [0], [1], [0, 0, 1, 1], [], []>} : vector<648x48xbf16>, vector<48x16xbf16>, vector<648x16xf32> -> vector<648x16xf32>
    %14 = arith.addf %9, %13 : vector<648x16xf32>
    %c0_13 = arith.constant 0 : index
    %c0_14 = arith.constant 0 : index
    %15 = vector.load %arg4[%c0_13, %c0_14] : memref<1x16xf32, #tpu.memory_space<vmem>>, vector<1x16xf32>
    %16 = vector.broadcast %15 : vector<1x16xf32> to vector<648x16xf32>
    %17 = arith.addf %14, %16 : vector<648x16xf32>
    %18 = vector.broadcast %0 : vector<648x1xf32> to vector<648x16xf32>
    %19 = arith.mulf %17, %18 : vector<648x16xf32>
    %cst_15 = arith.constant dense<0.000000e+00> : vector<16xf32>
    %20 = vector.multi_reduction <add>, %19, %cst_15 [0] : vector<648x16xf32> to vector<16xf32>
    %21 = vector.shape_cast %20 : vector<16xf32> to vector<1x16xf32>
    %22 = arith.mulf %19, %19 : vector<648x16xf32>
    %cst_16 = arith.constant dense<0.000000e+00> : vector<16xf32>
    %23 = vector.multi_reduction <add>, %22, %cst_16 [0] : vector<648x16xf32> to vector<16xf32>
    %24 = vector.shape_cast %23 : vector<16xf32> to vector<1x16xf32>
    %cst_17 = arith.constant 0.001953125 : f32
    %25 = vector.broadcast %cst_17 : f32 to vector<1x16xf32>
    %26 = arith.mulf %21, %25 : vector<1x16xf32>
    %cst_18 = arith.constant 0.001953125 : f32
    %27 = vector.broadcast %cst_18 : f32 to vector<1x16xf32>
    %28 = arith.mulf %24, %27 : vector<1x16xf32>
    %29 = arith.mulf %26, %26 : vector<1x16xf32>
    %30 = arith.subf %28, %29 : vector<1x16xf32>
    %c0_19 = arith.constant 0 : index
    %c0_20 = arith.constant 0 : index
    %31 = vector.load %arg5[%c0_19, %c0_20] : memref<1x16xf32, #tpu.memory_space<vmem>>, vector<1x16xf32>
    %cst_21 = arith.constant 9.99999974E-6 : f32
    %32 = vector.broadcast %cst_21 : f32 to vector<1x16xf32>
    %33 = arith.addf %30, %32 : vector<1x16xf32>
    %34 = math.rsqrt %33 : vector<1x16xf32>
    %35 = arith.mulf %31, %34 : vector<1x16xf32>
    %36 = vector.broadcast %26 : vector<1x16xf32> to vector<648x16xf32>
    %37 = arith.subf %17, %36 : vector<648x16xf32>
    %38 = vector.broadcast %35 : vector<1x16xf32> to vector<648x16xf32>
    %39 = arith.mulf %37, %38 : vector<648x16xf32>
    %c0_22 = arith.constant 0 : index
    %c0_23 = arith.constant 0 : index
    %40 = vector.load %arg6[%c0_22, %c0_23] : memref<1x16xf32, #tpu.memory_space<vmem>>, vector<1x16xf32>
    %41 = vector.broadcast %40 : vector<1x16xf32> to vector<648x16xf32>
    %42 = arith.addf %39, %41 : vector<648x16xf32>
    %cst_24 = arith.constant 0.000000e+00 : f32
    %43 = vector.broadcast %cst_24 : f32 to vector<648x16xf32>
    %44 = arith.maximumf %42, %43 : vector<648x16xf32>
    %45 = vector.broadcast %0 : vector<648x1xf32> to vector<648x16xf32>
    %46 = arith.mulf %44, %45 : vector<648x16xf32>
    %47 = arith.truncf %46 : vector<648x16xf32> to vector<648x16xbf16>
    %cst_25 = arith.constant 0.000000e+00 : bf16
    %48 = vector.broadcast %cst_25 : bf16 to vector<33x48xbf16>
    %c0_26 = arith.constant 0 : index
    %c0_27 = arith.constant 0 : index
    %49 = vector.load %arg12[%c0_26, %c0_27] : memref<712x48xbf16, #tpu.memory_space<vmem>>, vector<33x48xbf16>
    tpu.vector_store %arg12[%c0_26, %c0_27], %48 {strides = array<i32>} : memref<712x48xbf16, #tpu.memory_space<vmem>>, vector<33x48xbf16>,
    %cst_28 = arith.constant 0.000000e+00 : bf16
    %50 = vector.broadcast %cst_28 : bf16 to vector<33x48xbf16>
    %c679 = arith.constant 679 : index
    %c0_29 = arith.constant 0 : index
    %51 = vector.load %arg12[%c679, %c0_29] : memref<712x48xbf16, #tpu.memory_space<vmem>>, vector<33x48xbf16>
    tpu.vector_store %arg12[%c679, %c0_29], %50 {strides = array<i32>} : memref<712x48xbf16, #tpu.memory_space<vmem>>, vector<33x48xbf16>,
    %c33 = arith.constant 33 : index
    %c0_30 = arith.constant 0 : index
    %52 = vector.load %arg12[%c33, %c0_30] : memref<712x48xbf16, #tpu.memory_space<vmem>>, vector<648x16xbf16>
    tpu.vector_store %arg12[%c33, %c0_30], %47 {strides = array<i32>} : memref<712x48xbf16, #tpu.memory_space<vmem>>, vector<648x16xbf16>,
    %c32_31 = arith.constant 32 : index
    %c16 = arith.constant 16 : index
    %53 = vector.load %arg12[%c32_31, %c16] : memref<712x48xbf16, #tpu.memory_space<vmem>>, vector<648x16xbf16>
    tpu.vector_store %arg12[%c32_31, %c16], %47 {strides = array<i32>} : memref<712x48xbf16, #tpu.memory_space<vmem>>, vector<648x16xbf16>,
    %c31 = arith.constant 31 : index
    %c32_32 = arith.constant 32 : index
    %54 = vector.load %arg12[%c31, %c32_32] : memref<712x48xbf16, #tpu.memory_space<vmem>>, vector<648x16xbf16>
    tpu.vector_store %arg12[%c31, %c32_32], %47 {strides = array<i32>} : memref<712x48xbf16, #tpu.memory_space<vmem>>, vector<648x16xbf16>,
    %c14_33 = arith.constant 14 : index
    %c0_34 = arith.constant 0 : index
    %55 = vector.load %arg12[%c14_33, %c0_34] : memref<712x48xbf16, #tpu.memory_space<vmem>>, vector<648x48xbf16>
    %c0_35 = arith.constant 0 : index
    %c0_36 = arith.constant 0 : index
    %c0_37 = arith.constant 0 : index
    %56 = vector.load %arg7[%c0_35, %c0_36, %c0_37] : memref<3x48x16xbf16, #tpu.memory_space<vmem>>, vector<1x48x16xbf16>
    %57 = vector.shape_cast %56 : vector<1x48x16xbf16> to vector<48x16xbf16>
    %cst_38 = arith.constant dense<0.000000e+00> : vector<648x16xf32>
    %58 = tpu.matmul %55, %57, %cst_38 {dimension_numbers = #tpu.dot_dimension_numbers<[1], [0], [0], [1], [0, 0, 1, 1], [], []>} : vector<648x48xbf16>, vector<48x16xbf16>, vector<648x16xf32> -> vector<648x16xf32>
    %c32_39 = arith.constant 32 : index
    %c0_40 = arith.constant 0 : index
    %59 = vector.load %arg12[%c32_39, %c0_40] : memref<712x48xbf16, #tpu.memory_space<vmem>>, vector<648x48xbf16>
    %c1_41 = arith.constant 1 : index
    %c0_42 = arith.constant 0 : index
    %c0_43 = arith.constant 0 : index
    %60 = vector.load %arg7[%c1_41, %c0_42, %c0_43] : memref<3x48x16xbf16, #tpu.memory_space<vmem>>, vector<1x48x16xbf16>
    %61 = vector.shape_cast %60 : vector<1x48x16xbf16> to vector<48x16xbf16>
    %cst_44 = arith.constant dense<0.000000e+00> : vector<648x16xf32>
    %62 = tpu.matmul %59, %61, %cst_44 {dimension_numbers = #tpu.dot_dimension_numbers<[1], [0], [0], [1], [0, 0, 1, 1], [], []>} : vector<648x48xbf16>, vector<48x16xbf16>, vector<648x16xf32> -> vector<648x16xf32>
    %63 = arith.addf %58, %62 : vector<648x16xf32>
    %c50_45 = arith.constant 50 : index
    %c0_46 = arith.constant 0 : index
    %64 = vector.load %arg12[%c50_45, %c0_46] : memref<712x48xbf16, #tpu.memory_space<vmem>>, vector<648x48xbf16>
    %c2_47 = arith.constant 2 : index
    %c0_48 = arith.constant 0 : index
    %c0_49 = arith.constant 0 : index
    %65 = vector.load %arg7[%c2_47, %c0_48, %c0_49] : memref<3x48x16xbf16, #tpu.memory_space<vmem>>, vector<1x48x16xbf16>
    %66 = vector.shape_cast %65 : vector<1x48x16xbf16> to vector<48x16xbf16>
    %cst_50 = arith.constant dense<0.000000e+00> : vector<648x16xf32>
    %67 = tpu.matmul %64, %66, %cst_50 {dimension_numbers = #tpu.dot_dimension_numbers<[1], [0], [0], [1], [0, 0, 1, 1], [], []>} : vector<648x48xbf16>, vector<48x16xbf16>, vector<648x16xf32> -> vector<648x16xf32>
    %68 = arith.addf %63, %67 : vector<648x16xf32>
    %c0_51 = arith.constant 0 : index
    %c0_52 = arith.constant 0 : index
    %69 = vector.load %arg8[%c0_51, %c0_52] : memref<1x16xf32, #tpu.memory_space<vmem>>, vector<1x16xf32>
    %70 = vector.broadcast %69 : vector<1x16xf32> to vector<648x16xf32>
    %71 = arith.addf %68, %70 : vector<648x16xf32>
    %72 = vector.broadcast %0 : vector<648x1xf32> to vector<648x16xf32>
    %73 = arith.mulf %71, %72 : vector<648x16xf32>
    %cst_53 = arith.constant dense<0.000000e+00> : vector<16xf32>
    %74 = vector.multi_reduction <add>, %73, %cst_53 [0] : vector<648x16xf32> to vector<16xf32>
    %75 = vector.shape_cast %74 : vector<16xf32> to vector<1x16xf32>
    %76 = arith.mulf %73, %73 : vector<648x16xf32>
    %cst_54 = arith.constant dense<0.000000e+00> : vector<16xf32>
    %77 = vector.multi_reduction <add>, %76, %cst_54 [0] : vector<648x16xf32> to vector<16xf32>
    %78 = vector.shape_cast %77 : vector<16xf32> to vector<1x16xf32>
    %cst_55 = arith.constant 0.001953125 : f32
    %79 = vector.broadcast %cst_55 : f32 to vector<1x16xf32>
    %80 = arith.mulf %75, %79 : vector<1x16xf32>
    %cst_56 = arith.constant 0.001953125 : f32
    %81 = vector.broadcast %cst_56 : f32 to vector<1x16xf32>
    %82 = arith.mulf %78, %81 : vector<1x16xf32>
    %83 = arith.mulf %80, %80 : vector<1x16xf32>
    %84 = arith.subf %82, %83 : vector<1x16xf32>
    %c0_57 = arith.constant 0 : index
    %c0_58 = arith.constant 0 : index
    %85 = vector.load %arg9[%c0_57, %c0_58] : memref<1x16xf32, #tpu.memory_space<vmem>>, vector<1x16xf32>
    %cst_59 = arith.constant 9.99999974E-6 : f32
    %86 = vector.broadcast %cst_59 : f32 to vector<1x16xf32>
    %87 = arith.addf %84, %86 : vector<1x16xf32>
    %88 = math.rsqrt %87 : vector<1x16xf32>
    %89 = arith.mulf %85, %88 : vector<1x16xf32>
    %90 = vector.broadcast %80 : vector<1x16xf32> to vector<648x16xf32>
    %91 = arith.subf %71, %90 : vector<648x16xf32>
    %92 = vector.broadcast %89 : vector<1x16xf32> to vector<648x16xf32>
    %93 = arith.mulf %91, %92 : vector<648x16xf32>
    %c0_60 = arith.constant 0 : index
    %c0_61 = arith.constant 0 : index
    %94 = vector.load %arg10[%c0_60, %c0_61] : memref<1x16xf32, #tpu.memory_space<vmem>>, vector<1x16xf32>
    %95 = vector.broadcast %94 : vector<1x16xf32> to vector<648x16xf32>
    %96 = arith.addf %93, %95 : vector<648x16xf32>
    %c0_62 = arith.constant 0 : index
    %c0_63 = arith.constant 0 : index
    %97 = vector.load %arg1[%c0_62, %c0_63] : memref<648x16xf32, #tpu.memory_space<vmem>>, vector<648x16xf32>
    %98 = arith.addf %96, %97 : vector<648x16xf32>
    %cst_64 = arith.constant 0.000000e+00 : f32
    %99 = vector.broadcast %cst_64 : f32 to vector<648x16xf32>
    %100 = arith.maximumf %98, %99 : vector<648x16xf32>
    %c0_65 = arith.constant 0 : index
    %c0_66 = arith.constant 0 : index
    %101 = vector.load %arg11[%c0_65, %c0_66] : memref<648x16xf32, #tpu.memory_space<vmem>>, vector<648x16xf32>
    tpu.vector_store %arg11[%c0_65, %c0_66], %100 {strides = array<i32>} : memref<648x16xf32, #tpu.memory_space<vmem>>, vector<648x16xf32>,
    return
  }
}

</mosaic_0001>

<llo_original>
// kernel: unet_res_block.1
$region0: #{unet_res_block.1}
  #allocation0 [shape = 'u32[]', space=smem, size = 0x4, offset = 0x4, fixed_abs, tag = 'smem constant byte address 0x4 - core index']
  #allocation1 [shape = 'u32[144,128]{1,0:T(1,128)}', space=vmem, size = 0x12000, scoped, tag = 'internal scratch']
  #allocation2 [shape = 'bf16[712,48]{1,0:T(8,128)(2,1)}', space=vmem, size = 0x2c800, scoped, tag = 'scratch operand']
  %s0 = inlined_call_operand.vmem [shape: bf16[712,48], index: 0, kind: input, shape index: {}]
  %s1 = inlined_call_operand.vmem [shape: f32[648,16], index: 1, kind: input, shape index: {}]
  %s2 = inlined_call_operand.vmem [shape: f32[648,1], index: 2, kind: input, shape index: {}]
  %s3 = inlined_call_operand.vmem [shape: bf16[3,48,16], index: 3, kind: input, shape index: {}]
  %s4 = inlined_call_operand.vmem [shape: f32[1,16], index: 4, kind: input, shape index: {}]
  %s5 = inlined_call_operand.vmem [shape: f32[1,16], index: 5, kind: input, shape index: {}]
  %s6 = inlined_call_operand.vmem [shape: f32[1,16], index: 6, kind: input, shape index: {}]
  %s7 = inlined_call_operand.vmem [shape: bf16[3,48,16], index: 7, kind: input, shape index: {}]
  %s8 = inlined_call_operand.vmem [shape: f32[1,16], index: 8, kind: input, shape index: {}]
  %s9 = inlined_call_operand.vmem [shape: f32[1,16], index: 9, kind: input, shape index: {}]
  %s10 = inlined_call_operand.vmem [shape: f32[1,16], index: 10, kind: input, shape index: {}]
  %s11 = inlined_call_operand.vmem [shape: f32[648,16], index: 11, kind: output, shape index: {}]
  %s12 = sld [smem:[#allocation0]]
  $region54: #{unet_res_block.1} parent=0
    _
  %s14 = ssub.s32 1, %s12
  %s15 = scalar_select 0, %s14, %s12
  // Predicated region
  $region2: #{unet_res_block.1} parent=0 // pred_check
    _
  $region3: #{unet_res_block.1} parent=0 // pred_check_branch
    %17 = sbr.rel (0) target = $region5
  $region4: #{unet_res_block.1} parent=0 // pred_region
    _
  $region5: #{unet_res_block.1} parent=0 // pred_fallthru
    _
  // Predicated region
  $region6: #{unet_res_block.1} parent=0 // pred_check
    _
  $region7: #{unet_res_block.1} parent=0 // pred_check_branch
    %19 = sbr.rel (0) target = $region9
  $region8: #{unet_res_block.1} parent=0 // pred_region
    _
  $region9: #{unet_res_block.1} parent=0 // pred_fallthru
    _
  // Predicated region
  $region10: #{unet_res_block.1} parent=0 // pred_check
    _
  $region11: #{unet_res_block.1} parent=0 // pred_check_branch
    %21 = sbr.rel (0) target = $region13
  $region12: #{unet_res_block.1} parent=0 // pred_region
    _
  $region13: #{unet_res_block.1} parent=0 // pred_fallthru
    _
  // Predicated region
  $region14: #{unet_res_block.1} parent=0 // pred_check
    _
  $region15: #{unet_res_block.1} parent=0 // pred_check_branch
    %23 = sbr.rel (0) target = $region17
  $region16: #{unet_res_block.1} parent=0 // pred_region
    _
  $region17: #{unet_res_block.1} parent=0 // pred_fallthru
    _
  // Predicated region
  $region18: #{unet_res_block.1} parent=0 // pred_check
    _
  $region19: #{unet_res_block.1} parent=0 // pred_check_branch
    %25 = sbr.rel (0) target = $region21
  $region20: #{unet_res_block.1} parent=0 // pred_region
    _
  $region21: #{unet_res_block.1} parent=0 // pred_fallthru
    _
  // Predicated region
  $region22: #{unet_res_block.1} parent=0 // pred_check
    _
  $region23: #{unet_res_block.1} parent=0 // pred_check_branch
    %27 = sbr.rel (0) target = $region25
  $region24: #{unet_res_block.1} parent=0 // pred_region
    _
  $region25: #{unet_res_block.1} parent=0 // pred_fallthru
    _
  // Predicated region
  $region26: #{unet_res_block.1} parent=0 // pred_check
    _
  $region27: #{unet_res_block.1} parent=0 // pred_check_branch
    %29 = sbr.rel (0) target = $region29
  $region28: #{unet_res_block.1} parent=0 // pred_region
    _
  $region29: #{unet_res_block.1} parent=0 // pred_fallthru
    _
  // Predicated region
  $region30: #{unet_res_block.1} parent=0 // pred_check
    _
  $region31: #{unet_res_block.1} parent=0 // pred_check_branch
    %31 = sbr.rel (0) target = $region33
  $region32: #{unet_res_block.1} parent=0 // pred_region
    _
  $region33: #{unet_res_block.1} parent=0 // pred_fallthru
    _
  // Predicated region
  $region34: #{unet_res_block.1} parent=0 // pred_check
    _
  $region35: #{unet_res_block.1} parent=0 // pred_check_branch
    %33 = sbr.rel (0) target = $region37
  $region36: #{unet_res_block.1} parent=0 // pred_region
    _
  $region37: #{unet_res_block.1} parent=0 // pred_fallthru
    _
  // Predicated region
  $region38: #{unet_res_block.1} parent=0 // pred_check
    _
  $region39: #{unet_res_block.1} parent=0 // pred_check_branch
    %35 = sbr.rel (0) target = $region41
  $region40: #{unet_res_block.1} parent=0 // pred_region
    _
  $region41: #{unet_res_block.1} parent=0 // pred_fallthru
    _
  // Predicated region
  $region42: #{unet_res_block.1} parent=0 // pred_check
    _
  $region43: #{unet_res_block.1} parent=0 // pred_check_branch
    %37 = sbr.rel (0) target = $region45
  $region44: #{unet_res_block.1} parent=0 // pred_region
    _
  $region45: #{unet_res_block.1} parent=0 // pred_fallthru
    _
  %v39 = vld [vmem:[%s2] sm:$0xff]
  %v40 = vld [vmem:[%s2 + $0x8] sm:$0xff]
  %v41 = vld [vmem:[%s2 + $0x10] sm:$0xff]
  %v42 = vld [vmem:[%s2 + $0x18] sm:$0xff]
  %v43 = vld [vmem:[%s2 + $0x20] sm:$0xff]
  %v44 = vld [vmem:[%s2 + $0x28] sm:$0xff]
  %v45 = vld [vmem:[%s2 + $0x30] sm:$0xff]
  %v46 = vld [vmem:[%s2 + $0x38] sm:$0xff]
  %v47 = vld [vmem:[%s2 + $0x40] sm:$0xff]
  %v48 = vld [vmem:[%s2 + $0x48] sm:$0xff]
  %v49 = vld [vmem:[%s2 + $0x50] sm:$0xff]
  %v50 = vld [vmem:[%s2 + $0x58] sm:$0xff]
  %v51 = vld [vmem:[%s2 + $0x60] sm:$0xff]
  %v52 = vld [vmem:[%s2 + $0x68] sm:$0xff]
  %v53 = vld [vmem:[%s2 + $0x70] sm:$0xff]
  %v54 = vld [vmem:[%s2 + $0x78] sm:$0xff]
  %v55 = vld [vmem:[%s2 + $0x80] sm:$0xff]
  %v56 = vld [vmem:[%s2 + $0x88] sm:$0xff]
  %v57 = vld [vmem:[%s2 + $0x90] sm:$0xff]
  %v58 = vld [vmem:[%s2 + $0x98] sm:$0xff]
  %v59 = vld [vmem:[%s2 + $0xa0] sm:$0xff]
  %v60 = vld [vmem:[%s2 + $0xa8] sm:$0xff]
  %v61 = vld [vmem:[%s2 + $0xb0] sm:$0xff]
  %v62 = vld [vmem:[%s2 + $0xb8] sm:$0xff]
  %v63 = vld [vmem:[%s2 + $0xc0] sm:$0xff]
  %v64 = vld [vmem:[%s2 + $0xc8] sm:$0xff]
  %v65 = vld [vmem:[%s2 + $0xd0] sm:$0xff]
  %v66 = vld [vmem:[%s2 + $0xd8] sm:$0xff]
  %v67 = vld [vmem:[%s2 + $0xe0] sm:$0xff]
  %v68 = vld [vmem:[%s2 + $0xe8] sm:$0xff]
  %v69 = vld [vmem:[%s2 + $0xf0] sm:$0xff]
  %v70 = vld [vmem:[%s2 + $0xf8] sm:$0xff]
  %v71 = vld [vmem:[%s2 + $0x100] sm:$0xff]
  %v72 = vld [vmem:[%s2 + $0x108] sm:$0xff]
  %v73 = vld [vmem:[%s2 + $0x110] sm:$0xff]
  %v74 = vld [vmem:[%s2 + $0x118] sm:$0xff]
  %v75 = vld [vmem:[%s2 + $0x120] sm:$0xff]
  %v76 = vld [vmem:[%s2 + $0x128] sm:$0xff]
  %v77 = vld [vmem:[%s2 + $0x130] sm:$0xff]
  %v78 = vld [vmem:[%s2 + $0x138] sm:$0xff]
  %v79 = vld [vmem:[%s2 + $0x140] sm:$0xff]
  %v80 = vld [vmem:[%s2 + $0x148] sm:$0xff]
  %v81 = vld [vmem:[%s2 + $0x150] sm:$0xff]
  %v82 = vld [vmem:[%s2 + $0x158] sm:$0xff]
  %v83 = vld [vmem:[%s2 + $0x160] sm:$0xff]
  %v84 = vld [vmem:[%s2 + $0x168] sm:$0xff]
  %v85 = vld [vmem:[%s2 + $0x170] sm:$0xff]
  %v86 = vld [vmem:[%s2 + $0x178] sm:$0xff]
  %v87 = vld [vmem:[%s2 + $0x180] sm:$0xff]
  %v88 = vld [vmem:[%s2 + $0x188] sm:$0xff]
  %v89 = vld [vmem:[%s2 + $0x190] sm:$0xff]
  %v90 = vld [vmem:[%s2 + $0x198] sm:$0xff]
  %v91 = vld [vmem:[%s2 + $0x1a0] sm:$0xff]
  %v92 = vld [vmem:[%s2 + $0x1a8] sm:$0xff]
  %v93 = vld [vmem:[%s2 + $0x1b0] sm:$0xff]
  %v94 = vld [vmem:[%s2 + $0x1b8] sm:$0xff]
  %v95 = vld [vmem:[%s2 + $0x1c0] sm:$0xff]
  %v96 = vld [vmem:[%s2 + $0x1c8] sm:$0xff]
  %v97 = vld [vmem:[%s2 + $0x1d0] sm:$0xff]
  %v98 = vld [vmem:[%s2 + $0x1d8] sm:$0xff]
  %v99 = vld [vmem:[%s2 + $0x1e0] sm:$0xff]
  %v100 = vld [vmem:[%s2 + $0x1e8] sm:$0xff]
  %v101 = vld [vmem:[%s2 + $0x1f0] sm:$0xff]
  %v102 = vld [vmem:[%s2 + $0x1f8] sm:$0xff]
  %v103 = vld [vmem:[%s2 + $0x200] sm:$0xff]
  %v104 = vld [vmem:[%s2 + $0x208] sm:$0xff]
  %v105 = vld [vmem:[%s2 + $0x210] sm:$0xff]
  %v106 = vld [vmem:[%s2 + $0x218] sm:$0xff]
  %v107 = vld [vmem:[%s2 + $0x220] sm:$0xff]
  %v108 = vld [vmem:[%s2 + $0x228] sm:$0xff]
  %v109 = vld [vmem:[%s2 + $0x230] sm:$0xff]
  %v110 = vld [vmem:[%s2 + $0x238] sm:$0xff]
  %v111 = vld [vmem:[%s2 + $0x240] sm:$0xff]
  %v112 = vld [vmem:[%s2 + $0x248] sm:$0xff]
  %v113 = vld [vmem:[%s2 + $0x250] sm:$0xff]
  %v114 = vld [vmem:[%s2 + $0x258] sm:$0xff]
  %v115 = vld [vmem:[%s2 + $0x260] sm:$0xff]
  %v116 = vld [vmem:[%s2 + $0x268] sm:$0xff]
  %v117 = vld [vmem:[%s2 + $0x270] sm:$0xff]
  %v118 = vld [vmem:[%s2 + $0x278] sm:$0xff]
  %v119 = vld [vmem:[%s2 + $0x280] sm:$0xff]
  %v120 = vld [vmem:[%s0 + $0x4] sm:$0x8]
  %v121 = vld [vmem:[%s0 + $0x8] sm:$0xf]
  %v122 = vld [vmem:[%s0 + $0xc] sm:$0xf]
  %v123 = vld [vmem:[%s0 + $0x10] sm:$0xf]
  %v124 = vld [vmem:[%s0 + $0x14] sm:$0xf]
  %v125 = vld [vmem:[%s0 + $0x18] sm:$0xf]
  %v126 = vld [vmem:[%s0 + $0x1c] sm:$0xf]
  %v127 = vld [vmem:[%s0 + $0x20] sm:$0xf]
  %v128 = vld [vmem:[%s0 + $0x24] sm:$0xf]
  %v129 = vld [vmem:[%s0 + $0x28] sm:$0xf]
  %v130 = vld [vmem:[%s0 + $0x2c] sm:$0xf]
  %v131 = vld [vmem:[%s0 + $0x30] sm:$0xf]
  %v132 = vld [vmem:[%s0 + $0x34] sm:$0xf]
  %v133 = vld [vmem:[%s0 + $0x38] sm:$0xf]
  %v134 = vld [vmem:[%s0 + $0x3c] sm:$0xf]
  %v135 = vld [vmem:[%s0 + $0x40] sm:$0xf]
  %v136 = vld [vmem:[%s0 + $0x44] sm:$0xf]
  %v137 = vld [vmem:[%s0 + $0x48] sm:$0xf]
  %v138 = vld [vmem:[%s0 + $0x4c] sm:$0xf]
  %v139 = vld [vmem:[%s0 + $0x50] sm:$0xf]
  %v140 = vld [vmem:[%s0 + $0x54] sm:$0xf]
  %v141 = vld [vmem:[%s0 + $0x58] sm:$0xf]
  %v142 = vld [vmem:[%s0 + $0x5c] sm:$0xf]
  %v143 = vld [vmem:[%s0 + $0x60] sm:$0xf]
  %v144 = vld [vmem:[%s0 + $0x64] sm:$0xf]
  %v145 = vld [vmem:[%s0 + $0x68] sm:$0xf]
  %v146 = vld [vmem:[%s0 + $0x6c] sm:$0xf]
  %v147 = vld [vmem:[%s0 + $0x70] sm:$0xf]
  %v148 = vld [vmem:[%s0 + $0x74] sm:$0xf]
  %v149 = vld [vmem:[%s0 + $0x78] sm:$0xf]
  %v150 = vld [vmem:[%s0 + $0x7c] sm:$0xf]
  %v151 = vld [vmem:[%s0 + $0x80] sm:$0xf]
  %v152 = vld [vmem:[%s0 + $0x84] sm:$0xf]
  %v153 = vld [vmem:[%s0 + $0x88] sm:$0xf]
  %v154 = vld [vmem:[%s0 + $0x8c] sm:$0xf]
  %v155 = vld [vmem:[%s0 + $0x90] sm:$0xf]
  %v156 = vld [vmem:[%s0 + $0x94] sm:$0xf]
  %v157 = vld [vmem:[%s0 + $0x98] sm:$0xf]
  %v158 = vld [vmem:[%s0 + $0x9c] sm:$0xf]
  %v159 = vld [vmem:[%s0 + $0xa0] sm:$0xf]
  %v160 = vld [vmem:[%s0 + $0xa4] sm:$0xf]
  %v161 = vld [vmem:[%s0 + $0xa8] sm:$0xf]
  %v162 = vld [vmem:[%s0 + $0xac] sm:$0xf]
  %v163 = vld [vmem:[%s0 + $0xb0] sm:$0xf]
  %v164 = vld [vmem:[%s0 + $0xb4] sm:$0xf]
  %v165 = vld [vmem:[%s0 + $0xb8] sm:$0xf]
  %v166 = vld [vmem:[%s0 + $0xbc] sm:$0xf]
  %v167 = vld [vmem:[%s0 + $0xc0] sm:$0xf]
  %v168 = vld [vmem:[%s0 + $0xc4] sm:$0xf]
  %v169 = vld [vmem:[%s0 + $0xc8] sm:$0xf]
  %v170 = vld [vmem:[%s0 + $0xcc] sm:$0xf]
  %v171 = vld [vmem:[%s0 + $0xd0] sm:$0xf]
  %v172 = vld [vmem:[%s0 + $0xd4] sm:$0xf]
  %v173 = vld [vmem:[%s0 + $0xd8] sm:$0xf]
  %v174 = vld [vmem:[%s0 + $0xdc] sm:$0xf]
  %v175 = vld [vmem:[%s0 + $0xe0] sm:$0xf]
  %v176 = vld [vmem:[%s0 + $0xe4] sm:$0xf]
  %v177 = vld [vmem:[%s0 + $0xe8] sm:$0xf]
  %v178 = vld [vmem:[%s0 + $0xec] sm:$0xf]
  %v179 = vld [vmem:[%s0 + $0xf0] sm:$0xf]
  %v180 = vld [vmem:[%s0 + $0xf4] sm:$0xf]
  %v181 = vld [vmem:[%s0 + $0xf8] sm:$0xf]
  %v182 = vld [vmem:[%s0 + $0xfc] sm:$0xf]
  %v183 = vld [vmem:[%s0 + $0x100] sm:$0xf]
  %v184 = vld [vmem:[%s0 + $0x104] sm:$0xf]
  %v185 = vld [vmem:[%s0 + $0x108] sm:$0xf]
  %v186 = vld [vmem:[%s0 + $0x10c] sm:$0xf]
  %v187 = vld [vmem:[%s0 + $0x110] sm:$0xf]
  %v188 = vld [vmem:[%s0 + $0x114] sm:$0xf]
  %v189 = vld [vmem:[%s0 + $0x118] sm:$0xf]
  %v190 = vld [vmem:[%s0 + $0x11c] sm:$0xf]
  %v191 = vld [vmem:[%s0 + $0x120] sm:$0xf]
  %v192 = vld [vmem:[%s0 + $0x124] sm:$0xf]
  %v193 = vld [vmem:[%s0 + $0x128] sm:$0xf]
  %v194 = vld [vmem:[%s0 + $0x12c] sm:$0xf]
  %v195 = vld [vmem:[%s0 + $0x130] sm:$0xf]
  %v196 = vld [vmem:[%s0 + $0x134] sm:$0xf]
  %v197 = vld [vmem:[%s0 + $0x138] sm:$0xf]
  %v198 = vld [vmem:[%s0 + $0x13c] sm:$0xf]
  %v199 = vld [vmem:[%s0 + $0x140] sm:$0xf]
  %v200 = vld [vmem:[%s0 + $0x144] sm:$0xf]
  %v201 = vld [vmem:[%s0 + $0x148] sm:$0x7]
  %v202 = vld [vmem:[%s3] sm:$0xf]
  %v203 = vld [vmem:[%s3 + $0x4] sm:$0xf]
  %v204 = vld [vmem:[%s3 + $0x8] sm:$0xf]
  %v205 = vld [vmem:[%s3 + $0xc] sm:$0xf]
  %v206 = vld [vmem:[%s3 + $0x10] sm:$0xf]
  %v207 = vld [vmem:[%s3 + $0x14] sm:$0xf]
  %v208 = vld [vmem:[%s0 + $0x148] sm:$0xf]
  %v209 = vld [vmem:[%s0 + $0x14c] sm:$0xf]
  %v210 = vld [vmem:[%s0 + $0x150] sm:$0xf]
  %s211 = scalar_lea.vmem %s3, 24
  %v212 = vld [vmem:[%s211] sm:$0xf]
  %v213 = vld [vmem:[%s211 + $0x4] sm:$0xf]
  %v214 = vld [vmem:[%s211 + $0x8] sm:$0xf]
  %v215 = vld [vmem:[%s211 + $0xc] sm:$0xf]
  %v216 = vld [vmem:[%s211 + $0x10] sm:$0xf]
  %v217 = vld [vmem:[%s211 + $0x14] sm:$0xf]
  %v299 = vunpack.c.l.b16 %v123
  %v300 = vunpack.c.l.b16 %v124
  %v301 = vunpack.c.l.b16 %v125
  %v302 = vunpack.c.l.b16 %v126
  %v303 = vunpack.c.l.b16 %v127
  %v304 = vunpack.c.l.b16 %v128
  %v305 = vunpack.c.l.b16 %v129
  %v306 = vunpack.c.l.b16 %v130
  %v307 = vunpack.c.l.b16 %v131
  %v308 = vunpack.c.l.b16 %v132
  %v309 = vunpack.c.l.b16 %v133
  %v310 = vunpack.c.l.b16 %v134
  %v311 = vunpack.c.l.b16 %v135
  %v312 = vunpack.c.l.b16 %v136
  %v313 = vunpack.c.l.b16 %v137
  %v314 = vunpack.c.l.b16 %v138
  %v315 = vunpack.c.l.b16 %v139
  %v316 = vunpack.c.l.b16 %v140
  %v317 = vunpack.c.l.b16 %v141
  %v318 = vunpack.c.l.b16 %v142
  %v319 = vunpack.c.l.b16 %v143
  %v320 = vunpack.c.l.b16 %v144
  %v321 = vunpack.c.l.b16 %v145
  %v322 = vunpack.c.l.b16 %v146
  %v323 = vunpack.c.l.b16 %v147
  %v324 = vunpack.c.l.b16 %v148
  %v325 = vunpack.c.l.b16 %v149
  %v326 = vunpack.c.l.b16 %v150
  %v327 = vunpack.c.l.b16 %v151
  %v328 = vunpack.c.l.b16 %v152
  %v329 = vunpack.c.l.b16 %v153
  %v330 = vunpack.c.l.b16 %v154
  %v331 = vunpack.c.l.b16 %v155
  %v332 = vunpack.c.l.b16 %v156
  %v333 = vunpack.c.l.b16 %v157
  %v334 = vunpack.c.l.b16 %v158
  %v335 = vunpack.c.l.b16 %v159
  %v336 = vunpack.c.l.b16 %v160
  %v337 = vunpack.c.l.b16 %v161
  %v338 = vunpack.c.l.b16 %v162
  %v339 = vunpack.c.l.b16 %v163
  %v340 = vunpack.c.l.b16 %v164
  %v341 = vunpack.c.l.b16 %v165
  %v342 = vunpack.c.l.b16 %v166
  %v343 = vunpack.c.l.b16 %v167
  %v344 = vunpack.c.l.b16 %v168
  %v345 = vunpack.c.l.b16 %v169
  %v346 = vunpack.c.l.b16 %v170
  %v347 = vunpack.c.l.b16 %v171
  %v348 = vunpack.c.l.b16 %v172
  %v349 = vunpack.c.l.b16 %v173
  %v350 = vunpack.c.l.b16 %v174
  %v351 = vunpack.c.l.b16 %v175
  %v352 = vunpack.c.l.b16 %v176
  %v353 = vunpack.c.l.b16 %v177
  %v354 = vunpack.c.l.b16 %v178
  %v355 = vunpack.c.l.b16 %v179
  %v356 = vunpack.c.l.b16 %v180
  %v357 = vunpack.c.l.b16 %v181
  %v358 = vunpack.c.l.b16 %v182
  %v359 = vunpack.c.l.b16 %v183
  %v360 = vunpack.c.l.b16 %v184
  %v361 = vunpack.c.l.b16 %v185
  %v362 = vunpack.c.l.b16 %v186
  %v363 = vunpack.c.l.b16 %v187
  %v364 = vunpack.c.l.b16 %v188
  %v365 = vunpack.c.l.b16 %v189
  %v366 = vunpack.c.l.b16 %v190
  %v367 = vunpack.c.l.b16 %v191
  %v368 = vunpack.c.l.b16 %v192
  %v369 = vunpack.c.l.b16 %v193
  %v370 = vunpack.c.l.b16 %v194
  %v371 = vunpack.c.l.b16 %v195
  %v372 = vunpack.c.l.b16 %v196
  %v373 = vunpack.c.l.b16 %v197
  %v374 = vunpack.c.l.b16 %v198
  %v375 = vunpack.c.l.b16 %v199
  %v376 = vunpack.c.l.b16 %v200
  %v377 = vunpack.c.l.b16 %v208
  %v378 = vunpack.c.l.b16 %v209
  %v379 = vunpack.c.l.b16 %v210
  %v380 = vpack.c.b16 %v300, %v299
  %v381 = vpack.c.b16 %v302, %v301
  %v382 = vpack.c.b16 %v304, %v303
  %v383 = vpack.c.b16 %v306, %v305
  %v384 = vpack.c.b16 %v308, %v307
  %v385 = vpack.c.b16 %v310, %v309
  %v386 = vpack.c.b16 %v312, %v311
  %v387 = vpack.c.b16 %v314, %v313
  %v388 = vpack.c.b16 %v316, %v315
  %v389 = vpack.c.b16 %v318, %v317
  %v390 = vpack.c.b16 %v320, %v319
  %v391 = vpack.c.b16 %v322, %v321
  %v392 = vpack.c.b16 %v324, %v323
  %v393 = vpack.c.b16 %v326, %v325
  %v394 = vpack.c.b16 %v328, %v327
  %v395 = vpack.c.b16 %v330, %v329
  %v396 = vpack.c.b16 %v332, %v331
  %v397 = vpack.c.b16 %v334, %v333
  %v398 = vpack.c.b16 %v336, %v335
  %v399 = vpack.c.b16 %v338, %v337
  %v400 = vpack.c.b16 %v340, %v339
  %v401 = vpack.c.b16 %v342, %v341
  %v402 = vpack.c.b16 %v344, %v343
  %v403 = vpack.c.b16 %v346, %v345
  %v404 = vpack.c.b16 %v348, %v347
  %v405 = vpack.c.b16 %v350, %v349
  %v406 = vpack.c.b16 %v352, %v351
  %v407 = vpack.c.b16 %v354, %v353
  %v408 = vpack.c.b16 %v356, %v355
  %v409 = vpack.c.b16 %v358, %v357
  %v410 = vpack.c.b16 %v360, %v359
  %v411 = vpack.c.b16 %v362, %v361
  %v412 = vpack.c.b16 %v364, %v363
  %v413 = vpack.c.b16 %v366, %v365
  %v414 = vpack.c.b16 %v368, %v367
  %v415 = vpack.c.b16 %v370, %v369
  %v416 = vpack.c.b16 %v372, %v371
  %v417 = vpack.c.b16 %v374, %v373
  %v418 = vpack.c.b16 %v376, %v375
  %v419 = vpack.c.b16 %v378, %v377
  %v420 = vpack.c.b16 %v379, %v379
  %v427 = vunpack.c.l.b16 %v212
  %v428 = vunpack.c.l.b16 %v213
  %v429 = vunpack.c.l.b16 %v214
  %v430 = vunpack.c.l.b16 %v215
  %v431 = vunpack.c.l.b16 %v216
  %v432 = vunpack.c.l.b16 %v217
  %v433 = vpack.c.b16 %v428, %v427
  %v434 = vpack.c.b16 %v430, %v429
  %v435 = vpack.c.b16 %v432, %v431
  %vm439 = vcmask 392192
  %v441 = vsel %vm439, %v380, 0
  %v444 = vsel %vm439, %v381, 0
  %v447 = vsel %vm439, %v382, 0
  %v450 = vsel %vm439, %v383, 0
  %v453 = vsel %vm439, %v384, 0
  %v456 = vsel %vm439, %v385, 0
  %v459 = vsel %vm439, %v386, 0
  %v462 = vsel %vm439, %v387, 0
  %v465 = vsel %vm439, %v388, 0
  %v468 = vsel %vm439, %v389, 0
  %v471 = vsel %vm439, %v390, 0
  %v474 = vsel %vm439, %v391, 0
  %v477 = vsel %vm439, %v392, 0
  %v480 = vsel %vm439, %v393, 0
  %v483 = vsel %vm439, %v394, 0
  %v486 = vsel %vm439, %v395, 0
  %v489 = vsel %vm439, %v396, 0
  %v492 = vsel %vm439, %v397, 0
  %v495 = vsel %vm439, %v398, 0
  %v498 = vsel %vm439, %v399, 0
  %v501 = vsel %vm439, %v400, 0
  %v504 = vsel %vm439, %v401, 0
  %v507 = vsel %vm439, %v402, 0
  %v510 = vsel %vm439, %v403, 0
  %v513 = vsel %vm439, %v404, 0
  %v516 = vsel %vm439, %v405, 0
  %v519 = vsel %vm439, %v406, 0
  %v522 = vsel %vm439, %v407, 0
  %v525 = vsel %vm439, %v408, 0
  %v528 = vsel %vm439, %v409, 0
  %v531 = vsel %vm439, %v410, 0
  %v534 = vsel %vm439, %v411, 0
  %v537 = vsel %vm439, %v412, 0
  %v540 = vsel %vm439, %v413, 0
  %v543 = vsel %vm439, %v414, 0
  %v546 = vsel %vm439, %v415, 0
  %v549 = vsel %vm439, %v416, 0
  %v552 = vsel %vm439, %v417, 0
  %v555 = vsel %vm439, %v418, 0
  %v558 = vsel %vm439, %v419, 0
  %v561 = vsel %vm439, %v420, 0
  %563 = vmatprep.subr.bf16.mxu0 0
  %564 = vmatpush1.bf16.msra.mxu0 %v433
  %565 = vmatprep.subr.bf16.mxu0 0
  %566 = vmatpush1.bf16.msra.mxu0 %v434
  %567 = vmatprep.subr.bf16.mxu0 0
  %568 = vmatpush1.bf16.msra.mxu0 %v435
  %569 = vmatprep.subr.bf16.mxu0 0
  %570 = vmatpush1.bf16.msra.mxu0 0
  %571 = vmatprep.subr.bf16.mxu0 0
  %572 = vmatpush1.bf16.msra.mxu0 0
  %573 = vmatprep.subr.bf16.mxu0 0
  %574 = vmatpush1.bf16.msra.mxu0 0
  %575 = vmatprep.subr.bf16.mxu0 0
  %576 = vmatpush1.bf16.msra.mxu0 0
  %577 = vmatprep.subr.bf16.mxu0 0
  %578 = vmatpush1.bf16.msra.mxu0 0
  %579 = vmatprep.subr.bf16.mxu0 0
  %580 = vmatpush1.bf16.msra.mxu0 0
  %581 = vmatprep.subr.bf16.mxu0 0
  %582 = vmatpush1.bf16.msra.mxu0 0
  %583 = vmatprep.subr.bf16.mxu0 0
  %584 = vmatpush1.bf16.msra.mxu0 0
  %585 = vmatprep.subr.bf16.mxu0 0
  %586 = vmatpush1.bf16.msra.mxu0 0
  %587 = vmatprep.subr.bf16.mxu0 0
  %588 = vmatpush1.bf16.msra.mxu0 0
  %589 = vmatprep.subr.bf16.mxu0 0
  %590 = vmatpush1.bf16.msra.mxu0 0
  %591 = vmatprep.subr.bf16.mxu0 0
  %592 = vmatpush1.bf16.msra.mxu0 0
  %593 = vmatprep.subr.bf16.mxu0 0
  %594 = vmatpush1.bf16.msra.mxu0 0
  %595 = vmatprep.mubr.bf16.mxu0 0
  %596 = vmatmul.mubr.bf16.gmra.mrb[0].mxu0 %v441
  %v597 = vpop.f32.mrb[0].mxu0
  %v598 = vadd.f32 0.0, %v597
  %v599 = vpop.f32.mrb[0].mxu0
  %v600 = vpop.f32.mrb[0].mxu0
  %v601 = vadd.f32 0.0, %v600
  %v602 = vpop.f32.mrb[0].mxu0
  %603 = vmatprep.mubr.bf16.mxu0 0
  %604 = vmatmul.mubr.bf16.gmra.mrb[0].mxu0 %v444
  %v605 = vpop.f32.mrb[0].mxu0
  %v606 = vadd.f32 0.0, %v605
  %v607 = vpop.f32.mrb[0].mxu0
  %v608 = vpop.f32.mrb[0].mxu0
  %v609 = vadd.f32 0.0, %v608
  %v610 = vpop.f32.mrb[0].mxu0
  %611 = vmatprep.mubr.bf16.mxu0 0
  %612 = vmatmul.mubr.bf16.gmra.mrb[0].mxu0 %v447
  %v613 = vpop.f32.mrb[0].mxu0
  %v614 = vadd.f32 0.0, %v613
  %v615 = vpop.f32.mrb[0].mxu0
  %v616 = vpop.f32.mrb[0].mxu0
  %v617 = vadd.f32 0.0, %v616
  %v618 = vpop.f32.mrb[0].mxu0
  %619 = vmatprep.mubr.bf16.mxu0 0
  %620 = vmatmul.mubr.bf16.gmra.mrb[0].mxu0 %v450
  %v621 = vpop.f32.mrb[0].mxu0
  %v622 = vadd.f32 0.0, %v621
  %v623 = vpop.f32.mrb[0].mxu0
  %v624 = vpop.f32.mrb[0].mxu0
  %v625 = vadd.f32 0.0, %v624
  %v626 = vpop.f32.mrb[0].mxu0
  %627 = vmatprep.mubr.bf16.mxu0 0
  %628 = vmatmul.mubr.bf16.gmra.mrb[0].mxu0 %v453
  %v629 = vpop.f32.mrb[0].mxu0
  %v630 = vadd.f32 0.0, %v629
  %v631 = vpop.f32.mrb[0].mxu0
  %v632 = vpop.f32.mrb[0].mxu0
  %v633 = vadd.f32 0.0, %v632
  %v634 = vpop.f32.mrb[0].mxu0
  %635 = vmatprep.mubr.bf16.mxu0 0
  %636 = vmatmul.mubr.bf16.gmra.mrb[0].mxu0 %v456
  %v637 = vpop.f32.mrb[0].mxu0
  %v638 = vadd.f32 0.0, %v637
  %v639 = vpop.f32.mrb[0].mxu0
  %v640 = vpop.f32.mrb[0].mxu0
  %v641 = vadd.f32 0.0, %v640
  %v642 = vpop.f32.mrb[0].mxu0
  %643 = vmatprep.mubr.bf16.mxu0 0
  %644 = vmatmul.mubr.bf16.gmra.mrb[0].mxu0 %v459
  %v645 = vpop.f32.mrb[0].mxu0
  %v646 = vadd.f32 0.0, %v645
  %v647 = vpop.f32.mrb[0].mxu0
  %v648 = vpop.f32.mrb[0].mxu0
  %v649 = vadd.f32 0.0, %v648
  %v650 = vpop.f32.mrb[0].mxu0
  %651 = vmatprep.mubr.bf16.mxu0 0
  %652 = vmatmul.mubr.bf16.gmra.mrb[0].mxu0 %v462
  %v653 = vpop.f32.mrb[0].mxu0
  %v654 = vadd.f32 0.0, %v653
  %v655 = vpop.f32.mrb[0].mxu0
  %v656 = vpop.f32.mrb[0].mxu0
  %v657 = vadd.f32 0.0, %v656
  %v658 = vpop.f32.mrb[0].mxu0
  %659 = vmatprep.mubr.bf16.mxu0 0
  %660 = vmatmul.mubr.bf16.gmra.mrb[0].mxu0 %v465
  %v661 = vpop.f32.mrb[0].mxu0
  %v662 = vadd.f32 0.0, %v661
  %v663 = vpop.f32.mrb[0].mxu0
  %v664 = vpop.f32.mrb[0].mxu0
  %v665 = vadd.f32 0.0, %v664
  %v666 = vpop.f32.mrb[0].mxu0
  %667 = vmatprep.mubr.bf16.mxu0 0
  %668 = vmatmul.mubr.bf16.gmra.mrb[0].mxu0 %v468
  %v669 = vpop.f32.mrb[0].mxu0
  %v670 = vadd.f32 0.0, %v669
  %v671 = vpop.f32.mrb[0].mxu0
  %v672 = vpop.f32.mrb[0].mxu0
  %v673 = vadd.f32 0.0, %v672
  %v674 = vpop.f32.mrb[0].mxu0
  %675 = vmatprep.mubr.bf16.mxu0 0
  %676 = vmatmul.mubr.bf16.gmra.mrb[0].mxu0 %v471
  %v677 = vpop.f32.mrb[0].mxu0
  %v678 = vadd.f32 0.0, %v677
  %v679 = vpop.f32.mrb[0].mxu0
  %v680 = vpop.f32.mrb[0].mxu0
  %v681 = vadd.f32 0.0, %v680
  %v682 = vpop.f32.mrb[0].mxu0
  %683 = vmatprep.mubr.bf16.mxu0 0
  %684 = vmatmul.mubr.bf16.gmra.mrb[0].mxu0 %v474
  %v685 = vpop.f32.mrb[0].mxu0
  %v686 = vadd.f32 0.0, %v685
  %v687 = vpop.f32.mrb[0].mxu0
  %v688 = vpop.f32.mrb[0].mxu0
  %v689 = vadd.f32 0.0, %v688
  %v690 = vpop.f32.mrb[0].mxu0
  %691 = vmatprep.mubr.bf16.mxu0 0
  %692 = vmatmul.mubr.bf16.gmra.mrb[0].mxu0 %v477
  %v693 = vpop.f32.mrb[0].mxu0
  %v694 = vadd.f32 0.0, %v693
  %v695 = vpop.f32.mrb[0].mxu0
  %v696 = vpop.f32.mrb[0].mxu0
  %v697 = vadd.f32 0.0, %v696
  %v698 = vpop.f32.mrb[0].mxu0
  %699 = vmatprep.mubr.bf16.mxu0 0
  %700 = vmatmul.mubr.bf16.gmra.mrb[0].mxu0 %v480
  %v701 = vpop.f32.mrb[0].mxu0
  %v702 = vadd.f32 0.0, %v701
  %v703 = vpop.f32.mrb[0].mxu0
  %v704 = vpop.f32.mrb[0].mxu0
  %v705 = vadd.f32 0.0, %v704
  %v706 = vpop.f32.mrb[0].mxu0
  %707 = vmatprep.mubr.bf16.mxu0 0
  %708 = vmatmul.mubr.bf16.gmra.mrb[0].mxu0 %v483
  %v709 = vpop.f32.mrb[0].mxu0
  %v710 = vadd.f32 0.0, %v709
  %v711 = vpop.f32.mrb[0].mxu0
  %v712 = vpop.f32.mrb[0].mxu0
  %v713 = vadd.f32 0.0, %v712
  %v714 = vpop.f32.mrb[0].mxu0
  %715 = vmatprep.mubr.bf16.mxu0 0
  %716 = vmatmul.mubr.bf16.gmra.mrb[0].mxu0 %v486
  %v717 = vpop.f32.mrb[0].mxu0
  %v718 = vadd.f32 0.0, %v717
  %v719 = vpop.f32.mrb[0].mxu0
  %v720 = vpop.f32.mrb[0].mxu0
  %v721 = vadd.f32 0.0, %v720
  %v722 = vpop.f32.mrb[0].mxu0
  %723 = vmatprep.mubr.bf16.mxu0 0
  %724 = vmatmul.mubr.bf16.gmra.mrb[0].mxu0 %v489
  %v725 = vpop.f32.mrb[0].mxu0
  %v726 = vadd.f32 0.0, %v725
  %v727 = vpop.f32.mrb[0].mxu0
  %v728 = vpop.f32.mrb[0].mxu0
  %v729 = vadd.f32 0.0, %v728
  %v730 = vpop.f32.mrb[0].mxu0
  %731 = vmatprep.mubr.bf16.mxu0 0
  %732 = vmatmul.mubr.bf16.gmra.mrb[0].mxu0 %v492
  %v733 = vpop.f32.mrb[0].mxu0
  %v734 = vadd.f32 0.0, %v733
  %v735 = vpop.f32.mrb[0].mxu0
  %v736 = vpop.f32.mrb[0].mxu0
  %v737 = vadd.f32 0.0, %v736
  %v738 = vpop.f32.mrb[0].mxu0
  %739 = vmatprep.mubr.bf16.mxu0 0
  %740 = vmatmul.mubr.bf16.gmra.mrb[0].mxu0 %v495
  %v741 = vpop.f32.mrb[0].mxu0
  %v742 = vadd.f32 0.0, %v741
  %v743 = vpop.f32.mrb[0].mxu0
  %v744 = vpop.f32.mrb[0].mxu0
  %v745 = vadd.f32 0.0, %v744
  %v746 = vpop.f32.mrb[0].mxu0
  %747 = vmatprep.mubr.bf16.mxu0 0
  %748 = vmatmul.mubr.bf16.gmra.mrb[0].mxu0 %v498
  %v749 = vpop.f32.mrb[0].mxu0
  %v750 = vadd.f32 0.0, %v749
  %v751 = vpop.f32.mrb[0].mxu0
  %v752 = vpop.f32.mrb[0].mxu0
  %v753 = vadd.f32 0.0, %v752
  %v754 = vpop.f32.mrb[0].mxu0
  %755 = vmatprep.mubr.bf16.mxu0 0
  %756 = vmatmul.mubr.bf16.gmra.mrb[0].mxu0 %v501
  %v757 = vpop.f32.mrb[0].mxu0
  %v758 = vadd.f32 0.0, %v757
  %v759 = vpop.f32.mrb[0].mxu0
  %v760 = vpop.f32.mrb[0].mxu0
  %v761 = vadd.f32 0.0, %v760
  %v762 = vpop.f32.mrb[0].mxu0
  %763 = vmatprep.mubr.bf16.mxu0 0
  %764 = vmatmul.mubr.bf16.gmra.mrb[0].mxu0 %v504
  %v765 = vpop.f32.mrb[0].mxu0
  %v766 = vadd.f32 0.0, %v765
  %v767 = vpop.f32.mrb[0].mxu0
  %v768 = vpop.f32.mrb[0].mxu0
  %v769 = vadd.f32 0.0, %v768
  %v770 = vpop.f32.mrb[0].mxu0
  %771 = vmatprep.mubr.bf16.mxu0 0
  %772 = vmatmul.mubr.bf16.gmra.mrb[0].mxu0 %v507
  %v773 = vpop.f32.mrb[0].mxu0
  %v774 = vadd.f32 0.0, %v773
  %v775 = vpop.f32.mrb[0].mxu0
  %v776 = vpop.f32.mrb[0].mxu0
  %v777 = vadd.f32 0.0, %v776
  %v778 = vpop.f32.mrb[0].mxu0
  %779 = vmatprep.mubr.bf16.mxu0 0
  %780 = vmatmul.mubr.bf16.gmra.mrb[0].mxu0 %v510
  %v781 = vpop.f32.mrb[0].mxu0
  %v782 = vadd.f32 0.0, %v781
  %v783 = vpop.f32.mrb[0].mxu0
  %v784 = vpop.f32.mrb[0].mxu0
  %v785 = vadd.f32 0.0, %v784
  %v786 = vpop.f32.mrb[0].mxu0
  %787 = vmatprep.mubr.bf16.mxu0 0
  %788 = vmatmul.mubr.bf16.gmra.mrb[0].mxu0 %v513
  %v789 = vpop.f32.mrb[0].mxu0
  %v790 = vadd.f32 0.0, %v789
  %v791 = vpop.f32.mrb[0].mxu0
  %v792 = vpop.f32.mrb[0].mxu0
  %v793 = vadd.f32 0.0, %v792
  %v794 = vpop.f32.mrb[0].mxu0
  %795 = vmatprep.mubr.bf16.mxu0 0
  %796 = vmatmul.mubr.bf16.gmra.mrb[0].mxu0 %v516
  %v797 = vpop.f32.mrb[0].mxu0
  %v798 = vadd.f32 0.0, %v797
  %v799 = vpop.f32.mrb[0].mxu0
  %v800 = vpop.f32.mrb[0].mxu0
  %v801 = vadd.f32 0.0, %v800
  %v802 = vpop.f32.mrb[0].mxu0
  %803 = vmatprep.mubr.bf16.mxu0 0
  %804 = vmatmul.mubr.bf16.gmra.mrb[0].mxu0 %v519
  %v805 = vpop.f32.mrb[0].mxu0
  %v806 = vadd.f32 0.0, %v805
  %v807 = vpop.f32.mrb[0].mxu0
  %v808 = vpop.f32.mrb[0].mxu0
  %v809 = vadd.f32 0.0, %v808
  %v810 = vpop.f32.mrb[0].mxu0
  %811 = vmatprep.mubr.bf16.mxu0 0
  %812 = vmatmul.mubr.bf16.gmra.mrb[0].mxu0 %v522
  %v813 = vpop.f32.mrb[0].mxu0
  %v814 = vadd.f32 0.0, %v813
  %v815 = vpop.f32.mrb[0].mxu0
  %v816 = vpop.f32.mrb[0].mxu0
  %v817 = vadd.f32 0.0, %v816
  %v818 = vpop.f32.mrb[0].mxu0
  %819 = vmatprep.mubr.bf16.mxu0 0
  %820 = vmatmul.mubr.bf16.gmra.mrb[0].mxu0 %v525
  %v821 = vpop.f32.mrb[0].mxu0
  %v822 = vadd.f32 0.0, %v821
  %v823 = vpop.f32.mrb[0].mxu0
  %v824 = vpop.f32.mrb[0].mxu0
  %v825 = vadd.f32 0.0, %v824
  %v826 = vpop.f32.mrb[0].mxu0
  %827 = vmatprep.mubr.bf16.mxu0 0
  %828 = vmatmul.mubr.bf16.gmra.mrb[0].mxu0 %v528
  %v829 = vpop.f32.mrb[0].mxu0
  %v830 = vadd.f32 0.0, %v829
  %v831 = vpop.f32.mrb[0].mxu0
  %v832 = vpop.f32.mrb[0].mxu0
  %v833 = vadd.f32 0.0, %v832
  %v834 = vpop.f32.mrb[0].mxu0
  %835 = vmatprep.mubr.bf16.mxu0 0
  %836 = vmatmul.mubr.bf16.gmra.mrb[0].mxu0 %v531
  %v837 = vpop.f32.mrb[0].mxu0
  %v838 = vadd.f32 0.0, %v837
  %v839 = vpop.f32.mrb[0].mxu0
  %v840 = vpop.f32.mrb[0].mxu0
  %v841 = vadd.f32 0.0, %v840
  %v842 = vpop.f32.mrb[0].mxu0
  %843 = vmatprep.mubr.bf16.mxu0 0
  %844 = vmatmul.mubr.bf16.gmra.mrb[0].mxu0 %v534
  %v845 = vpop.f32.mrb[0].mxu0
  %v846 = vadd.f32 0.0, %v845
  %v847 = vpop.f32.mrb[0].mxu0
  %v848 = vpop.f32.mrb[0].mxu0
  %v849 = vadd.f32 0.0, %v848
  %v850 = vpop.f32.mrb[0].mxu0
  %851 = vmatprep.mubr.bf16.mxu0 0
  %852 = vmatmul.mubr.bf16.gmra.mrb[0].mxu0 %v537
  %v853 = vpop.f32.mrb[0].mxu0
  %v854 = vadd.f32 0.0, %v853
  %v855 = vpop.f32.mrb[0].mxu0
  %v856 = vpop.f32.mrb[0].mxu0
  %v857 = vadd.f32 0.0, %v856
  %v858 = vpop.f32.mrb[0].mxu0
  %859 = vmatprep.mubr.bf16.mxu0 0
  %860 = vmatmul.mubr.bf16.gmra.mrb[0].mxu0 %v540
  %v861 = vpop.f32.mrb[0].mxu0
  %v862 = vadd.f32 0.0, %v861
  %v863 = vpop.f32.mrb[0].mxu0
  %v864 = vpop.f32.mrb[0].mxu0
  %v865 = vadd.f32 0.0, %v864
  %v866 = vpop.f32.mrb[0].mxu0
  %867 = vmatprep.mubr.bf16.mxu0 0
  %868 = vmatmul.mubr.bf16.gmra.mrb[0].mxu0 %v543
  %v869 = vpop.f32.mrb[0].mxu0
  %v870 = vadd.f32 0.0, %v869
  %v871 = vpop.f32.mrb[0].mxu0
  %v872 = vpop.f32.mrb[0].mxu0
  %v873 = vadd.f32 0.0, %v872
  %v874 = vpop.f32.mrb[0].mxu0
  %875 = vmatprep.mubr.bf16.mxu0 0
  %876 = vmatmul.mubr.bf16.gmra.mrb[0].mxu0 %v546
  %v877 = vpop.f32.mrb[0].mxu0
  %v878 = vadd.f32 0.0, %v877
  %v879 = vpop.f32.mrb[0].mxu0
  %v880 = vpop.f32.mrb[0].mxu0
  %v881 = vadd.f32 0.0, %v880
  %v882 = vpop.f32.mrb[0].mxu0
  %883 = vmatprep.mubr.bf16.mxu0 0
  %884 = vmatmul.mubr.bf16.gmra.mrb[0].mxu0 %v549
  %v885 = vpop.f32.mrb[0].mxu0
  %v886 = vadd.f32 0.0, %v885
  %v887 = vpop.f32.mrb[0].mxu0
  %v888 = vpop.f32.mrb[0].mxu0
  %v889 = vadd.f32 0.0, %v888
  %v890 = vpop.f32.mrb[0].mxu0
  %891 = vmatprep.mubr.bf16.mxu0 0
  %892 = vmatmul.mubr.bf16.gmra.mrb[0].mxu0 %v552
  %v893 = vpop.f32.mrb[0].mxu0
  %v894 = vadd.f32 0.0, %v893
  %v895 = vpop.f32.mrb[0].mxu0
  %v896 = vpop.f32.mrb[0].mxu0
  %v897 = vadd.f32 0.0, %v896
  %v898 = vpop.f32.mrb[0].mxu0
  %899 = vmatprep.mubr.bf16.mxu0 0
  %900 = vmatmul.mubr.bf16.gmra.mrb[0].mxu0 %v555
  %v901 = vpop.f32.mrb[0].mxu0
  %v902 = vadd.f32 0.0, %v901
  %v903 = vpop.f32.mrb[0].mxu0
  %v904 = vpop.f32.mrb[0].mxu0
  %v905 = vadd.f32 0.0, %v904
  %v906 = vpop.f32.mrb[0].mxu0
  %907 = vmatprep.mubr.bf16.mxu0 0
  %908 = vmatmul.mubr.bf16.gmra.mrb[0].mxu0 %v558
  %v909 = vpop.f32.mrb[0].mxu0
  %v910 = vadd.f32 0.0, %v909
  %v911 = vpop.f32.mrb[0].mxu0
  %v912 = vpop.f32.mrb[0].mxu0
  %v913 = vadd.f32 0.0, %v912
  %v914 = vpop.f32.mrb[0].mxu0
  %915 = vmatprep.mubr.bf16.mxu0 0
  %916 = vmatmul.mubr.bf16.gmra.mrb[0].mxu0 %v561
  %v917 = vpop.f32.mrb[0].mxu0
  %v918 = vadd.f32 0.0, %v917
  %v919 = vpop.f32.mrb[0].mxu0
  %v920 = vpop.f32.mrb[0].mxu0
  %v921 = vpop.f32.mrb[0].mxu0
  %922 = vdwg.mxu0
  %v927 = vunpack.c.l.b16 %v120
  %v928 = vunpack.c.l.b16 %v121
  %v929 = vunpack.c.l.b16 %v122
  %v930 = vunpack.c.l.b16 %v201
  %v931 = vpack.c.b16 %v928, %v927
  %v932 = vpack.c.b16 %v299, %v929
  %v933 = vpack.c.b16 %v301, %v300
  %v934 = vpack.c.b16 %v303, %v302
  %v935 = vpack.c.b16 %v305, %v304
  %v936 = vpack.c.b16 %v307, %v306
  %v937 = vpack.c.b16 %v309, %v308
  %v938 = vpack.c.b16 %v311, %v310
  %v939 = vpack.c.b16 %v313, %v312
  %v940 = vpack.c.b16 %v315, %v314
  %v941 = vpack.c.b16 %v317, %v316
  %v942 = vpack.c.b16 %v319, %v318
  %v943 = vpack.c.b16 %v321, %v320
  %v944 = vpack.c.b16 %v323, %v322
  %v945 = vpack.c.b16 %v325, %v324
  %v946 = vpack.c.b16 %v327, %v326
  %v947 = vpack.c.b16 %v329, %v328
  %v948 = vpack.c.b16 %v331, %v330
  %v949 = vpack.c.b16 %v333, %v332
  %v950 = vpack.c.b16 %v335, %v334
  %v951 = vpack.c.b16 %v337, %v336
  %v952 = vpack.c.b16 %v339, %v338
  %v953 = vpack.c.b16 %v341, %v340
  %v954 = vpack.c.b16 %v343, %v342
  %v955 = vpack.c.b16 %v345, %v344
  %v956 = vpack.c.b16 %v347, %v346
  %v957 = vpack.c.b16 %v349, %v348
  %v958 = vpack.c.b16 %v351, %v350
  %v959 = vpack.c.b16 %v353, %v352
  %v960 = vpack.c.b16 %v355, %v354
  %v961 = vpack.c.b16 %v357, %v356
  %v962 = vpack.c.b16 %v359, %v358
  %v963 = vpack.c.b16 %v361, %v360
  %v964 = vpack.c.b16 %v363, %v362
  %v965 = vpack.c.b16 %v365, %v364
  %v966 = vpack.c.b16 %v367, %v366
  %v967 = vpack.c.b16 %v369, %v368
  %v968 = vpack.c.b16 %v371, %v370
  %v969 = vpack.c.b16 %v373, %v372
  %v970 = vpack.c.b16 %v375, %v374
  %v971 = vpack.c.b16 %v930, %v376
  %vm972 = vcmask 1044480
  %v973 = vrot.slane %v931, 3
  %v974 = vrot.slane %v932, 3
  %v975 = vsel %vm972, %v973, %v974
  %v976 = vrot.slane %v933, 3
  %v977 = vsel %vm972, %v974, %v976
  %v978 = vrot.slane %v934, 3
  %v979 = vsel %vm972, %v976, %v978
  %v980 = vrot.slane %v935, 3
  %v981 = vsel %vm972, %v978, %v980
  %v982 = vrot.slane %v936, 3
  %v983 = vsel %vm972, %v980, %v982
  %v984 = vrot.slane %v937, 3
  %v985 = vsel %vm972, %v982, %v984
  %v986 = vrot.slane %v938, 3
  %v987 = vsel %vm972, %v984, %v986
  %v988 = vrot.slane %v939, 3
  %v989 = vsel %vm972, %v986, %v988
  %v990 = vrot.slane %v940, 3
  %v991 = vsel %vm972, %v988, %v990
  %v992 = vrot.slane %v941, 3
  %v993 = vsel %vm972, %v990, %v992
  %v994 = vrot.slane %v942, 3
  %v995 = vsel %vm972, %v992, %v994
  %v996 = vrot.slane %v943, 3
  %v997 = vsel %vm972, %v994, %v996
  %v998 = vrot.slane %v944, 3
  %v999 = vsel %vm972, %v996, %v998
  %v1000 = vrot.slane %v945, 3
  %v1001 = vsel %vm972, %v998, %v1000
  %v1002 = vrot.slane %v946, 3
  %v1003 = vsel %vm972, %v1000, %v1002
  %v1004 = vrot.slane %v947, 3
  %v1005 = vsel %vm972, %v1002, %v1004
  %v1006 = vrot.slane %v948, 3
  %v1007 = vsel %vm972, %v1004, %v1006
  %v1008 = vrot.slane %v949, 3
  %v1009 = vsel %vm972, %v1006, %v1008
  %v1010 = vrot.slane %v950, 3
  %v1011 = vsel %vm972, %v1008, %v1010
  %v1012 = vrot.slane %v951, 3
  %v1013 = vsel %vm972, %v1010, %v1012
  %v1014 = vrot.slane %v952, 3
  %v1015 = vsel %vm972, %v1012, %v1014
  %v1016 = vrot.slane %v953, 3
  %v1017 = vsel %vm972, %v1014, %v1016
  %v1018 = vrot.slane %v954, 3
  %v1019 = vsel %vm972, %v1016, %v1018
  %v1020 = vrot.slane %v955, 3
  %v1021 = vsel %vm972, %v1018, %v1020
  %v1022 = vrot.slane %v956, 3
  %v1023 = vsel %vm972, %v1020, %v1022
  %v1024 = vrot.slane %v957, 3
  %v1025 = vsel %vm972, %v1022, %v1024
  %v1026 = vrot.slane %v958, 3
  %v1027 = vsel %vm972, %v1024, %v1026
  %v1028 = vrot.slane %v959, 3
  %v1029 = vsel %vm972, %v1026, %v1028
  %v1030 = vrot.slane %v960, 3
  %v1031 = vsel %vm972, %v1028, %v1030
  %v1032 = vrot.slane %v961, 3
  %v1033 = vsel %vm972, %v1030, %v1032
  %v1034 = vrot.slane %v962, 3
  %v1035 = vsel %vm972, %v1032, %v1034
  %v1036 = vrot.slane %v963, 3
  %v1037 = vsel %vm972, %v1034, %v1036
  %v1038 = vrot.slane %v964, 3
  %v1039 = vsel %vm972, %v1036, %v1038
  %v1040 = vrot.slane %v965, 3
  %v1041 = vsel %vm972, %v1038, %v1040
  %v1042 = vrot.slane %v966, 3
  %v1043 = vsel %vm972, %v1040, %v1042
  %v1044 = vrot.slane %v967, 3
  %v1045 = vsel %vm972, %v1042, %v1044
  %v1046 = vrot.slane %v968, 3
  %v1047 = vsel %vm972, %v1044, %v1046
  %v1048 = vrot.slane %v969, 3
  %v1049 = vsel %vm972, %v1046, %v1048
  %v1050 = vrot.slane %v970, 3
  %v1051 = vsel %vm972, %v1048, %v1050
  %v1052 = vrot.slane %v971, 3
  %v1053 = vsel %vm972, %v1050, %v1052
  %v1060 = vunpack.c.l.b16 %v202
  %v1061 = vunpack.c.l.b16 %v203
  %v1062 = vunpack.c.l.b16 %v204
  %v1063 = vunpack.c.l.b16 %v205
  %v1064 = vunpack.c.l.b16 %v206
  %v1065 = vunpack.c.l.b16 %v207
  %v1066 = vpack.c.b16 %v1061, %v1060
  %v1067 = vpack.c.b16 %v1063, %v1062
  %v1068 = vpack.c.b16 %v1065, %v1064
  %v1073 = vsel %vm439, %v975, 0
  %v1076 = vsel %vm439, %v977, 0
  %v1079 = vsel %vm439, %v979, 0
  %v1082 = vsel %vm439, %v981, 0
  %v1085 = vsel %vm439, %v983, 0
  %v1088 = vsel %vm439, %v985, 0
  %v1091 = vsel %vm439, %v987, 0
  %v1094 = vsel %vm439, %v989, 0
  %v1097 = vsel %vm439, %v991, 0
  %v1100 = vsel %vm439, %v993, 0
  %v1103 = vsel %vm439, %v995, 0
  %v1106 = vsel %vm439, %v997, 0
  %v1109 = vsel %vm439, %v999, 0
  %v1112 = vsel %vm439, %v1001, 0
  %v1115 = vsel %vm439, %v1003, 0
  %v1118 = vsel %vm439, %v1005, 0
  %v1121 = vsel %vm439, %v1007, 0
  %v1124 = vsel %vm439, %v1009, 0
  %v1127 = vsel %vm439, %v1011, 0
  %v1130 = vsel %vm439, %v1013, 0
  %v1133 = vsel %vm439, %v1015, 0
  %v1136 = vsel %vm439, %v1017, 0
  %v1139 = vsel %vm439, %v1019, 0
  %v1142 = vsel %vm439, %v1021, 0
  %v1145 = vsel %vm439, %v1023, 0
  %v1148 = vsel %vm439, %v1025, 0
  %v1151 = vsel %vm439, %v1027, 0
  %v1154 = vsel %vm439, %v1029, 0
  %v1157 = vsel %vm439, %v1031, 0
  %v1160 = vsel %vm439, %v1033, 0
  %v1163 = vsel %vm439, %v1035, 0
  %v1166 = vsel %vm439, %v1037, 0
  %v1169 = vsel %vm439, %v1039, 0
  %v1172 = vsel %vm439, %v1041, 0
  %v1175 = vsel %vm439, %v1043, 0
  %v1178 = vsel %vm439, %v1045, 0
  %v1181 = vsel %vm439, %v1047, 0
  %v1184 = vsel %vm439, %v1049, 0
  %v1187 = vsel %vm439, %v1051, 0
  %v1190 = vsel %vm439, %v1053, 0
  %v1193 = vsel %vm439, %v1052, 0
  %1195 = vmatprep.subr.bf16.mxu0 0
  %1196 = vmatpush1.bf16.msra.mxu0 %v1066
  %1197 = vmatprep.subr.bf16.mxu0 0
  %1198 = vmatpush1.bf16.msra.mxu0 %v1067
  %1199 = vmatprep.subr.bf16.mxu0 0
  %1200 = vmatpush1.bf16.msra.mxu0 %v1068
  %1201 = vmatprep.subr.bf16.mxu0 0
  %1202 = vmatpush1.bf16.msra.mxu0 0
  %1203 = vmatprep.subr.bf16.mxu0 0
  %1204 = vmatpush1.bf16.msra.mxu0 0
  %1205 = vmatprep.subr.bf16.mxu0 0
  %1206 = vmatpush1.bf16.msra.mxu0 0
  %1207 = vmatprep.subr.bf16.mxu0 0
  %1208 = vmatpush1.bf16.msra.mxu0 0
  %1209 = vmatprep.subr.bf16.mxu0 0
  %1210 = vmatpush1.bf16.msra.mxu0 0
  %1211 = vmatprep.subr.bf16.mxu0 0
  %1212 = vmatpush1.bf16.msra.mxu0 0
  %1213 = vmatprep.subr.bf16.mxu0 0
  %1214 = vmatpush1.bf16.msra.mxu0 0
  %1215 = vmatprep.subr.bf16.mxu0 0
  %1216 = vmatpush1.bf16.msra.mxu0 0
  %1217 = vmatprep.subr.bf16.mxu0 0
  %1218 = vmatpush1.bf16.msra.mxu0 0
  %1219 = vmatprep.subr.bf16.mxu0 0
  %1220 = vmatpush1.bf16.msra.mxu0 0
  %1221 = vmatprep.subr.bf16.mxu0 0
  %1222 = vmatpush1.bf16.msra.mxu0 0
  %1223 = vmatprep.subr.bf16.mxu0 0
  %1224 = vmatpush1.bf16.msra.mxu0 0
  %1225 = vmatprep.subr.bf16.mxu0 0
  %1226 = vmatpush1.bf16.msra.mxu0 0
  %1227 = vmatprep.mubr.bf16.mxu0 0
  %1228 = vmatmul.mubr.bf16.gmra.mrb[0].mxu0 %v1073
  %v1229 = vpop.f32.mrb[0].mxu0
  %v1230 = vadd.f32 %v598, %v1229
  %v1231 = vpop.f32.mrb[0].mxu0
  %v1232 = vpop.f32.mrb[0].mxu0
  %v1233 = vadd.f32 %v601, %v1232
  %v1234 = vpop.f32.mrb[0].mxu0
  %1235 = vmatprep.mubr.bf16.mxu0 0
  %1236 = vmatmul.mubr.bf16.gmra.mrb[0].mxu0 %v1076
  %v1237 = vpop.f32.mrb[0].mxu0
  %v1238 = vadd.f32 %v606, %v1237
  %v1239 = vpop.f32.mrb[0].mxu0
  %v1240 = vpop.f32.mrb[0].mxu0
  %v1241 = vadd.f32 %v609, %v1240
  %v1242 = vpop.f32.mrb[0].mxu0
  %1243 = vmatprep.mubr.bf16.mxu0 0
  %1244 = vmatmul.mubr.bf16.gmra.mrb[0].mxu0 %v1079
  %v1245 = vpop.f32.mrb[0].mxu0
  %v1246 = vadd.f32 %v614, %v1245
  %v1247 = vpop.f32.mrb[0].mxu0
  %v1248 = vpop.f32.mrb[0].mxu0
  %v1249 = vadd.f32 %v617, %v1248
  %v1250 = vpop.f32.mrb[0].mxu0
  %1251 = vmatprep.mubr.bf16.mxu0 0
  %1252 = vmatmul.mubr.bf16.gmra.mrb[0].mxu0 %v1082
  %v1253 = vpop.f32.mrb[0].mxu0
  %v1254 = vadd.f32 %v622, %v1253
  %v1255 = vpop.f32.mrb[0].mxu0
  %v1256 = vpop.f32.mrb[0].mxu0
  %v1257 = vadd.f32 %v625, %v1256
  %v1258 = vpop.f32.mrb[0].mxu0
  %1259 = vmatprep.mubr.bf16.mxu0 0
  %1260 = vmatmul.mubr.bf16.gmra.mrb[0].mxu0 %v1085
  %v1261 = vpop.f32.mrb[0].mxu0
  %v1262 = vadd.f32 %v630, %v1261
  %v1263 = vpop.f32.mrb[0].mxu0
  %v1264 = vpop.f32.mrb[0].mxu0
  %v1265 = vadd.f32 %v633, %v1264
  %v1266 = vpop.f32.mrb[0].mxu0
  %1267 = vmatprep.mubr.bf16.mxu0 0
  %1268 = vmatmul.mubr.bf16.gmra.mrb[0].mxu0 %v1088
  %v1269 = vpop.f32.mrb[0].mxu0
  %v1270 = vadd.f32 %v638, %v1269
  %v1271 = vpop.f32.mrb[0].mxu0
  %v1272 = vpop.f32.mrb[0].mxu0
  %v1273 = vadd.f32 %v641, %v1272
  %v1274 = vpop.f32.mrb[0].mxu0
  %1275 = vmatprep.mubr.bf16.mxu0 0
  %1276 = vmatmul.mubr.bf16.gmra.mrb[0].mxu0 %v1091
  %v1277 = vpop.f32.mrb[0].mxu0
  %v1278 = vadd.f32 %v646, %v1277
  %v1279 = vpop.f32.mrb[0].mxu0
  %v1280 = vpop.f32.mrb[0].mxu0
  %v1281 = vadd.f32 %v649, %v1280
  %v1282 = vpop.f32.mrb[0].mxu0
  %1283 = vmatprep.mubr.bf16.mxu0 0
  %1284 = vmatmul.mubr.bf16.gmra.mrb[0].mxu0 %v1094
  %v1285 = vpop.f32.mrb[0].mxu0
  %v1286 = vadd.f32 %v654, %v1285
  %v1287 = vpop.f32.mrb[0].mxu0
  %v1288 = vpop.f32.mrb[0].mxu0
  %v1289 = vadd.f32 %v657, %v1288
  %v1290 = vpop.f32.mrb[0].mxu0
  %1291 = vmatprep.mubr.bf16.mxu0 0
  %1292 = vmatmul.mubr.bf16.gmra.mrb[0].mxu0 %v1097
  %v1293 = vpop.f32.mrb[0].mxu0
  %v1294 = vadd.f32 %v662, %v1293
  %v1295 = vpop.f32.mrb[0].mxu0
  %v1296 = vpop.f32.mrb[0].mxu0
  %v1297 = vadd.f32 %v665, %v1296
  %v1298 = vpop.f32.mrb[0].mxu0
  %1299 = vmatprep.mubr.bf16.mxu0 0
  %1300 = vmatmul.mubr.bf16.gmra.mrb[0].mxu0 %v1100
  %v1301 = vpop.f32.mrb[0].mxu0
  %v1302 = vadd.f32 %v670, %v1301
  %v1303 = vpop.f32.mrb[0].mxu0
  %v1304 = vpop.f32.mrb[0].mxu0
  %v1305 = vadd.f32 %v673, %v1304
  %v1306 = vpop.f32.mrb[0].mxu0
  %1307 = vmatprep.mubr.bf16.mxu0 0
  %1308 = vmatmul.mubr.bf16.gmra.mrb[0].mxu0 %v1103
  %v1309 = vpop.f32.mrb[0].mxu0
  %v1310 = vadd.f32 %v678, %v1309
  %v1311 = vpop.f32.mrb[0].mxu0
  %v1312 = vpop.f32.mrb[0].mxu0
  %v1313 = vadd.f32 %v681, %v1312
  %v1314 = vpop.f32.mrb[0].mxu0
  %1315 = vmatprep.mubr.bf16.mxu0 0
  %1316 = vmatmul.mubr.bf16.gmra.mrb[0].mxu0 %v1106
  %v1317 = vpop.f32.mrb[0].mxu0
  %v1318 = vadd.f32 %v686, %v1317
  %v1319 = vpop.f32.mrb[0].mxu0
  %v1320 = vpop.f32.mrb[0].mxu0
  %v1321 = vadd.f32 %v689, %v1320
  %v1322 = vpop.f32.mrb[0].mxu0
  %1323 = vmatprep.mubr.bf16.mxu0 0
  %1324 = vmatmul.mubr.bf16.gmra.mrb[0].mxu0 %v1109
  %v1325 = vpop.f32.mrb[0].mxu0
  %v1326 = vadd.f32 %v694, %v1325
  %v1327 = vpop.f32.mrb[0].mxu0
  %v1328 = vpop.f32.mrb[0].mxu0
  %v1329 = vadd.f32 %v697, %v1328
  %v1330 = vpop.f32.mrb[0].mxu0
  %1331 = vmatprep.mubr.bf16.mxu0 0
  %1332 = vmatmul.mubr.bf16.gmra.mrb[0].mxu0 %v1112
  %v1333 = vpop.f32.mrb[0].mxu0
  %v1334 = vadd.f32 %v702, %v1333
  %v1335 = vpop.f32.mrb[0].mxu0
  %v1336 = vpop.f32.mrb[0].mxu0
  %v1337 = vadd.f32 %v705, %v1336
  %v1338 = vpop.f32.mrb[0].mxu0
  %1339 = vmatprep.mubr.bf16.mxu0 0
  %1340 = vmatmul.mubr.bf16.gmra.mrb[0].mxu0 %v1115
  %v1341 = vpop.f32.mrb[0].mxu0
  %v1342 = vadd.f32 %v710, %v1341
  %v1343 = vpop.f32.mrb[0].mxu0
  %v1344 = vpop.f32.mrb[0].mxu0
  %v1345 = vadd.f32 %v713, %v1344
  %v1346 = vpop.f32.mrb[0].mxu0
  %1347 = vmatprep.mubr.bf16.mxu0 0
  %1348 = vmatmul.mubr.bf16.gmra.mrb[0].mxu0 %v1118
  %v1349 = vpop.f32.mrb[0].mxu0
  %v1350 = vadd.f32 %v718, %v1349
  %v1351 = vpop.f32.mrb[0].mxu0
  %v1352 = vpop.f32.mrb[0].mxu0
  %v1353 = vadd.f32 %v721, %v1352
  %v1354 = vpop.f32.mrb[0].mxu0
  %1355 = vmatprep.mubr.bf16.mxu0 0
  %1356 = vmatmul.mubr.bf16.gmra.mrb[0].mxu0 %v1121
  %v1357 = vpop.f32.mrb[0].mxu0
  %v1358 = vadd.f32 %v726, %v1357
  %v1359 = vpop.f32.mrb[0].mxu0
  %v1360 = vpop.f32.mrb[0].mxu0
  %v1361 = vadd.f32 %v729, %v1360
  %v1362 = vpop.f32.mrb[0].mxu0
  %1363 = vmatprep.mubr.bf16.mxu0 0
  %1364 = vmatmul.mubr.bf16.gmra.mrb[0].mxu0 %v1124
  %v1365 = vpop.f32.mrb[0].mxu0
  %v1366 = vadd.f32 %v734, %v1365
  %v1367 = vpop.f32.mrb[0].mxu0
  %v1368 = vpop.f32.mrb[0].mxu0
  %v1369 = vadd.f32 %v737, %v1368
  %v1370 = vpop.f32.mrb[0].mxu0
  %1371 = vmatprep.mubr.bf16.mxu0 0
  %1372 = vmatmul.mubr.bf16.gmra.mrb[0].mxu0 %v1127
  %v1373 = vpop.f32.mrb[0].mxu0
  %v1374 = vadd.f32 %v742, %v1373
  %v1375 = vpop.f32.mrb[0].mxu0
  %v1376 = vpop.f32.mrb[0].mxu0
  %v1377 = vadd.f32 %v745, %v1376
  %v1378 = vpop.f32.mrb[0].mxu0
  %1379 = vmatprep.mubr.bf16.mxu0 0
  %1380 = vmatmul.mubr.bf16.gmra.mrb[0].mxu0 %v1130
  %v1381 = vpop.f32.mrb[0].mxu0
  %v1382 = vadd.f32 %v750, %v1381
  %v1383 = vpop.f32.mrb[0].mxu0
  %v1384 = vpop.f32.mrb[0].mxu0
  %v1385 = vadd.f32 %v753, %v1384
  %v1386 = vpop.f32.mrb[0].mxu0
  %1387 = vmatprep.mubr.bf16.mxu0 0
  %1388 = vmatmul.mubr.bf16.gmra.mrb[0].mxu0 %v1133
  %v1389 = vpop.f32.mrb[0].mxu0
  %v1390 = vadd.f32 %v758, %v1389
  %v1391 = vpop.f32.mrb[0].mxu0
  %v1392 = vpop.f32.mrb[0].mxu0
  %v1393 = vadd.f32 %v761, %v1392
  %v1394 = vpop.f32.mrb[0].mxu0
  %1395 = vmatprep.mubr.bf16.mxu0 0
  %1396 = vmatmul.mubr.bf16.gmra.mrb[0].mxu0 %v1136
  %v1397 = vpop.f32.mrb[0].mxu0
  %v1398 = vadd.f32 %v766, %v1397
  %v1399 = vpop.f32.mrb[0].mxu0
  %v1400 = vpop.f32.mrb[0].mxu0
  %v1401 = vadd.f32 %v769, %v1400
  %v1402 = vpop.f32.mrb[0].mxu0
  %1403 = vmatprep.mubr.bf16.mxu0 0
  %1404 = vmatmul.mubr.bf16.gmra.mrb[0].mxu0 %v1139
  %v1405 = vpop.f32.mrb[0].mxu0
  %v1406 = vadd.f32 %v774, %v1405
  %v1407 = vpop.f32.mrb[0].mxu0
  %v1408 = vpop.f32.mrb[0].mxu0
  %v1409 = vadd.f32 %v777, %v1408
  %v1410 = vpop.f32.mrb[0].mxu0
  %1411 = vmatprep.mubr.bf16.mxu0 0
  %1412 = vmatmul.mubr.bf16.gmra.mrb[0].mxu0 %v1142
  %v1413 = vpop.f32.mrb[0].mxu0
  %v1414 = vadd.f32 %v782, %v1413
  %v1415 = vpop.f32.mrb[0].mxu0
  %v1416 = vpop.f32.mrb[0].mxu0
  %v1417 = vadd.f32 %v785, %v1416
  %v1418 = vpop.f32.mrb[0].mxu0
  %1419 = vmatprep.mubr.bf16.mxu0 0
  %1420 = vmatmul.mubr.bf16.gmra.mrb[0].mxu0 %v1145
  %v1421 = vpop.f32.mrb[0].mxu0
  %v1422 = vadd.f32 %v790, %v1421
  %v1423 = vpop.f32.mrb[0].mxu0
  %v1424 = vpop.f32.mrb[0].mxu0
  %v1425 = vadd.f32 %v793, %v1424
  %v1426 = vpop.f32.mrb[0].mxu0
  %1427 = vmatprep.mubr.bf16.mxu0 0
  %1428 = vmatmul.mubr.bf16.gmra.mrb[0].mxu0 %v1148
  %v1429 = vpop.f32.mrb[0].mxu0
  %v1430 = vadd.f32 %v798, %v1429
  %v1431 = vpop.f32.mrb[0].mxu0
  %v1432 = vpop.f32.mrb[0].mxu0
  %v1433 = vadd.f32 %v801, %v1432
  %v1434 = vpop.f32.mrb[0].mxu0
  %1435 = vmatprep.mubr.bf16.mxu0 0
  %1436 = vmatmul.mubr.bf16.gmra.mrb[0].mxu0 %v1151
  %v1437 = vpop.f32.mrb[0].mxu0
  %v1438 = vadd.f32 %v806, %v1437
  %v1439 = vpop.f32.mrb[0].mxu0
  %v1440 = vpop.f32.mrb[0].mxu0
  %v1441 = vadd.f32 %v809, %v1440
  %v1442 = vpop.f32.mrb[0].mxu0
  %1443 = vmatprep.mubr.bf16.mxu0 0
  %1444 = vmatmul.mubr.bf16.gmra.mrb[0].mxu0 %v1154
  %v1445 = vpop.f32.mrb[0].mxu0
  %v1446 = vadd.f32 %v814, %v1445
  %v1447 = vpop.f32.mrb[0].mxu0
  %v1448 = vpop.f32.mrb[0].mxu0
  %v1449 = vadd.f32 %v817, %v1448
  %v1450 = vpop.f32.mrb[0].mxu0
  %1451 = vmatprep.mubr.bf16.mxu0 0
  %1452 = vmatmul.mubr.bf16.gmra.mrb[0].mxu0 %v1157
  %v1453 = vpop.f32.mrb[0].mxu0
  %v1454 = vadd.f32 %v822, %v1453
  %v1455 = vpop.f32.mrb[0].mxu0
  %v1456 = vpop.f32.mrb[0].mxu0
  %v1457 = vadd.f32 %v825, %v1456
  %v1458 = vpop.f32.mrb[0].mxu0
  %1459 = vmatprep.mubr.bf16.mxu0 0
  %1460 = vmatmul.mubr.bf16.gmra.mrb[0].mxu0 %v1160
  %v1461 = vpop.f32.mrb[0].mxu0
  %v1462 = vadd.f32 %v830, %v1461
  %v1463 = vpop.f32.mrb[0].mxu0
  %v1464 = vpop.f32.mrb[0].mxu0
  %v1465 = vadd.f32 %v833, %v1464
  %v1466 = vpop.f32.mrb[0].mxu0
  %1467 = vmatprep.mubr.bf16.mxu0 0
  %1468 = vmatmul.mubr.bf16.gmra.mrb[0].mxu0 %v1163
  %v1469 = vpop.f32.mrb[0].mxu0
  %v1470 = vadd.f32 %v838, %v1469
  %v1471 = vpop.f32.mrb[0].mxu0
  %v1472 = vpop.f32.mrb[0].mxu0
  %v1473 = vadd.f32 %v841, %v1472
  %v1474 = vpop.f32.mrb[0].mxu0
  %1475 = vmatprep.mubr.bf16.mxu0 0
  %1476 = vmatmul.mubr.bf16.gmra.mrb[0].mxu0 %v1166
  %v1477 = vpop.f32.mrb[0].mxu0
  %v1478 = vadd.f32 %v846, %v1477
  %v1479 = vpop.f32.mrb[0].mxu0
  %v1480 = vpop.f32.mrb[0].mxu0
  %v1481 = vadd.f32 %v849, %v1480
  %v1482 = vpop.f32.mrb[0].mxu0
  %1483 = vmatprep.mubr.bf16.mxu0 0
  %1484 = vmatmul.mubr.bf16.gmra.mrb[0].mxu0 %v1169
  %v1485 = vpop.f32.mrb[0].mxu0
  %v1486 = vadd.f32 %v854, %v1485
  %v1487 = vpop.f32.mrb[0].mxu0
  %v1488 = vpop.f32.mrb[0].mxu0
  %v1489 = vadd.f32 %v857, %v1488
  %v1490 = vpop.f32.mrb[0].mxu0
  %1491 = vmatprep.mubr.bf16.mxu0 0
  %1492 = vmatmul.mubr.bf16.gmra.mrb[0].mxu0 %v1172
  %v1493 = vpop.f32.mrb[0].mxu0
  %v1494 = vadd.f32 %v862, %v1493
  %v1495 = vpop.f32.mrb[0].mxu0
  %v1496 = vpop.f32.mrb[0].mxu0
  %v1497 = vadd.f32 %v865, %v1496
  %v1498 = vpop.f32.mrb[0].mxu0
  %1499 = vmatprep.mubr.bf16.mxu0 0
  %1500 = vmatmul.mubr.bf16.gmra.mrb[0].mxu0 %v1175
  %v1501 = vpop.f32.mrb[0].mxu0
  %v1502 = vadd.f32 %v870, %v1501
  %v1503 = vpop.f32.mrb[0].mxu0
  %v1504 = vpop.f32.mrb[0].mxu0
  %v1505 = vadd.f32 %v873, %v1504
  %v1506 = vpop.f32.mrb[0].mxu0
  %1507 = vmatprep.mubr.bf16.mxu0 0
  %1508 = vmatmul.mubr.bf16.gmra.mrb[0].mxu0 %v1178
  %v1509 = vpop.f32.mrb[0].mxu0
  %v1510 = vadd.f32 %v878, %v1509
  %v1511 = vpop.f32.mrb[0].mxu0
  %v1512 = vpop.f32.mrb[0].mxu0
  %v1513 = vadd.f32 %v881, %v1512
  %v1514 = vpop.f32.mrb[0].mxu0
  %1515 = vmatprep.mubr.bf16.mxu0 0
  %1516 = vmatmul.mubr.bf16.gmra.mrb[0].mxu0 %v1181
  %v1517 = vpop.f32.mrb[0].mxu0
  %v1518 = vadd.f32 %v886, %v1517
  %v1519 = vpop.f32.mrb[0].mxu0
  %v1520 = vpop.f32.mrb[0].mxu0
  %v1521 = vadd.f32 %v889, %v1520
  %v1522 = vpop.f32.mrb[0].mxu0
  %1523 = vmatprep.mubr.bf16.mxu0 0
  %1524 = vmatmul.mubr.bf16.gmra.mrb[0].mxu0 %v1184
  %v1525 = vpop.f32.mrb[0].mxu0
  %v1526 = vadd.f32 %v894, %v1525
  %v1527 = vpop.f32.mrb[0].mxu0
  %v1528 = vpop.f32.mrb[0].mxu0
  %v1529 = vadd.f32 %v897, %v1528
  %v1530 = vpop.f32.mrb[0].mxu0
  %1531 = vmatprep.mubr.bf16.mxu0 0
  %1532 = vmatmul.mubr.bf16.gmra.mrb[0].mxu0 %v1187
  %v1533 = vpop.f32.mrb[0].mxu0
  %v1534 = vadd.f32 %v902, %v1533
  %v1535 = vpop.f32.mrb[0].mxu0
  %v1536 = vpop.f32.mrb[0].mxu0
  %v1537 = vadd.f32 %v905, %v1536
  %v1538 = vpop.f32.mrb[0].mxu0
  %1539 = vmatprep.mubr.bf16.mxu0 0
  %1540 = vmatmul.mubr.bf16.gmra.mrb[0].mxu0 %v1190
  %v1541 = vpop.f32.mrb[0].mxu0
  %v1542 = vadd.f32 %v910, %v1541
  %v1543 = vpop.f32.mrb[0].mxu0
  %v1544 = vpop.f32.mrb[0].mxu0
  %v1545 = vadd.f32 %v913, %v1544
  %v1546 = vpop.f32.mrb[0].mxu0
  %1547 = vmatprep.mubr.bf16.mxu0 0
  %1548 = vmatmul.mubr.bf16.gmra.mrb[0].mxu0 %v1193
  %v1549 = vpop.f32.mrb[0].mxu0
  %v1550 = vadd.f32 %v918, %v1549
  %v1551 = vpop.f32.mrb[0].mxu0
  %v1552 = vpop.f32.mrb[0].mxu0
  %v1553 = vpop.f32.mrb[0].mxu0
  %1554 = vdwg.mxu0
  %v1555 = vld [vmem:[%s0 + $0x18] sm:$0xe]
  %v1556 = vld [vmem:[%s0 + $0x1c] sm:$0xf]
  %v1557 = vld [vmem:[%s0 + $0x20] sm:$0xf]
  %v1558 = vld [vmem:[%s0 + $0x24] sm:$0xf]
  %v1559 = vld [vmem:[%s0 + $0x28] sm:$0xf]
  %v1560 = vld [vmem:[%s0 + $0x2c] sm:$0xf]
  %v1561 = vld [vmem:[%s0 + $0x30] sm:$0xf]
  %v1562 = vld [vmem:[%s0 + $0x34] sm:$0xf]
  %v1563 = vld [vmem:[%s0 + $0x38] sm:$0xf]
  %v1564 = vld [vmem:[%s0 + $0x3c] sm:$0xf]
  %v1565 = vld [vmem:[%s0 + $0x40] sm:$0xf]
  %v1566 = vld [vmem:[%s0 + $0x44] sm:$0xf]
  %v1567 = vld [vmem:[%s0 + $0x48] sm:$0xf]
  %v1568 = vld [vmem:[%s0 + $0x4c] sm:$0xf]
  %v1569 = vld [vmem:[%s0 + $0x50] sm:$0xf]
  %v1570 = vld [vmem:[%s0 + $0x54] sm:$0xf]
  %v1571 = vld [vmem:[%s0 + $0x58] sm:$0xf]
  %v1572 = vld [vmem:[%s0 + $0x5c] sm:$0xf]
  %v1573 = vld [vmem:[%s0 + $0x60] sm:$0xf]
  %v1574 = vld [vmem:[%s0 + $0x64] sm:$0xf]
  %v1575 = vld [vmem:[%s0 + $0x68] sm:$0xf]
  %v1576 = vld [vmem:[%s0 + $0x6c] sm:$0xf]
  %v1577 = vld [vmem:[%s0 + $0x70] sm:$0xf]
  %v1578 = vld [vmem:[%s0 + $0x74] sm:$0xf]
  %v1579 = vld [vmem:[%s0 + $0x78] sm:$0xf]
  %v1580 = vld [vmem:[%s0 + $0x7c] sm:$0xf]
  %v1581 = vld [vmem:[%s0 + $0x80] sm:$0xf]
  %v1582 = vld [vmem:[%s0 + $0x84] sm:$0xf]
  %v1583 = vld [vmem:[%s0 + $0x88] sm:$0xf]
  %v1584 = vld [vmem:[%s0 + $0x8c] sm:$0xf]
  %v1585 = vld [vmem:[%s0 + $0x90] sm:$0xf]
  %v1586 = vld [vmem:[%s0 + $0x94] sm:$0xf]
  %v1587 = vld [vmem:[%s0 + $0x98] sm:$0xf]
  %v1588 = vld [vmem:[%s0 + $0x9c] sm:$0xf]
  %v1589 = vld [vmem:[%s0 + $0xa0] sm:$0xf]
  %v1590 = vld [vmem:[%s0 + $0xa4] sm:$0xf]
  %v1591 = vld [vmem:[%s0 + $0xa8] sm:$0xf]
  %v1592 = vld [vmem:[%s0 + $0xac] sm:$0xf]
  %v1593 = vld [vmem:[%s0 + $0xb0] sm:$0xf]
  %v1594 = vld [vmem:[%s0 + $0xb4] sm:$0xf]
  %v1595 = vld [vmem:[%s0 + $0xb8] sm:$0xf]
  %v1596 = vld [vmem:[%s0 + $0xbc] sm:$0xf]
  %v1597 = vld [vmem:[%s0 + $0xc0] sm:$0xf]
  %v1598 = vld [vmem:[%s0 + $0xc4] sm:$0xf]
  %v1599 = vld [vmem:[%s0 + $0xc8] sm:$0xf]
  %v1600 = vld [vmem:[%s0 + $0xcc] sm:$0xf]
  %v1601 = vld [vmem:[%s0 + $0xd0] sm:$0xf]
  %v1602 = vld [vmem:[%s0 + $0xd4] sm:$0xf]
  %v1603 = vld [vmem:[%s0 + $0xd8] sm:$0xf]
  %v1604 = vld [vmem:[%s0 + $0xdc] sm:$0xf]
  %v1605 = vld [vmem:[%s0 + $0xe0] sm:$0xf]
  %v1606 = vld [vmem:[%s0 + $0xe4] sm:$0xf]
  %v1607 = vld [vmem:[%s0 + $0xe8] sm:$0xf]
  %v1608 = vld [vmem:[%s0 + $0xec] sm:$0xf]
  %v1609 = vld [vmem:[%s0 + $0xf0] sm:$0xf]
  %v1610 = vld [vmem:[%s0 + $0xf4] sm:$0xf]
  %v1611 = vld [vmem:[%s0 + $0xf8] sm:$0xf]
  %v1612 = vld [vmem:[%s0 + $0xfc] sm:$0xf]
  %v1613 = vld [vmem:[%s0 + $0x100] sm:$0xf]
  %v1614 = vld [vmem:[%s0 + $0x104] sm:$0xf]
  %v1615 = vld [vmem:[%s0 + $0x108] sm:$0xf]
  %v1616 = vld [vmem:[%s0 + $0x10c] sm:$0xf]
  %v1617 = vld [vmem:[%s0 + $0x110] sm:$0xf]
  %v1618 = vld [vmem:[%s0 + $0x114] sm:$0xf]
  %v1619 = vld [vmem:[%s0 + $0x118] sm:$0xf]
  %v1620 = vld [vmem:[%s0 + $0x11c] sm:$0xf]
  %v1621 = vld [vmem:[%s0 + $0x120] sm:$0xf]
  %v1622 = vld [vmem:[%s0 + $0x124] sm:$0xf]
  %v1623 = vld [vmem:[%s0 + $0x128] sm:$0xf]
  %v1624 = vld [vmem:[%s0 + $0x12c] sm:$0xf]
  %v1625 = vld [vmem:[%s0 + $0x130] sm:$0xf]
  %v1626 = vld [vmem:[%s0 + $0x134] sm:$0xf]
  %v1627 = vld [vmem:[%s0 + $0x138] sm:$0xf]
  %v1628 = vld [vmem:[%s0 + $0x13c] sm:$0xf]
  %v1629 = vld [vmem:[%s0 + $0x140] sm:$0xf]
  %v1630 = vld [vmem:[%s0 + $0x144] sm:$0xf]
  %v1631 = vld [vmem:[%s0 + $0x148] sm:$0xf]
  %v1632 = vld [vmem:[%s0 + $0x14c] sm:$0xf]
  %v1633 = vld [vmem:[%s0 + $0x150] sm:$0xf]
  %v1634 = vld [vmem:[%s0 + $0x154] sm:$0xf]
  %v1635 = vld [vmem:[%s0 + $0x158] sm:$0xf]
  %v1636 = vld [vmem:[%s0 + $0x15c] sm:$0x1]
  %s1637 = scalar_lea.vmem %s3, 48
  %v1638 = vld [vmem:[%s1637] sm:$0xf]
  %v1639 = vld [vmem:[%s1637 + $0x4] sm:$0xf]
  %v1640 = vld [vmem:[%s1637 + $0x8] sm:$0xf]
  %v1641 = vld [vmem:[%s1637 + $0xc] sm:$0xf]
  %v1642 = vld [vmem:[%s1637 + $0x10] sm:$0xf]
  %v1643 = vld [vmem:[%s1637 + $0x14] sm:$0xf]
  %v1726 = vunpack.c.l.b16 %v1555
  %v1727 = vunpack.c.l.b16 %v1556
  %v1728 = vunpack.c.l.b16 %v1557
  %v1729 = vunpack.c.l.b16 %v1558
  %v1730 = vunpack.c.l.b16 %v1559
  %v1731 = vunpack.c.l.b16 %v1560
  %v1732 = vunpack.c.l.b16 %v1561
  %v1733 = vunpack.c.l.b16 %v1562
  %v1734 = vunpack.c.l.b16 %v1563
  %v1735 = vunpack.c.l.b16 %v1564
  %v1736 = vunpack.c.l.b16 %v1565
  %v1737 = vunpack.c.l.b16 %v1566
  %v1738 = vunpack.c.l.b16 %v1567
  %v1739 = vunpack.c.l.b16 %v1568
  %v1740 = vunpack.c.l.b16 %v1569
  %v1741 = vunpack.c.l.b16 %v1570
  %v1742 = vunpack.c.l.b16 %v1571
  %v1743 = vunpack.c.l.b16 %v1572
  %v1744 = vunpack.c.l.b16 %v1573
  %v1745 = vunpack.c.l.b16 %v1574
  %v1746 = vunpack.c.l.b16 %v1575
  %v1747 = vunpack.c.l.b16 %v1576
  %v1748 = vunpack.c.l.b16 %v1577
  %v1749 = vunpack.c.l.b16 %v1578
  %v1750 = vunpack.c.l.b16 %v1579
  %v1751 = vunpack.c.l.b16 %v1580
  %v1752 = vunpack.c.l.b16 %v1581
  %v1753 = vunpack.c.l.b16 %v1582
  %v1754 = vunpack.c.l.b16 %v1583
  %v1755 = vunpack.c.l.b16 %v1584
  %v1756 = vunpack.c.l.b16 %v1585
  %v1757 = vunpack.c.l.b16 %v1586
  %v1758 = vunpack.c.l.b16 %v1587
  %v1759 = vunpack.c.l.b16 %v1588
  %v1760 = vunpack.c.l.b16 %v1589
  %v1761 = vunpack.c.l.b16 %v1590
  %v1762 = vunpack.c.l.b16 %v1591
  %v1763 = vunpack.c.l.b16 %v1592
  %v1764 = vunpack.c.l.b16 %v1593
  %v1765 = vunpack.c.l.b16 %v1594
  %v1766 = vunpack.c.l.b16 %v1595
  %v1767 = vunpack.c.l.b16 %v1596
  %v1768 = vunpack.c.l.b16 %v1597
  %v1769 = vunpack.c.l.b16 %v1598
  %v1770 = vunpack.c.l.b16 %v1599
  %v1771 = vunpack.c.l.b16 %v1600
  %v1772 = vunpack.c.l.b16 %v1601
  %v1773 = vunpack.c.l.b16 %v1602
  %v1774 = vunpack.c.l.b16 %v1603
  %v1775 = vunpack.c.l.b16 %v1604
  %v1776 = vunpack.c.l.b16 %v1605
  %v1777 = vunpack.c.l.b16 %v1606
  %v1778 = vunpack.c.l.b16 %v1607
  %v1779 = vunpack.c.l.b16 %v1608
  %v1780 = vunpack.c.l.b16 %v1609
  %v1781 = vunpack.c.l.b16 %v1610
  %v1782 = vunpack.c.l.b16 %v1611
  %v1783 = vunpack.c.l.b16 %v1612
  %v1784 = vunpack.c.l.b16 %v1613
  %v1785 = vunpack.c.l.b16 %v1614
  %v1786 = vunpack.c.l.b16 %v1615
  %v1787 = vunpack.c.l.b16 %v1616
  %v1788 = vunpack.c.l.b16 %v1617
  %v1789 = vunpack.c.l.b16 %v1618
  %v1790 = vunpack.c.l.b16 %v1619
  %v1791 = vunpack.c.l.b16 %v1620
  %v1792 = vunpack.c.l.b16 %v1621
  %v1793 = vunpack.c.l.b16 %v1622
  %v1794 = vunpack.c.l.b16 %v1623
  %v1795 = vunpack.c.l.b16 %v1624
  %v1796 = vunpack.c.l.b16 %v1625
  %v1797 = vunpack.c.l.b16 %v1626
  %v1798 = vunpack.c.l.b16 %v1627
  %v1799 = vunpack.c.l.b16 %v1628
  %v1800 = vunpack.c.l.b16 %v1629
  %v1801 = vunpack.c.l.b16 %v1630
  %v1802 = vunpack.c.l.b16 %v1631
  %v1803 = vunpack.c.l.b16 %v1632
  %v1804 = vunpack.c.l.b16 %v1633
  %v1805 = vunpack.c.l.b16 %v1634
  %v1806 = vunpack.c.l.b16 %v1635
  %v1807 = vunpack.c.l.b16 %v1636
  %v1808 = vpack.c.b16 %v1727, %v1726
  %v1809 = vpack.c.b16 %v1729, %v1728
  %v1810 = vpack.c.b16 %v1731, %v1730
  %v1811 = vpack.c.b16 %v1733, %v1732
  %v1812 = vpack.c.b16 %v1735, %v1734
  %v1813 = vpack.c.b16 %v1737, %v1736
  %v1814 = vpack.c.b16 %v1739, %v1738
  %v1815 = vpack.c.b16 %v1741, %v1740
  %v1816 = vpack.c.b16 %v1743, %v1742
  %v1817 = vpack.c.b16 %v1745, %v1744
  %v1818 = vpack.c.b16 %v1747, %v1746
  %v1819 = vpack.c.b16 %v1749, %v1748
  %v1820 = vpack.c.b16 %v1751, %v1750
  %v1821 = vpack.c.b16 %v1753, %v1752
  %v1822 = vpack.c.b16 %v1755, %v1754
  %v1823 = vpack.c.b16 %v1757, %v1756
  %v1824 = vpack.c.b16 %v1759, %v1758
  %v1825 = vpack.c.b16 %v1761, %v1760
  %v1826 = vpack.c.b16 %v1763, %v1762
  %v1827 = vpack.c.b16 %v1765, %v1764
  %v1828 = vpack.c.b16 %v1767, %v1766
  %v1829 = vpack.c.b16 %v1769, %v1768
  %v1830 = vpack.c.b16 %v1771, %v1770
  %v1831 = vpack.c.b16 %v1773, %v1772
  %v1832 = vpack.c.b16 %v1775, %v1774
  %v1833 = vpack.c.b16 %v1777, %v1776
  %v1834 = vpack.c.b16 %v1779, %v1778
  %v1835 = vpack.c.b16 %v1781, %v1780
  %v1836 = vpack.c.b16 %v1783, %v1782
  %v1837 = vpack.c.b16 %v1785, %v1784
  %v1838 = vpack.c.b16 %v1787, %v1786
  %v1839 = vpack.c.b16 %v1789, %v1788
  %v1840 = vpack.c.b16 %v1791, %v1790
  %v1841 = vpack.c.b16 %v1793, %v1792
  %v1842 = vpack.c.b16 %v1795, %v1794
  %v1843 = vpack.c.b16 %v1797, %v1796
  %v1844 = vpack.c.b16 %v1799, %v1798
  %v1845 = vpack.c.b16 %v1801, %v1800
  %v1846 = vpack.c.b16 %v1803, %v1802
  %v1847 = vpack.c.b16 %v1805, %v1804
  %v1848 = vpack.c.b16 %v1807, %v1806
  %vm1849 = vcmask 1046528
  %v1850 = vrot.slane %v1808, 1
  %v1851 = vrot.slane %v1809, 1
  %v1852 = vsel %vm1849, %v1850, %v1851
  %v1853 = vrot.slane %v1810, 1
  %v1854 = vsel %vm1849, %v1851, %v1853
  %v1855 = vrot.slane %v1811, 1
  %v1856 = vsel %vm1849, %v1853, %v1855
  %v1857 = vrot.slane %v1812, 1
  %v1858 = vsel %vm1849, %v1855, %v1857
  %v1859 = vrot.slane %v1813, 1
  %v1860 = vsel %vm1849, %v1857, %v1859
  %v1861 = vrot.slane %v1814, 1
  %v1862 = vsel %vm1849, %v1859, %v1861
  %v1863 = vrot.slane %v1815, 1
  %v1864 = vsel %vm1849, %v1861, %v1863
  %v1865 = vrot.slane %v1816, 1
  %v1866 = vsel %vm1849, %v1863, %v1865
  %v1867 = vrot.slane %v1817, 1
  %v1868 = vsel %vm1849, %v1865, %v1867
  %v1869 = vrot.slane %v1818, 1
  %v1870 = vsel %vm1849, %v1867, %v1869
  %v1871 = vrot.slane %v1819, 1
  %v1872 = vsel %vm1849, %v1869, %v1871
  %v1873 = vrot.slane %v1820, 1
  %v1874 = vsel %vm1849, %v1871, %v1873
  %v1875 = vrot.slane %v1821, 1
  %v1876 = vsel %vm1849, %v1873, %v1875
  %v1877 = vrot.slane %v1822, 1
  %v1878 = vsel %vm1849, %v1875, %v1877
  %v1879 = vrot.slane %v1823, 1
  %v1880 = vsel %vm1849, %v1877, %v1879
  %v1881 = vrot.slane %v1824, 1
  %v1882 = vsel %vm1849, %v1879, %v1881
  %v1883 = vrot.slane %v1825, 1
  %v1884 = vsel %vm1849, %v1881, %v1883
  %v1885 = vrot.slane %v1826, 1
  %v1886 = vsel %vm1849, %v1883, %v1885
  %v1887 = vrot.slane %v1827, 1
  %v1888 = vsel %vm1849, %v1885, %v1887
  %v1889 = vrot.slane %v1828, 1
  %v1890 = vsel %vm1849, %v1887, %v1889
  %v1891 = vrot.slane %v1829, 1
  %v1892 = vsel %vm1849, %v1889, %v1891
  %v1893 = vrot.slane %v1830, 1
  %v1894 = vsel %vm1849, %v1891, %v1893
  %v1895 = vrot.slane %v1831, 1
  %v1896 = vsel %vm1849, %v1893, %v1895
  %v1897 = vrot.slane %v1832, 1
  %v1898 = vsel %vm1849, %v1895, %v1897
  %v1899 = vrot.slane %v1833, 1
  %v1900 = vsel %vm1849, %v1897, %v1899
  %v1901 = vrot.slane %v1834, 1
  %v1902 = vsel %vm1849, %v1899, %v1901
  %v1903 = vrot.slane %v1835, 1
  %v1904 = vsel %vm1849, %v1901, %v1903
  %v1905 = vrot.slane %v1836, 1
  %v1906 = vsel %vm1849, %v1903, %v1905
  %v1907 = vrot.slane %v1837, 1
  %v1908 = vsel %vm1849, %v1905, %v1907
  %v1909 = vrot.slane %v1838, 1
  %v1910 = vsel %vm1849, %v1907, %v1909
  %v1911 = vrot.slane %v1839, 1
  %v1912 = vsel %vm1849, %v1909, %v1911
  %v1913 = vrot.slane %v1840, 1
  %v1914 = vsel %vm1849, %v1911, %v1913
  %v1915 = vrot.slane %v1841, 1
  %v1916 = vsel %vm1849, %v1913, %v1915
  %v1917 = vrot.slane %v1842, 1
  %v1918 = vsel %vm1849, %v1915, %v1917
  %v1919 = vrot.slane %v1843, 1
  %v1920 = vsel %vm1849, %v1917, %v1919
  %v1921 = vrot.slane %v1844, 1
  %v1922 = vsel %vm1849, %v1919, %v1921
  %v1923 = vrot.slane %v1845, 1
  %v1924 = vsel %vm1849, %v1921, %v1923
  %v1925 = vrot.slane %v1846, 1
  %v1926 = vsel %vm1849, %v1923, %v1925
  %v1927 = vrot.slane %v1847, 1
  %v1928 = vsel %vm1849, %v1925, %v1927
  %v1929 = vrot.slane %v1848, 1
  %v1930 = vsel %vm1849, %v1927, %v1929
  %v1937 = vunpack.c.l.b16 %v1638
  %v1938 = vunpack.c.l.b16 %v1639
  %v1939 = vunpack.c.l.b16 %v1640
  %v1940 = vunpack.c.l.b16 %v1641
  %v1941 = vunpack.c.l.b16 %v1642
  %v1942 = vunpack.c.l.b16 %v1643
  %v1943 = vpack.c.b16 %v1938, %v1937
  %v1944 = vpack.c.b16 %v1940, %v1939
  %v1945 = vpack.c.b16 %v1942, %v1941
  %v1950 = vsel %vm439, %v1852, 0
  %v1953 = vsel %vm439, %v1854, 0
  %v1956 = vsel %vm439, %v1856, 0
  %v1959 = vsel %vm439, %v1858, 0
  %v1962 = vsel %vm439, %v1860, 0
  %v1965 = vsel %vm439, %v1862, 0
  %v1968 = vsel %vm439, %v1864, 0
  %v1971 = vsel %vm439, %v1866, 0
  %v1974 = vsel %vm439, %v1868, 0
  %v1977 = vsel %vm439, %v1870, 0
  %v1980 = vsel %vm439, %v1872, 0
  %v1983 = vsel %vm439, %v1874, 0
  %v1986 = vsel %vm439, %v1876, 0
  %v1989 = vsel %vm439, %v1878, 0
  %v1992 = vsel %vm439, %v1880, 0
  %v1995 = vsel %vm439, %v1882, 0
  %v1998 = vsel %vm439, %v1884, 0
  %v2001 = vsel %vm439, %v1886, 0
  %v2004 = vsel %vm439, %v1888, 0
  %v2007 = vsel %vm439, %v1890, 0
  %v2010 = vsel %vm439, %v1892, 0
  %v2013 = vsel %vm439, %v1894, 0
  %v2016 = vsel %vm439, %v1896, 0
  %v2019 = vsel %vm439, %v1898, 0
  %v2022 = vsel %vm439, %v1900, 0
  %v2025 = vsel %vm439, %v1902, 0
  %v2028 = vsel %vm439, %v1904, 0
  %v2031 = vsel %vm439, %v1906, 0
  %v2034 = vsel %vm439, %v1908, 0
  %v2037 = vsel %vm439, %v1910, 0
  %v2040 = vsel %vm439, %v1912, 0
  %v2043 = vsel %vm439, %v1914, 0
  %v2046 = vsel %vm439, %v1916, 0
  %v2049 = vsel %vm439, %v1918, 0
  %v2052 = vsel %vm439, %v1920, 0
  %v2055 = vsel %vm439, %v1922, 0
  %v2058 = vsel %vm439, %v1924, 0
  %v2061 = vsel %vm439, %v1926, 0
  %v2064 = vsel %vm439, %v1928, 0
  %v2067 = vsel %vm439, %v1930, 0
  %v2070 = vsel %vm439, %v1929, 0
  %2072 = vmatprep.subr.bf16.mxu0 0
  %2073 = vmatpush1.bf16.msra.mxu0 %v1943
  %2074 = vmatprep.subr.bf16.mxu0 0
  %2075 = vmatpush1.bf16.msra.mxu0 %v1944
  %2076 = vmatprep.subr.bf16.mxu0 0
  %2077 = vmatpush1.bf16.msra.mxu0 %v1945
  %2078 = vmatprep.subr.bf16.mxu0 0
  %2079 = vmatpush1.bf16.msra.mxu0 0
  %2080 = vmatprep.subr.bf16.mxu0 0
  %2081 = vmatpush1.bf16.msra.mxu0 0
  %2082 = vmatprep.subr.bf16.mxu0 0
  %2083 = vmatpush1.bf16.msra.mxu0 0
  %2084 = vmatprep.subr.bf16.mxu0 0
  %2085 = vmatpush1.bf16.msra.mxu0 0
  %2086 = vmatprep.subr.bf16.mxu0 0
  %2087 = vmatpush1.bf16.msra.mxu0 0
  %2088 = vmatprep.subr.bf16.mxu0 0
  %2089 = vmatpush1.bf16.msra.mxu0 0
  %2090 = vmatprep.subr.bf16.mxu0 0
  %2091 = vmatpush1.bf16.msra.mxu0 0
  %2092 = vmatprep.subr.bf16.mxu0 0
  %2093 = vmatpush1.bf16.msra.mxu0 0
  %2094 = vmatprep.subr.bf16.mxu0 0
  %2095 = vmatpush1.bf16.msra.mxu0 0
  %2096 = vmatprep.subr.bf16.mxu0 0
  %2097 = vmatpush1.bf16.msra.mxu0 0
  %2098 = vmatprep.subr.bf16.mxu0 0
  %2099 = vmatpush1.bf16.msra.mxu0 0
  %2100 = vmatprep.subr.bf16.mxu0 0
  %2101 = vmatpush1.bf16.msra.mxu0 0
  %2102 = vmatprep.subr.bf16.mxu0 0
  %2103 = vmatpush1.bf16.msra.mxu0 0
  %2104 = vmatprep.mubr.bf16.mxu0 0
  %2105 = vmatmul.mubr.bf16.gmra.mrb[0].mxu0 %v1950
  %v2106 = vpop.f32.mrb[0].mxu0
  %v2107 = vadd.f32 0.0, %v2106
  %v2108 = vpop.f32.mrb[0].mxu0
  %v2109 = vpop.f32.mrb[0].mxu0
  %v2110 = vadd.f32 0.0, %v2109
  %v2111 = vpop.f32.mrb[0].mxu0
  %2112 = vmatprep.mubr.bf16.mxu0 0
  %2113 = vmatmul.mubr.bf16.gmra.mrb[0].mxu0 %v1953
  %v2114 = vpop.f32.mrb[0].mxu0
  %v2115 = vadd.f32 0.0, %v2114
  %v2116 = vpop.f32.mrb[0].mxu0
  %v2117 = vpop.f32.mrb[0].mxu0
  %v2118 = vadd.f32 0.0, %v2117
  %v2119 = vpop.f32.mrb[0].mxu0
  %2120 = vmatprep.mubr.bf16.mxu0 0
  %2121 = vmatmul.mubr.bf16.gmra.mrb[0].mxu0 %v1956
  %v2122 = vpop.f32.mrb[0].mxu0
  %v2123 = vadd.f32 0.0, %v2122
  %v2124 = vpop.f32.mrb[0].mxu0
  %v2125 = vpop.f32.mrb[0].mxu0
  %v2126 = vadd.f32 0.0, %v2125
  %v2127 = vpop.f32.mrb[0].mxu0
  %2128 = vmatprep.mubr.bf16.mxu0 0
  %2129 = vmatmul.mubr.bf16.gmra.mrb[0].mxu0 %v1959
  %v2130 = vpop.f32.mrb[0].mxu0
  %v2131 = vadd.f32 0.0, %v2130
  %v2132 = vpop.f32.mrb[0].mxu0
  %v2133 = vpop.f32.mrb[0].mxu0
  %v2134 = vadd.f32 0.0, %v2133
  %v2135 = vpop.f32.mrb[0].mxu0
  %2136 = vmatprep.mubr.bf16.mxu0 0
  %2137 = vmatmul.mubr.bf16.gmra.mrb[0].mxu0 %v1962
  %v2138 = vpop.f32.mrb[0].mxu0
  %v2139 = vadd.f32 0.0, %v2138
  %v2140 = vpop.f32.mrb[0].mxu0
  %v2141 = vpop.f32.mrb[0].mxu0
  %v2142 = vadd.f32 0.0, %v2141
  %v2143 = vpop.f32.mrb[0].mxu0
  %2144 = vmatprep.mubr.bf16.mxu0 0
  %2145 = vmatmul.mubr.bf16.gmra.mrb[0].mxu0 %v1965
  %v2146 = vpop.f32.mrb[0].mxu0
  %v2147 = vadd.f32 0.0, %v2146
  %v2148 = vpop.f32.mrb[0].mxu0
  %v2149 = vpop.f32.mrb[0].mxu0
  %v2150 = vadd.f32 0.0, %v2149
  %v2151 = vpop.f32.mrb[0].mxu0
  %2152 = vmatprep.mubr.bf16.mxu0 0
  %2153 = vmatmul.mubr.bf16.gmra.mrb[0].mxu0 %v1968
  %v2154 = vpop.f32.mrb[0].mxu0
  %v2155 = vadd.f32 0.0, %v2154
  %v2156 = vpop.f32.mrb[0].mxu0
  %v2157 = vpop.f32.mrb[0].mxu0
  %v2158 = vadd.f32 0.0, %v2157
  %v2159 = vpop.f32.mrb[0].mxu0
  %2160 = vmatprep.mubr.bf16.mxu0 0
  %2161 = vmatmul.mubr.bf16.gmra.mrb[0].mxu0 %v1971
  %v2162 = vpop.f32.mrb[0].mxu0
  %v2163 = vadd.f32 0.0, %v2162
  %v2164 = vpop.f32.mrb[0].mxu0
  %v2165 = vpop.f32.mrb[0].mxu0
  %v2166 = vadd.f32 0.0, %v2165
  %v2167 = vpop.f32.mrb[0].mxu0
  %2168 = vmatprep.mubr.bf16.mxu0 0
  %2169 = vmatmul.mubr.bf16.gmra.mrb[0].mxu0 %v1974
  %v2170 = vpop.f32.mrb[0].mxu0
  %v2171 = vadd.f32 0.0, %v2170
  %v2172 = vpop.f32.mrb[0].mxu0
  %v2173 = vpop.f32.mrb[0].mxu0
  %v2174 = vadd.f32 0.0, %v2173
  %v2175 = vpop.f32.mrb[0].mxu0
  %2176 = vmatprep.mubr.bf16.mxu0 0
  %2177 = vmatmul.mubr.bf16.gmra.mrb[0].mxu0 %v1977
  %v2178 = vpop.f32.mrb[0].mxu0
  %v2179 = vadd.f32 0.0, %v2178
  %v2180 = vpop.f32.mrb[0].mxu0
  %v2181 = vpop.f32.mrb[0].mxu0
  %v2182 = vadd.f32 0.0, %v2181
  %v2183 = vpop.f32.mrb[0].mxu0
  %2184 = vmatprep.mubr.bf16.mxu0 0
  %2185 = vmatmul.mubr.bf16.gmra.mrb[0].mxu0 %v1980
  %v2186 = vpop.f32.mrb[0].mxu0
  %v2187 = vadd.f32 0.0, %v2186
  %v2188 = vpop.f32.mrb[0].mxu0
  %v2189 = vpop.f32.mrb[0].mxu0
  %v2190 = vadd.f32 0.0, %v2189
  %v2191 = vpop.f32.mrb[0].mxu0
  %2192 = vmatprep.mubr.bf16.mxu0 0
  %2193 = vmatmul.mubr.bf16.gmra.mrb[0].mxu0 %v1983
  %v2194 = vpop.f32.mrb[0].mxu0
  %v2195 = vadd.f32 0.0, %v2194
  %v2196 = vpop.f32.mrb[0].mxu0
  %v2197 = vpop.f32.mrb[0].mxu0
  %v2198 = vadd.f32 0.0, %v2197
  %v2199 = vpop.f32.mrb[0].mxu0
  %2200 = vmatprep.mubr.bf16.mxu0 0
  %2201 = vmatmul.mubr.bf16.gmra.mrb[0].mxu0 %v1986
  %v2202 = vpop.f32.mrb[0].mxu0
  %v2203 = vadd.f32 0.0, %v2202
  %v2204 = vpop.f32.mrb[0].mxu0
  %v2205 = vpop.f32.mrb[0].mxu0
  %v2206 = vadd.f32 0.0, %v2205
  %v2207 = vpop.f32.mrb[0].mxu0
  %2208 = vmatprep.mubr.bf16.mxu0 0
  %2209 = vmatmul.mubr.bf16.gmra.mrb[0].mxu0 %v1989
  %v2210 = vpop.f32.mrb[0].mxu0
  %v2211 = vadd.f32 0.0, %v2210
  %v2212 = vpop.f32.mrb[0].mxu0
  %v2213 = vpop.f32.mrb[0].mxu0
  %v2214 = vadd.f32 0.0, %v2213
  %v2215 = vpop.f32.mrb[0].mxu0
  %2216 = vmatprep.mubr.bf16.mxu0 0
  %2217 = vmatmul.mubr.bf16.gmra.mrb[0].mxu0 %v1992
  %v2218 = vpop.f32.mrb[0].mxu0
  %v2219 = vadd.f32 0.0, %v2218
  %v2220 = vpop.f32.mrb[0].mxu0
  %v2221 = vpop.f32.mrb[0].mxu0
  %v2222 = vadd.f32 0.0, %v2221
  %v2223 = vpop.f32.mrb[0].mxu0
  %2224 = vmatprep.mubr.bf16.mxu0 0
  %2225 = vmatmul.mubr.bf16.gmra.mrb[0].mxu0 %v1995
  %v2226 = vpop.f32.mrb[0].mxu0
  %v2227 = vadd.f32 0.0, %v2226
  %v2228 = vpop.f32.mrb[0].mxu0
  %v2229 = vpop.f32.mrb[0].mxu0
  %v2230 = vadd.f32 0.0, %v2229
  %v2231 = vpop.f32.mrb[0].mxu0
  %2232 = vmatprep.mubr.bf16.mxu0 0
  %2233 = vmatmul.mubr.bf16.gmra.mrb[0].mxu0 %v1998
  %v2234 = vpop.f32.mrb[0].mxu0
  %v2235 = vadd.f32 0.0, %v2234
  %v2236 = vpop.f32.mrb[0].mxu0
  %v2237 = vpop.f32.mrb[0].mxu0
  %v2238 = vadd.f32 0.0, %v2237
  %v2239 = vpop.f32.mrb[0].mxu0
  %2240 = vmatprep.mubr.bf16.mxu0 0
  %2241 = vmatmul.mubr.bf16.gmra.mrb[0].mxu0 %v2001
  %v2242 = vpop.f32.mrb[0].mxu0
  %v2243 = vadd.f32 0.0, %v2242
  %v2244 = vpop.f32.mrb[0].mxu0
  %v2245 = vpop.f32.mrb[0].mxu0
  %v2246 = vadd.f32 0.0, %v2245
  %v2247 = vpop.f32.mrb[0].mxu0
  %2248 = vmatprep.mubr.bf16.mxu0 0
  %2249 = vmatmul.mubr.bf16.gmra.mrb[0].mxu0 %v2004
  %v2250 = vpop.f32.mrb[0].mxu0
  %v2251 = vadd.f32 0.0, %v2250
  %v2252 = vpop.f32.mrb[0].mxu0
  %v2253 = vpop.f32.mrb[0].mxu0
  %v2254 = vadd.f32 0.0, %v2253
  %v2255 = vpop.f32.mrb[0].mxu0
  %2256 = vmatprep.mubr.bf16.mxu0 0
  %2257 = vmatmul.mubr.bf16.gmra.mrb[0].mxu0 %v2007
  %v2258 = vpop.f32.mrb[0].mxu0
  %v2259 = vadd.f32 0.0, %v2258
  %v2260 = vpop.f32.mrb[0].mxu0
  %v2261 = vpop.f32.mrb[0].mxu0
  %v2262 = vadd.f32 0.0, %v2261
  %v2263 = vpop.f32.mrb[0].mxu0
  %2264 = vmatprep.mubr.bf16.mxu0 0
  %2265 = vmatmul.mubr.bf16.gmra.mrb[0].mxu0 %v2010
  %v2266 = vpop.f32.mrb[0].mxu0
  %v2267 = vadd.f32 0.0, %v2266
  %v2268 = vpop.f32.mrb[0].mxu0
  %v2269 = vpop.f32.mrb[0].mxu0
  %v2270 = vadd.f32 0.0, %v2269
  %v2271 = vpop.f32.mrb[0].mxu0
  %2272 = vmatprep.mubr.bf16.mxu0 0
  %2273 = vmatmul.mubr.bf16.gmra.mrb[0].mxu0 %v2013
  %v2274 = vpop.f32.mrb[0].mxu0
  %v2275 = vadd.f32 0.0, %v2274
  %v2276 = vpop.f32.mrb[0].mxu0
  %v2277 = vpop.f32.mrb[0].mxu0
  %v2278 = vadd.f32 0.0, %v2277
  %v2279 = vpop.f32.mrb[0].mxu0
  %2280 = vmatprep.mubr.bf16.mxu0 0
  %2281 = vmatmul.mubr.bf16.gmra.mrb[0].mxu0 %v2016
  %v2282 = vpop.f32.mrb[0].mxu0
  %v2283 = vadd.f32 0.0, %v2282
  %v2284 = vpop.f32.mrb[0].mxu0
  %v2285 = vpop.f32.mrb[0].mxu0
  %v2286 = vadd.f32 0.0, %v2285
  %v2287 = vpop.f32.mrb[0].mxu0
  %2288 = vmatprep.mubr.bf16.mxu0 0
  %2289 = vmatmul.mubr.bf16.gmra.mrb[0].mxu0 %v2019
  %v2290 = vpop.f32.mrb[0].mxu0
  %v2291 = vadd.f32 0.0, %v2290
  %v2292 = vpop.f32.mrb[0].mxu0
  %v2293 = vpop.f32.mrb[0].mxu0
  %v2294 = vadd.f32 0.0, %v2293
  %v2295 = vpop.f32.mrb[0].mxu0
  %2296 = vmatprep.mubr.bf16.mxu0 0
  %2297 = vmatmul.mubr.bf16.gmra.mrb[0].mxu0 %v2022
  %v2298 = vpop.f32.mrb[0].mxu0
  %v2299 = vadd.f32 0.0, %v2298
  %v2300 = vpop.f32.mrb[0].mxu0
  %v2301 = vpop.f32.mrb[0].mxu0
  %v2302 = vadd.f32 0.0, %v2301
  %v2303 = vpop.f32.mrb[0].mxu0
  %2304 = vmatprep.mubr.bf16.mxu0 0
  %2305 = vmatmul.mubr.bf16.gmra.mrb[0].mxu0 %v2025
  %v2306 = vpop.f32.mrb[0].mxu0
  %v2307 = vadd.f32 0.0, %v2306
  %v2308 = vpop.f32.mrb[0].mxu0
  %v2309 = vpop.f32.mrb[0].mxu0
  %v2310 = vadd.f32 0.0, %v2309
  %v2311 = vpop.f32.mrb[0].mxu0
  %2312 = vmatprep.mubr.bf16.mxu0 0
  %2313 = vmatmul.mubr.bf16.gmra.mrb[0].mxu0 %v2028
  %v2314 = vpop.f32.mrb[0].mxu0
  %v2315 = vadd.f32 0.0, %v2314
  %v2316 = vpop.f32.mrb[0].mxu0
  %v2317 = vpop.f32.mrb[0].mxu0
  %v2318 = vadd.f32 0.0, %v2317
  %v2319 = vpop.f32.mrb[0].mxu0
  %2320 = vmatprep.mubr.bf16.mxu0 0
  %2321 = vmatmul.mubr.bf16.gmra.mrb[0].mxu0 %v2031
  %v2322 = vpop.f32.mrb[0].mxu0
  %v2323 = vadd.f32 0.0, %v2322
  %v2324 = vpop.f32.mrb[0].mxu0
  %v2325 = vpop.f32.mrb[0].mxu0
  %v2326 = vadd.f32 0.0, %v2325
  %v2327 = vpop.f32.mrb[0].mxu0
  %2328 = vmatprep.mubr.bf16.mxu0 0
  %2329 = vmatmul.mubr.bf16.gmra.mrb[0].mxu0 %v2034
  %v2330 = vpop.f32.mrb[0].mxu0
  %v2331 = vadd.f32 0.0, %v2330
  %v2332 = vpop.f32.mrb[0].mxu0
  %v2333 = vpop.f32.mrb[0].mxu0
  %v2334 = vadd.f32 0.0, %v2333
  %v2335 = vpop.f32.mrb[0].mxu0
  %2336 = vmatprep.mubr.bf16.mxu0 0
  %2337 = vmatmul.mubr.bf16.gmra.mrb[0].mxu0 %v2037
  %v2338 = vpop.f32.mrb[0].mxu0
  %v2339 = vadd.f32 0.0, %v2338
  %v2340 = vpop.f32.mrb[0].mxu0
  %v2341 = vpop.f32.mrb[0].mxu0
  %v2342 = vadd.f32 0.0, %v2341
  %v2343 = vpop.f32.mrb[0].mxu0
  %2344 = vmatprep.mubr.bf16.mxu0 0
  %2345 = vmatmul.mubr.bf16.gmra.mrb[0].mxu0 %v2040
  %v2346 = vpop.f32.mrb[0].mxu0
  %v2347 = vadd.f32 0.0, %v2346
  %v2348 = vpop.f32.mrb[0].mxu0
  %v2349 = vpop.f32.mrb[0].mxu0
  %v2350 = vadd.f32 0.0, %v2349
  %v2351 = vpop.f32.mrb[0].mxu0
  %2352 = vmatprep.mubr.bf16.mxu0 0
  %2353 = vmatmul.mubr.bf16.gmra.mrb[0].mxu0 %v2043
  %v2354 = vpop.f32.mrb[0].mxu0
  %v2355 = vadd.f32 0.0, %v2354
  %v2356 = vpop.f32.mrb[0].mxu0
  %v2357 = vpop.f32.mrb[0].mxu0
  %v2358 = vadd.f32 0.0, %v2357
  %v2359 = vpop.f32.mrb[0].mxu0
  %2360 = vmatprep.mubr.bf16.mxu0 0
  %2361 = vmatmul.mubr.bf16.gmra.mrb[0].mxu0 %v2046
  %v2362 = vpop.f32.mrb[0].mxu0
  %v2363 = vadd.f32 0.0, %v2362
  %v2364 = vpop.f32.mrb[0].mxu0
  %v2365 = vpop.f32.mrb[0].mxu0
  %v2366 = vadd.f32 0.0, %v2365
  %v2367 = vpop.f32.mrb[0].mxu0
  %2368 = vmatprep.mubr.bf16.mxu0 0
  %2369 = vmatmul.mubr.bf16.gmra.mrb[0].mxu0 %v2049
  %v2370 = vpop.f32.mrb[0].mxu0
  %v2371 = vadd.f32 0.0, %v2370
  %v2372 = vpop.f32.mrb[0].mxu0
  %v2373 = vpop.f32.mrb[0].mxu0
  %v2374 = vadd.f32 0.0, %v2373
  %v2375 = vpop.f32.mrb[0].mxu0
  %2376 = vmatprep.mubr.bf16.mxu0 0
  %2377 = vmatmul.mubr.bf16.gmra.mrb[0].mxu0 %v2052
  %v2378 = vpop.f32.mrb[0].mxu0
  %v2379 = vadd.f32 0.0, %v2378
  %v2380 = vpop.f32.mrb[0].mxu0
  %v2381 = vpop.f32.mrb[0].mxu0
  %v2382 = vadd.f32 0.0, %v2381
  %v2383 = vpop.f32.mrb[0].mxu0
  %2384 = vmatprep.mubr.bf16.mxu0 0
  %2385 = vmatmul.mubr.bf16.gmra.mrb[0].mxu0 %v2055
  %v2386 = vpop.f32.mrb[0].mxu0
  %v2387 = vadd.f32 0.0, %v2386
  %v2388 = vpop.f32.mrb[0].mxu0
  %v2389 = vpop.f32.mrb[0].mxu0
  %v2390 = vadd.f32 0.0, %v2389
  %v2391 = vpop.f32.mrb[0].mxu0
  %2392 = vmatprep.mubr.bf16.mxu0 0
  %2393 = vmatmul.mubr.bf16.gmra.mrb[0].mxu0 %v2058
  %v2394 = vpop.f32.mrb[0].mxu0
  %v2395 = vadd.f32 0.0, %v2394
  %v2396 = vpop.f32.mrb[0].mxu0
  %v2397 = vpop.f32.mrb[0].mxu0
  %v2398 = vadd.f32 0.0, %v2397
  %v2399 = vpop.f32.mrb[0].mxu0
  %2400 = vmatprep.mubr.bf16.mxu0 0
  %2401 = vmatmul.mubr.bf16.gmra.mrb[0].mxu0 %v2061
  %v2402 = vpop.f32.mrb[0].mxu0
  %v2403 = vadd.f32 0.0, %v2402
  %v2404 = vpop.f32.mrb[0].mxu0
  %v2405 = vpop.f32.mrb[0].mxu0
  %v2406 = vadd.f32 0.0, %v2405
  %v2407 = vpop.f32.mrb[0].mxu0
  %2408 = vmatprep.mubr.bf16.mxu0 0
  %2409 = vmatmul.mubr.bf16.gmra.mrb[0].mxu0 %v2064
  %v2410 = vpop.f32.mrb[0].mxu0
  %v2411 = vadd.f32 0.0, %v2410
  %v2412 = vpop.f32.mrb[0].mxu0
  %v2413 = vpop.f32.mrb[0].mxu0
  %v2414 = vadd.f32 0.0, %v2413
  %v2415 = vpop.f32.mrb[0].mxu0
  %2416 = vmatprep.mubr.bf16.mxu0 0
  %2417 = vmatmul.mubr.bf16.gmra.mrb[0].mxu0 %v2067
  %v2418 = vpop.f32.mrb[0].mxu0
  %v2419 = vadd.f32 0.0, %v2418
  %v2420 = vpop.f32.mrb[0].mxu0
  %v2421 = vpop.f32.mrb[0].mxu0
  %v2422 = vadd.f32 0.0, %v2421
  %v2423 = vpop.f32.mrb[0].mxu0
  %2424 = vmatprep.mubr.bf16.mxu0 0
  %2425 = vmatmul.mubr.bf16.gmra.mrb[0].mxu0 %v2070
  %v2426 = vpop.f32.mrb[0].mxu0
  %v2427 = vadd.f32 0.0, %v2426
  %v2428 = vpop.f32.mrb[0].mxu0
  %v2429 = vpop.f32.mrb[0].mxu0
  %v2430 = vpop.f32.mrb[0].mxu0
  %2431 = vdwg.mxu0
  %v2432 = vadd.f32 %v1230, %v2107
  %v2433 = vadd.f32 %v1233, %v2110
  %v2434 = vadd.f32 %v1238, %v2115
  %v2435 = vadd.f32 %v1241, %v2118
  %v2436 = vadd.f32 %v1246, %v2123
  %v2437 = vadd.f32 %v1249, %v2126
  %v2438 = vadd.f32 %v1254, %v2131
  %v2439 = vadd.f32 %v1257, %v2134
  %v2440 = vadd.f32 %v1262, %v2139
  %v2441 = vadd.f32 %v1265, %v2142
  %v2442 = vadd.f32 %v1270, %v2147
  %v2443 = vadd.f32 %v1273, %v2150
  %v2444 = vadd.f32 %v1278, %v2155
  %v2445 = vadd.f32 %v1281, %v2158
  %v2446 = vadd.f32 %v1286, %v2163
  %v2447 = vadd.f32 %v1289, %v2166
  %v2448 = vadd.f32 %v1294, %v2171
  %v2449 = vadd.f32 %v1297, %v2174
  %v2450 = vadd.f32 %v1302, %v2179
  %v2451 = vadd.f32 %v1305, %v2182
  %v2452 = vadd.f32 %v1310, %v2187
  %v2453 = vadd.f32 %v1313, %v2190
  %v2454 = vadd.f32 %v1318, %v2195
  %v2455 = vadd.f32 %v1321, %v2198
  %v2456 = vadd.f32 %v1326, %v2203
  %v2457 = vadd.f32 %v1329, %v2206
  %v2458 = vadd.f32 %v1334, %v2211
  %v2459 = vadd.f32 %v1337, %v2214
  %v2460 = vadd.f32 %v1342, %v2219
  %v2461 = vadd.f32 %v1345, %v2222
  %v2462 = vadd.f32 %v1350, %v2227
  %v2463 = vadd.f32 %v1353, %v2230
  %v2464 = vadd.f32 %v1358, %v2235
  %v2465 = vadd.f32 %v1361, %v2238
  %v2466 = vadd.f32 %v1366, %v2243
  %v2467 = vadd.f32 %v1369, %v2246
  %v2468 = vadd.f32 %v1374, %v2251
  %v2469 = vadd.f32 %v1377, %v2254
  %v2470 = vadd.f32 %v1382, %v2259
  %v2471 = vadd.f32 %v1385, %v2262
  %v2472 = vadd.f32 %v1390, %v2267
  %v2473 = vadd.f32 %v1393, %v2270
  %v2474 = vadd.f32 %v1398, %v2275
  %v2475 = vadd.f32 %v1401, %v2278
  %v2476 = vadd.f32 %v1406, %v2283
  %v2477 = vadd.f32 %v1409, %v2286
  %v2478 = vadd.f32 %v1414, %v2291
  %v2479 = vadd.f32 %v1417, %v2294
  %v2480 = vadd.f32 %v1422, %v2299
  %v2481 = vadd.f32 %v1425, %v2302
  %v2482 = vadd.f32 %v1430, %v2307
  %v2483 = vadd.f32 %v1433, %v2310
  %v2484 = vadd.f32 %v1438, %v2315
  %v2485 = vadd.f32 %v1441, %v2318
  %v2486 = vadd.f32 %v1446, %v2323
  %v2487 = vadd.f32 %v1449, %v2326
  %v2488 = vadd.f32 %v1454, %v2331
  %v2489 = vadd.f32 %v1457, %v2334
  %v2490 = vadd.f32 %v1462, %v2339
  %v2491 = vadd.f32 %v1465, %v2342
  %v2492 = vadd.f32 %v1470, %v2347
  %v2493 = vadd.f32 %v1473, %v2350
  %v2494 = vadd.f32 %v1478, %v2355
  %v2495 = vadd.f32 %v1481, %v2358
  %v2496 = vadd.f32 %v1486, %v2363
  %v2497 = vadd.f32 %v1489, %v2366
  %v2498 = vadd.f32 %v1494, %v2371
  %v2499 = vadd.f32 %v1497, %v2374
  %v2500 = vadd.f32 %v1502, %v2379
  %v2501 = vadd.f32 %v1505, %v2382
  %v2502 = vadd.f32 %v1510, %v2387
  %v2503 = vadd.f32 %v1513, %v2390
  %v2504 = vadd.f32 %v1518, %v2395
  %v2505 = vadd.f32 %v1521, %v2398
  %v2506 = vadd.f32 %v1526, %v2403
  %v2507 = vadd.f32 %v1529, %v2406
  %v2508 = vadd.f32 %v1534, %v2411
  %v2509 = vadd.f32 %v1537, %v2414
  %v2510 = vadd.f32 %v1542, %v2419
  %v2511 = vadd.f32 %v1545, %v2422
  %v2512 = vadd.f32 %v1550, %v2427
  %v2513 = vld [vmem:[%s4] sm:$0x1]
  %v2515 = vlaneseq
  %v2516 = vshrl.u32 %v2515, 7
  %v2517 = vsub.s32 0, %v2516
  %v2518 = vrot.slane %v2513, %v2517
  %v2520 = vadd.f32 %v2432, %v2518
  %v2521 = vadd.f32 %v2433, %v2518
  %v2522 = vadd.f32 %v2434, %v2518
  %v2523 = vadd.f32 %v2435, %v2518
  %v2524 = vadd.f32 %v2436, %v2518
  %v2525 = vadd.f32 %v2437, %v2518
  %v2526 = vadd.f32 %v2438, %v2518
  %v2527 = vadd.f32 %v2439, %v2518
  %v2528 = vadd.f32 %v2440, %v2518
  %v2529 = vadd.f32 %v2441, %v2518
  %v2530 = vadd.f32 %v2442, %v2518
  %v2531 = vadd.f32 %v2443, %v2518
  %v2532 = vadd.f32 %v2444, %v2518
  %v2533 = vadd.f32 %v2445, %v2518
  %v2534 = vadd.f32 %v2446, %v2518
  %v2535 = vadd.f32 %v2447, %v2518
  %v2536 = vadd.f32 %v2448, %v2518
  %v2537 = vadd.f32 %v2449, %v2518
  %v2538 = vadd.f32 %v2450, %v2518
  %v2539 = vadd.f32 %v2451, %v2518
  %v2540 = vadd.f32 %v2452, %v2518
  %v2541 = vadd.f32 %v2453, %v2518
  %v2542 = vadd.f32 %v2454, %v2518
  %v2543 = vadd.f32 %v2455, %v2518
  %v2544 = vadd.f32 %v2456, %v2518
  %v2545 = vadd.f32 %v2457, %v2518
  %v2546 = vadd.f32 %v2458, %v2518
  %v2547 = vadd.f32 %v2459, %v2518
  %v2548 = vadd.f32 %v2460, %v2518
  %v2549 = vadd.f32 %v2461, %v2518
  %v2550 = vadd.f32 %v2462, %v2518
  %v2551 = vadd.f32 %v2463, %v2518
  %v2552 = vadd.f32 %v2464, %v2518
  %v2553 = vadd.f32 %v2465, %v2518
  %v2554 = vadd.f32 %v2466, %v2518
  %v2555 = vadd.f32 %v2467, %v2518
  %v2556 = vadd.f32 %v2468, %v2518
  %v2557 = vadd.f32 %v2469, %v2518
  %v2558 = vadd.f32 %v2470, %v2518
  %v2559 = vadd.f32 %v2471, %v2518
  %v2560 = vadd.f32 %v2472, %v2518
  %v2561 = vadd.f32 %v2473, %v2518
  %v2562 = vadd.f32 %v2474, %v2518
  %v2563 = vadd.f32 %v2475, %v2518
  %v2564 = vadd.f32 %v2476, %v2518
  %v2565 = vadd.f32 %v2477, %v2518
  %v2566 = vadd.f32 %v2478, %v2518
  %v2567 = vadd.f32 %v2479, %v2518
  %v2568 = vadd.f32 %v2480, %v2518
  %v2569 = vadd.f32 %v2481, %v2518
  %v2570 = vadd.f32 %v2482, %v2518
  %v2571 = vadd.f32 %v2483, %v2518
  %v2572 = vadd.f32 %v2484, %v2518
  %v2573 = vadd.f32 %v2485, %v2518
  %v2574 = vadd.f32 %v2486, %v2518
  %v2575 = vadd.f32 %v2487, %v2518
  %v2576 = vadd.f32 %v2488, %v2518
  %v2577 = vadd.f32 %v2489, %v2518
  %v2578 = vadd.f32 %v2490, %v2518
  %v2579 = vadd.f32 %v2491, %v2518
  %v2580 = vadd.f32 %v2492, %v2518
  %v2581 = vadd.f32 %v2493, %v2518
  %v2582 = vadd.f32 %v2494, %v2518
  %v2583 = vadd.f32 %v2495, %v2518
  %v2584 = vadd.f32 %v2496, %v2518
  %v2585 = vadd.f32 %v2497, %v2518
  %v2586 = vadd.f32 %v2498, %v2518
  %v2587 = vadd.f32 %v2499, %v2518
  %v2588 = vadd.f32 %v2500, %v2518
  %v2589 = vadd.f32 %v2501, %v2518
  %v2590 = vadd.f32 %v2502, %v2518
  %v2591 = vadd.f32 %v2503, %v2518
  %v2592 = vadd.f32 %v2504, %v2518
  %v2593 = vadd.f32 %v2505, %v2518
  %v2594 = vadd.f32 %v2506, %v2518
  %v2595 = vadd.f32 %v2507, %v2518
  %v2596 = vadd.f32 %v2508, %v2518
  %v2597 = vadd.f32 %v2509, %v2518
  %v2598 = vadd.f32 %v2510, %v2518
  %v2599 = vadd.f32 %v2511, %v2518
  %v2600 = vadd.f32 %v2512, %v2518
  %2602 = vset.pattern.permute.xlu0 0
  %2603 = vperm.xlu0 %2602, %v39
  %v2604 = vpop.permute.xlu0 %2603
  %2607 = vset.pattern.permute.xlu0 0
  %2608 = vperm.xlu0 %2607, %v40
  %v2609 = vpop.permute.xlu0 %2608
  %2612 = vset.pattern.permute.xlu0 0
  %2613 = vperm.xlu0 %2612, %v41
  %v2614 = vpop.permute.xlu0 %2613
  %2617 = vset.pattern.permute.xlu0 0
  %2618 = vperm.xlu0 %2617, %v42
  %v2619 = vpop.permute.xlu0 %2618
  %2622 = vset.pattern.permute.xlu0 0
  %2623 = vperm.xlu0 %2622, %v43
  %v2624 = vpop.permute.xlu0 %2623
  %2627 = vset.pattern.permute.xlu0 0
  %2628 = vperm.xlu0 %2627, %v44
  %v2629 = vpop.permute.xlu0 %2628
  %2632 = vset.pattern.permute.xlu0 0
  %2633 = vperm.xlu0 %2632, %v45
  %v2634 = vpop.permute.xlu0 %2633
  %2637 = vset.pattern.permute.xlu0 0
  %2638 = vperm.xlu0 %2637, %v46
  %v2639 = vpop.permute.xlu0 %2638
  %2642 = vset.pattern.permute.xlu0 0
  %2643 = vperm.xlu0 %2642, %v47
  %v2644 = vpop.permute.xlu0 %2643
  %2647 = vset.pattern.permute.xlu0 0
  %2648 = vperm.xlu0 %2647, %v48
  %v2649 = vpop.permute.xlu0 %2648
  %2652 = vset.pattern.permute.xlu0 0
  %2653 = vperm.xlu0 %2652, %v49
  %v2654 = vpop.permute.xlu0 %2653
  %2657 = vset.pattern.permute.xlu0 0
  %2658 = vperm.xlu0 %2657, %v50
  %v2659 = vpop.permute.xlu0 %2658
  %2662 = vset.pattern.permute.xlu0 0
  %2663 = vperm.xlu0 %2662, %v51
  %v2664 = vpop.permute.xlu0 %2663
  %2667 = vset.pattern.permute.xlu0 0
  %2668 = vperm.xlu0 %2667, %v52
  %v2669 = vpop.permute.xlu0 %2668
  %2672 = vset.pattern.permute.xlu0 0
  %2673 = vperm.xlu0 %2672, %v53
  %v2674 = vpop.permute.xlu0 %2673
  %2677 = vset.pattern.permute.xlu0 0
  %2678 = vperm.xlu0 %2677, %v54
  %v2679 = vpop.permute.xlu0 %2678
  %2682 = vset.pattern.permute.xlu0 0
  %2683 = vperm.xlu0 %2682, %v55
  %v2684 = vpop.permute.xlu0 %2683
  %2687 = vset.pattern.permute.xlu0 0
  %2688 = vperm.xlu0 %2687, %v56
  %v2689 = vpop.permute.xlu0 %2688
  %2692 = vset.pattern.permute.xlu0 0
  %2693 = vperm.xlu0 %2692, %v57
  %v2694 = vpop.permute.xlu0 %2693
  %2697 = vset.pattern.permute.xlu0 0
  %2698 = vperm.xlu0 %2697, %v58
  %v2699 = vpop.permute.xlu0 %2698
  %2702 = vset.pattern.permute.xlu0 0
  %2703 = vperm.xlu0 %2702, %v59
  %v2704 = vpop.permute.xlu0 %2703
  %2707 = vset.pattern.permute.xlu0 0
  %2708 = vperm.xlu0 %2707, %v60
  %v2709 = vpop.permute.xlu0 %2708
  %2712 = vset.pattern.permute.xlu0 0
  %2713 = vperm.xlu0 %2712, %v61
  %v2714 = vpop.permute.xlu0 %2713
  %2717 = vset.pattern.permute.xlu0 0
  %2718 = vperm.xlu0 %2717, %v62
  %v2719 = vpop.permute.xlu0 %2718
  %2722 = vset.pattern.permute.xlu0 0
  %2723 = vperm.xlu0 %2722, %v63
  %v2724 = vpop.permute.xlu0 %2723
  %2727 = vset.pattern.permute.xlu0 0
  %2728 = vperm.xlu0 %2727, %v64
  %v2729 = vpop.permute.xlu0 %2728
  %2732 = vset.pattern.permute.xlu0 0
  %2733 = vperm.xlu0 %2732, %v65
  %v2734 = vpop.permute.xlu0 %2733
  %2737 = vset.pattern.permute.xlu0 0
  %2738 = vperm.xlu0 %2737, %v66
  %v2739 = vpop.permute.xlu0 %2738
  %2742 = vset.pattern.permute.xlu0 0
  %2743 = vperm.xlu0 %2742, %v67
  %v2744 = vpop.permute.xlu0 %2743
  %2747 = vset.pattern.permute.xlu0 0
  %2748 = vperm.xlu0 %2747, %v68
  %v2749 = vpop.permute.xlu0 %2748
  %2752 = vset.pattern.permute.xlu0 0
  %2753 = vperm.xlu0 %2752, %v69
  %v2754 = vpop.permute.xlu0 %2753
  %2757 = vset.pattern.permute.xlu0 0
  %2758 = vperm.xlu0 %2757, %v70
  %v2759 = vpop.permute.xlu0 %2758
  %2762 = vset.pattern.permute.xlu0 0
  %2763 = vperm.xlu0 %2762, %v71
  %v2764 = vpop.permute.xlu0 %2763
  %2767 = vset.pattern.permute.xlu0 0
  %2768 = vperm.xlu0 %2767, %v72
  %v2769 = vpop.permute.xlu0 %2768
  %2772 = vset.pattern.permute.xlu0 0
  %2773 = vperm.xlu0 %2772, %v73
  %v2774 = vpop.permute.xlu0 %2773
  %2777 = vset.pattern.permute.xlu0 0
  %2778 = vperm.xlu0 %2777, %v74
  %v2779 = vpop.permute.xlu0 %2778
  %2782 = vset.pattern.permute.xlu0 0
  %2783 = vperm.xlu0 %2782, %v75
  %v2784 = vpop.permute.xlu0 %2783
  %2787 = vset.pattern.permute.xlu0 0
  %2788 = vperm.xlu0 %2787, %v76
  %v2789 = vpop.permute.xlu0 %2788
  %2792 = vset.pattern.permute.xlu0 0
  %2793 = vperm.xlu0 %2792, %v77
  %v2794 = vpop.permute.xlu0 %2793
  %2797 = vset.pattern.permute.xlu0 0
  %2798 = vperm.xlu0 %2797, %v78
  %v2799 = vpop.permute.xlu0 %2798
  %2802 = vset.pattern.permute.xlu0 0
  %2803 = vperm.xlu0 %2802, %v79
  %v2804 = vpop.permute.xlu0 %2803
  %2807 = vset.pattern.permute.xlu0 0
  %2808 = vperm.xlu0 %2807, %v80
  %v2809 = vpop.permute.xlu0 %2808
  %2812 = vset.pattern.permute.xlu0 0
  %2813 = vperm.xlu0 %2812, %v81
  %v2814 = vpop.permute.xlu0 %2813
  %2817 = vset.pattern.permute.xlu0 0
  %2818 = vperm.xlu0 %2817, %v82
  %v2819 = vpop.permute.xlu0 %2818
  %2822 = vset.pattern.permute.xlu0 0
  %2823 = vperm.xlu0 %2822, %v83
  %v2824 = vpop.permute.xlu0 %2823
  %2827 = vset.pattern.permute.xlu0 0
  %2828 = vperm.xlu0 %2827, %v84
  %v2829 = vpop.permute.xlu0 %2828
  %2832 = vset.pattern.permute.xlu0 0
  %2833 = vperm.xlu0 %2832, %v85
  %v2834 = vpop.permute.xlu0 %2833
  %2837 = vset.pattern.permute.xlu0 0
  %2838 = vperm.xlu0 %2837, %v86
  %v2839 = vpop.permute.xlu0 %2838
  %2842 = vset.pattern.permute.xlu0 0
  %2843 = vperm.xlu0 %2842, %v87
  %v2844 = vpop.permute.xlu0 %2843
  %2847 = vset.pattern.permute.xlu0 0
  %2848 = vperm.xlu0 %2847, %v88
  %v2849 = vpop.permute.xlu0 %2848
  %2852 = vset.pattern.permute.xlu0 0
  %2853 = vperm.xlu0 %2852, %v89
  %v2854 = vpop.permute.xlu0 %2853
  %2857 = vset.pattern.permute.xlu0 0
  %2858 = vperm.xlu0 %2857, %v90
  %v2859 = vpop.permute.xlu0 %2858
  %2862 = vset.pattern.permute.xlu0 0
  %2863 = vperm.xlu0 %2862, %v91
  %v2864 = vpop.permute.xlu0 %2863
  %2867 = vset.pattern.permute.xlu0 0
  %2868 = vperm.xlu0 %2867, %v92
  %v2869 = vpop.permute.xlu0 %2868
  %2872 = vset.pattern.permute.xlu0 0
  %2873 = vperm.xlu0 %2872, %v93
  %v2874 = vpop.permute.xlu0 %2873
  %2877 = vset.pattern.permute.xlu0 0
  %2878 = vperm.xlu0 %2877, %v94
  %v2879 = vpop.permute.xlu0 %2878
  %2882 = vset.pattern.permute.xlu0 0
  %2883 = vperm.xlu0 %2882, %v95
  %v2884 = vpop.permute.xlu0 %2883
  %2887 = vset.pattern.permute.xlu0 0
  %2888 = vperm.xlu0 %2887, %v96
  %v2889 = vpop.permute.xlu0 %2888
  %2892 = vset.pattern.permute.xlu0 0
  %2893 = vperm.xlu0 %2892, %v97
  %v2894 = vpop.permute.xlu0 %2893
  %2897 = vset.pattern.permute.xlu0 0
  %2898 = vperm.xlu0 %2897, %v98
  %v2899 = vpop.permute.xlu0 %2898
  %2902 = vset.pattern.permute.xlu0 0
  %2903 = vperm.xlu0 %2902, %v99
  %v2904 = vpop.permute.xlu0 %2903
  %2907 = vset.pattern.permute.xlu0 0
  %2908 = vperm.xlu0 %2907, %v100
  %v2909 = vpop.permute.xlu0 %2908
  %2912 = vset.pattern.permute.xlu0 0
  %2913 = vperm.xlu0 %2912, %v101
  %v2914 = vpop.permute.xlu0 %2913
  %2917 = vset.pattern.permute.xlu0 0
  %2918 = vperm.xlu0 %2917, %v102
  %v2919 = vpop.permute.xlu0 %2918
  %2922 = vset.pattern.permute.xlu0 0
  %2923 = vperm.xlu0 %2922, %v103
  %v2924 = vpop.permute.xlu0 %2923
  %2927 = vset.pattern.permute.xlu0 0
  %2928 = vperm.xlu0 %2927, %v104
  %v2929 = vpop.permute.xlu0 %2928
  %2932 = vset.pattern.permute.xlu0 0
  %2933 = vperm.xlu0 %2932, %v105
  %v2934 = vpop.permute.xlu0 %2933
  %2937 = vset.pattern.permute.xlu0 0
  %2938 = vperm.xlu0 %2937, %v106
  %v2939 = vpop.permute.xlu0 %2938
  %2942 = vset.pattern.permute.xlu0 0
  %2943 = vperm.xlu0 %2942, %v107
  %v2944 = vpop.permute.xlu0 %2943
  %2947 = vset.pattern.permute.xlu0 0
  %2948 = vperm.xlu0 %2947, %v108
  %v2949 = vpop.permute.xlu0 %2948
  %2952 = vset.pattern.permute.xlu0 0
  %2953 = vperm.xlu0 %2952, %v109
  %v2954 = vpop.permute.xlu0 %2953
  %2957 = vset.pattern.permute.xlu0 0
  %2958 = vperm.xlu0 %2957, %v110
  %v2959 = vpop.permute.xlu0 %2958
  %2962 = vset.pattern.permute.xlu0 0
  %2963 = vperm.xlu0 %2962, %v111
  %v2964 = vpop.permute.xlu0 %2963
  %2967 = vset.pattern.permute.xlu0 0
  %2968 = vperm.xlu0 %2967, %v112
  %v2969 = vpop.permute.xlu0 %2968
  %2972 = vset.pattern.permute.xlu0 0
  %2973 = vperm.xlu0 %2972, %v113
  %v2974 = vpop.permute.xlu0 %2973
  %2977 = vset.pattern.permute.xlu0 0
  %2978 = vperm.xlu0 %2977, %v114
  %v2979 = vpop.permute.xlu0 %2978
  %2982 = vset.pattern.permute.xlu0 0
  %2983 = vperm.xlu0 %2982, %v115
  %v2984 = vpop.permute.xlu0 %2983
  %2987 = vset.pattern.permute.xlu0 0
  %2988 = vperm.xlu0 %2987, %v116
  %v2989 = vpop.permute.xlu0 %2988
  %2992 = vset.pattern.permute.xlu0 0
  %2993 = vperm.xlu0 %2992, %v117
  %v2994 = vpop.permute.xlu0 %2993
  %2997 = vset.pattern.permute.xlu0 0
  %2998 = vperm.xlu0 %2997, %v118
  %v2999 = vpop.permute.xlu0 %2998
  %3002 = vset.pattern.permute.xlu0 0
  %3003 = vperm.xlu0 %3002, %v119
  %v3004 = vpop.permute.xlu0 %3003
  %v3006 = vmul.f32 %v2520, %v2604
  %v3007 = vmul.f32 %v2521, %v2609
  %v3008 = vmul.f32 %v2522, %v2614
  %v3009 = vmul.f32 %v2523, %v2619
  %v3010 = vmul.f32 %v2524, %v2624
  %v3011 = vmul.f32 %v2525, %v2629
  %v3012 = vmul.f32 %v2526, %v2634
  %v3013 = vmul.f32 %v2527, %v2639
  %v3014 = vmul.f32 %v2528, %v2644
  %v3015 = vmul.f32 %v2529, %v2649
  %v3016 = vmul.f32 %v2530, %v2654
  %v3017 = vmul.f32 %v2531, %v2659
  %v3018 = vmul.f32 %v2532, %v2664
  %v3019 = vmul.f32 %v2533, %v2669
  %v3020 = vmul.f32 %v2534, %v2674
  %v3021 = vmul.f32 %v2535, %v2679
  %v3022 = vmul.f32 %v2536, %v2684
  %v3023 = vmul.f32 %v2537, %v2689
  %v3024 = vmul.f32 %v2538, %v2694
  %v3025 = vmul.f32 %v2539, %v2699
  %v3026 = vmul.f32 %v2540, %v2704
  %v3027 = vmul.f32 %v2541, %v2709
  %v3028 = vmul.f32 %v2542, %v2714
  %v3029 = vmul.f32 %v2543, %v2719
  %v3030 = vmul.f32 %v2544, %v2724
  %v3031 = vmul.f32 %v2545, %v2729
  %v3032 = vmul.f32 %v2546, %v2734
  %v3033 = vmul.f32 %v2547, %v2739
  %v3034 = vmul.f32 %v2548, %v2744
  %v3035 = vmul.f32 %v2549, %v2749
  %v3036 = vmul.f32 %v2550, %v2754
  %v3037 = vmul.f32 %v2551, %v2759
  %v3038 = vmul.f32 %v2552, %v2764
  %v3039 = vmul.f32 %v2553, %v2769
  %v3040 = vmul.f32 %v2554, %v2774
  %v3041 = vmul.f32 %v2555, %v2779
  %v3042 = vmul.f32 %v2556, %v2784
  %v3043 = vmul.f32 %v2557, %v2789
  %v3044 = vmul.f32 %v2558, %v2794
  %v3045 = vmul.f32 %v2559, %v2799
  %v3046 = vmul.f32 %v2560, %v2804
  %v3047 = vmul.f32 %v2561, %v2809
  %v3048 = vmul.f32 %v2562, %v2814
  %v3049 = vmul.f32 %v2563, %v2819
  %v3050 = vmul.f32 %v2564, %v2824
  %v3051 = vmul.f32 %v2565, %v2829
  %v3052 = vmul.f32 %v2566, %v2834
  %v3053 = vmul.f32 %v2567, %v2839
  %v3054 = vmul.f32 %v2568, %v2844
  %v3055 = vmul.f32 %v2569, %v2849
  %v3056 = vmul.f32 %v2570, %v2854
  %v3057 = vmul.f32 %v2571, %v2859
  %v3058 = vmul.f32 %v2572, %v2864
  %v3059 = vmul.f32 %v2573, %v2869
  %v3060 = vmul.f32 %v2574, %v2874
  %v3061 = vmul.f32 %v2575, %v2879
  %v3062 = vmul.f32 %v2576, %v2884
  %v3063 = vmul.f32 %v2577, %v2889
  %v3064 = vmul.f32 %v2578, %v2894
  %v3065 = vmul.f32 %v2579, %v2899
  %v3066 = vmul.f32 %v2580, %v2904
  %v3067 = vmul.f32 %v2581, %v2909
  %v3068 = vmul.f32 %v2582, %v2914
  %v3069 = vmul.f32 %v2583, %v2919
  %v3070 = vmul.f32 %v2584, %v2924
  %v3071 = vmul.f32 %v2585, %v2929
  %v3072 = vmul.f32 %v2586, %v2934
  %v3073 = vmul.f32 %v2587, %v2939
  %v3074 = vmul.f32 %v2588, %v2944
  %v3075 = vmul.f32 %v2589, %v2949
  %v3076 = vmul.f32 %v2590, %v2954
  %v3077 = vmul.f32 %v2591, %v2959
  %v3078 = vmul.f32 %v2592, %v2964
  %v3079 = vmul.f32 %v2593, %v2969
  %v3080 = vmul.f32 %v2594, %v2974
  %v3081 = vmul.f32 %v2595, %v2979
  %v3082 = vmul.f32 %v2596, %v2984
  %v3083 = vmul.f32 %v2597, %v2989
  %v3084 = vmul.f32 %v2598, %v2994
  %v3085 = vmul.f32 %v2599, %v2999
  %v3086 = vmul.f32 %v2600, %v3004
  %vm3087 = vcmask 130048
  %v3088 = vsel %vm3087, %v3006, 0.0
  %v3089 = vsel %vm3087, %v3007, 0.0
  %v3090 = vadd.f32 %v3088, %v3089
  %v3091 = vsel %vm3087, %v3008, 0.0
  %v3092 = vadd.f32 %v3090, %v3091
  %v3093 = vsel %vm3087, %v3009, 0.0
  %v3094 = vadd.f32 %v3092, %v3093
  %v3095 = vsel %vm3087, %v3010, 0.0
  %v3096 = vadd.f32 %v3094, %v3095
  %v3097 = vsel %vm3087, %v3011, 0.0
  %v3098 = vadd.f32 %v3096, %v3097
  %v3099 = vsel %vm3087, %v3012, 0.0
  %v3100 = vadd.f32 %v3098, %v3099
  %v3101 = vsel %vm3087, %v3013, 0.0
  %v3102 = vadd.f32 %v3100, %v3101
  %v3103 = vsel %vm3087, %v3014, 0.0
  %v3104 = vadd.f32 %v3102, %v3103
  %v3105 = vsel %vm3087, %v3015, 0.0
  %v3106 = vadd.f32 %v3104, %v3105
  %v3107 = vsel %vm3087, %v3016, 0.0
  %v3108 = vadd.f32 %v3106, %v3107
  %v3109 = vsel %vm3087, %v3017, 0.0
  %v3110 = vadd.f32 %v3108, %v3109
  %v3111 = vsel %vm3087, %v3018, 0.0
  %v3112 = vadd.f32 %v3110, %v3111
  %v3113 = vsel %vm3087, %v3019, 0.0
  %v3114 = vadd.f32 %v3112, %v3113
  %v3115 = vsel %vm3087, %v3020, 0.0
  %v3116 = vadd.f32 %v3114, %v3115
  %v3117 = vsel %vm3087, %v3021, 0.0
  %v3118 = vadd.f32 %v3116, %v3117
  %v3119 = vsel %vm3087, %v3022, 0.0
  %v3120 = vadd.f32 %v3118, %v3119
  %v3121 = vsel %vm3087, %v3023, 0.0
  %v3122 = vadd.f32 %v3120, %v3121
  %v3123 = vsel %vm3087, %v3024, 0.0
  %v3124 = vadd.f32 %v3122, %v3123
  %v3125 = vsel %vm3087, %v3025, 0.0
  %v3126 = vadd.f32 %v3124, %v3125
  %v3127 = vsel %vm3087, %v3026, 0.0
  %v3128 = vadd.f32 %v3126, %v3127
  %v3129 = vsel %vm3087, %v3027, 0.0
  %v3130 = vadd.f32 %v3128, %v3129
  %v3131 = vsel %vm3087, %v3028, 0.0
  %v3132 = vadd.f32 %v3130, %v3131
  %v3133 = vsel %vm3087, %v3029, 0.0
  %v3134 = vadd.f32 %v3132, %v3133
  %v3135 = vsel %vm3087, %v3030, 0.0
  %v3136 = vadd.f32 %v3134, %v3135
  %v3137 = vsel %vm3087, %v3031, 0.0
  %v3138 = vadd.f32 %v3136, %v3137
  %v3139 = vsel %vm3087, %v3032, 0.0
  %v3140 = vadd.f32 %v3138, %v3139
  %v3141 = vsel %vm3087, %v3033, 0.0
  %v3142 = vadd.f32 %v3140, %v3141
  %v3143 = vsel %vm3087, %v3034, 0.0
  %v3144 = vadd.f32 %v3142, %v3143
  %v3145 = vsel %vm3087, %v3035, 0.0
  %v3146 = vadd.f32 %v3144, %v3145
  %v3147 = vsel %vm3087, %v3036, 0.0
  %v3148 = vadd.f32 %v3146, %v3147
  %v3149 = vsel %vm3087, %v3037, 0.0
  %v3150 = vadd.f32 %v3148, %v3149
  %v3151 = vsel %vm3087, %v3038, 0.0
  %v3152 = vadd.f32 %v3150, %v3151
  %v3153 = vsel %vm3087, %v3039, 0.0
  %v3154 = vadd.f32 %v3152, %v3153
  %v3155 = vsel %vm3087, %v3040, 0.0
  %v3156 = vadd.f32 %v3154, %v3155
  %v3157 = vsel %vm3087, %v3041, 0.0
  %v3158 = vadd.f32 %v3156, %v3157
  %v3159 = vsel %vm3087, %v3042, 0.0
  %v3160 = vadd.f32 %v3158, %v3159
  %v3161 = vsel %vm3087, %v3043, 0.0
  %v3162 = vadd.f32 %v3160, %v3161
  %v3163 = vsel %vm3087, %v3044, 0.0
  %v3164 = vadd.f32 %v3162, %v3163
  %v3165 = vsel %vm3087, %v3045, 0.0
  %v3166 = vadd.f32 %v3164, %v3165
  %v3167 = vsel %vm3087, %v3046, 0.0
  %v3168 = vadd.f32 %v3166, %v3167
  %v3169 = vsel %vm3087, %v3047, 0.0
  %v3170 = vadd.f32 %v3168, %v3169
  %v3171 = vsel %vm3087, %v3048, 0.0
  %v3172 = vadd.f32 %v3170, %v3171
  %v3173 = vsel %vm3087, %v3049, 0.0
  %v3174 = vadd.f32 %v3172, %v3173
  %v3175 = vsel %vm3087, %v3050, 0.0
  %v3176 = vadd.f32 %v3174, %v3175
  %v3177 = vsel %vm3087, %v3051, 0.0
  %v3178 = vadd.f32 %v3176, %v3177
  %v3179 = vsel %vm3087, %v3052, 0.0
  %v3180 = vadd.f32 %v3178, %v3179
  %v3181 = vsel %vm3087, %v3053, 0.0
  %v3182 = vadd.f32 %v3180, %v3181
  %v3183 = vsel %vm3087, %v3054, 0.0
  %v3184 = vadd.f32 %v3182, %v3183
  %v3185 = vsel %vm3087, %v3055, 0.0
  %v3186 = vadd.f32 %v3184, %v3185
  %v3187 = vsel %vm3087, %v3056, 0.0
  %v3188 = vadd.f32 %v3186, %v3187
  %v3189 = vsel %vm3087, %v3057, 0.0
  %v3190 = vadd.f32 %v3188, %v3189
  %v3191 = vsel %vm3087, %v3058, 0.0
  %v3192 = vadd.f32 %v3190, %v3191
  %v3193 = vsel %vm3087, %v3059, 0.0
  %v3194 = vadd.f32 %v3192, %v3193
  %v3195 = vsel %vm3087, %v3060, 0.0
  %v3196 = vadd.f32 %v3194, %v3195
  %v3197 = vsel %vm3087, %v3061, 0.0
  %v3198 = vadd.f32 %v3196, %v3197
  %v3199 = vsel %vm3087, %v3062, 0.0
  %v3200 = vadd.f32 %v3198, %v3199
  %v3201 = vsel %vm3087, %v3063, 0.0
  %v3202 = vadd.f32 %v3200, %v3201
  %v3203 = vsel %vm3087, %v3064, 0.0
  %v3204 = vadd.f32 %v3202, %v3203
  %v3205 = vsel %vm3087, %v3065, 0.0
  %v3206 = vadd.f32 %v3204, %v3205
  %v3207 = vsel %vm3087, %v3066, 0.0
  %v3208 = vadd.f32 %v3206, %v3207
  %v3209 = vsel %vm3087, %v3067, 0.0
  %v3210 = vadd.f32 %v3208, %v3209
  %v3211 = vsel %vm3087, %v3068, 0.0
  %v3212 = vadd.f32 %v3210, %v3211
  %v3213 = vsel %vm3087, %v3069, 0.0
  %v3214 = vadd.f32 %v3212, %v3213
  %v3215 = vsel %vm3087, %v3070, 0.0
  %v3216 = vadd.f32 %v3214, %v3215
  %v3217 = vsel %vm3087, %v3071, 0.0
  %v3218 = vadd.f32 %v3216, %v3217
  %v3219 = vsel %vm3087, %v3072, 0.0
  %v3220 = vadd.f32 %v3218, %v3219
  %v3221 = vsel %vm3087, %v3073, 0.0
  %v3222 = vadd.f32 %v3220, %v3221
  %v3223 = vsel %vm3087, %v3074, 0.0
  %v3224 = vadd.f32 %v3222, %v3223
  %v3225 = vsel %vm3087, %v3075, 0.0
  %v3226 = vadd.f32 %v3224, %v3225
  %v3227 = vsel %vm3087, %v3076, 0.0
  %v3228 = vadd.f32 %v3226, %v3227
  %v3229 = vsel %vm3087, %v3077, 0.0
  %v3230 = vadd.f32 %v3228, %v3229
  %v3231 = vsel %vm3087, %v3078, 0.0
  %v3232 = vadd.f32 %v3230, %v3231
  %v3233 = vsel %vm3087, %v3079, 0.0
  %v3234 = vadd.f32 %v3232, %v3233
  %v3235 = vsel %vm3087, %v3080, 0.0
  %v3236 = vadd.f32 %v3234, %v3235
  %v3237 = vsel %vm3087, %v3081, 0.0
  %v3238 = vadd.f32 %v3236, %v3237
  %v3239 = vsel %vm3087, %v3082, 0.0
  %v3240 = vadd.f32 %v3238, %v3239
  %v3241 = vsel %vm3087, %v3083, 0.0
  %v3242 = vadd.f32 %v3240, %v3241
  %v3243 = vsel %vm3087, %v3084, 0.0
  %v3244 = vadd.f32 %v3242, %v3243
  %v3245 = vsel %vm3087, %v3085, 0.0
  %v3246 = vadd.f32 %v3244, %v3245
  %v3247 = vsel %vm3087, %v3086, 0.0
  %v3248 = vadd.f32 %v3246, %v3247
  %v3249 = vrot.slane %v3248, 4
  %v3250 = vadd.f32 %v3248, %v3249
  %v3251 = vrot.slane %v3250, 2
  %v3252 = vadd.f32 %v3250, %v3251
  %v3253 = vrot.slane %v3252, 1
  %v3254 = vadd.f32 %v3252, %v3253
  %v3255 = vmul.f32 %v3006, %v3006
  %v3256 = vmul.f32 %v3007, %v3007
  %v3257 = vmul.f32 %v3008, %v3008
  %v3258 = vmul.f32 %v3009, %v3009
  %v3259 = vmul.f32 %v3010, %v3010
  %v3260 = vmul.f32 %v3011, %v3011
  %v3261 = vmul.f32 %v3012, %v3012
  %v3262 = vmul.f32 %v3013, %v3013
  %v3263 = vmul.f32 %v3014, %v3014
  %v3264 = vmul.f32 %v3015, %v3015
  %v3265 = vmul.f32 %v3016, %v3016
  %v3266 = vmul.f32 %v3017, %v3017
  %v3267 = vmul.f32 %v3018, %v3018
  %v3268 = vmul.f32 %v3019, %v3019
  %v3269 = vmul.f32 %v3020, %v3020
  %v3270 = vmul.f32 %v3021, %v3021
  %v3271 = vmul.f32 %v3022, %v3022
  %v3272 = vmul.f32 %v3023, %v3023
  %v3273 = vmul.f32 %v3024, %v3024
  %v3274 = vmul.f32 %v3025, %v3025
  %v3275 = vmul.f32 %v3026, %v3026
  %v3276 = vmul.f32 %v3027, %v3027
  %v3277 = vmul.f32 %v3028, %v3028
  %v3278 = vmul.f32 %v3029, %v3029
  %v3279 = vmul.f32 %v3030, %v3030
  %v3280 = vmul.f32 %v3031, %v3031
  %v3281 = vmul.f32 %v3032, %v3032
  %v3282 = vmul.f32 %v3033, %v3033
  %v3283 = vmul.f32 %v3034, %v3034
  %v3284 = vmul.f32 %v3035, %v3035
  %v3285 = vmul.f32 %v3036, %v3036
  %v3286 = vmul.f32 %v3037, %v3037
  %v3287 = vmul.f32 %v3038, %v3038
  %v3288 = vmul.f32 %v3039, %v3039
  %v3289 = vmul.f32 %v3040, %v3040
  %v3290 = vmul.f32 %v3041, %v3041
  %v3291 = vmul.f32 %v3042, %v3042
  %v3292 = vmul.f32 %v3043, %v3043
  %v3293 = vmul.f32 %v3044, %v3044
  %v3294 = vmul.f32 %v3045, %v3045
  %v3295 = vmul.f32 %v3046, %v3046
  %v3296 = vmul.f32 %v3047, %v3047
  %v3297 = vmul.f32 %v3048, %v3048
  %v3298 = vmul.f32 %v3049, %v3049
  %v3299 = vmul.f32 %v3050, %v3050
  %v3300 = vmul.f32 %v3051, %v3051
  %v3301 = vmul.f32 %v3052, %v3052
  %v3302 = vmul.f32 %v3053, %v3053
  %v3303 = vmul.f32 %v3054, %v3054
  %v3304 = vmul.f32 %v3055, %v3055
  %v3305 = vmul.f32 %v3056, %v3056
  %v3306 = vmul.f32 %v3057, %v3057
  %v3307 = vmul.f32 %v3058, %v3058
  %v3308 = vmul.f32 %v3059, %v3059
  %v3309 = vmul.f32 %v3060, %v3060
  %v3310 = vmul.f32 %v3061, %v3061
  %v3311 = vmul.f32 %v3062, %v3062
  %v3312 = vmul.f32 %v3063, %v3063
  %v3313 = vmul.f32 %v3064, %v3064
  %v3314 = vmul.f32 %v3065, %v3065
  %v3315 = vmul.f32 %v3066, %v3066
  %v3316 = vmul.f32 %v3067, %v3067
  %v3317 = vmul.f32 %v3068, %v3068
  %v3318 = vmul.f32 %v3069, %v3069
  %v3319 = vmul.f32 %v3070, %v3070
  %v3320 = vmul.f32 %v3071, %v3071
  %v3321 = vmul.f32 %v3072, %v3072
  %v3322 = vmul.f32 %v3073, %v3073
  %v3323 = vmul.f32 %v3074, %v3074
  %v3324 = vmul.f32 %v3075, %v3075
  %v3325 = vmul.f32 %v3076, %v3076
  %v3326 = vmul.f32 %v3077, %v3077
  %v3327 = vmul.f32 %v3078, %v3078
  %v3328 = vmul.f32 %v3079, %v3079
  %v3329 = vmul.f32 %v3080, %v3080
  %v3330 = vmul.f32 %v3081, %v3081
  %v3331 = vmul.f32 %v3082, %v3082
  %v3332 = vmul.f32 %v3083, %v3083
  %v3333 = vmul.f32 %v3084, %v3084
  %v3334 = vmul.f32 %v3085, %v3085
  %v3335 = vmul.f32 %v3086, %v3086
  %v3336 = vsel %vm3087, %v3255, 0.0
  %v3337 = vsel %vm3087, %v3256, 0.0
  %v3338 = vadd.f32 %v3336, %v3337
  %v3339 = vsel %vm3087, %v3257, 0.0
  %v3340 = vadd.f32 %v3338, %v3339
  %v3341 = vsel %vm3087, %v3258, 0.0
  %v3342 = vadd.f32 %v3340, %v3341
  %v3343 = vsel %vm3087, %v3259, 0.0
  %v3344 = vadd.f32 %v3342, %v3343
  %v3345 = vsel %vm3087, %v3260, 0.0
  %v3346 = vadd.f32 %v3344, %v3345
  %v3347 = vsel %vm3087, %v3261, 0.0
  %v3348 = vadd.f32 %v3346, %v3347
  %v3349 = vsel %vm3087, %v3262, 0.0
  %v3350 = vadd.f32 %v3348, %v3349
  %v3351 = vsel %vm3087, %v3263, 0.0
  %v3352 = vadd.f32 %v3350, %v3351
  %v3353 = vsel %vm3087, %v3264, 0.0
  %v3354 = vadd.f32 %v3352, %v3353
  %v3355 = vsel %vm3087, %v3265, 0.0
  %v3356 = vadd.f32 %v3354, %v3355
  %v3357 = vsel %vm3087, %v3266, 0.0
  %v3358 = vadd.f32 %v3356, %v3357
  %v3359 = vsel %vm3087, %v3267, 0.0
  %v3360 = vadd.f32 %v3358, %v3359
  %v3361 = vsel %vm3087, %v3268, 0.0
  %v3362 = vadd.f32 %v3360, %v3361
  %v3363 = vsel %vm3087, %v3269, 0.0
  %v3364 = vadd.f32 %v3362, %v3363
  %v3365 = vsel %vm3087, %v3270, 0.0
  %v3366 = vadd.f32 %v3364, %v3365
  %v3367 = vsel %vm3087, %v3271, 0.0
  %v3368 = vadd.f32 %v3366, %v3367
  %v3369 = vsel %vm3087, %v3272, 0.0
  %v3370 = vadd.f32 %v3368, %v3369
  %v3371 = vsel %vm3087, %v3273, 0.0
  %v3372 = vadd.f32 %v3370, %v3371
  %v3373 = vsel %vm3087, %v3274, 0.0
  %v3374 = vadd.f32 %v3372, %v3373
  %v3375 = vsel %vm3087, %v3275, 0.0
  %v3376 = vadd.f32 %v3374, %v3375
  %v3377 = vsel %vm3087, %v3276, 0.0
  %v3378 = vadd.f32 %v3376, %v3377
  %v3379 = vsel %vm3087, %v3277, 0.0
  %v3380 = vadd.f32 %v3378, %v3379
  %v3381 = vsel %vm3087, %v3278, 0.0
  %v3382 = vadd.f32 %v3380, %v3381
  %v3383 = vsel %vm3087, %v3279, 0.0
  %v3384 = vadd.f32 %v3382, %v3383
  %v3385 = vsel %vm3087, %v3280, 0.0
  %v3386 = vadd.f32 %v3384, %v3385
  %v3387 = vsel %vm3087, %v3281, 0.0
  %v3388 = vadd.f32 %v3386, %v3387
  %v3389 = vsel %vm3087, %v3282, 0.0
  %v3390 = vadd.f32 %v3388, %v3389
  %v3391 = vsel %vm3087, %v3283, 0.0
  %v3392 = vadd.f32 %v3390, %v3391
  %v3393 = vsel %vm3087, %v3284, 0.0
  %v3394 = vadd.f32 %v3392, %v3393
  %v3395 = vsel %vm3087, %v3285, 0.0
  %v3396 = vadd.f32 %v3394, %v3395
  %v3397 = vsel %vm3087, %v3286, 0.0
  %v3398 = vadd.f32 %v3396, %v3397
  %v3399 = vsel %vm3087, %v3287, 0.0
  %v3400 = vadd.f32 %v3398, %v3399
  %v3401 = vsel %vm3087, %v3288, 0.0
  %v3402 = vadd.f32 %v3400, %v3401
  %v3403 = vsel %vm3087, %v3289, 0.0
  %v3404 = vadd.f32 %v3402, %v3403
  %v3405 = vsel %vm3087, %v3290, 0.0
  %v3406 = vadd.f32 %v3404, %v3405
  %v3407 = vsel %vm3087, %v3291, 0.0
  %v3408 = vadd.f32 %v3406, %v3407
  %v3409 = vsel %vm3087, %v3292, 0.0
  %v3410 = vadd.f32 %v3408, %v3409
  %v3411 = vsel %vm3087, %v3293, 0.0
  %v3412 = vadd.f32 %v3410, %v3411
  %v3413 = vsel %vm3087, %v3294, 0.0
  %v3414 = vadd.f32 %v3412, %v3413
  %v3415 = vsel %vm3087, %v3295, 0.0
  %v3416 = vadd.f32 %v3414, %v3415
  %v3417 = vsel %vm3087, %v3296, 0.0
  %v3418 = vadd.f32 %v3416, %v3417
  %v3419 = vsel %vm3087, %v3297, 0.0
  %v3420 = vadd.f32 %v3418, %v3419
  %v3421 = vsel %vm3087, %v3298, 0.0
  %v3422 = vadd.f32 %v3420, %v3421
  %v3423 = vsel %vm3087, %v3299, 0.0
  %v3424 = vadd.f32 %v3422, %v3423
  %v3425 = vsel %vm3087, %v3300, 0.0
  %v3426 = vadd.f32 %v3424, %v3425
  %v3427 = vsel %vm3087, %v3301, 0.0
  %v3428 = vadd.f32 %v3426, %v3427
  %v3429 = vsel %vm3087, %v3302, 0.0
  %v3430 = vadd.f32 %v3428, %v3429
  %v3431 = vsel %vm3087, %v3303, 0.0
  %v3432 = vadd.f32 %v3430, %v3431
  %v3433 = vsel %vm3087, %v3304, 0.0
  %v3434 = vadd.f32 %v3432, %v3433
  %v3435 = vsel %vm3087, %v3305, 0.0
  %v3436 = vadd.f32 %v3434, %v3435
  %v3437 = vsel %vm3087, %v3306, 0.0
  %v3438 = vadd.f32 %v3436, %v3437
  %v3439 = vsel %vm3087, %v3307, 0.0
  %v3440 = vadd.f32 %v3438, %v3439
  %v3441 = vsel %vm3087, %v3308, 0.0
  %v3442 = vadd.f32 %v3440, %v3441
  %v3443 = vsel %vm3087, %v3309, 0.0
  %v3444 = vadd.f32 %v3442, %v3443
  %v3445 = vsel %vm3087, %v3310, 0.0
  %v3446 = vadd.f32 %v3444, %v3445
  %v3447 = vsel %vm3087, %v3311, 0.0
  %v3448 = vadd.f32 %v3446, %v3447
  %v3449 = vsel %vm3087, %v3312, 0.0
  %v3450 = vadd.f32 %v3448, %v3449
  %v3451 = vsel %vm3087, %v3313, 0.0
  %v3452 = vadd.f32 %v3450, %v3451
  %v3453 = vsel %vm3087, %v3314, 0.0
  %v3454 = vadd.f32 %v3452, %v3453
  %v3455 = vsel %vm3087, %v3315, 0.0
  %v3456 = vadd.f32 %v3454, %v3455
  %v3457 = vsel %vm3087, %v3316, 0.0
  %v3458 = vadd.f32 %v3456, %v3457
  %v3459 = vsel %vm3087, %v3317, 0.0
  %v3460 = vadd.f32 %v3458, %v3459
  %v3461 = vsel %vm3087, %v3318, 0.0
  %v3462 = vadd.f32 %v3460, %v3461
  %v3463 = vsel %vm3087, %v3319, 0.0
  %v3464 = vadd.f32 %v3462, %v3463
  %v3465 = vsel %vm3087, %v3320, 0.0
  %v3466 = vadd.f32 %v3464, %v3465
  %v3467 = vsel %vm3087, %v3321, 0.0
  %v3468 = vadd.f32 %v3466, %v3467
  %v3469 = vsel %vm3087, %v3322, 0.0
  %v3470 = vadd.f32 %v3468, %v3469
  %v3471 = vsel %vm3087, %v3323, 0.0
  %v3472 = vadd.f32 %v3470, %v3471
  %v3473 = vsel %vm3087, %v3324, 0.0
  %v3474 = vadd.f32 %v3472, %v3473
  %v3475 = vsel %vm3087, %v3325, 0.0
  %v3476 = vadd.f32 %v3474, %v3475
  %v3477 = vsel %vm3087, %v3326, 0.0
  %v3478 = vadd.f32 %v3476, %v3477
  %v3479 = vsel %vm3087, %v3327, 0.0
  %v3480 = vadd.f32 %v3478, %v3479
  %v3481 = vsel %vm3087, %v3328, 0.0
  %v3482 = vadd.f32 %v3480, %v3481
  %v3483 = vsel %vm3087, %v3329, 0.0
  %v3484 = vadd.f32 %v3482, %v3483
  %v3485 = vsel %vm3087, %v3330, 0.0
  %v3486 = vadd.f32 %v3484, %v3485
  %v3487 = vsel %vm3087, %v3331, 0.0
  %v3488 = vadd.f32 %v3486, %v3487
  %v3489 = vsel %vm3087, %v3332, 0.0
  %v3490 = vadd.f32 %v3488, %v3489
  %v3491 = vsel %vm3087, %v3333, 0.0
  %v3492 = vadd.f32 %v3490, %v3491
  %v3493 = vsel %vm3087, %v3334, 0.0
  %v3494 = vadd.f32 %v3492, %v3493
  %v3495 = vsel %vm3087, %v3335, 0.0
  %v3496 = vadd.f32 %v3494, %v3495
  %v3497 = vrot.slane %v3496, 4
  %v3498 = vadd.f32 %v3496, %v3497
  %v3499 = vrot.slane %v3498, 2
  %v3500 = vadd.f32 %v3498, %v3499
  %v3501 = vrot.slane %v3500, 1
  %v3502 = vadd.f32 %v3500, %v3501
  %v3503 = vmul.f32 %v3254, 0.001953125
  %v3504 = vmul.f32 %v3502, 0.001953125
  %v3505 = vmul.f32 %v3503, %v3503
  %v3506 = vsub.f32 %v3504, %v3505
  %v3507 = vld [vmem:[%s5] sm:$0x1]
  %v3508 = vadd.f32 %v3506, 1e-05
  %v3509 = vrsqrt.pop %v3508
  %v3510 = vmul.f32 %v3507, %v3509
  %v3511 = vsub.f32 %v2520, %v3503
  %v3512 = vsub.f32 %v2521, %v3503
  %v3513 = vsub.f32 %v2522, %v3503
  %v3514 = vsub.f32 %v2523, %v3503
  %v3515 = vsub.f32 %v2524, %v3503
  %v3516 = vsub.f32 %v2525, %v3503
  %v3517 = vsub.f32 %v2526, %v3503
  %v3518 = vsub.f32 %v2527, %v3503
  %v3519 = vsub.f32 %v2528, %v3503
  %v3520 = vsub.f32 %v2529, %v3503
  %v3521 = vsub.f32 %v2530, %v3503
  %v3522 = vsub.f32 %v2531, %v3503
  %v3523 = vsub.f32 %v2532, %v3503
  %v3524 = vsub.f32 %v2533, %v3503
  %v3525 = vsub.f32 %v2534, %v3503
  %v3526 = vsub.f32 %v2535, %v3503
  %v3527 = vsub.f32 %v2536, %v3503
  %v3528 = vsub.f32 %v2537, %v3503
  %v3529 = vsub.f32 %v2538, %v3503
  %v3530 = vsub.f32 %v2539, %v3503
  %v3531 = vsub.f32 %v2540, %v3503
  %v3532 = vsub.f32 %v2541, %v3503
  %v3533 = vsub.f32 %v2542, %v3503
  %v3534 = vsub.f32 %v2543, %v3503
  %v3535 = vsub.f32 %v2544, %v3503
  %v3536 = vsub.f32 %v2545, %v3503
  %v3537 = vsub.f32 %v2546, %v3503
  %v3538 = vsub.f32 %v2547, %v3503
  %v3539 = vsub.f32 %v2548, %v3503
  %v3540 = vsub.f32 %v2549, %v3503
  %v3541 = vsub.f32 %v2550, %v3503
  %v3542 = vsub.f32 %v2551, %v3503
  %v3543 = vsub.f32 %v2552, %v3503
  %v3544 = vsub.f32 %v2553, %v3503
  %v3545 = vsub.f32 %v2554, %v3503
  %v3546 = vsub.f32 %v2555, %v3503
  %v3547 = vsub.f32 %v2556, %v3503
  %v3548 = vsub.f32 %v2557, %v3503
  %v3549 = vsub.f32 %v2558, %v3503
  %v3550 = vsub.f32 %v2559, %v3503
  %v3551 = vsub.f32 %v2560, %v3503
  %v3552 = vsub.f32 %v2561, %v3503
  %v3553 = vsub.f32 %v2562, %v3503
  %v3554 = vsub.f32 %v2563, %v3503
  %v3555 = vsub.f32 %v2564, %v3503
  %v3556 = vsub.f32 %v2565, %v3503
  %v3557 = vsub.f32 %v2566, %v3503
  %v3558 = vsub.f32 %v2567, %v3503
  %v3559 = vsub.f32 %v2568, %v3503
  %v3560 = vsub.f32 %v2569, %v3503
  %v3561 = vsub.f32 %v2570, %v3503
  %v3562 = vsub.f32 %v2571, %v3503
  %v3563 = vsub.f32 %v2572, %v3503
  %v3564 = vsub.f32 %v2573, %v3503
  %v3565 = vsub.f32 %v2574, %v3503
  %v3566 = vsub.f32 %v2575, %v3503
  %v3567 = vsub.f32 %v2576, %v3503
  %v3568 = vsub.f32 %v2577, %v3503
  %v3569 = vsub.f32 %v2578, %v3503
  %v3570 = vsub.f32 %v2579, %v3503
  %v3571 = vsub.f32 %v2580, %v3503
  %v3572 = vsub.f32 %v2581, %v3503
  %v3573 = vsub.f32 %v2582, %v3503
  %v3574 = vsub.f32 %v2583, %v3503
  %v3575 = vsub.f32 %v2584, %v3503
  %v3576 = vsub.f32 %v2585, %v3503
  %v3577 = vsub.f32 %v2586, %v3503
  %v3578 = vsub.f32 %v2587, %v3503
  %v3579 = vsub.f32 %v2588, %v3503
  %v3580 = vsub.f32 %v2589, %v3503
  %v3581 = vsub.f32 %v2590, %v3503
  %v3582 = vsub.f32 %v2591, %v3503
  %v3583 = vsub.f32 %v2592, %v3503
  %v3584 = vsub.f32 %v2593, %v3503
  %v3585 = vsub.f32 %v2594, %v3503
  %v3586 = vsub.f32 %v2595, %v3503
  %v3587 = vsub.f32 %v2596, %v3503
  %v3588 = vsub.f32 %v2597, %v3503
  %v3589 = vsub.f32 %v2598, %v3503
  %v3590 = vsub.f32 %v2599, %v3503
  %v3591 = vsub.f32 %v2600, %v3503
  %v3593 = vlaneseq
  %v3594 = vshrl.u32 %v3593, 7
  %v3595 = vsub.s32 0, %v3594
  %v3596 = vrot.slane %v3510, %v3595
  %v3598 = vmul.f32 %v3511, %v3596
  %v3599 = vmul.f32 %v3512, %v3596
  %v3600 = vmul.f32 %v3513, %v3596
  %v3601 = vmul.f32 %v3514, %v3596
  %v3602 = vmul.f32 %v3515, %v3596
  %v3603 = vmul.f32 %v3516, %v3596
  %v3604 = vmul.f32 %v3517, %v3596
  %v3605 = vmul.f32 %v3518, %v3596
  %v3606 = vmul.f32 %v3519, %v3596
  %v3607 = vmul.f32 %v3520, %v3596
  %v3608 = vmul.f32 %v3521, %v3596
  %v3609 = vmul.f32 %v3522, %v3596
  %v3610 = vmul.f32 %v3523, %v3596
  %v3611 = vmul.f32 %v3524, %v3596
  %v3612 = vmul.f32 %v3525, %v3596
  %v3613 = vmul.f32 %v3526, %v3596
  %v3614 = vmul.f32 %v3527, %v3596
  %v3615 = vmul.f32 %v3528, %v3596
  %v3616 = vmul.f32 %v3529, %v3596
  %v3617 = vmul.f32 %v3530, %v3596
  %v3618 = vmul.f32 %v3531, %v3596
  %v3619 = vmul.f32 %v3532, %v3596
  %v3620 = vmul.f32 %v3533, %v3596
  %v3621 = vmul.f32 %v3534, %v3596
  %v3622 = vmul.f32 %v3535, %v3596
  %v3623 = vmul.f32 %v3536, %v3596
  %v3624 = vmul.f32 %v3537, %v3596
  %v3625 = vmul.f32 %v3538, %v3596
  %v3626 = vmul.f32 %v3539, %v3596
  %v3627 = vmul.f32 %v3540, %v3596
  %v3628 = vmul.f32 %v3541, %v3596
  %v3629 = vmul.f32 %v3542, %v3596
  %v3630 = vmul.f32 %v3543, %v3596
  %v3631 = vmul.f32 %v3544, %v3596
  %v3632 = vmul.f32 %v3545, %v3596
  %v3633 = vmul.f32 %v3546, %v3596
  %v3634 = vmul.f32 %v3547, %v3596
  %v3635 = vmul.f32 %v3548, %v3596
  %v3636 = vmul.f32 %v3549, %v3596
  %v3637 = vmul.f32 %v3550, %v3596
  %v3638 = vmul.f32 %v3551, %v3596
  %v3639 = vmul.f32 %v3552, %v3596
  %v3640 = vmul.f32 %v3553, %v3596
  %v3641 = vmul.f32 %v3554, %v3596
  %v3642 = vmul.f32 %v3555, %v3596
  %v3643 = vmul.f32 %v3556, %v3596
  %v3644 = vmul.f32 %v3557, %v3596
  %v3645 = vmul.f32 %v3558, %v3596
  %v3646 = vmul.f32 %v3559, %v3596
  %v3647 = vmul.f32 %v3560, %v3596
  %v3648 = vmul.f32 %v3561, %v3596
  %v3649 = vmul.f32 %v3562, %v3596
  %v3650 = vmul.f32 %v3563, %v3596
  %v3651 = vmul.f32 %v3564, %v3596
  %v3652 = vmul.f32 %v3565, %v3596
  %v3653 = vmul.f32 %v3566, %v3596
  %v3654 = vmul.f32 %v3567, %v3596
  %v3655 = vmul.f32 %v3568, %v3596
  %v3656 = vmul.f32 %v3569, %v3596
  %v3657 = vmul.f32 %v3570, %v3596
  %v3658 = vmul.f32 %v3571, %v3596
  %v3659 = vmul.f32 %v3572, %v3596
  %v3660 = vmul.f32 %v3573, %v3596
  %v3661 = vmul.f32 %v3574, %v3596
  %v3662 = vmul.f32 %v3575, %v3596
  %v3663 = vmul.f32 %v3576, %v3596
  %v3664 = vmul.f32 %v3577, %v3596
  %v3665 = vmul.f32 %v3578, %v3596
  %v3666 = vmul.f32 %v3579, %v3596
  %v3667 = vmul.f32 %v3580, %v3596
  %v3668 = vmul.f32 %v3581, %v3596
  %v3669 = vmul.f32 %v3582, %v3596
  %v3670 = vmul.f32 %v3583, %v3596
  %v3671 = vmul.f32 %v3584, %v3596
  %v3672 = vmul.f32 %v3585, %v3596
  %v3673 = vmul.f32 %v3586, %v3596
  %v3674 = vmul.f32 %v3587, %v3596
  %v3675 = vmul.f32 %v3588, %v3596
  %v3676 = vmul.f32 %v3589, %v3596
  %v3677 = vmul.f32 %v3590, %v3596
  %v3678 = vmul.f32 %v3591, %v3596
  %v3679 = vld [vmem:[%s6] sm:$0x1]
  %v3681 = vlaneseq
  %v3682 = vshrl.u32 %v3681, 7
  %v3683 = vsub.s32 0, %v3682
  %v3684 = vrot.slane %v3679, %v3683
  %v3686 = vadd.f32 %v3598, %v3684
  %v3687 = vadd.f32 %v3599, %v3684
  %v3688 = vadd.f32 %v3600, %v3684
  %v3689 = vadd.f32 %v3601, %v3684
  %v3690 = vadd.f32 %v3602, %v3684
  %v3691 = vadd.f32 %v3603, %v3684
  %v3692 = vadd.f32 %v3604, %v3684
  %v3693 = vadd.f32 %v3605, %v3684
  %v3694 = vadd.f32 %v3606, %v3684
  %v3695 = vadd.f32 %v3607, %v3684
  %v3696 = vadd.f32 %v3608, %v3684
  %v3697 = vadd.f32 %v3609, %v3684
  %v3698 = vadd.f32 %v3610, %v3684
  %v3699 = vadd.f32 %v3611, %v3684
  %v3700 = vadd.f32 %v3612, %v3684
  %v3701 = vadd.f32 %v3613, %v3684
  %v3702 = vadd.f32 %v3614, %v3684
  %v3703 = vadd.f32 %v3615, %v3684
  %v3704 = vadd.f32 %v3616, %v3684
  %v3705 = vadd.f32 %v3617, %v3684
  %v3706 = vadd.f32 %v3618, %v3684
  %v3707 = vadd.f32 %v3619, %v3684
  %v3708 = vadd.f32 %v3620, %v3684
  %v3709 = vadd.f32 %v3621, %v3684
  %v3710 = vadd.f32 %v3622, %v3684
  %v3711 = vadd.f32 %v3623, %v3684
  %v3712 = vadd.f32 %v3624, %v3684
  %v3713 = vadd.f32 %v3625, %v3684
  %v3714 = vadd.f32 %v3626, %v3684
  %v3715 = vadd.f32 %v3627, %v3684
  %v3716 = vadd.f32 %v3628, %v3684
  %v3717 = vadd.f32 %v3629, %v3684
  %v3718 = vadd.f32 %v3630, %v3684
  %v3719 = vadd.f32 %v3631, %v3684
  %v3720 = vadd.f32 %v3632, %v3684
  %v3721 = vadd.f32 %v3633, %v3684
  %v3722 = vadd.f32 %v3634, %v3684
  %v3723 = vadd.f32 %v3635, %v3684
  %v3724 = vadd.f32 %v3636, %v3684
  %v3725 = vadd.f32 %v3637, %v3684
  %v3726 = vadd.f32 %v3638, %v3684
  %v3727 = vadd.f32 %v3639, %v3684
  %v3728 = vadd.f32 %v3640, %v3684
  %v3729 = vadd.f32 %v3641, %v3684
  %v3730 = vadd.f32 %v3642, %v3684
  %v3731 = vadd.f32 %v3643, %v3684
  %v3732 = vadd.f32 %v3644, %v3684
  %v3733 = vadd.f32 %v3645, %v3684
  %v3734 = vadd.f32 %v3646, %v3684
  %v3735 = vadd.f32 %v3647, %v3684
  %v3736 = vadd.f32 %v3648, %v3684
  %v3737 = vadd.f32 %v3649, %v3684
  %v3738 = vadd.f32 %v3650, %v3684
  %v3739 = vadd.f32 %v3651, %v3684
  %v3740 = vadd.f32 %v3652, %v3684
  %v3741 = vadd.f32 %v3653, %v3684
  %v3742 = vadd.f32 %v3654, %v3684
  %v3743 = vadd.f32 %v3655, %v3684
  %v3744 = vadd.f32 %v3656, %v3684
  %v3745 = vadd.f32 %v3657, %v3684
  %v3746 = vadd.f32 %v3658, %v3684
  %v3747 = vadd.f32 %v3659, %v3684
  %v3748 = vadd.f32 %v3660, %v3684
  %v3749 = vadd.f32 %v3661, %v3684
  %v3750 = vadd.f32 %v3662, %v3684
  %v3751 = vadd.f32 %v3663, %v3684
  %v3752 = vadd.f32 %v3664, %v3684
  %v3753 = vadd.f32 %v3665, %v3684
  %v3754 = vadd.f32 %v3666, %v3684
  %v3755 = vadd.f32 %v3667, %v3684
  %v3756 = vadd.f32 %v3668, %v3684
  %v3757 = vadd.f32 %v3669, %v3684
  %v3758 = vadd.f32 %v3670, %v3684
  %v3759 = vadd.f32 %v3671, %v3684
  %v3760 = vadd.f32 %v3672, %v3684
  %v3761 = vadd.f32 %v3673, %v3684
  %v3762 = vadd.f32 %v3674, %v3684
  %v3763 = vadd.f32 %v3675, %v3684
  %v3764 = vadd.f32 %v3676, %v3684
  %v3765 = vadd.f32 %v3677, %v3684
  %v3766 = vadd.f32 %v3678, %v3684
  %v3767 = vmax.f32 %v3686, 0.0
  %v3768 = vmax.f32 %v3687, 0.0
  %v3769 = vmax.f32 %v3688, 0.0
  %v3770 = vmax.f32 %v3689, 0.0
  %v3771 = vmax.f32 %v3690, 0.0
  %v3772 = vmax.f32 %v3691, 0.0
  %v3773 = vmax.f32 %v3692, 0.0
  %v3774 = vmax.f32 %v3693, 0.0
  %v3775 = vmax.f32 %v3694, 0.0
  %v3776 = vmax.f32 %v3695, 0.0
  %v3777 = vmax.f32 %v3696, 0.0
  %v3778 = vmax.f32 %v3697, 0.0
  %v3779 = vmax.f32 %v3698, 0.0
  %v3780 = vmax.f32 %v3699, 0.0
  %v3781 = vmax.f32 %v3700, 0.0
  %v3782 = vmax.f32 %v3701, 0.0
  %v3783 = vmax.f32 %v3702, 0.0
  %v3784 = vmax.f32 %v3703, 0.0
  %v3785 = vmax.f32 %v3704, 0.0
  %v3786 = vmax.f32 %v3705, 0.0
  %v3787 = vmax.f32 %v3706, 0.0
  %v3788 = vmax.f32 %v3707, 0.0
  %v3789 = vmax.f32 %v3708, 0.0
  %v3790 = vmax.f32 %v3709, 0.0
  %v3791 = vmax.f32 %v3710, 0.0
  %v3792 = vmax.f32 %v3711, 0.0
  %v3793 = vmax.f32 %v3712, 0.0
  %v3794 = vmax.f32 %v3713, 0.0
  %v3795 = vmax.f32 %v3714, 0.0
  %v3796 = vmax.f32 %v3715, 0.0
  %v3797 = vmax.f32 %v3716, 0.0
  %v3798 = vmax.f32 %v3717, 0.0
  %v3799 = vmax.f32 %v3718, 0.0
  %v3800 = vmax.f32 %v3719, 0.0
  %v3801 = vmax.f32 %v3720, 0.0
  %v3802 = vmax.f32 %v3721, 0.0
  %v3803 = vmax.f32 %v3722, 0.0
  %v3804 = vmax.f32 %v3723, 0.0
  %v3805 = vmax.f32 %v3724, 0.0
  %v3806 = vmax.f32 %v3725, 0.0
  %v3807 = vmax.f32 %v3726, 0.0
  %v3808 = vmax.f32 %v3727, 0.0
  %v3809 = vmax.f32 %v3728, 0.0
  %v3810 = vmax.f32 %v3729, 0.0
  %v3811 = vmax.f32 %v3730, 0.0
  %v3812 = vmax.f32 %v3731, 0.0
  %v3813 = vmax.f32 %v3732, 0.0
  %v3814 = vmax.f32 %v3733, 0.0
  %v3815 = vmax.f32 %v3734, 0.0
  %v3816 = vmax.f32 %v3735, 0.0
  %v3817 = vmax.f32 %v3736, 0.0
  %v3818 = vmax.f32 %v3737, 0.0
  %v3819 = vmax.f32 %v3738, 0.0
  %v3820 = vmax.f32 %v3739, 0.0
  %v3821 = vmax.f32 %v3740, 0.0
  %v3822 = vmax.f32 %v3741, 0.0
  %v3823 = vmax.f32 %v3742, 0.0
  %v3824 = vmax.f32 %v3743, 0.0
  %v3825 = vmax.f32 %v3744, 0.0
  %v3826 = vmax.f32 %v3745, 0.0
  %v3827 = vmax.f32 %v3746, 0.0
  %v3828 = vmax.f32 %v3747, 0.0
  %v3829 = vmax.f32 %v3748, 0.0
  %v3830 = vmax.f32 %v3749, 0.0
  %v3831 = vmax.f32 %v3750, 0.0
  %v3832 = vmax.f32 %v3751, 0.0
  %v3833 = vmax.f32 %v3752, 0.0
  %v3834 = vmax.f32 %v3753, 0.0
  %v3835 = vmax.f32 %v3754, 0.0
  %v3836 = vmax.f32 %v3755, 0.0
  %v3837 = vmax.f32 %v3756, 0.0
  %v3838 = vmax.f32 %v3757, 0.0
  %v3839 = vmax.f32 %v3758, 0.0
  %v3840 = vmax.f32 %v3759, 0.0
  %v3841 = vmax.f32 %v3760, 0.0
  %v3842 = vmax.f32 %v3761, 0.0
  %v3843 = vmax.f32 %v3762, 0.0
  %v3844 = vmax.f32 %v3763, 0.0
  %v3845 = vmax.f32 %v3764, 0.0
  %v3846 = vmax.f32 %v3765, 0.0
  %v3847 = vmax.f32 %v3766, 0.0
  %v3848 = vmul.f32 %v3767, %v2604
  %v3849 = vmul.f32 %v3768, %v2609
  %v3850 = vmul.f32 %v3769, %v2614
  %v3851 = vmul.f32 %v3770, %v2619
  %v3852 = vmul.f32 %v3771, %v2624
  %v3853 = vmul.f32 %v3772, %v2629
  %v3854 = vmul.f32 %v3773, %v2634
  %v3855 = vmul.f32 %v3774, %v2639
  %v3856 = vmul.f32 %v3775, %v2644
  %v3857 = vmul.f32 %v3776, %v2649
  %v3858 = vmul.f32 %v3777, %v2654
  %v3859 = vmul.f32 %v3778, %v2659
  %v3860 = vmul.f32 %v3779, %v2664
  %v3861 = vmul.f32 %v3780, %v2669
  %v3862 = vmul.f32 %v3781, %v2674
  %v3863 = vmul.f32 %v3782, %v2679
  %v3864 = vmul.f32 %v3783, %v2684
  %v3865 = vmul.f32 %v3784, %v2689
  %v3866 = vmul.f32 %v3785, %v2694
  %v3867 = vmul.f32 %v3786, %v2699
  %v3868 = vmul.f32 %v3787, %v2704
  %v3869 = vmul.f32 %v3788, %v2709
  %v3870 = vmul.f32 %v3789, %v2714
  %v3871 = vmul.f32 %v3790, %v2719
  %v3872 = vmul.f32 %v3791, %v2724
  %v3873 = vmul.f32 %v3792, %v2729
  %v3874 = vmul.f32 %v3793, %v2734
  %v3875 = vmul.f32 %v3794, %v2739
  %v3876 = vmul.f32 %v3795, %v2744
  %v3877 = vmul.f32 %v3796, %v2749
  %v3878 = vmul.f32 %v3797, %v2754
  %v3879 = vmul.f32 %v3798, %v2759
  %v3880 = vmul.f32 %v3799, %v2764
  %v3881 = vmul.f32 %v3800, %v2769
  %v3882 = vmul.f32 %v3801, %v2774
  %v3883 = vmul.f32 %v3802, %v2779
  %v3884 = vmul.f32 %v3803, %v2784
  %v3885 = vmul.f32 %v3804, %v2789
  %v3886 = vmul.f32 %v3805, %v2794
  %v3887 = vmul.f32 %v3806, %v2799
  %v3888 = vmul.f32 %v3807, %v2804
  %v3889 = vmul.f32 %v3808, %v2809
  %v3890 = vmul.f32 %v3809, %v2814
  %v3891 = vmul.f32 %v3810, %v2819
  %v3892 = vmul.f32 %v3811, %v2824
  %v3893 = vmul.f32 %v3812, %v2829
  %v3894 = vmul.f32 %v3813, %v2834
  %v3895 = vmul.f32 %v3814, %v2839
  %v3896 = vmul.f32 %v3815, %v2844
  %v3897 = vmul.f32 %v3816, %v2849
  %v3898 = vmul.f32 %v3817, %v2854
  %v3899 = vmul.f32 %v3818, %v2859
  %v3900 = vmul.f32 %v3819, %v2864
  %v3901 = vmul.f32 %v3820, %v2869
  %v3902 = vmul.f32 %v3821, %v2874
  %v3903 = vmul.f32 %v3822, %v2879
  %v3904 = vmul.f32 %v3823, %v2884
  %v3905 = vmul.f32 %v3824, %v2889
  %v3906 = vmul.f32 %v3825, %v2894
  %v3907 = vmul.f32 %v3826, %v2899
  %v3908 = vmul.f32 %v3827, %v2904
  %v3909 = vmul.f32 %v3828, %v2909
  %v3910 = vmul.f32 %v3829, %v2914
  %v3911 = vmul.f32 %v3830, %v2919
  %v3912 = vmul.f32 %v3831, %v2924
  %v3913 = vmul.f32 %v3832, %v2929
  %v3914 = vmul.f32 %v3833, %v2934
  %v3915 = vmul.f32 %v3834, %v2939
  %v3916 = vmul.f32 %v3835, %v2944
  %v3917 = vmul.f32 %v3836, %v2949
  %v3918 = vmul.f32 %v3837, %v2954
  %v3919 = vmul.f32 %v3838, %v2959
  %v3920 = vmul.f32 %v3839, %v2964
  %v3921 = vmul.f32 %v3840, %v2969
  %v3922 = vmul.f32 %v3841, %v2974
  %v3923 = vmul.f32 %v3842, %v2979
  %v3924 = vmul.f32 %v3843, %v2984
  %v3925 = vmul.f32 %v3844, %v2989
  %v3926 = vmul.f32 %v3845, %v2994
  %v3927 = vmul.f32 %v3846, %v2999
  %v3928 = vmul.f32 %v3847, %v3004
  %v3929 = vpack.c.bf16 %v3849, %v3848
  %v3930 = vpack.c.bf16 %v3851, %v3850
  %v3931 = vpack.c.bf16 %v3853, %v3852
  %v3932 = vpack.c.bf16 %v3855, %v3854
  %v3933 = vpack.c.bf16 %v3857, %v3856
  %v3934 = vpack.c.bf16 %v3859, %v3858
  %v3935 = vpack.c.bf16 %v3861, %v3860
  %v3936 = vpack.c.bf16 %v3863, %v3862
  %v3937 = vpack.c.bf16 %v3865, %v3864
  %v3938 = vpack.c.bf16 %v3867, %v3866
  %v3939 = vpack.c.bf16 %v3869, %v3868
  %v3940 = vpack.c.bf16 %v3871, %v3870
  %v3941 = vpack.c.bf16 %v3873, %v3872
  %v3942 = vpack.c.bf16 %v3875, %v3874
  %v3943 = vpack.c.bf16 %v3877, %v3876
  %v3944 = vpack.c.bf16 %v3879, %v3878
  %v3945 = vpack.c.bf16 %v3881, %v3880
  %v3946 = vpack.c.bf16 %v3883, %v3882
  %v3947 = vpack.c.bf16 %v3885, %v3884
  %v3948 = vpack.c.bf16 %v3887, %v3886
  %v3949 = vpack.c.bf16 %v3889, %v3888
  %v3950 = vpack.c.bf16 %v3891, %v3890
  %v3951 = vpack.c.bf16 %v3893, %v3892
  %v3952 = vpack.c.bf16 %v3895, %v3894
  %v3953 = vpack.c.bf16 %v3897, %v3896
  %v3954 = vpack.c.bf16 %v3899, %v3898
  %v3955 = vpack.c.bf16 %v3901, %v3900
  %v3956 = vpack.c.bf16 %v3903, %v3902
  %v3957 = vpack.c.bf16 %v3905, %v3904
  %v3958 = vpack.c.bf16 %v3907, %v3906
  %v3959 = vpack.c.bf16 %v3909, %v3908
  %v3960 = vpack.c.bf16 %v3911, %v3910
  %v3961 = vpack.c.bf16 %v3913, %v3912
  %v3962 = vpack.c.bf16 %v3915, %v3914
  %v3963 = vpack.c.bf16 %v3917, %v3916
  %v3964 = vpack.c.bf16 %v3919, %v3918
  %v3965 = vpack.c.bf16 %v3921, %v3920
  %v3966 = vpack.c.bf16 %v3923, %v3922
  %v3967 = vpack.c.bf16 %v3925, %v3924
  %v3968 = vpack.c.bf16 %v3927, %v3926
  %v3969 = vpack.c.bf16 %v3928, %v3928
  %vm3970 = vcmask 388096
  %3971 = vst.msk [vmem:[#allocation2] sm:$0xf] %vm3970, 0
  %3972 = vst.msk [vmem:[#allocation2 + $0x4] sm:$0xf] %vm3970, 0
  %3973 = vst.msk [vmem:[#allocation2 + $0x8] sm:$0xf] %vm3970, 0
  %3974 = vst.msk [vmem:[#allocation2 + $0xc] sm:$0xf] %vm3970, 0
  %vm3975 = vcmask 385024
  %vm3976 = vsmask.f32 256
  %vm3977 = vmand %vm3975, %vm3976
  %v3978 = vld [vmem:[#allocation2 + $0x10] sm:$0x1]
  %v3979 = vsel %vm3977, 0, %v3978
  %3980 = vst [vmem:[#allocation2 + $0x10] sm:$0x1] %v3979
  %vm3981 = vcmask 388099
  %vm3982 = vsmask.f32 7950
  %vm3983 = vmand %vm3981, %vm3982
  %v3984 = vld [vmem:[#allocation2 + $0x150] sm:$0x8]
  %v3985 = vsel %vm3983, 0, %v3984
  %3986 = vst [vmem:[#allocation2 + $0x150] sm:$0x8] %v3985
  %3987 = vst.msk [vmem:[#allocation2 + $0x154] sm:$0xf] %vm3970, 0
  %3988 = vst.msk [vmem:[#allocation2 + $0x158] sm:$0xf] %vm3970, 0
  %3989 = vst.msk [vmem:[#allocation2 + $0x15c] sm:$0xf] %vm3970, 0
  %3990 = vst.msk [vmem:[#allocation2 + $0x160] sm:$0xf] %vm3970, 0
  %v4032 = vunpack.c.l.b16 %v3929
  %v4033 = vunpack.c.h.b16 %v3929
  %v4034 = vunpack.c.l.b16 %v3930
  %v4035 = vunpack.c.h.b16 %v3930
  %v4036 = vunpack.c.l.b16 %v3931
  %v4037 = vunpack.c.h.b16 %v3931
  %v4038 = vunpack.c.l.b16 %v3932
  %v4039 = vunpack.c.h.b16 %v3932
  %v4040 = vunpack.c.l.b16 %v3933
  %v4041 = vunpack.c.h.b16 %v3933
  %v4042 = vunpack.c.l.b16 %v3934
  %v4043 = vunpack.c.h.b16 %v3934
  %v4044 = vunpack.c.l.b16 %v3935
  %v4045 = vunpack.c.h.b16 %v3935
  %v4046 = vunpack.c.l.b16 %v3936
  %v4047 = vunpack.c.h.b16 %v3936
  %v4048 = vunpack.c.l.b16 %v3937
  %v4049 = vunpack.c.h.b16 %v3937
  %v4050 = vunpack.c.l.b16 %v3938
  %v4051 = vunpack.c.h.b16 %v3938
  %v4052 = vunpack.c.l.b16 %v3939
  %v4053 = vunpack.c.h.b16 %v3939
  %v4054 = vunpack.c.l.b16 %v3940
  %v4055 = vunpack.c.h.b16 %v3940
  %v4056 = vunpack.c.l.b16 %v3941
  %v4057 = vunpack.c.h.b16 %v3941
  %v4058 = vunpack.c.l.b16 %v3942
  %v4059 = vunpack.c.h.b16 %v3942
  %v4060 = vunpack.c.l.b16 %v3943
  %v4061 = vunpack.c.h.b16 %v3943
  %v4062 = vunpack.c.l.b16 %v3944
  %v4063 = vunpack.c.h.b16 %v3944
  %v4064 = vunpack.c.l.b16 %v3945
  %v4065 = vunpack.c.h.b16 %v3945
  %v4066 = vunpack.c.l.b16 %v3946
  %v4067 = vunpack.c.h.b16 %v3946
  %v4068 = vunpack.c.l.b16 %v3947
  %v4069 = vunpack.c.h.b16 %v3947
  %v4070 = vunpack.c.l.b16 %v3948
  %v4071 = vunpack.c.h.b16 %v3948
  %v4072 = vunpack.c.l.b16 %v3949
  %v4073 = vunpack.c.h.b16 %v3949
  %v4074 = vunpack.c.l.b16 %v3950
  %v4075 = vunpack.c.h.b16 %v3950
  %v4076 = vunpack.c.l.b16 %v3951
  %v4077 = vunpack.c.h.b16 %v3951
  %v4078 = vunpack.c.l.b16 %v3952
  %v4079 = vunpack.c.h.b16 %v3952
  %v4080 = vunpack.c.l.b16 %v3953
  %v4081 = vunpack.c.h.b16 %v3953
  %v4082 = vunpack.c.l.b16 %v3954
  %v4083 = vunpack.c.h.b16 %v3954
  %v4084 = vunpack.c.l.b16 %v3955
  %v4085 = vunpack.c.h.b16 %v3955
  %v4086 = vunpack.c.l.b16 %v3956
  %v4087 = vunpack.c.h.b16 %v3956
  %v4088 = vunpack.c.l.b16 %v3957
  %v4089 = vunpack.c.h.b16 %v3957
  %v4090 = vunpack.c.l.b16 %v3958
  %v4091 = vunpack.c.h.b16 %v3958
  %v4092 = vunpack.c.l.b16 %v3959
  %v4093 = vunpack.c.h.b16 %v3959
  %v4094 = vunpack.c.l.b16 %v3960
  %v4095 = vunpack.c.h.b16 %v3960
  %v4096 = vunpack.c.l.b16 %v3961
  %v4097 = vunpack.c.h.b16 %v3961
  %v4098 = vunpack.c.l.b16 %v3962
  %v4099 = vunpack.c.h.b16 %v3962
  %v4100 = vunpack.c.l.b16 %v3963
  %v4101 = vunpack.c.h.b16 %v3963
  %v4102 = vunpack.c.l.b16 %v3964
  %v4103 = vunpack.c.h.b16 %v3964
  %v4104 = vunpack.c.l.b16 %v3965
  %v4105 = vunpack.c.h.b16 %v3965
  %v4106 = vunpack.c.l.b16 %v3966
  %v4107 = vunpack.c.h.b16 %v3966
  %v4108 = vunpack.c.l.b16 %v3967
  %v4109 = vunpack.c.h.b16 %v3967
  %v4110 = vunpack.c.l.b16 %v3968
  %v4111 = vunpack.c.h.b16 %v3968
  %v4112 = vunpack.c.l.b16 %v3969
  %v4113 = vpack.c.b16 %v4032, %v4032
  %v4114 = vpack.c.b16 %v4033, %v4033
  %v4115 = vpack.c.b16 %v4034, %v4034
  %v4116 = vpack.c.b16 %v4035, %v4035
  %v4117 = vpack.c.b16 %v4036, %v4036
  %v4118 = vpack.c.b16 %v4037, %v4037
  %v4119 = vpack.c.b16 %v4038, %v4038
  %v4120 = vpack.c.b16 %v4039, %v4039
  %v4121 = vpack.c.b16 %v4040, %v4040
  %v4122 = vpack.c.b16 %v4041, %v4041
  %v4123 = vpack.c.b16 %v4042, %v4042
  %v4124 = vpack.c.b16 %v4043, %v4043
  %v4125 = vpack.c.b16 %v4044, %v4044
  %v4126 = vpack.c.b16 %v4045, %v4045
  %v4127 = vpack.c.b16 %v4046, %v4046
  %v4128 = vpack.c.b16 %v4047, %v4047
  %v4129 = vpack.c.b16 %v4048, %v4048
  %v4130 = vpack.c.b16 %v4049, %v4049
  %v4131 = vpack.c.b16 %v4050, %v4050
  %v4132 = vpack.c.b16 %v4051, %v4051
  %v4133 = vpack.c.b16 %v4052, %v4052
  %v4134 = vpack.c.b16 %v4053, %v4053
  %v4135 = vpack.c.b16 %v4054, %v4054
  %v4136 = vpack.c.b16 %v4055, %v4055
  %v4137 = vpack.c.b16 %v4056, %v4056
  %v4138 = vpack.c.b16 %v4057, %v4057
  %v4139 = vpack.c.b16 %v4058, %v4058
  %v4140 = vpack.c.b16 %v4059, %v4059
  %v4141 = vpack.c.b16 %v4060, %v4060
  %v4142 = vpack.c.b16 %v4061, %v4061
  %v4143 = vpack.c.b16 %v4062, %v4062
  %v4144 = vpack.c.b16 %v4063, %v4063
  %v4145 = vpack.c.b16 %v4064, %v4064
  %v4146 = vpack.c.b16 %v4065, %v4065
  %v4147 = vpack.c.b16 %v4066, %v4066
  %v4148 = vpack.c.b16 %v4067, %v4067
  %v4149 = vpack.c.b16 %v4068, %v4068
  %v4150 = vpack.c.b16 %v4069, %v4069
  %v4151 = vpack.c.b16 %v4070, %v4070
  %v4152 = vpack.c.b16 %v4071, %v4071
  %v4153 = vpack.c.b16 %v4072, %v4072
  %v4154 = vpack.c.b16 %v4073, %v4073
  %v4155 = vpack.c.b16 %v4074, %v4074
  %v4156 = vpack.c.b16 %v4075, %v4075
  %v4157 = vpack.c.b16 %v4076, %v4076
  %v4158 = vpack.c.b16 %v4077, %v4077
  %v4159 = vpack.c.b16 %v4078, %v4078
  %v4160 = vpack.c.b16 %v4079, %v4079
  %v4161 = vpack.c.b16 %v4080, %v4080
  %v4162 = vpack.c.b16 %v4081, %v4081
  %v4163 = vpack.c.b16 %v4082, %v4082
  %v4164 = vpack.c.b16 %v4083, %v4083
  %v4165 = vpack.c.b16 %v4084, %v4084
  %v4166 = vpack.c.b16 %v4085, %v4085
  %v4167 = vpack.c.b16 %v4086, %v4086
  %v4168 = vpack.c.b16 %v4087, %v4087
  %v4169 = vpack.c.b16 %v4088, %v4088
  %v4170 = vpack.c.b16 %v4089, %v4089
  %v4171 = vpack.c.b16 %v4090, %v4090
  %v4172 = vpack.c.b16 %v4091, %v4091
  %v4173 = vpack.c.b16 %v4092, %v4092
  %v4174 = vpack.c.b16 %v4093, %v4093
  %v4175 = vpack.c.b16 %v4094, %v4094
  %v4176 = vpack.c.b16 %v4095, %v4095
  %v4177 = vpack.c.b16 %v4096, %v4096
  %v4178 = vpack.c.b16 %v4097, %v4097
  %v4179 = vpack.c.b16 %v4098, %v4098
  %v4180 = vpack.c.b16 %v4099, %v4099
  %v4181 = vpack.c.b16 %v4100, %v4100
  %v4182 = vpack.c.b16 %v4101, %v4101
  %v4183 = vpack.c.b16 %v4102, %v4102
  %v4184 = vpack.c.b16 %v4103, %v4103
  %v4185 = vpack.c.b16 %v4104, %v4104
  %v4186 = vpack.c.b16 %v4105, %v4105
  %v4187 = vpack.c.b16 %v4106, %v4106
  %v4188 = vpack.c.b16 %v4107, %v4107
  %v4189 = vpack.c.b16 %v4108, %v4108
  %v4190 = vpack.c.b16 %v4109, %v4109
  %v4191 = vpack.c.b16 %v4110, %v4110
  %v4192 = vpack.c.b16 %v4111, %v4111
  %v4193 = vpack.c.b16 %v4112, %v4112
  %vm4194 = vsmask.f32 4368
  %vm4195 = vmor %vm3976, %vm4194
  %v4197 = vshrl.u32 %v4113, 16
  %v4199 = vrot.slane %v4197, 7
  %v4200 = vshll.u32 %v4113, 16
  %v4202 = vor.u32 %v4199, %v4200
  %v4203 = vrot.slane %v4199, 4
  %v4205 = vshrl.u32 %v4114, 16
  %v4207 = vrot.slane %v4205, 7
  %v4208 = vshll.u32 %v4114, 16
  %v4210 = vor.u32 %v4207, %v4208
  %v4211 = vsel %vm4195, %v4203, %v4210
  %v4212 = vrot.slane %v4207, 4
  %v4214 = vshrl.u32 %v4115, 16
  %v4216 = vrot.slane %v4214, 7
  %v4217 = vshll.u32 %v4115, 16
  %v4219 = vor.u32 %v4216, %v4217
  %v4220 = vsel %vm4195, %v4212, %v4219
  %v4221 = vrot.slane %v4216, 4
  %v4223 = vshrl.u32 %v4116, 16
  %v4225 = vrot.slane %v4223, 7
  %v4226 = vshll.u32 %v4116, 16
  %v4228 = vor.u32 %v4225, %v4226
  %v4229 = vsel %vm4195, %v4221, %v4228
  %v4230 = vrot.slane %v4225, 4
  %v4232 = vshrl.u32 %v4117, 16
  %v4234 = vrot.slane %v4232, 7
  %v4235 = vshll.u32 %v4117, 16
  %v4237 = vor.u32 %v4234, %v4235
  %v4238 = vsel %vm4195, %v4230, %v4237
  %v4239 = vrot.slane %v4234, 4
  %v4241 = vshrl.u32 %v4118, 16
  %v4243 = vrot.slane %v4241, 7
  %v4244 = vshll.u32 %v4118, 16
  %v4246 = vor.u32 %v4243, %v4244
  %v4247 = vsel %vm4195, %v4239, %v4246
  %v4248 = vrot.slane %v4243, 4
  %v4250 = vshrl.u32 %v4119, 16
  %v4252 = vrot.slane %v4250, 7
  %v4253 = vshll.u32 %v4119, 16
  %v4255 = vor.u32 %v4252, %v4253
  %v4256 = vsel %vm4195, %v4248, %v4255
  %v4257 = vrot.slane %v4252, 4
  %v4259 = vshrl.u32 %v4120, 16
  %v4261 = vrot.slane %v4259, 7
  %v4262 = vshll.u32 %v4120, 16
  %v4264 = vor.u32 %v4261, %v4262
  %v4265 = vsel %vm4195, %v4257, %v4264
  %v4266 = vrot.slane %v4261, 4
  %v4268 = vshrl.u32 %v4121, 16
  %v4270 = vrot.slane %v4268, 7
  %v4271 = vshll.u32 %v4121, 16
  %v4273 = vor.u32 %v4270, %v4271
  %v4274 = vsel %vm4195, %v4266, %v4273
  %v4275 = vrot.slane %v4270, 4
  %v4277 = vshrl.u32 %v4122, 16
  %v4279 = vrot.slane %v4277, 7
  %v4280 = vshll.u32 %v4122, 16
  %v4282 = vor.u32 %v4279, %v4280
  %v4283 = vsel %vm4195, %v4275, %v4282
  %v4284 = vrot.slane %v4279, 4
  %v4286 = vshrl.u32 %v4123, 16
  %v4288 = vrot.slane %v4286, 7
  %v4289 = vshll.u32 %v4123, 16
  %v4291 = vor.u32 %v4288, %v4289
  %v4292 = vsel %vm4195, %v4284, %v4291
  %v4293 = vrot.slane %v4288, 4
  %v4295 = vshrl.u32 %v4124, 16
  %v4297 = vrot.slane %v4295, 7
  %v4298 = vshll.u32 %v4124, 16
  %v4300 = vor.u32 %v4297, %v4298
  %v4301 = vsel %vm4195, %v4293, %v4300
  %v4302 = vrot.slane %v4297, 4
  %v4304 = vshrl.u32 %v4125, 16
  %v4306 = vrot.slane %v4304, 7
  %v4307 = vshll.u32 %v4125, 16
  %v4309 = vor.u32 %v4306, %v4307
  %v4310 = vsel %vm4195, %v4302, %v4309
  %v4311 = vrot.slane %v4306, 4
  %v4313 = vshrl.u32 %v4126, 16
  %v4315 = vrot.slane %v4313, 7
  %v4316 = vshll.u32 %v4126, 16
  %v4318 = vor.u32 %v4315, %v4316
  %v4319 = vsel %vm4195, %v4311, %v4318
  %v4320 = vrot.slane %v4315, 4
  %v4322 = vshrl.u32 %v4127, 16
  %v4324 = vrot.slane %v4322, 7
  %v4325 = vshll.u32 %v4127, 16
  %v4327 = vor.u32 %v4324, %v4325
  %v4328 = vsel %vm4195, %v4320, %v4327
  %v4329 = vrot.slane %v4324, 4
  %v4331 = vshrl.u32 %v4128, 16
  %v4333 = vrot.slane %v4331, 7
  %v4334 = vshll.u32 %v4128, 16
  %v4336 = vor.u32 %v4333, %v4334
  %v4337 = vsel %vm4195, %v4329, %v4336
  %v4338 = vrot.slane %v4333, 4
  %v4340 = vshrl.u32 %v4129, 16
  %v4342 = vrot.slane %v4340, 7
  %v4343 = vshll.u32 %v4129, 16
  %v4345 = vor.u32 %v4342, %v4343
  %v4346 = vsel %vm4195, %v4338, %v4345
  %v4347 = vrot.slane %v4342, 4
  %v4349 = vshrl.u32 %v4130, 16
  %v4351 = vrot.slane %v4349, 7
  %v4352 = vshll.u32 %v4130, 16
  %v4354 = vor.u32 %v4351, %v4352
  %v4355 = vsel %vm4195, %v4347, %v4354
  %v4356 = vrot.slane %v4351, 4
  %v4358 = vshrl.u32 %v4131, 16
  %v4360 = vrot.slane %v4358, 7
  %v4361 = vshll.u32 %v4131, 16
  %v4363 = vor.u32 %v4360, %v4361
  %v4364 = vsel %vm4195, %v4356, %v4363
  %v4365 = vrot.slane %v4360, 4
  %v4367 = vshrl.u32 %v4132, 16
  %v4369 = vrot.slane %v4367, 7
  %v4370 = vshll.u32 %v4132, 16
  %v4372 = vor.u32 %v4369, %v4370
  %v4373 = vsel %vm4195, %v4365, %v4372
  %v4374 = vrot.slane %v4369, 4
  %v4376 = vshrl.u32 %v4133, 16
  %v4378 = vrot.slane %v4376, 7
  %v4379 = vshll.u32 %v4133, 16
  %v4381 = vor.u32 %v4378, %v4379
  %v4382 = vsel %vm4195, %v4374, %v4381
  %v4383 = vrot.slane %v4378, 4
  %v4385 = vshrl.u32 %v4134, 16
  %v4387 = vrot.slane %v4385, 7
  %v4388 = vshll.u32 %v4134, 16
  %v4390 = vor.u32 %v4387, %v4388
  %v4391 = vsel %vm4195, %v4383, %v4390
  %v4392 = vrot.slane %v4387, 4
  %v4394 = vshrl.u32 %v4135, 16
  %v4396 = vrot.slane %v4394, 7
  %v4397 = vshll.u32 %v4135, 16
  %v4399 = vor.u32 %v4396, %v4397
  %v4400 = vsel %vm4195, %v4392, %v4399
  %v4401 = vrot.slane %v4396, 4
  %v4403 = vshrl.u32 %v4136, 16
  %v4405 = vrot.slane %v4403, 7
  %v4406 = vshll.u32 %v4136, 16
  %v4408 = vor.u32 %v4405, %v4406
  %v4409 = vsel %vm4195, %v4401, %v4408
  %v4410 = vrot.slane %v4405, 4
  %v4412 = vshrl.u32 %v4137, 16
  %v4414 = vrot.slane %v4412, 7
  %v4415 = vshll.u32 %v4137, 16
  %v4417 = vor.u32 %v4414, %v4415
  %v4418 = vsel %vm4195, %v4410, %v4417
  %v4419 = vrot.slane %v4414, 4
  %v4421 = vshrl.u32 %v4138, 16
  %v4423 = vrot.slane %v4421, 7
  %v4424 = vshll.u32 %v4138, 16
  %v4426 = vor.u32 %v4423, %v4424
  %v4427 = vsel %vm4195, %v4419, %v4426
  %v4428 = vrot.slane %v4423, 4
  %v4430 = vshrl.u32 %v4139, 16
  %v4432 = vrot.slane %v4430, 7
  %v4433 = vshll.u32 %v4139, 16
  %v4435 = vor.u32 %v4432, %v4433
  %v4436 = vsel %vm4195, %v4428, %v4435
  %v4437 = vrot.slane %v4432, 4
  %v4439 = vshrl.u32 %v4140, 16
  %v4441 = vrot.slane %v4439, 7
  %v4442 = vshll.u32 %v4140, 16
  %v4444 = vor.u32 %v4441, %v4442
  %v4445 = vsel %vm4195, %v4437, %v4444
  %v4446 = vrot.slane %v4441, 4
  %v4448 = vshrl.u32 %v4141, 16
  %v4450 = vrot.slane %v4448, 7
  %v4451 = vshll.u32 %v4141, 16
  %v4453 = vor.u32 %v4450, %v4451
  %v4454 = vsel %vm4195, %v4446, %v4453
  %v4455 = vrot.slane %v4450, 4
  %v4457 = vshrl.u32 %v4142, 16
  %v4459 = vrot.slane %v4457, 7
  %v4460 = vshll.u32 %v4142, 16
  %v4462 = vor.u32 %v4459, %v4460
  %v4463 = vsel %vm4195, %v4455, %v4462
  %v4464 = vrot.slane %v4459, 4
  %v4466 = vshrl.u32 %v4143, 16
  %v4468 = vrot.slane %v4466, 7
  %v4469 = vshll.u32 %v4143, 16
  %v4471 = vor.u32 %v4468, %v4469
  %v4472 = vsel %vm4195, %v4464, %v4471
  %v4473 = vrot.slane %v4468, 4
  %v4475 = vshrl.u32 %v4144, 16
  %v4477 = vrot.slane %v4475, 7
  %v4478 = vshll.u32 %v4144, 16
  %v4480 = vor.u32 %v4477, %v4478
  %v4481 = vsel %vm4195, %v4473, %v4480
  %v4482 = vrot.slane %v4477, 4
  %v4484 = vshrl.u32 %v4145, 16
  %v4486 = vrot.slane %v4484, 7
  %v4487 = vshll.u32 %v4145, 16
  %v4489 = vor.u32 %v4486, %v4487
  %v4490 = vsel %vm4195, %v4482, %v4489
  %v4491 = vrot.slane %v4486, 4
  %v4493 = vshrl.u32 %v4146, 16
  %v4495 = vrot.slane %v4493, 7
  %v4496 = vshll.u32 %v4146, 16
  %v4498 = vor.u32 %v4495, %v4496
  %v4499 = vsel %vm4195, %v4491, %v4498
  %v4500 = vrot.slane %v4495, 4
  %v4502 = vshrl.u32 %v4147, 16
  %v4504 = vrot.slane %v4502, 7
  %v4505 = vshll.u32 %v4147, 16
  %v4507 = vor.u32 %v4504, %v4505
  %v4508 = vsel %vm4195, %v4500, %v4507
  %v4509 = vrot.slane %v4504, 4
  %v4511 = vshrl.u32 %v4148, 16
  %v4513 = vrot.slane %v4511, 7
  %v4514 = vshll.u32 %v4148, 16
  %v4516 = vor.u32 %v4513, %v4514
  %v4517 = vsel %vm4195, %v4509, %v4516
  %v4518 = vrot.slane %v4513, 4
  %v4520 = vshrl.u32 %v4149, 16
  %v4522 = vrot.slane %v4520, 7
  %v4523 = vshll.u32 %v4149, 16
  %v4525 = vor.u32 %v4522, %v4523
  %v4526 = vsel %vm4195, %v4518, %v4525
  %v4527 = vrot.slane %v4522, 4
  %v4529 = vshrl.u32 %v4150, 16
  %v4531 = vrot.slane %v4529, 7
  %v4532 = vshll.u32 %v4150, 16
  %v4534 = vor.u32 %v4531, %v4532
  %v4535 = vsel %vm4195, %v4527, %v4534
  %v4536 = vrot.slane %v4531, 4
  %v4538 = vshrl.u32 %v4151, 16
  %v4540 = vrot.slane %v4538, 7
  %v4541 = vshll.u32 %v4151, 16
  %v4543 = vor.u32 %v4540, %v4541
  %v4544 = vsel %vm4195, %v4536, %v4543
  %v4545 = vrot.slane %v4540, 4
  %v4547 = vshrl.u32 %v4152, 16
  %v4549 = vrot.slane %v4547, 7
  %v4550 = vshll.u32 %v4152, 16
  %v4552 = vor.u32 %v4549, %v4550
  %v4553 = vsel %vm4195, %v4545, %v4552
  %v4554 = vrot.slane %v4549, 4
  %v4556 = vshrl.u32 %v4153, 16
  %v4558 = vrot.slane %v4556, 7
  %v4559 = vshll.u32 %v4153, 16
  %v4561 = vor.u32 %v4558, %v4559
  %v4562 = vsel %vm4195, %v4554, %v4561
  %v4563 = vrot.slane %v4558, 4
  %v4565 = vshrl.u32 %v4154, 16
  %v4567 = vrot.slane %v4565, 7
  %v4568 = vshll.u32 %v4154, 16
  %v4570 = vor.u32 %v4567, %v4568
  %v4571 = vsel %vm4195, %v4563, %v4570
  %v4572 = vrot.slane %v4567, 4
  %v4574 = vshrl.u32 %v4155, 16
  %v4576 = vrot.slane %v4574, 7
  %v4577 = vshll.u32 %v4155, 16
  %v4579 = vor.u32 %v4576, %v4577
  %v4580 = vsel %vm4195, %v4572, %v4579
  %v4581 = vrot.slane %v4576, 4
  %v4583 = vshrl.u32 %v4156, 16
  %v4585 = vrot.slane %v4583, 7
  %v4586 = vshll.u32 %v4156, 16
  %v4588 = vor.u32 %v4585, %v4586
  %v4589 = vsel %vm4195, %v4581, %v4588
  %v4590 = vrot.slane %v4585, 4
  %v4592 = vshrl.u32 %v4157, 16
  %v4594 = vrot.slane %v4592, 7
  %v4595 = vshll.u32 %v4157, 16
  %v4597 = vor.u32 %v4594, %v4595
  %v4598 = vsel %vm4195, %v4590, %v4597
  %v4599 = vrot.slane %v4594, 4
  %v4601 = vshrl.u32 %v4158, 16
  %v4603 = vrot.slane %v4601, 7
  %v4604 = vshll.u32 %v4158, 16
  %v4606 = vor.u32 %v4603, %v4604
  %v4607 = vsel %vm4195, %v4599, %v4606
  %v4608 = vrot.slane %v4603, 4
  %v4610 = vshrl.u32 %v4159, 16
  %v4612 = vrot.slane %v4610, 7
  %v4613 = vshll.u32 %v4159, 16
  %v4615 = vor.u32 %v4612, %v4613
  %v4616 = vsel %vm4195, %v4608, %v4615
  %v4617 = vrot.slane %v4612, 4
  %v4619 = vshrl.u32 %v4160, 16
  %v4621 = vrot.slane %v4619, 7
  %v4622 = vshll.u32 %v4160, 16
  %v4624 = vor.u32 %v4621, %v4622
  %v4625 = vsel %vm4195, %v4617, %v4624
  %v4626 = vrot.slane %v4621, 4
  %v4628 = vshrl.u32 %v4161, 16
  %v4630 = vrot.slane %v4628, 7
  %v4631 = vshll.u32 %v4161, 16
  %v4633 = vor.u32 %v4630, %v4631
  %v4634 = vsel %vm4195, %v4626, %v4633
  %v4635 = vrot.slane %v4630, 4
  %v4637 = vshrl.u32 %v4162, 16
  %v4639 = vrot.slane %v4637, 7
  %v4640 = vshll.u32 %v4162, 16
  %v4642 = vor.u32 %v4639, %v4640
  %v4643 = vsel %vm4195, %v4635, %v4642
  %v4644 = vrot.slane %v4639, 4
  %v4646 = vshrl.u32 %v4163, 16
  %v4648 = vrot.slane %v4646, 7
  %v4649 = vshll.u32 %v4163, 16
  %v4651 = vor.u32 %v4648, %v4649
  %v4652 = vsel %vm4195, %v4644, %v4651
  %v4653 = vrot.slane %v4648, 4
  %v4655 = vshrl.u32 %v4164, 16
  %v4657 = vrot.slane %v4655, 7
  %v4658 = vshll.u32 %v4164, 16
  %v4660 = vor.u32 %v4657, %v4658
  %v4661 = vsel %vm4195, %v4653, %v4660
  %v4662 = vrot.slane %v4657, 4
  %v4664 = vshrl.u32 %v4165, 16
  %v4666 = vrot.slane %v4664, 7
  %v4667 = vshll.u32 %v4165, 16
  %v4669 = vor.u32 %v4666, %v4667
  %v4670 = vsel %vm4195, %v4662, %v4669
  %v4671 = vrot.slane %v4666, 4
  %v4673 = vshrl.u32 %v4166, 16
  %v4675 = vrot.slane %v4673, 7
  %v4676 = vshll.u32 %v4166, 16
  %v4678 = vor.u32 %v4675, %v4676
  %v4679 = vsel %vm4195, %v4671, %v4678
  %v4680 = vrot.slane %v4675, 4
  %v4682 = vshrl.u32 %v4167, 16
  %v4684 = vrot.slane %v4682, 7
  %v4685 = vshll.u32 %v4167, 16
  %v4687 = vor.u32 %v4684, %v4685
  %v4688 = vsel %vm4195, %v4680, %v4687
  %v4689 = vrot.slane %v4684, 4
  %v4691 = vshrl.u32 %v4168, 16
  %v4693 = vrot.slane %v4691, 7
  %v4694 = vshll.u32 %v4168, 16
  %v4696 = vor.u32 %v4693, %v4694
  %v4697 = vsel %vm4195, %v4689, %v4696
  %v4698 = vrot.slane %v4693, 4
  %v4700 = vshrl.u32 %v4169, 16
  %v4702 = vrot.slane %v4700, 7
  %v4703 = vshll.u32 %v4169, 16
  %v4705 = vor.u32 %v4702, %v4703
  %v4706 = vsel %vm4195, %v4698, %v4705
  %v4707 = vrot.slane %v4702, 4
  %v4709 = vshrl.u32 %v4170, 16
  %v4711 = vrot.slane %v4709, 7
  %v4712 = vshll.u32 %v4170, 16
  %v4714 = vor.u32 %v4711, %v4712
  %v4715 = vsel %vm4195, %v4707, %v4714
  %v4716 = vrot.slane %v4711, 4
  %v4718 = vshrl.u32 %v4171, 16
  %v4720 = vrot.slane %v4718, 7
  %v4721 = vshll.u32 %v4171, 16
  %v4723 = vor.u32 %v4720, %v4721
  %v4724 = vsel %vm4195, %v4716, %v4723
  %v4725 = vrot.slane %v4720, 4
  %v4727 = vshrl.u32 %v4172, 16
  %v4729 = vrot.slane %v4727, 7
  %v4730 = vshll.u32 %v4172, 16
  %v4732 = vor.u32 %v4729, %v4730
  %v4733 = vsel %vm4195, %v4725, %v4732
  %v4734 = vrot.slane %v4729, 4
  %v4736 = vshrl.u32 %v4173, 16
  %v4738 = vrot.slane %v4736, 7
  %v4739 = vshll.u32 %v4173, 16
  %v4741 = vor.u32 %v4738, %v4739
  %v4742 = vsel %vm4195, %v4734, %v4741
  %v4743 = vrot.slane %v4738, 4
  %v4745 = vshrl.u32 %v4174, 16
  %v4747 = vrot.slane %v4745, 7
  %v4748 = vshll.u32 %v4174, 16
  %v4750 = vor.u32 %v4747, %v4748
  %v4751 = vsel %vm4195, %v4743, %v4750
  %v4752 = vrot.slane %v4747, 4
  %v4754 = vshrl.u32 %v4175, 16
  %v4756 = vrot.slane %v4754, 7
  %v4757 = vshll.u32 %v4175, 16
  %v4759 = vor.u32 %v4756, %v4757
  %v4760 = vsel %vm4195, %v4752, %v4759
  %v4761 = vrot.slane %v4756, 4
  %v4763 = vshrl.u32 %v4176, 16
  %v4765 = vrot.slane %v4763, 7
  %v4766 = vshll.u32 %v4176, 16
  %v4768 = vor.u32 %v4765, %v4766
  %v4769 = vsel %vm4195, %v4761, %v4768
  %v4770 = vrot.slane %v4765, 4
  %v4772 = vshrl.u32 %v4177, 16
  %v4774 = vrot.slane %v4772, 7
  %v4775 = vshll.u32 %v4177, 16
  %v4777 = vor.u32 %v4774, %v4775
  %v4778 = vsel %vm4195, %v4770, %v4777
  %v4779 = vrot.slane %v4774, 4
  %v4781 = vshrl.u32 %v4178, 16
  %v4783 = vrot.slane %v4781, 7
  %v4784 = vshll.u32 %v4178, 16
  %v4786 = vor.u32 %v4783, %v4784
  %v4787 = vsel %vm4195, %v4779, %v4786
  %v4788 = vrot.slane %v4783, 4
  %v4790 = vshrl.u32 %v4179, 16
  %v4792 = vrot.slane %v4790, 7
  %v4793 = vshll.u32 %v4179, 16
  %v4795 = vor.u32 %v4792, %v4793
  %v4796 = vsel %vm4195, %v4788, %v4795
  %v4797 = vrot.slane %v4792, 4
  %v4799 = vshrl.u32 %v4180, 16
  %v4801 = vrot.slane %v4799, 7
  %v4802 = vshll.u32 %v4180, 16
  %v4804 = vor.u32 %v4801, %v4802
  %v4805 = vsel %vm4195, %v4797, %v4804
  %v4806 = vrot.slane %v4801, 4
  %v4808 = vshrl.u32 %v4181, 16
  %v4810 = vrot.slane %v4808, 7
  %v4811 = vshll.u32 %v4181, 16
  %v4813 = vor.u32 %v4810, %v4811
  %v4814 = vsel %vm4195, %v4806, %v4813
  %v4815 = vrot.slane %v4810, 4
  %v4817 = vshrl.u32 %v4182, 16
  %v4819 = vrot.slane %v4817, 7
  %v4820 = vshll.u32 %v4182, 16
  %v4822 = vor.u32 %v4819, %v4820
  %v4823 = vsel %vm4195, %v4815, %v4822
  %v4824 = vrot.slane %v4819, 4
  %v4826 = vshrl.u32 %v4183, 16
  %v4828 = vrot.slane %v4826, 7
  %v4829 = vshll.u32 %v4183, 16
  %v4831 = vor.u32 %v4828, %v4829
  %v4832 = vsel %vm4195, %v4824, %v4831
  %v4833 = vrot.slane %v4828, 4
  %v4835 = vshrl.u32 %v4184, 16
  %v4837 = vrot.slane %v4835, 7
  %v4838 = vshll.u32 %v4184, 16
  %v4840 = vor.u32 %v4837, %v4838
  %v4841 = vsel %vm4195, %v4833, %v4840
  %v4842 = vrot.slane %v4837, 4
  %v4844 = vshrl.u32 %v4185, 16
  %v4846 = vrot.slane %v4844, 7
  %v4847 = vshll.u32 %v4185, 16
  %v4849 = vor.u32 %v4846, %v4847
  %v4850 = vsel %vm4195, %v4842, %v4849
  %v4851 = vrot.slane %v4846, 4
  %v4853 = vshrl.u32 %v4186, 16
  %v4855 = vrot.slane %v4853, 7
  %v4856 = vshll.u32 %v4186, 16
  %v4858 = vor.u32 %v4855, %v4856
  %v4859 = vsel %vm4195, %v4851, %v4858
  %v4860 = vrot.slane %v4855, 4
  %v4862 = vshrl.u32 %v4187, 16
  %v4864 = vrot.slane %v4862, 7
  %v4865 = vshll.u32 %v4187, 16
  %v4867 = vor.u32 %v4864, %v4865
  %v4868 = vsel %vm4195, %v4860, %v4867
  %v4869 = vrot.slane %v4864, 4
  %v4871 = vshrl.u32 %v4188, 16
  %v4873 = vrot.slane %v4871, 7
  %v4874 = vshll.u32 %v4188, 16
  %v4876 = vor.u32 %v4873, %v4874
  %v4877 = vsel %vm4195, %v4869, %v4876
  %v4878 = vrot.slane %v4873, 4
  %v4880 = vshrl.u32 %v4189, 16
  %v4882 = vrot.slane %v4880, 7
  %v4883 = vshll.u32 %v4189, 16
  %v4885 = vor.u32 %v4882, %v4883
  %v4886 = vsel %vm4195, %v4878, %v4885
  %v4887 = vrot.slane %v4882, 4
  %v4889 = vshrl.u32 %v4190, 16
  %v4891 = vrot.slane %v4889, 7
  %v4892 = vshll.u32 %v4190, 16
  %v4894 = vor.u32 %v4891, %v4892
  %v4895 = vsel %vm4195, %v4887, %v4894
  %v4896 = vrot.slane %v4891, 4
  %v4898 = vshrl.u32 %v4191, 16
  %v4900 = vrot.slane %v4898, 7
  %v4901 = vshll.u32 %v4191, 16
  %v4903 = vor.u32 %v4900, %v4901
  %v4904 = vsel %vm4195, %v4896, %v4903
  %v4905 = vrot.slane %v4900, 4
  %v4907 = vshrl.u32 %v4192, 16
  %v4909 = vrot.slane %v4907, 7
  %v4910 = vshll.u32 %v4192, 16
  %v4912 = vor.u32 %v4909, %v4910
  %v4913 = vsel %vm4195, %v4905, %v4912
  %v4914 = vrot.slane %v4909, 4
  %v4916 = vshrl.u32 %v4193, 16
  %v4918 = vrot.slane %v4916, 7
  %v4919 = vshll.u32 %v4193, 16
  %v4921 = vor.u32 %v4918, %v4919
  %v4922 = vsel %vm4195, %v4914, %v4921
  %v4923 = vrot.slane %v4918, 4
  %vm5006 = vcmask 125952
  %vm5007 = vsmask.f32 7938
  %vm5008 = vmand %vm5006, %vm5007
  %v5009 = vld [vmem:[#allocation2 + $0x10] sm:$0xf]
  %v5010 = vsel %vm5008, %v4202, %v5009
  %5011 = vst [vmem:[#allocation2 + $0x10] sm:$0xf] %v5010
  %vm5012 = vcmask 125952
  %5013 = vst.msk [vmem:[#allocation2 + $0x14] sm:$0xf] %vm5012, %v4211
  %5014 = vst.msk [vmem:[#allocation2 + $0x18] sm:$0xf] %vm5012, %v4220
  %5015 = vst.msk [vmem:[#allocation2 + $0x1c] sm:$0xf] %vm5012, %v4229
  %5016 = vst.msk [vmem:[#allocation2 + $0x20] sm:$0xf] %vm5012, %v4238
  %5017 = vst.msk [vmem:[#allocation2 + $0x24] sm:$0xf] %vm5012, %v4247
  %5018 = vst.msk [vmem:[#allocation2 + $0x28] sm:$0xf] %vm5012, %v4256
  %5019 = vst.msk [vmem:[#allocation2 + $0x2c] sm:$0xf] %vm5012, %v4265
  %5020 = vst.msk [vmem:[#allocation2 + $0x30] sm:$0xf] %vm5012, %v4274
  %5021 = vst.msk [vmem:[#allocation2 + $0x34] sm:$0xf] %vm5012, %v4283
  %5022 = vst.msk [vmem:[#allocation2 + $0x38] sm:$0xf] %vm5012, %v4292
  %5023 = vst.msk [vmem:[#allocation2 + $0x3c] sm:$0xf] %vm5012, %v4301
  %5024 = vst.msk [vmem:[#allocation2 + $0x40] sm:$0xf] %vm5012, %v4310
  %5025 = vst.msk [vmem:[#allocation2 + $0x44] sm:$0xf] %vm5012, %v4319
  %5026 = vst.msk [vmem:[#allocation2 + $0x48] sm:$0xf] %vm5012, %v4328
  %5027 = vst.msk [vmem:[#allocation2 + $0x4c] sm:$0xf] %vm5012, %v4337
  %5028 = vst.msk [vmem:[#allocation2 + $0x50] sm:$0xf] %vm5012, %v4346
  %5029 = vst.msk [vmem:[#allocation2 + $0x54] sm:$0xf] %vm5012, %v4355
  %5030 = vst.msk [vmem:[#allocation2 + $0x58] sm:$0xf] %vm5012, %v4364
  %5031 = vst.msk [vmem:[#allocation2 + $0x5c] sm:$0xf] %vm5012, %v4373
  %5032 = vst.msk [vmem:[#allocation2 + $0x60] sm:$0xf] %vm5012, %v4382
  %5033 = vst.msk [vmem:[#allocation2 + $0x64] sm:$0xf] %vm5012, %v4391
  %5034 = vst.msk [vmem:[#allocation2 + $0x68] sm:$0xf] %vm5012, %v4400
  %5035 = vst.msk [vmem:[#allocation2 + $0x6c] sm:$0xf] %vm5012, %v4409
  %5036 = vst.msk [vmem:[#allocation2 + $0x70] sm:$0xf] %vm5012, %v4418
  %5037 = vst.msk [vmem:[#allocation2 + $0x74] sm:$0xf] %vm5012, %v4427
  %5038 = vst.msk [vmem:[#allocation2 + $0x78] sm:$0xf] %vm5012, %v4436
  %5039 = vst.msk [vmem:[#allocation2 + $0x7c] sm:$0xf] %vm5012, %v4445
  %5040 = vst.msk [vmem:[#allocation2 + $0x80] sm:$0xf] %vm5012, %v4454
  %5041 = vst.msk [vmem:[#allocation2 + $0x84] sm:$0xf] %vm5012, %v4463
  %5042 = vst.msk [vmem:[#allocation2 + $0x88] sm:$0xf] %vm5012, %v4472
  %5043 = vst.msk [vmem:[#allocation2 + $0x8c] sm:$0xf] %vm5012, %v4481
  %5044 = vst.msk [vmem:[#allocation2 + $0x90] sm:$0xf] %vm5012, %v4490
  %5045 = vst.msk [vmem:[#allocation2 + $0x94] sm:$0xf] %vm5012, %v4499
  %5046 = vst.msk [vmem:[#allocation2 + $0x98] sm:$0xf] %vm5012, %v4508
  %5047 = vst.msk [vmem:[#allocation2 + $0x9c] sm:$0xf] %vm5012, %v4517
  %5048 = vst.msk [vmem:[#allocation2 + $0xa0] sm:$0xf] %vm5012, %v4526
  %5049 = vst.msk [vmem:[#allocation2 + $0xa4] sm:$0xf] %vm5012, %v4535
  %5050 = vst.msk [vmem:[#allocation2 + $0xa8] sm:$0xf] %vm5012, %v4544
  %5051 = vst.msk [vmem:[#allocation2 + $0xac] sm:$0xf] %vm5012, %v4553
  %5052 = vst.msk [vmem:[#allocation2 + $0xb0] sm:$0xf] %vm5012, %v4562
  %5053 = vst.msk [vmem:[#allocation2 + $0xb4] sm:$0xf] %vm5012, %v4571
  %5054 = vst.msk [vmem:[#allocation2 + $0xb8] sm:$0xf] %vm5012, %v4580
  %5055 = vst.msk [vmem:[#allocation2 + $0xbc] sm:$0xf] %vm5012, %v4589
  %5056 = vst.msk [vmem:[#allocation2 + $0xc0] sm:$0xf] %vm5012, %v4598
  %5057 = vst.msk [vmem:[#allocation2 + $0xc4] sm:$0xf] %vm5012, %v4607
  %5058 = vst.msk [vmem:[#allocation2 + $0xc8] sm:$0xf] %vm5012, %v4616
  %5059 = vst.msk [vmem:[#allocation2 + $0xcc] sm:$0xf] %vm5012, %v4625
  %5060 = vst.msk [vmem:[#allocation2 + $0xd0] sm:$0xf] %vm5012, %v4634
  %5061 = vst.msk [vmem:[#allocation2 + $0xd4] sm:$0xf] %vm5012, %v4643
  %5062 = vst.msk [vmem:[#allocation2 + $0xd8] sm:$0xf] %vm5012, %v4652
  %5063 = vst.msk [vmem:[#allocation2 + $0xdc] sm:$0xf] %vm5012, %v4661
  %5064 = vst.msk [vmem:[#allocation2 + $0xe0] sm:$0xf] %vm5012, %v4670
  %5065 = vst.msk [vmem:[#allocation2 + $0xe4] sm:$0xf] %vm5012, %v4679
  %5066 = vst.msk [vmem:[#allocation2 + $0xe8] sm:$0xf] %vm5012, %v4688
  %5067 = vst.msk [vmem:[#allocation2 + $0xec] sm:$0xf] %vm5012, %v4697
  %5068 = vst.msk [vmem:[#allocation2 + $0xf0] sm:$0xf] %vm5012, %v4706
  %5069 = vst.msk [vmem:[#allocation2 + $0xf4] sm:$0xf] %vm5012, %v4715
  %5070 = vst.msk [vmem:[#allocation2 + $0xf8] sm:$0xf] %vm5012, %v4724
  %5071 = vst.msk [vmem:[#allocation2 + $0xfc] sm:$0xf] %vm5012, %v4733
  %5072 = vst.msk [vmem:[#allocation2 + $0x100] sm:$0xf] %vm5012, %v4742
  %5073 = vst.msk [vmem:[#allocation2 + $0x104] sm:$0xf] %vm5012, %v4751
  %5074 = vst.msk [vmem:[#allocation2 + $0x108] sm:$0xf] %vm5012, %v4760
  %5075 = vst.msk [vmem:[#allocation2 + $0x10c] sm:$0xf] %vm5012, %v4769
  %5076 = vst.msk [vmem:[#allocation2 + $0x110] sm:$0xf] %vm5012, %v4778
  %5077 = vst.msk [vmem:[#allocation2 + $0x114] sm:$0xf] %vm5012, %v4787
  %5078 = vst.msk [vmem:[#allocation2 + $0x118] sm:$0xf] %vm5012, %v4796
  %5079 = vst.msk [vmem:[#allocation2 + $0x11c] sm:$0xf] %vm5012, %v4805
  %5080 = vst.msk [vmem:[#allocation2 + $0x120] sm:$0xf] %vm5012, %v4814
  %5081 = vst.msk [vmem:[#allocation2 + $0x124] sm:$0xf] %vm5012, %v4823
  %5082 = vst.msk [vmem:[#allocation2 + $0x128] sm:$0xf] %vm5012, %v4832
  %5083 = vst.msk [vmem:[#allocation2 + $0x12c] sm:$0xf] %vm5012, %v4841
  %5084 = vst.msk [vmem:[#allocation2 + $0x130] sm:$0xf] %vm5012, %v4850
  %5085 = vst.msk [vmem:[#allocation2 + $0x134] sm:$0xf] %vm5012, %v4859
  %5086 = vst.msk [vmem:[#allocation2 + $0x138] sm:$0xf] %vm5012, %v4868
  %5087 = vst.msk [vmem:[#allocation2 + $0x13c] sm:$0xf] %vm5012, %v4877
  %5088 = vst.msk [vmem:[#allocation2 + $0x140] sm:$0xf] %vm5012, %v4886
  %5089 = vst.msk [vmem:[#allocation2 + $0x144] sm:$0xf] %vm5012, %v4895
  %5090 = vst.msk [vmem:[#allocation2 + $0x148] sm:$0xf] %vm5012, %v4904
  %5091 = vst.msk [vmem:[#allocation2 + $0x14c] sm:$0xf] %vm5012, %v4913
  %5092 = vst.msk [vmem:[#allocation2 + $0x150] sm:$0xf] %vm5012, %v4922
  %vm5093 = vcmask 122880
  %vm5094 = vmand %vm5093, %vm3976
  %v5095 = vld [vmem:[#allocation2 + $0x154] sm:$0x1]
  %v5096 = vsel %vm5094, %v4923, %v5095
  %5097 = vst [vmem:[#allocation2 + $0x154] sm:$0x1] %v5096
  %5098 = vrot.lane.b32.xlu0 %v4113, 16
  %v5099 = vpop.permute.xlu0 %5098
  %5100 = vrot.lane.b32.xlu0 %v4114, 16
  %v5101 = vpop.permute.xlu0 %5100
  %5102 = vrot.lane.b32.xlu0 %v4115, 16
  %v5103 = vpop.permute.xlu0 %5102
  %5104 = vrot.lane.b32.xlu0 %v4116, 16
  %v5105 = vpop.permute.xlu0 %5104
  %5106 = vrot.lane.b32.xlu0 %v4117, 16
  %v5107 = vpop.permute.xlu0 %5106
  %5108 = vrot.lane.b32.xlu0 %v4118, 16
  %v5109 = vpop.permute.xlu0 %5108
  %5110 = vrot.lane.b32.xlu0 %v4119, 16
  %v5111 = vpop.permute.xlu0 %5110
  %5112 = vrot.lane.b32.xlu0 %v4120, 16
  %v5113 = vpop.permute.xlu0 %5112
  %5114 = vrot.lane.b32.xlu0 %v4121, 16
  %v5115 = vpop.permute.xlu0 %5114
  %5116 = vrot.lane.b32.xlu0 %v4122, 16
  %v5117 = vpop.permute.xlu0 %5116
  %5118 = vrot.lane.b32.xlu0 %v4123, 16
  %v5119 = vpop.permute.xlu0 %5118
  %5120 = vrot.lane.b32.xlu0 %v4124, 16
  %v5121 = vpop.permute.xlu0 %5120
  %5122 = vrot.lane.b32.xlu0 %v4125, 16
  %v5123 = vpop.permute.xlu0 %5122
  %5124 = vrot.lane.b32.xlu0 %v4126, 16
  %v5125 = vpop.permute.xlu0 %5124
  %5126 = vrot.lane.b32.xlu0 %v4127, 16
  %v5127 = vpop.permute.xlu0 %5126
  %5128 = vrot.lane.b32.xlu0 %v4128, 16
  %v5129 = vpop.permute.xlu0 %5128
  %5130 = vrot.lane.b32.xlu0 %v4129, 16
  %v5131 = vpop.permute.xlu0 %5130
  %5132 = vrot.lane.b32.xlu0 %v4130, 16
  %v5133 = vpop.permute.xlu0 %5132
  %5134 = vrot.lane.b32.xlu0 %v4131, 16
  %v5135 = vpop.permute.xlu0 %5134
  %5136 = vrot.lane.b32.xlu0 %v4132, 16
  %v5137 = vpop.permute.xlu0 %5136
  %5138 = vrot.lane.b32.xlu0 %v4133, 16
  %v5139 = vpop.permute.xlu0 %5138
  %5140 = vrot.lane.b32.xlu0 %v4134, 16
  %v5141 = vpop.permute.xlu0 %5140
  %5142 = vrot.lane.b32.xlu0 %v4135, 16
  %v5143 = vpop.permute.xlu0 %5142
  %5144 = vrot.lane.b32.xlu0 %v4136, 16
  %v5145 = vpop.permute.xlu0 %5144
  %5146 = vrot.lane.b32.xlu0 %v4137, 16
  %v5147 = vpop.permute.xlu0 %5146
  %5148 = vrot.lane.b32.xlu0 %v4138, 16
  %v5149 = vpop.permute.xlu0 %5148
  %5150 = vrot.lane.b32.xlu0 %v4139, 16
  %v5151 = vpop.permute.xlu0 %5150
  %5152 = vrot.lane.b32.xlu0 %v4140, 16
  %v5153 = vpop.permute.xlu0 %5152
  %5154 = vrot.lane.b32.xlu0 %v4141, 16
  %v5155 = vpop.permute.xlu0 %5154
  %5156 = vrot.lane.b32.xlu0 %v4142, 16
  %v5157 = vpop.permute.xlu0 %5156
  %5158 = vrot.lane.b32.xlu0 %v4143, 16
  %v5159 = vpop.permute.xlu0 %5158
  %5160 = vrot.lane.b32.xlu0 %v4144, 16
  %v5161 = vpop.permute.xlu0 %5160
  %5162 = vrot.lane.b32.xlu0 %v4145, 16
  %v5163 = vpop.permute.xlu0 %5162
  %5164 = vrot.lane.b32.xlu0 %v4146, 16
  %v5165 = vpop.permute.xlu0 %5164
  %5166 = vrot.lane.b32.xlu0 %v4147, 16
  %v5167 = vpop.permute.xlu0 %5166
  %5168 = vrot.lane.b32.xlu0 %v4148, 16
  %v5169 = vpop.permute.xlu0 %5168
  %5170 = vrot.lane.b32.xlu0 %v4149, 16
  %v5171 = vpop.permute.xlu0 %5170
  %5172 = vrot.lane.b32.xlu0 %v4150, 16
  %v5173 = vpop.permute.xlu0 %5172
  %5174 = vrot.lane.b32.xlu0 %v4151, 16
  %v5175 = vpop.permute.xlu0 %5174
  %5176 = vrot.lane.b32.xlu0 %v4152, 16
  %v5177 = vpop.permute.xlu0 %5176
  %5178 = vrot.lane.b32.xlu0 %v4153, 16
  %v5179 = vpop.permute.xlu0 %5178
  %5180 = vrot.lane.b32.xlu0 %v4154, 16
  %v5181 = vpop.permute.xlu0 %5180
  %5182 = vrot.lane.b32.xlu0 %v4155, 16
  %v5183 = vpop.permute.xlu0 %5182
  %5184 = vrot.lane.b32.xlu0 %v4156, 16
  %v5185 = vpop.permute.xlu0 %5184
  %5186 = vrot.lane.b32.xlu0 %v4157, 16
  %v5187 = vpop.permute.xlu0 %5186
  %5188 = vrot.lane.b32.xlu0 %v4158, 16
  %v5189 = vpop.permute.xlu0 %5188
  %5190 = vrot.lane.b32.xlu0 %v4159, 16
  %v5191 = vpop.permute.xlu0 %5190
  %5192 = vrot.lane.b32.xlu0 %v4160, 16
  %v5193 = vpop.permute.xlu0 %5192
  %5194 = vrot.lane.b32.xlu0 %v4161, 16
  %v5195 = vpop.permute.xlu0 %5194
  %5196 = vrot.lane.b32.xlu0 %v4162, 16
  %v5197 = vpop.permute.xlu0 %5196
  %5198 = vrot.lane.b32.xlu0 %v4163, 16
  %v5199 = vpop.permute.xlu0 %5198
  %5200 = vrot.lane.b32.xlu0 %v4164, 16
  %v5201 = vpop.permute.xlu0 %5200
  %5202 = vrot.lane.b32.xlu0 %v4165, 16
  %v5203 = vpop.permute.xlu0 %5202
  %5204 = vrot.lane.b32.xlu0 %v4166, 16
  %v5205 = vpop.permute.xlu0 %5204
  %5206 = vrot.lane.b32.xlu0 %v4167, 16
  %v5207 = vpop.permute.xlu0 %5206
  %5208 = vrot.lane.b32.xlu0 %v4168, 16
  %v5209 = vpop.permute.xlu0 %5208
  %5210 = vrot.lane.b32.xlu0 %v4169, 16
  %v5211 = vpop.permute.xlu0 %5210
  %5212 = vrot.lane.b32.xlu0 %v4170, 16
  %v5213 = vpop.permute.xlu0 %5212
  %5214 = vrot.lane.b32.xlu0 %v4171, 16
  %v5215 = vpop.permute.xlu0 %5214
  %5216 = vrot.lane.b32.xlu0 %v4172, 16
  %v5217 = vpop.permute.xlu0 %5216
  %5218 = vrot.lane.b32.xlu0 %v4173, 16
  %v5219 = vpop.permute.xlu0 %5218
  %5220 = vrot.lane.b32.xlu0 %v4174, 16
  %v5221 = vpop.permute.xlu0 %5220
  %5222 = vrot.lane.b32.xlu0 %v4175, 16
  %v5223 = vpop.permute.xlu0 %5222
  %5224 = vrot.lane.b32.xlu0 %v4176, 16
  %v5225 = vpop.permute.xlu0 %5224
  %5226 = vrot.lane.b32.xlu0 %v4177, 16
  %v5227 = vpop.permute.xlu0 %5226
  %5228 = vrot.lane.b32.xlu0 %v4178, 16
  %v5229 = vpop.permute.xlu0 %5228
  %5230 = vrot.lane.b32.xlu0 %v4179, 16
  %v5231 = vpop.permute.xlu0 %5230
  %5232 = vrot.lane.b32.xlu0 %v4180, 16
  %v5233 = vpop.permute.xlu0 %5232
  %5234 = vrot.lane.b32.xlu0 %v4181, 16
  %v5235 = vpop.permute.xlu0 %5234
  %5236 = vrot.lane.b32.xlu0 %v4182, 16
  %v5237 = vpop.permute.xlu0 %5236
  %5238 = vrot.lane.b32.xlu0 %v4183, 16
  %v5239 = vpop.permute.xlu0 %5238
  %5240 = vrot.lane.b32.xlu0 %v4184, 16
  %v5241 = vpop.permute.xlu0 %5240
  %5242 = vrot.lane.b32.xlu0 %v4185, 16
  %v5243 = vpop.permute.xlu0 %5242
  %5244 = vrot.lane.b32.xlu0 %v4186, 16
  %v5245 = vpop.permute.xlu0 %5244
  %5246 = vrot.lane.b32.xlu0 %v4187, 16
  %v5247 = vpop.permute.xlu0 %5246
  %5248 = vrot.lane.b32.xlu0 %v4188, 16
  %v5249 = vpop.permute.xlu0 %5248
  %5250 = vrot.lane.b32.xlu0 %v4189, 16
  %v5251 = vpop.permute.xlu0 %5250
  %5252 = vrot.lane.b32.xlu0 %v4190, 16
  %v5253 = vpop.permute.xlu0 %5252
  %5254 = vrot.lane.b32.xlu0 %v4191, 16
  %v5255 = vpop.permute.xlu0 %5254
  %5256 = vrot.lane.b32.xlu0 %v4192, 16
  %v5257 = vpop.permute.xlu0 %5256
  %5258 = vrot.lane.b32.xlu0 %v4193, 16
  %v5259 = vpop.permute.xlu0 %5258
  %vm5341 = vcmask 257152
  %5342 = vst.msk [vmem:[#allocation2 + $0x10] sm:$0xf] %vm5341, %v5099
  %5343 = vst.msk [vmem:[#allocation2 + $0x14] sm:$0xf] %vm5341, %v5101
  %5344 = vst.msk [vmem:[#allocation2 + $0x18] sm:$0xf] %vm5341, %v5103
  %5345 = vst.msk [vmem:[#allocation2 + $0x1c] sm:$0xf] %vm5341, %v5105
  %5346 = vst.msk [vmem:[#allocation2 + $0x20] sm:$0xf] %vm5341, %v5107
  %5347 = vst.msk [vmem:[#allocation2 + $0x24] sm:$0xf] %vm5341, %v5109
  %5348 = vst.msk [vmem:[#allocation2 + $0x28] sm:$0xf] %vm5341, %v5111
  %5349 = vst.msk [vmem:[#allocation2 + $0x2c] sm:$0xf] %vm5341, %v5113
  %5350 = vst.msk [vmem:[#allocation2 + $0x30] sm:$0xf] %vm5341, %v5115
  %5351 = vst.msk [vmem:[#allocation2 + $0x34] sm:$0xf] %vm5341, %v5117
  %5352 = vst.msk [vmem:[#allocation2 + $0x38] sm:$0xf] %vm5341, %v5119
  %5353 = vst.msk [vmem:[#allocation2 + $0x3c] sm:$0xf] %vm5341, %v5121
  %5354 = vst.msk [vmem:[#allocation2 + $0x40] sm:$0xf] %vm5341, %v5123
  %5355 = vst.msk [vmem:[#allocation2 + $0x44] sm:$0xf] %vm5341, %v5125
  %5356 = vst.msk [vmem:[#allocation2 + $0x48] sm:$0xf] %vm5341, %v5127
  %5357 = vst.msk [vmem:[#allocation2 + $0x4c] sm:$0xf] %vm5341, %v5129
  %5358 = vst.msk [vmem:[#allocation2 + $0x50] sm:$0xf] %vm5341, %v5131
  %5359 = vst.msk [vmem:[#allocation2 + $0x54] sm:$0xf] %vm5341, %v5133
  %5360 = vst.msk [vmem:[#allocation2 + $0x58] sm:$0xf] %vm5341, %v5135
  %5361 = vst.msk [vmem:[#allocation2 + $0x5c] sm:$0xf] %vm5341, %v5137
  %5362 = vst.msk [vmem:[#allocation2 + $0x60] sm:$0xf] %vm5341, %v5139
  %5363 = vst.msk [vmem:[#allocation2 + $0x64] sm:$0xf] %vm5341, %v5141
  %5364 = vst.msk [vmem:[#allocation2 + $0x68] sm:$0xf] %vm5341, %v5143
  %5365 = vst.msk [vmem:[#allocation2 + $0x6c] sm:$0xf] %vm5341, %v5145
  %5366 = vst.msk [vmem:[#allocation2 + $0x70] sm:$0xf] %vm5341, %v5147
  %5367 = vst.msk [vmem:[#allocation2 + $0x74] sm:$0xf] %vm5341, %v5149
  %5368 = vst.msk [vmem:[#allocation2 + $0x78] sm:$0xf] %vm5341, %v5151
  %5369 = vst.msk [vmem:[#allocation2 + $0x7c] sm:$0xf] %vm5341, %v5153
  %5370 = vst.msk [vmem:[#allocation2 + $0x80] sm:$0xf] %vm5341, %v5155
  %5371 = vst.msk [vmem:[#allocation2 + $0x84] sm:$0xf] %vm5341, %v5157
  %5372 = vst.msk [vmem:[#allocation2 + $0x88] sm:$0xf] %vm5341, %v5159
  %5373 = vst.msk [vmem:[#allocation2 + $0x8c] sm:$0xf] %vm5341, %v5161
  %5374 = vst.msk [vmem:[#allocation2 + $0x90] sm:$0xf] %vm5341, %v5163
  %5375 = vst.msk [vmem:[#allocation2 + $0x94] sm:$0xf] %vm5341, %v5165
  %5376 = vst.msk [vmem:[#allocation2 + $0x98] sm:$0xf] %vm5341, %v5167
  %5377 = vst.msk [vmem:[#allocation2 + $0x9c] sm:$0xf] %vm5341, %v5169
  %5378 = vst.msk [vmem:[#allocation2 + $0xa0] sm:$0xf] %vm5341, %v5171
  %5379 = vst.msk [vmem:[#allocation2 + $0xa4] sm:$0xf] %vm5341, %v5173
  %5380 = vst.msk [vmem:[#allocation2 + $0xa8] sm:$0xf] %vm5341, %v5175
  %5381 = vst.msk [vmem:[#allocation2 + $0xac] sm:$0xf] %vm5341, %v5177
  %5382 = vst.msk [vmem:[#allocation2 + $0xb0] sm:$0xf] %vm5341, %v5179
  %5383 = vst.msk [vmem:[#allocation2 + $0xb4] sm:$0xf] %vm5341, %v5181
  %5384 = vst.msk [vmem:[#allocation2 + $0xb8] sm:$0xf] %vm5341, %v5183
  %5385 = vst.msk [vmem:[#allocation2 + $0xbc] sm:$0xf] %vm5341, %v5185
  %5386 = vst.msk [vmem:[#allocation2 + $0xc0] sm:$0xf] %vm5341, %v5187
  %5387 = vst.msk [vmem:[#allocation2 + $0xc4] sm:$0xf] %vm5341, %v5189
  %5388 = vst.msk [vmem:[#allocation2 + $0xc8] sm:$0xf] %vm5341, %v5191
  %5389 = vst.msk [vmem:[#allocation2 + $0xcc] sm:$0xf] %vm5341, %v5193
  %5390 = vst.msk [vmem:[#allocation2 + $0xd0] sm:$0xf] %vm5341, %v5195
  %5391 = vst.msk [vmem:[#allocation2 + $0xd4] sm:$0xf] %vm5341, %v5197
  %5392 = vst.msk [vmem:[#allocation2 + $0xd8] sm:$0xf] %vm5341, %v5199
  %5393 = vst.msk [vmem:[#allocation2 + $0xdc] sm:$0xf] %vm5341, %v5201
  %5394 = vst.msk [vmem:[#allocation2 + $0xe0] sm:$0xf] %vm5341, %v5203
  %5395 = vst.msk [vmem:[#allocation2 + $0xe4] sm:$0xf] %vm5341, %v5205
  %5396 = vst.msk [vmem:[#allocation2 + $0xe8] sm:$0xf] %vm5341, %v5207
  %5397 = vst.msk [vmem:[#allocation2 + $0xec] sm:$0xf] %vm5341, %v5209
  %5398 = vst.msk [vmem:[#allocation2 + $0xf0] sm:$0xf] %vm5341, %v5211
  %5399 = vst.msk [vmem:[#allocation2 + $0xf4] sm:$0xf] %vm5341, %v5213
  %5400 = vst.msk [vmem:[#allocation2 + $0xf8] sm:$0xf] %vm5341, %v5215
  %5401 = vst.msk [vmem:[#allocation2 + $0xfc] sm:$0xf] %vm5341, %v5217
  %5402 = vst.msk [vmem:[#allocation2 + $0x100] sm:$0xf] %vm5341, %v5219
  %5403 = vst.msk [vmem:[#allocation2 + $0x104] sm:$0xf] %vm5341, %v5221
  %5404 = vst.msk [vmem:[#allocation2 + $0x108] sm:$0xf] %vm5341, %v5223
  %5405 = vst.msk [vmem:[#allocation2 + $0x10c] sm:$0xf] %vm5341, %v5225
  %5406 = vst.msk [vmem:[#allocation2 + $0x110] sm:$0xf] %vm5341, %v5227
  %5407 = vst.msk [vmem:[#allocation2 + $0x114] sm:$0xf] %vm5341, %v5229
  %5408 = vst.msk [vmem:[#allocation2 + $0x118] sm:$0xf] %vm5341, %v5231
  %5409 = vst.msk [vmem:[#allocation2 + $0x11c] sm:$0xf] %vm5341, %v5233
  %5410 = vst.msk [vmem:[#allocation2 + $0x120] sm:$0xf] %vm5341, %v5235
  %5411 = vst.msk [vmem:[#allocation2 + $0x124] sm:$0xf] %vm5341, %v5237
  %5412 = vst.msk [vmem:[#allocation2 + $0x128] sm:$0xf] %vm5341, %v5239
  %5413 = vst.msk [vmem:[#allocation2 + $0x12c] sm:$0xf] %vm5341, %v5241
  %5414 = vst.msk [vmem:[#allocation2 + $0x130] sm:$0xf] %vm5341, %v5243
  %5415 = vst.msk [vmem:[#allocation2 + $0x134] sm:$0xf] %vm5341, %v5245
  %5416 = vst.msk [vmem:[#allocation2 + $0x138] sm:$0xf] %vm5341, %v5247
  %5417 = vst.msk [vmem:[#allocation2 + $0x13c] sm:$0xf] %vm5341, %v5249
  %5418 = vst.msk [vmem:[#allocation2 + $0x140] sm:$0xf] %vm5341, %v5251
  %5419 = vst.msk [vmem:[#allocation2 + $0x144] sm:$0xf] %vm5341, %v5253
  %5420 = vst.msk [vmem:[#allocation2 + $0x148] sm:$0xf] %vm5341, %v5255
  %5421 = vst.msk [vmem:[#allocation2 + $0x14c] sm:$0xf] %vm5341, %v5257
  %5422 = vst.msk [vmem:[#allocation2 + $0x150] sm:$0xf] %vm5341, %v5259
  %vm5423 = vsmask.f32 3328
  %vm5424 = vsmask.f32 7440
  %vm5425 = vmor %vm5423, %vm5424
  %v5426 = vrot.slane %v4200, 5
  %v5427 = vrot.slane %v4197, 4
  %v5428 = vor.u32 %v5427, %v5426
  %v5429 = vrot.slane %v5428, 4
  %v5430 = vrot.slane %v4208, 5
  %v5431 = vsel %vm5425, %v5429, %v5430
  %v5432 = vrot.slane %v4205, 4
  %v5433 = vor.u32 %v5432, %v5430
  %v5434 = vrot.slane %v5433, 4
  %v5435 = vrot.slane %v4217, 5
  %v5436 = vsel %vm5425, %v5434, %v5435
  %v5437 = vrot.slane %v4214, 4
  %v5438 = vor.u32 %v5437, %v5435
  %v5439 = vrot.slane %v5438, 4
  %v5440 = vrot.slane %v4226, 5
  %v5441 = vsel %vm5425, %v5439, %v5440
  %v5442 = vrot.slane %v4223, 4
  %v5443 = vor.u32 %v5442, %v5440
  %v5444 = vrot.slane %v5443, 4
  %v5445 = vrot.slane %v4235, 5
  %v5446 = vsel %vm5425, %v5444, %v5445
  %v5447 = vrot.slane %v4232, 4
  %v5448 = vor.u32 %v5447, %v5445
  %v5449 = vrot.slane %v5448, 4
  %v5450 = vrot.slane %v4244, 5
  %v5451 = vsel %vm5425, %v5449, %v5450
  %v5452 = vrot.slane %v4241, 4
  %v5453 = vor.u32 %v5452, %v5450
  %v5454 = vrot.slane %v5453, 4
  %v5455 = vrot.slane %v4253, 5
  %v5456 = vsel %vm5425, %v5454, %v5455
  %v5457 = vrot.slane %v4250, 4
  %v5458 = vor.u32 %v5457, %v5455
  %v5459 = vrot.slane %v5458, 4
  %v5460 = vrot.slane %v4262, 5
  %v5461 = vsel %vm5425, %v5459, %v5460
  %v5462 = vrot.slane %v4259, 4
  %v5463 = vor.u32 %v5462, %v5460
  %v5464 = vrot.slane %v5463, 4
  %v5465 = vrot.slane %v4271, 5
  %v5466 = vsel %vm5425, %v5464, %v5465
  %v5467 = vrot.slane %v4268, 4
  %v5468 = vor.u32 %v5467, %v5465
  %v5469 = vrot.slane %v5468, 4
  %v5470 = vrot.slane %v4280, 5
  %v5471 = vsel %vm5425, %v5469, %v5470
  %v5472 = vrot.slane %v4277, 4
  %v5473 = vor.u32 %v5472, %v5470
  %v5474 = vrot.slane %v5473, 4
  %v5475 = vrot.slane %v4289, 5
  %v5476 = vsel %vm5425, %v5474, %v5475
  %v5477 = vrot.slane %v4286, 4
  %v5478 = vor.u32 %v5477, %v5475
  %v5479 = vrot.slane %v5478, 4
  %v5480 = vrot.slane %v4298, 5
  %v5481 = vsel %vm5425, %v5479, %v5480
  %v5482 = vrot.slane %v4295, 4
  %v5483 = vor.u32 %v5482, %v5480
  %v5484 = vrot.slane %v5483, 4
  %v5485 = vrot.slane %v4307, 5
  %v5486 = vsel %vm5425, %v5484, %v5485
  %v5487 = vrot.slane %v4304, 4
  %v5488 = vor.u32 %v5487, %v5485
  %v5489 = vrot.slane %v5488, 4
  %v5490 = vrot.slane %v4316, 5
  %v5491 = vsel %vm5425, %v5489, %v5490
  %v5492 = vrot.slane %v4313, 4
  %v5493 = vor.u32 %v5492, %v5490
  %v5494 = vrot.slane %v5493, 4
  %v5495 = vrot.slane %v4325, 5
  %v5496 = vsel %vm5425, %v5494, %v5495
  %v5497 = vrot.slane %v4322, 4
  %v5498 = vor.u32 %v5497, %v5495
  %v5499 = vrot.slane %v5498, 4
  %v5500 = vrot.slane %v4334, 5
  %v5501 = vsel %vm5425, %v5499, %v5500
  %v5502 = vrot.slane %v4331, 4
  %v5503 = vor.u32 %v5502, %v5500
  %v5504 = vrot.slane %v5503, 4
  %v5505 = vrot.slane %v4343, 5
  %v5506 = vsel %vm5425, %v5504, %v5505
  %v5507 = vrot.slane %v4340, 4
  %v5508 = vor.u32 %v5507, %v5505
  %v5509 = vrot.slane %v5508, 4
  %v5510 = vrot.slane %v4352, 5
  %v5511 = vsel %vm5425, %v5509, %v5510
  %v5512 = vrot.slane %v4349, 4
  %v5513 = vor.u32 %v5512, %v5510
  %v5514 = vrot.slane %v5513, 4
  %v5515 = vrot.slane %v4361, 5
  %v5516 = vsel %vm5425, %v5514, %v5515
  %v5517 = vrot.slane %v4358, 4
  %v5518 = vor.u32 %v5517, %v5515
  %v5519 = vrot.slane %v5518, 4
  %v5520 = vrot.slane %v4370, 5
  %v5521 = vsel %vm5425, %v5519, %v5520
  %v5522 = vrot.slane %v4367, 4
  %v5523 = vor.u32 %v5522, %v5520
  %v5524 = vrot.slane %v5523, 4
  %v5525 = vrot.slane %v4379, 5
  %v5526 = vsel %vm5425, %v5524, %v5525
  %v5527 = vrot.slane %v4376, 4
  %v5528 = vor.u32 %v5527, %v5525
  %v5529 = vrot.slane %v5528, 4
  %v5530 = vrot.slane %v4388, 5
  %v5531 = vsel %vm5425, %v5529, %v5530
  %v5532 = vrot.slane %v4385, 4
  %v5533 = vor.u32 %v5532, %v5530
  %v5534 = vrot.slane %v5533, 4
  %v5535 = vrot.slane %v4397, 5
  %v5536 = vsel %vm5425, %v5534, %v5535
  %v5537 = vrot.slane %v4394, 4
  %v5538 = vor.u32 %v5537, %v5535
  %v5539 = vrot.slane %v5538, 4
  %v5540 = vrot.slane %v4406, 5
  %v5541 = vsel %vm5425, %v5539, %v5540
  %v5542 = vrot.slane %v4403, 4
  %v5543 = vor.u32 %v5542, %v5540
  %v5544 = vrot.slane %v5543, 4
  %v5545 = vrot.slane %v4415, 5
  %v5546 = vsel %vm5425, %v5544, %v5545
  %v5547 = vrot.slane %v4412, 4
  %v5548 = vor.u32 %v5547, %v5545
  %v5549 = vrot.slane %v5548, 4
  %v5550 = vrot.slane %v4424, 5
  %v5551 = vsel %vm5425, %v5549, %v5550
  %v5552 = vrot.slane %v4421, 4
  %v5553 = vor.u32 %v5552, %v5550
  %v5554 = vrot.slane %v5553, 4
  %v5555 = vrot.slane %v4433, 5
  %v5556 = vsel %vm5425, %v5554, %v5555
  %v5557 = vrot.slane %v4430, 4
  %v5558 = vor.u32 %v5557, %v5555
  %v5559 = vrot.slane %v5558, 4
  %v5560 = vrot.slane %v4442, 5
  %v5561 = vsel %vm5425, %v5559, %v5560
  %v5562 = vrot.slane %v4439, 4
  %v5563 = vor.u32 %v5562, %v5560
  %v5564 = vrot.slane %v5563, 4
  %v5565 = vrot.slane %v4451, 5
  %v5566 = vsel %vm5425, %v5564, %v5565
  %v5567 = vrot.slane %v4448, 4
  %v5568 = vor.u32 %v5567, %v5565
  %v5569 = vrot.slane %v5568, 4
  %v5570 = vrot.slane %v4460, 5
  %v5571 = vsel %vm5425, %v5569, %v5570
  %v5572 = vrot.slane %v4457, 4
  %v5573 = vor.u32 %v5572, %v5570
  %v5574 = vrot.slane %v5573, 4
  %v5575 = vrot.slane %v4469, 5
  %v5576 = vsel %vm5425, %v5574, %v5575
  %v5577 = vrot.slane %v4466, 4
  %v5578 = vor.u32 %v5577, %v5575
  %v5579 = vrot.slane %v5578, 4
  %v5580 = vrot.slane %v4478, 5
  %v5581 = vsel %vm5425, %v5579, %v5580
  %v5582 = vrot.slane %v4475, 4
  %v5583 = vor.u32 %v5582, %v5580
  %v5584 = vrot.slane %v5583, 4
  %v5585 = vrot.slane %v4487, 5
  %v5586 = vsel %vm5425, %v5584, %v5585
  %v5587 = vrot.slane %v4484, 4
  %v5588 = vor.u32 %v5587, %v5585
  %v5589 = vrot.slane %v5588, 4
  %v5590 = vrot.slane %v4496, 5
  %v5591 = vsel %vm5425, %v5589, %v5590
  %v5592 = vrot.slane %v4493, 4
  %v5593 = vor.u32 %v5592, %v5590
  %v5594 = vrot.slane %v5593, 4
  %v5595 = vrot.slane %v4505, 5
  %v5596 = vsel %vm5425, %v5594, %v5595
  %v5597 = vrot.slane %v4502, 4
  %v5598 = vor.u32 %v5597, %v5595
  %v5599 = vrot.slane %v5598, 4
  %v5600 = vrot.slane %v4514, 5
  %v5601 = vsel %vm5425, %v5599, %v5600
  %v5602 = vrot.slane %v4511, 4
  %v5603 = vor.u32 %v5602, %v5600
  %v5604 = vrot.slane %v5603, 4
  %v5605 = vrot.slane %v4523, 5
  %v5606 = vsel %vm5425, %v5604, %v5605
  %v5607 = vrot.slane %v4520, 4
  %v5608 = vor.u32 %v5607, %v5605
  %v5609 = vrot.slane %v5608, 4
  %v5610 = vrot.slane %v4532, 5
  %v5611 = vsel %vm5425, %v5609, %v5610
  %v5612 = vrot.slane %v4529, 4
  %v5613 = vor.u32 %v5612, %v5610
  %v5614 = vrot.slane %v5613, 4
  %v5615 = vrot.slane %v4541, 5
  %v5616 = vsel %vm5425, %v5614, %v5615
  %v5617 = vrot.slane %v4538, 4
  %v5618 = vor.u32 %v5617, %v5615
  %v5619 = vrot.slane %v5618, 4
  %v5620 = vrot.slane %v4550, 5
  %v5621 = vsel %vm5425, %v5619, %v5620
  %v5622 = vrot.slane %v4547, 4
  %v5623 = vor.u32 %v5622, %v5620
  %v5624 = vrot.slane %v5623, 4
  %v5625 = vrot.slane %v4559, 5
  %v5626 = vsel %vm5425, %v5624, %v5625
  %v5627 = vrot.slane %v4556, 4
  %v5628 = vor.u32 %v5627, %v5625
  %v5629 = vrot.slane %v5628, 4
  %v5630 = vrot.slane %v4568, 5
  %v5631 = vsel %vm5425, %v5629, %v5630
  %v5632 = vrot.slane %v4565, 4
  %v5633 = vor.u32 %v5632, %v5630
  %v5634 = vrot.slane %v5633, 4
  %v5635 = vrot.slane %v4577, 5
  %v5636 = vsel %vm5425, %v5634, %v5635
  %v5637 = vrot.slane %v4574, 4
  %v5638 = vor.u32 %v5637, %v5635
  %v5639 = vrot.slane %v5638, 4
  %v5640 = vrot.slane %v4586, 5
  %v5641 = vsel %vm5425, %v5639, %v5640
  %v5642 = vrot.slane %v4583, 4
  %v5643 = vor.u32 %v5642, %v5640
  %v5644 = vrot.slane %v5643, 4
  %v5645 = vrot.slane %v4595, 5
  %v5646 = vsel %vm5425, %v5644, %v5645
  %v5647 = vrot.slane %v4592, 4
  %v5648 = vor.u32 %v5647, %v5645
  %v5649 = vrot.slane %v5648, 4
  %v5650 = vrot.slane %v4604, 5
  %v5651 = vsel %vm5425, %v5649, %v5650
  %v5652 = vrot.slane %v4601, 4
  %v5653 = vor.u32 %v5652, %v5650
  %v5654 = vrot.slane %v5653, 4
  %v5655 = vrot.slane %v4613, 5
  %v5656 = vsel %vm5425, %v5654, %v5655
  %v5657 = vrot.slane %v4610, 4
  %v5658 = vor.u32 %v5657, %v5655
  %v5659 = vrot.slane %v5658, 4
  %v5660 = vrot.slane %v4622, 5
  %v5661 = vsel %vm5425, %v5659, %v5660
  %v5662 = vrot.slane %v4619, 4
  %v5663 = vor.u32 %v5662, %v5660
  %v5664 = vrot.slane %v5663, 4
  %v5665 = vrot.slane %v4631, 5
  %v5666 = vsel %vm5425, %v5664, %v5665
  %v5667 = vrot.slane %v4628, 4
  %v5668 = vor.u32 %v5667, %v5665
  %v5669 = vrot.slane %v5668, 4
  %v5670 = vrot.slane %v4640, 5
  %v5671 = vsel %vm5425, %v5669, %v5670
  %v5672 = vrot.slane %v4637, 4
  %v5673 = vor.u32 %v5672, %v5670
  %v5674 = vrot.slane %v5673, 4
  %v5675 = vrot.slane %v4649, 5
  %v5676 = vsel %vm5425, %v5674, %v5675
  %v5677 = vrot.slane %v4646, 4
  %v5678 = vor.u32 %v5677, %v5675
  %v5679 = vrot.slane %v5678, 4
  %v5680 = vrot.slane %v4658, 5
  %v5681 = vsel %vm5425, %v5679, %v5680
  %v5682 = vrot.slane %v4655, 4
  %v5683 = vor.u32 %v5682, %v5680
  %v5684 = vrot.slane %v5683, 4
  %v5685 = vrot.slane %v4667, 5
  %v5686 = vsel %vm5425, %v5684, %v5685
  %v5687 = vrot.slane %v4664, 4
  %v5688 = vor.u32 %v5687, %v5685
  %v5689 = vrot.slane %v5688, 4
  %v5690 = vrot.slane %v4676, 5
  %v5691 = vsel %vm5425, %v5689, %v5690
  %v5692 = vrot.slane %v4673, 4
  %v5693 = vor.u32 %v5692, %v5690
  %v5694 = vrot.slane %v5693, 4
  %v5695 = vrot.slane %v4685, 5
  %v5696 = vsel %vm5425, %v5694, %v5695
  %v5697 = vrot.slane %v4682, 4
  %v5698 = vor.u32 %v5697, %v5695
  %v5699 = vrot.slane %v5698, 4
  %v5700 = vrot.slane %v4694, 5
  %v5701 = vsel %vm5425, %v5699, %v5700
  %v5702 = vrot.slane %v4691, 4
  %v5703 = vor.u32 %v5702, %v5700
  %v5704 = vrot.slane %v5703, 4
  %v5705 = vrot.slane %v4703, 5
  %v5706 = vsel %vm5425, %v5704, %v5705
  %v5707 = vrot.slane %v4700, 4
  %v5708 = vor.u32 %v5707, %v5705
  %v5709 = vrot.slane %v5708, 4
  %v5710 = vrot.slane %v4712, 5
  %v5711 = vsel %vm5425, %v5709, %v5710
  %v5712 = vrot.slane %v4709, 4
  %v5713 = vor.u32 %v5712, %v5710
  %v5714 = vrot.slane %v5713, 4
  %v5715 = vrot.slane %v4721, 5
  %v5716 = vsel %vm5425, %v5714, %v5715
  %v5717 = vrot.slane %v4718, 4
  %v5718 = vor.u32 %v5717, %v5715
  %v5719 = vrot.slane %v5718, 4
  %v5720 = vrot.slane %v4730, 5
  %v5721 = vsel %vm5425, %v5719, %v5720
  %v5722 = vrot.slane %v4727, 4
  %v5723 = vor.u32 %v5722, %v5720
  %v5724 = vrot.slane %v5723, 4
  %v5725 = vrot.slane %v4739, 5
  %v5726 = vsel %vm5425, %v5724, %v5725
  %v5727 = vrot.slane %v4736, 4
  %v5728 = vor.u32 %v5727, %v5725
  %v5729 = vrot.slane %v5728, 4
  %v5730 = vrot.slane %v4748, 5
  %v5731 = vsel %vm5425, %v5729, %v5730
  %v5732 = vrot.slane %v4745, 4
  %v5733 = vor.u32 %v5732, %v5730
  %v5734 = vrot.slane %v5733, 4
  %v5735 = vrot.slane %v4757, 5
  %v5736 = vsel %vm5425, %v5734, %v5735
  %v5737 = vrot.slane %v4754, 4
  %v5738 = vor.u32 %v5737, %v5735
  %v5739 = vrot.slane %v5738, 4
  %v5740 = vrot.slane %v4766, 5
  %v5741 = vsel %vm5425, %v5739, %v5740
  %v5742 = vrot.slane %v4763, 4
  %v5743 = vor.u32 %v5742, %v5740
  %v5744 = vrot.slane %v5743, 4
  %v5745 = vrot.slane %v4775, 5
  %v5746 = vsel %vm5425, %v5744, %v5745
  %v5747 = vrot.slane %v4772, 4
  %v5748 = vor.u32 %v5747, %v5745
  %v5749 = vrot.slane %v5748, 4
  %v5750 = vrot.slane %v4784, 5
  %v5751 = vsel %vm5425, %v5749, %v5750
  %v5752 = vrot.slane %v4781, 4
  %v5753 = vor.u32 %v5752, %v5750
  %v5754 = vrot.slane %v5753, 4
  %v5755 = vrot.slane %v4793, 5
  %v5756 = vsel %vm5425, %v5754, %v5755
  %v5757 = vrot.slane %v4790, 4
  %v5758 = vor.u32 %v5757, %v5755
  %v5759 = vrot.slane %v5758, 4
  %v5760 = vrot.slane %v4802, 5
  %v5761 = vsel %vm5425, %v5759, %v5760
  %v5762 = vrot.slane %v4799, 4
  %v5763 = vor.u32 %v5762, %v5760
  %v5764 = vrot.slane %v5763, 4
  %v5765 = vrot.slane %v4811, 5
  %v5766 = vsel %vm5425, %v5764, %v5765
  %v5767 = vrot.slane %v4808, 4
  %v5768 = vor.u32 %v5767, %v5765
  %v5769 = vrot.slane %v5768, 4
  %v5770 = vrot.slane %v4820, 5
  %v5771 = vsel %vm5425, %v5769, %v5770
  %v5772 = vrot.slane %v4817, 4
  %v5773 = vor.u32 %v5772, %v5770
  %v5774 = vrot.slane %v5773, 4
  %v5775 = vrot.slane %v4829, 5
  %v5776 = vsel %vm5425, %v5774, %v5775
  %v5777 = vrot.slane %v4826, 4
  %v5778 = vor.u32 %v5777, %v5775
  %v5779 = vrot.slane %v5778, 4
  %v5780 = vrot.slane %v4838, 5
  %v5781 = vsel %vm5425, %v5779, %v5780
  %v5782 = vrot.slane %v4835, 4
  %v5783 = vor.u32 %v5782, %v5780
  %v5784 = vrot.slane %v5783, 4
  %v5785 = vrot.slane %v4847, 5
  %v5786 = vsel %vm5425, %v5784, %v5785
  %v5787 = vrot.slane %v4844, 4
  %v5788 = vor.u32 %v5787, %v5785
  %v5789 = vrot.slane %v5788, 4
  %v5790 = vrot.slane %v4856, 5
  %v5791 = vsel %vm5425, %v5789, %v5790
  %v5792 = vrot.slane %v4853, 4
  %v5793 = vor.u32 %v5792, %v5790
  %v5794 = vrot.slane %v5793, 4
  %v5795 = vrot.slane %v4865, 5
  %v5796 = vsel %vm5425, %v5794, %v5795
  %v5797 = vrot.slane %v4862, 4
  %v5798 = vor.u32 %v5797, %v5795
  %v5799 = vrot.slane %v5798, 4
  %v5800 = vrot.slane %v4874, 5
  %v5801 = vsel %vm5425, %v5799, %v5800
  %v5802 = vrot.slane %v4871, 4
  %v5803 = vor.u32 %v5802, %v5800
  %v5804 = vrot.slane %v5803, 4
  %v5805 = vrot.slane %v4883, 5
  %v5806 = vsel %vm5425, %v5804, %v5805
  %v5807 = vrot.slane %v4880, 4
  %v5808 = vor.u32 %v5807, %v5805
  %v5809 = vrot.slane %v5808, 4
  %v5810 = vrot.slane %v4892, 5
  %v5811 = vsel %vm5425, %v5809, %v5810
  %v5812 = vrot.slane %v4889, 4
  %v5813 = vor.u32 %v5812, %v5810
  %v5814 = vrot.slane %v5813, 4
  %v5815 = vrot.slane %v4901, 5
  %v5816 = vsel %vm5425, %v5814, %v5815
  %v5817 = vrot.slane %v4898, 4
  %v5818 = vor.u32 %v5817, %v5815
  %v5819 = vrot.slane %v5818, 4
  %v5820 = vrot.slane %v4910, 5
  %v5821 = vsel %vm5425, %v5819, %v5820
  %v5822 = vrot.slane %v4907, 4
  %v5823 = vor.u32 %v5822, %v5820
  %v5824 = vrot.slane %v5823, 4
  %v5825 = vrot.slane %v4919, 5
  %v5826 = vsel %vm5425, %v5824, %v5825
  %v5827 = vrot.slane %v4916, 4
  %v5828 = vor.u32 %v5827, %v5825
  %v5829 = vrot.slane %v5828, 4
  %5830 = vrot.lane.b32.xlu0 %v5426, 32
  %v5831 = vpop.permute.xlu0 %5830
  %5832 = vrot.lane.b32.xlu0 %v5431, 32
  %v5833 = vpop.permute.xlu0 %5832
  %5834 = vrot.lane.b32.xlu0 %v5436, 32
  %v5835 = vpop.permute.xlu0 %5834
  %5836 = vrot.lane.b32.xlu0 %v5441, 32
  %v5837 = vpop.permute.xlu0 %5836
  %5838 = vrot.lane.b32.xlu0 %v5446, 32
  %v5839 = vpop.permute.xlu0 %5838
  %5840 = vrot.lane.b32.xlu0 %v5451, 32
  %v5841 = vpop.permute.xlu0 %5840
  %5842 = vrot.lane.b32.xlu0 %v5456, 32
  %v5843 = vpop.permute.xlu0 %5842
  %5844 = vrot.lane.b32.xlu0 %v5461, 32
  %v5845 = vpop.permute.xlu0 %5844
  %5846 = vrot.lane.b32.xlu0 %v5466, 32
  %v5847 = vpop.permute.xlu0 %5846
  %5848 = vrot.lane.b32.xlu0 %v5471, 32
  %v5849 = vpop.permute.xlu0 %5848
  %5850 = vrot.lane.b32.xlu0 %v5476, 32
  %v5851 = vpop.permute.xlu0 %5850
  %5852 = vrot.lane.b32.xlu0 %v5481, 32
  %v5853 = vpop.permute.xlu0 %5852
  %5854 = vrot.lane.b32.xlu0 %v5486, 32
  %v5855 = vpop.permute.xlu0 %5854
  %5856 = vrot.lane.b32.xlu0 %v5491, 32
  %v5857 = vpop.permute.xlu0 %5856
  %5858 = vrot.lane.b32.xlu0 %v5496, 32
  %v5859 = vpop.permute.xlu0 %5858
  %5860 = vrot.lane.b32.xlu0 %v5501, 32
  %v5861 = vpop.permute.xlu0 %5860
  %5862 = vrot.lane.b32.xlu0 %v5506, 32
  %v5863 = vpop.permute.xlu0 %5862
  %5864 = vrot.lane.b32.xlu0 %v5511, 32
  %v5865 = vpop.permute.xlu0 %5864
  %5866 = vrot.lane.b32.xlu0 %v5516, 32
  %v5867 = vpop.permute.xlu0 %5866
  %5868 = vrot.lane.b32.xlu0 %v5521, 32
  %v5869 = vpop.permute.xlu0 %5868
  %5870 = vrot.lane.b32.xlu0 %v5526, 32
  %v5871 = vpop.permute.xlu0 %5870
  %5872 = vrot.lane.b32.xlu0 %v5531, 32
  %v5873 = vpop.permute.xlu0 %5872
  %5874 = vrot.lane.b32.xlu0 %v5536, 32
  %v5875 = vpop.permute.xlu0 %5874
  %5876 = vrot.lane.b32.xlu0 %v5541, 32
  %v5877 = vpop.permute.xlu0 %5876
  %5878 = vrot.lane.b32.xlu0 %v5546, 32
  %v5879 = vpop.permute.xlu0 %5878
  %5880 = vrot.lane.b32.xlu0 %v5551, 32
  %v5881 = vpop.permute.xlu0 %5880
  %5882 = vrot.lane.b32.xlu0 %v5556, 32
  %v5883 = vpop.permute.xlu0 %5882
  %5884 = vrot.lane.b32.xlu0 %v5561, 32
  %v5885 = vpop.permute.xlu0 %5884
  %5886 = vrot.lane.b32.xlu0 %v5566, 32
  %v5887 = vpop.permute.xlu0 %5886
  %5888 = vrot.lane.b32.xlu0 %v5571, 32
  %v5889 = vpop.permute.xlu0 %5888
  %5890 = vrot.lane.b32.xlu0 %v5576, 32
  %v5891 = vpop.permute.xlu0 %5890
  %5892 = vrot.lane.b32.xlu0 %v5581, 32
  %v5893 = vpop.permute.xlu0 %5892
  %5894 = vrot.lane.b32.xlu0 %v5586, 32
  %v5895 = vpop.permute.xlu0 %5894
  %5896 = vrot.lane.b32.xlu0 %v5591, 32
  %v5897 = vpop.permute.xlu0 %5896
  %5898 = vrot.lane.b32.xlu0 %v5596, 32
  %v5899 = vpop.permute.xlu0 %5898
  %5900 = vrot.lane.b32.xlu0 %v5601, 32
  %v5901 = vpop.permute.xlu0 %5900
  %5902 = vrot.lane.b32.xlu0 %v5606, 32
  %v5903 = vpop.permute.xlu0 %5902
  %5904 = vrot.lane.b32.xlu0 %v5611, 32
  %v5905 = vpop.permute.xlu0 %5904
  %5906 = vrot.lane.b32.xlu0 %v5616, 32
  %v5907 = vpop.permute.xlu0 %5906
  %5908 = vrot.lane.b32.xlu0 %v5621, 32
  %v5909 = vpop.permute.xlu0 %5908
  %5910 = vrot.lane.b32.xlu0 %v5626, 32
  %v5911 = vpop.permute.xlu0 %5910
  %5912 = vrot.lane.b32.xlu0 %v5631, 32
  %v5913 = vpop.permute.xlu0 %5912
  %5914 = vrot.lane.b32.xlu0 %v5636, 32
  %v5915 = vpop.permute.xlu0 %5914
  %5916 = vrot.lane.b32.xlu0 %v5641, 32
  %v5917 = vpop.permute.xlu0 %5916
  %5918 = vrot.lane.b32.xlu0 %v5646, 32
  %v5919 = vpop.permute.xlu0 %5918
  %5920 = vrot.lane.b32.xlu0 %v5651, 32
  %v5921 = vpop.permute.xlu0 %5920
  %5922 = vrot.lane.b32.xlu0 %v5656, 32
  %v5923 = vpop.permute.xlu0 %5922
  %5924 = vrot.lane.b32.xlu0 %v5661, 32
  %v5925 = vpop.permute.xlu0 %5924
  %5926 = vrot.lane.b32.xlu0 %v5666, 32
  %v5927 = vpop.permute.xlu0 %5926
  %5928 = vrot.lane.b32.xlu0 %v5671, 32
  %v5929 = vpop.permute.xlu0 %5928
  %5930 = vrot.lane.b32.xlu0 %v5676, 32
  %v5931 = vpop.permute.xlu0 %5930
  %5932 = vrot.lane.b32.xlu0 %v5681, 32
  %v5933 = vpop.permute.xlu0 %5932
  %5934 = vrot.lane.b32.xlu0 %v5686, 32
  %v5935 = vpop.permute.xlu0 %5934
  %5936 = vrot.lane.b32.xlu0 %v5691, 32
  %v5937 = vpop.permute.xlu0 %5936
  %5938 = vrot.lane.b32.xlu0 %v5696, 32
  %v5939 = vpop.permute.xlu0 %5938
  %5940 = vrot.lane.b32.xlu0 %v5701, 32
  %v5941 = vpop.permute.xlu0 %5940
  %5942 = vrot.lane.b32.xlu0 %v5706, 32
  %v5943 = vpop.permute.xlu0 %5942
  %5944 = vrot.lane.b32.xlu0 %v5711, 32
  %v5945 = vpop.permute.xlu0 %5944
  %5946 = vrot.lane.b32.xlu0 %v5716, 32
  %v5947 = vpop.permute.xlu0 %5946
  %5948 = vrot.lane.b32.xlu0 %v5721, 32
  %v5949 = vpop.permute.xlu0 %5948
  %5950 = vrot.lane.b32.xlu0 %v5726, 32
  %v5951 = vpop.permute.xlu0 %5950
  %5952 = vrot.lane.b32.xlu0 %v5731, 32
  %v5953 = vpop.permute.xlu0 %5952
  %5954 = vrot.lane.b32.xlu0 %v5736, 32
  %v5955 = vpop.permute.xlu0 %5954
  %5956 = vrot.lane.b32.xlu0 %v5741, 32
  %v5957 = vpop.permute.xlu0 %5956
  %5958 = vrot.lane.b32.xlu0 %v5746, 32
  %v5959 = vpop.permute.xlu0 %5958
  %5960 = vrot.lane.b32.xlu0 %v5751, 32
  %v5961 = vpop.permute.xlu0 %5960
  %5962 = vrot.lane.b32.xlu0 %v5756, 32
  %v5963 = vpop.permute.xlu0 %5962
  %5964 = vrot.lane.b32.xlu0 %v5761, 32
  %v5965 = vpop.permute.xlu0 %5964
  %5966 = vrot.lane.b32.xlu0 %v5766, 32
  %v5967 = vpop.permute.xlu0 %5966
  %5968 = vrot.lane.b32.xlu0 %v5771, 32
  %v5969 = vpop.permute.xlu0 %5968
  %5970 = vrot.lane.b32.xlu0 %v5776, 32
  %v5971 = vpop.permute.xlu0 %5970
  %5972 = vrot.lane.b32.xlu0 %v5781, 32
  %v5973 = vpop.permute.xlu0 %5972
  %5974 = vrot.lane.b32.xlu0 %v5786, 32
  %v5975 = vpop.permute.xlu0 %5974
  %5976 = vrot.lane.b32.xlu0 %v5791, 32
  %v5977 = vpop.permute.xlu0 %5976
  %5978 = vrot.lane.b32.xlu0 %v5796, 32
  %v5979 = vpop.permute.xlu0 %5978
  %5980 = vrot.lane.b32.xlu0 %v5801, 32
  %v5981 = vpop.permute.xlu0 %5980
  %5982 = vrot.lane.b32.xlu0 %v5806, 32
  %v5983 = vpop.permute.xlu0 %5982
  %5984 = vrot.lane.b32.xlu0 %v5811, 32
  %v5985 = vpop.permute.xlu0 %5984
  %5986 = vrot.lane.b32.xlu0 %v5816, 32
  %v5987 = vpop.permute.xlu0 %5986
  %5988 = vrot.lane.b32.xlu0 %v5821, 32
  %v5989 = vpop.permute.xlu0 %5988
  %5990 = vrot.lane.b32.xlu0 %v5826, 32
  %v5991 = vpop.permute.xlu0 %5990
  %5992 = vrot.lane.b32.xlu0 %v5829, 32
  %v5993 = vpop.permute.xlu0 %5992
  %vm6076 = vcmask 388355
  %vm6077 = vmand %vm6076, %vm3982
  %v6078 = vld [vmem:[#allocation2 + $0xc] sm:$0x8]
  %v6079 = vsel %vm6077, %v5831, %v6078
  %6080 = vst [vmem:[#allocation2 + $0xc] sm:$0x8] %v6079
  %vm6081 = vcmask 388352
  %6082 = vst.msk [vmem:[#allocation2 + $0x10] sm:$0xf] %vm6081, %v5833
  %6083 = vst.msk [vmem:[#allocation2 + $0x14] sm:$0xf] %vm6081, %v5835
  %6084 = vst.msk [vmem:[#allocation2 + $0x18] sm:$0xf] %vm6081, %v5837
  %6085 = vst.msk [vmem:[#allocation2 + $0x1c] sm:$0xf] %vm6081, %v5839
  %6086 = vst.msk [vmem:[#allocation2 + $0x20] sm:$0xf] %vm6081, %v5841
  %6087 = vst.msk [vmem:[#allocation2 + $0x24] sm:$0xf] %vm6081, %v5843
  %6088 = vst.msk [vmem:[#allocation2 + $0x28] sm:$0xf] %vm6081, %v5845
  %6089 = vst.msk [vmem:[#allocation2 + $0x2c] sm:$0xf] %vm6081, %v5847
  %6090 = vst.msk [vmem:[#allocation2 + $0x30] sm:$0xf] %vm6081, %v5849
  %6091 = vst.msk [vmem:[#allocation2 + $0x34] sm:$0xf] %vm6081, %v5851
  %6092 = vst.msk [vmem:[#allocation2 + $0x38] sm:$0xf] %vm6081, %v5853
  %6093 = vst.msk [vmem:[#allocation2 + $0x3c] sm:$0xf] %vm6081, %v5855
  %6094 = vst.msk [vmem:[#allocation2 + $0x40] sm:$0xf] %vm6081, %v5857
  %6095 = vst.msk [vmem:[#allocation2 + $0x44] sm:$0xf] %vm6081, %v5859
  %6096 = vst.msk [vmem:[#allocation2 + $0x48] sm:$0xf] %vm6081, %v5861
  %6097 = vst.msk [vmem:[#allocation2 + $0x4c] sm:$0xf] %vm6081, %v5863
  %6098 = vst.msk [vmem:[#allocation2 + $0x50] sm:$0xf] %vm6081, %v5865
  %6099 = vst.msk [vmem:[#allocation2 + $0x54] sm:$0xf] %vm6081, %v5867
  %6100 = vst.msk [vmem:[#allocation2 + $0x58] sm:$0xf] %vm6081, %v5869
  %6101 = vst.msk [vmem:[#allocation2 + $0x5c] sm:$0xf] %vm6081, %v5871
  %6102 = vst.msk [vmem:[#allocation2 + $0x60] sm:$0xf] %vm6081, %v5873
  %6103 = vst.msk [vmem:[#allocation2 + $0x64] sm:$0xf] %vm6081, %v5875
  %6104 = vst.msk [vmem:[#allocation2 + $0x68] sm:$0xf] %vm6081, %v5877
  %6105 = vst.msk [vmem:[#allocation2 + $0x6c] sm:$0xf] %vm6081, %v5879
  %6106 = vst.msk [vmem:[#allocation2 + $0x70] sm:$0xf] %vm6081, %v5881
  %6107 = vst.msk [vmem:[#allocation2 + $0x74] sm:$0xf] %vm6081, %v5883
  %6108 = vst.msk [vmem:[#allocation2 + $0x78] sm:$0xf] %vm6081, %v5885
  %6109 = vst.msk [vmem:[#allocation2 + $0x7c] sm:$0xf] %vm6081, %v5887
  %6110 = vst.msk [vmem:[#allocation2 + $0x80] sm:$0xf] %vm6081, %v5889
  %6111 = vst.msk [vmem:[#allocation2 + $0x84] sm:$0xf] %vm6081, %v5891
  %6112 = vst.msk [vmem:[#allocation2 + $0x88] sm:$0xf] %vm6081, %v5893
  %6113 = vst.msk [vmem:[#allocation2 + $0x8c] sm:$0xf] %vm6081, %v5895
  %6114 = vst.msk [vmem:[#allocation2 + $0x90] sm:$0xf] %vm6081, %v5897
  %6115 = vst.msk [vmem:[#allocation2 + $0x94] sm:$0xf] %vm6081, %v5899
  %6116 = vst.msk [vmem:[#allocation2 + $0x98] sm:$0xf] %vm6081, %v5901
  %6117 = vst.msk [vmem:[#allocation2 + $0x9c] sm:$0xf] %vm6081, %v5903
  %6118 = vst.msk [vmem:[#allocation2 + $0xa0] sm:$0xf] %vm6081, %v5905
  %6119 = vst.msk [vmem:[#allocation2 + $0xa4] sm:$0xf] %vm6081, %v5907
  %6120 = vst.msk [vmem:[#allocation2 + $0xa8] sm:$0xf] %vm6081, %v5909
  %6121 = vst.msk [vmem:[#allocation2 + $0xac] sm:$0xf] %vm6081, %v5911
  %6122 = vst.msk [vmem:[#allocation2 + $0xb0] sm:$0xf] %vm6081, %v5913
  %6123 = vst.msk [vmem:[#allocation2 + $0xb4] sm:$0xf] %vm6081, %v5915
  %6124 = vst.msk [vmem:[#allocation2 + $0xb8] sm:$0xf] %vm6081, %v5917
  %6125 = vst.msk [vmem:[#allocation2 + $0xbc] sm:$0xf] %vm6081, %v5919
  %6126 = vst.msk [vmem:[#allocation2 + $0xc0] sm:$0xf] %vm6081, %v5921
  %6127 = vst.msk [vmem:[#allocation2 + $0xc4] sm:$0xf] %vm6081, %v5923
  %6128 = vst.msk [vmem:[#allocation2 + $0xc8] sm:$0xf] %vm6081, %v5925
  %6129 = vst.msk [vmem:[#allocation2 + $0xcc] sm:$0xf] %vm6081, %v5927
  %6130 = vst.msk [vmem:[#allocation2 + $0xd0] sm:$0xf] %vm6081, %v5929
  %6131 = vst.msk [vmem:[#allocation2 + $0xd4] sm:$0xf] %vm6081, %v5931
  %6132 = vst.msk [vmem:[#allocation2 + $0xd8] sm:$0xf] %vm6081, %v5933
  %6133 = vst.msk [vmem:[#allocation2 + $0xdc] sm:$0xf] %vm6081, %v5935
  %6134 = vst.msk [vmem:[#allocation2 + $0xe0] sm:$0xf] %vm6081, %v5937
  %6135 = vst.msk [vmem:[#allocation2 + $0xe4] sm:$0xf] %vm6081, %v5939
  %6136 = vst.msk [vmem:[#allocation2 + $0xe8] sm:$0xf] %vm6081, %v5941
  %6137 = vst.msk [vmem:[#allocation2 + $0xec] sm:$0xf] %vm6081, %v5943
  %6138 = vst.msk [vmem:[#allocation2 + $0xf0] sm:$0xf] %vm6081, %v5945
  %6139 = vst.msk [vmem:[#allocation2 + $0xf4] sm:$0xf] %vm6081, %v5947
  %6140 = vst.msk [vmem:[#allocation2 + $0xf8] sm:$0xf] %vm6081, %v5949
  %6141 = vst.msk [vmem:[#allocation2 + $0xfc] sm:$0xf] %vm6081, %v5951
  %6142 = vst.msk [vmem:[#allocation2 + $0x100] sm:$0xf] %vm6081, %v5953
  %6143 = vst.msk [vmem:[#allocation2 + $0x104] sm:$0xf] %vm6081, %v5955
  %6144 = vst.msk [vmem:[#allocation2 + $0x108] sm:$0xf] %vm6081, %v5957
  %6145 = vst.msk [vmem:[#allocation2 + $0x10c] sm:$0xf] %vm6081, %v5959
  %6146 = vst.msk [vmem:[#allocation2 + $0x110] sm:$0xf] %vm6081, %v5961
  %6147 = vst.msk [vmem:[#allocation2 + $0x114] sm:$0xf] %vm6081, %v5963
  %6148 = vst.msk [vmem:[#allocation2 + $0x118] sm:$0xf] %vm6081, %v5965
  %6149 = vst.msk [vmem:[#allocation2 + $0x11c] sm:$0xf] %vm6081, %v5967
  %6150 = vst.msk [vmem:[#allocation2 + $0x120] sm:$0xf] %vm6081, %v5969
  %6151 = vst.msk [vmem:[#allocation2 + $0x124] sm:$0xf] %vm6081, %v5971
  %6152 = vst.msk [vmem:[#allocation2 + $0x128] sm:$0xf] %vm6081, %v5973
  %6153 = vst.msk [vmem:[#allocation2 + $0x12c] sm:$0xf] %vm6081, %v5975
  %6154 = vst.msk [vmem:[#allocation2 + $0x130] sm:$0xf] %vm6081, %v5977
  %6155 = vst.msk [vmem:[#allocation2 + $0x134] sm:$0xf] %vm6081, %v5979
  %6156 = vst.msk [vmem:[#allocation2 + $0x138] sm:$0xf] %vm6081, %v5981
  %6157 = vst.msk [vmem:[#allocation2 + $0x13c] sm:$0xf] %vm6081, %v5983
  %6158 = vst.msk [vmem:[#allocation2 + $0x140] sm:$0xf] %vm6081, %v5985
  %6159 = vst.msk [vmem:[#allocation2 + $0x144] sm:$0xf] %vm6081, %v5987
  %6160 = vst.msk [vmem:[#allocation2 + $0x148] sm:$0xf] %vm6081, %v5989
  %6161 = vst.msk [vmem:[#allocation2 + $0x14c] sm:$0xf] %vm6081, %v5991
  %vm6162 = vcmask 388352
  %vm6163 = vmand %vm6162, %vm5423
  %v6164 = vld [vmem:[#allocation2 + $0x150] sm:$0xf]
  %v6165 = vsel %vm6163, %v5993, %v6164
  %6166 = vst [vmem:[#allocation2 + $0x150] sm:$0xf] %v6165
  %v6167 = vld [vmem:[#allocation2 + $0x4] sm:$0x8]
  %v6168 = vld [vmem:[#allocation2 + $0x8] sm:$0xf]
  %v6169 = vld [vmem:[#allocation2 + $0xc] sm:$0xf]
  %v6170 = vld [vmem:[#allocation2 + $0x10] sm:$0xf]
  %v6171 = vld [vmem:[#allocation2 + $0x14] sm:$0xf]
  %v6172 = vld [vmem:[#allocation2 + $0x18] sm:$0xf]
  %v6173 = vld [vmem:[#allocation2 + $0x1c] sm:$0xf]
  %v6174 = vld [vmem:[#allocation2 + $0x20] sm:$0xf]
  %v6175 = vld [vmem:[#allocation2 + $0x24] sm:$0xf]
  %v6176 = vld [vmem:[#allocation2 + $0x28] sm:$0xf]
  %v6177 = vld [vmem:[#allocation2 + $0x2c] sm:$0xf]
  %v6178 = vld [vmem:[#allocation2 + $0x30] sm:$0xf]
  %v6179 = vld [vmem:[#allocation2 + $0x34] sm:$0xf]
  %v6180 = vld [vmem:[#allocation2 + $0x38] sm:$0xf]
  %v6181 = vld [vmem:[#allocation2 + $0x3c] sm:$0xf]
  %v6182 = vld [vmem:[#allocation2 + $0x40] sm:$0xf]
  %v6183 = vld [vmem:[#allocation2 + $0x44] sm:$0xf]
  %v6184 = vld [vmem:[#allocation2 + $0x48] sm:$0xf]
  %v6185 = vld [vmem:[#allocation2 + $0x4c] sm:$0xf]
  %v6186 = vld [vmem:[#allocation2 + $0x50] sm:$0xf]
  %v6187 = vld [vmem:[#allocation2 + $0x54] sm:$0xf]
  %v6188 = vld [vmem:[#allocation2 + $0x58] sm:$0xf]
  %v6189 = vld [vmem:[#allocation2 + $0x5c] sm:$0xf]
  %v6190 = vld [vmem:[#allocation2 + $0x60] sm:$0xf]
  %v6191 = vld [vmem:[#allocation2 + $0x64] sm:$0xf]
  %v6192 = vld [vmem:[#allocation2 + $0x68] sm:$0xf]
  %v6193 = vld [vmem:[#allocation2 + $0x6c] sm:$0xf]
  %v6194 = vld [vmem:[#allocation2 + $0x70] sm:$0xf]
  %v6195 = vld [vmem:[#allocation2 + $0x74] sm:$0xf]
  %v6196 = vld [vmem:[#allocation2 + $0x78] sm:$0xf]
  %v6197 = vld [vmem:[#allocation2 + $0x7c] sm:$0xf]
  %v6198 = vld [vmem:[#allocation2 + $0x80] sm:$0xf]
  %v6199 = vld [vmem:[#allocation2 + $0x84] sm:$0xf]
  %v6200 = vld [vmem:[#allocation2 + $0x88] sm:$0xf]
  %v6201 = vld [vmem:[#allocation2 + $0x8c] sm:$0xf]
  %v6202 = vld [vmem:[#allocation2 + $0x90] sm:$0xf]
  %v6203 = vld [vmem:[#allocation2 + $0x94] sm:$0xf]
  %v6204 = vld [vmem:[#allocation2 + $0x98] sm:$0xf]
  %v6205 = vld [vmem:[#allocation2 + $0x9c] sm:$0xf]
  %v6206 = vld [vmem:[#allocation2 + $0xa0] sm:$0xf]
  %v6207 = vld [vmem:[#allocation2 + $0xa4] sm:$0xf]
  %v6208 = vld [vmem:[#allocation2 + $0xa8] sm:$0xf]
  %v6209 = vld [vmem:[#allocation2 + $0xac] sm:$0xf]
  %v6210 = vld [vmem:[#allocation2 + $0xb0] sm:$0xf]
  %v6211 = vld [vmem:[#allocation2 + $0xb4] sm:$0xf]
  %v6212 = vld [vmem:[#allocation2 + $0xb8] sm:$0xf]
  %v6213 = vld [vmem:[#allocation2 + $0xbc] sm:$0xf]
  %v6214 = vld [vmem:[#allocation2 + $0xc0] sm:$0xf]
  %v6215 = vld [vmem:[#allocation2 + $0xc4] sm:$0xf]
  %v6216 = vld [vmem:[#allocation2 + $0xc8] sm:$0xf]
  %v6217 = vld [vmem:[#allocation2 + $0xcc] sm:$0xf]
  %v6218 = vld [vmem:[#allocation2 + $0xd0] sm:$0xf]
  %v6219 = vld [vmem:[#allocation2 + $0xd4] sm:$0xf]
  %v6220 = vld [vmem:[#allocation2 + $0xd8] sm:$0xf]
  %v6221 = vld [vmem:[#allocation2 + $0xdc] sm:$0xf]
  %v6222 = vld [vmem:[#allocation2 + $0xe0] sm:$0xf]
  %v6223 = vld [vmem:[#allocation2 + $0xe4] sm:$0xf]
  %v6224 = vld [vmem:[#allocation2 + $0xe8] sm:$0xf]
  %v6225 = vld [vmem:[#allocation2 + $0xec] sm:$0xf]
  %v6226 = vld [vmem:[#allocation2 + $0xf0] sm:$0xf]
  %v6227 = vld [vmem:[#allocation2 + $0xf4] sm:$0xf]
  %v6228 = vld [vmem:[#allocation2 + $0xf8] sm:$0xf]
  %v6229 = vld [vmem:[#allocation2 + $0xfc] sm:$0xf]
  %v6230 = vld [vmem:[#allocation2 + $0x100] sm:$0xf]
  %v6231 = vld [vmem:[#allocation2 + $0x104] sm:$0xf]
  %v6232 = vld [vmem:[#allocation2 + $0x108] sm:$0xf]
  %v6233 = vld [vmem:[#allocation2 + $0x10c] sm:$0xf]
  %v6234 = vld [vmem:[#allocation2 + $0x110] sm:$0xf]
  %v6235 = vld [vmem:[#allocation2 + $0x114] sm:$0xf]
  %v6236 = vld [vmem:[#allocation2 + $0x118] sm:$0xf]
  %v6237 = vld [vmem:[#allocation2 + $0x11c] sm:$0xf]
  %v6238 = vld [vmem:[#allocation2 + $0x120] sm:$0xf]
  %v6239 = vld [vmem:[#allocation2 + $0x124] sm:$0xf]
  %v6240 = vld [vmem:[#allocation2 + $0x128] sm:$0xf]
  %v6241 = vld [vmem:[#allocation2 + $0x12c] sm:$0xf]
  %v6242 = vld [vmem:[#allocation2 + $0x130] sm:$0xf]
  %v6243 = vld [vmem:[#allocation2 + $0x134] sm:$0xf]
  %v6244 = vld [vmem:[#allocation2 + $0x138] sm:$0xf]
  %v6245 = vld [vmem:[#allocation2 + $0x13c] sm:$0xf]
  %v6246 = vld [vmem:[#allocation2 + $0x140] sm:$0xf]
  %v6247 = vld [vmem:[#allocation2 + $0x144] sm:$0xf]
  %v6248 = vld [vmem:[#allocation2 + $0x148] sm:$0x7]
  %v6249 = vld [vmem:[%s7] sm:$0xf]
  %v6250 = vld [vmem:[%s7 + $0x4] sm:$0xf]
  %v6251 = vld [vmem:[%s7 + $0x8] sm:$0xf]
  %v6252 = vld [vmem:[%s7 + $0xc] sm:$0xf]
  %v6253 = vld [vmem:[%s7 + $0x10] sm:$0xf]
  %v6254 = vld [vmem:[%s7 + $0x14] sm:$0xf]
  %v6255 = vld [vmem:[#allocation2 + $0x148] sm:$0xf]
  %v6256 = vld [vmem:[#allocation2 + $0x14c] sm:$0xf]
  %v6257 = vld [vmem:[#allocation2 + $0x150] sm:$0xf]
  %s6258 = scalar_lea.vmem %s7, 24
  %v6259 = vld [vmem:[%s6258] sm:$0xf]
  %v6260 = vld [vmem:[%s6258 + $0x4] sm:$0xf]
  %v6261 = vld [vmem:[%s6258 + $0x8] sm:$0xf]
  %v6262 = vld [vmem:[%s6258 + $0xc] sm:$0xf]
  %v6263 = vld [vmem:[%s6258 + $0x10] sm:$0xf]
  %v6264 = vld [vmem:[%s6258 + $0x14] sm:$0xf]
  %v6346 = vunpack.c.l.b16 %v6170
  %v6347 = vunpack.c.l.b16 %v6171
  %v6348 = vunpack.c.l.b16 %v6172
  %v6349 = vunpack.c.l.b16 %v6173
  %v6350 = vunpack.c.l.b16 %v6174
  %v6351 = vunpack.c.l.b16 %v6175
  %v6352 = vunpack.c.l.b16 %v6176
  %v6353 = vunpack.c.l.b16 %v6177
  %v6354 = vunpack.c.l.b16 %v6178
  %v6355 = vunpack.c.l.b16 %v6179
  %v6356 = vunpack.c.l.b16 %v6180
  %v6357 = vunpack.c.l.b16 %v6181
  %v6358 = vunpack.c.l.b16 %v6182
  %v6359 = vunpack.c.l.b16 %v6183
  %v6360 = vunpack.c.l.b16 %v6184
  %v6361 = vunpack.c.l.b16 %v6185
  %v6362 = vunpack.c.l.b16 %v6186
  %v6363 = vunpack.c.l.b16 %v6187
  %v6364 = vunpack.c.l.b16 %v6188
  %v6365 = vunpack.c.l.b16 %v6189
  %v6366 = vunpack.c.l.b16 %v6190
  %v6367 = vunpack.c.l.b16 %v6191
  %v6368 = vunpack.c.l.b16 %v6192
  %v6369 = vunpack.c.l.b16 %v6193
  %v6370 = vunpack.c.l.b16 %v6194
  %v6371 = vunpack.c.l.b16 %v6195
  %v6372 = vunpack.c.l.b16 %v6196
  %v6373 = vunpack.c.l.b16 %v6197
  %v6374 = vunpack.c.l.b16 %v6198
  %v6375 = vunpack.c.l.b16 %v6199
  %v6376 = vunpack.c.l.b16 %v6200
  %v6377 = vunpack.c.l.b16 %v6201
  %v6378 = vunpack.c.l.b16 %v6202
  %v6379 = vunpack.c.l.b16 %v6203
  %v6380 = vunpack.c.l.b16 %v6204
  %v6381 = vunpack.c.l.b16 %v6205
  %v6382 = vunpack.c.l.b16 %v6206
  %v6383 = vunpack.c.l.b16 %v6207
  %v6384 = vunpack.c.l.b16 %v6208
  %v6385 = vunpack.c.l.b16 %v6209
  %v6386 = vunpack.c.l.b16 %v6210
  %v6387 = vunpack.c.l.b16 %v6211
  %v6388 = vunpack.c.l.b16 %v6212
  %v6389 = vunpack.c.l.b16 %v6213
  %v6390 = vunpack.c.l.b16 %v6214
  %v6391 = vunpack.c.l.b16 %v6215
  %v6392 = vunpack.c.l.b16 %v6216
  %v6393 = vunpack.c.l.b16 %v6217
  %v6394 = vunpack.c.l.b16 %v6218
  %v6395 = vunpack.c.l.b16 %v6219
  %v6396 = vunpack.c.l.b16 %v6220
  %v6397 = vunpack.c.l.b16 %v6221
  %v6398 = vunpack.c.l.b16 %v6222
  %v6399 = vunpack.c.l.b16 %v6223
  %v6400 = vunpack.c.l.b16 %v6224
  %v6401 = vunpack.c.l.b16 %v6225
  %v6402 = vunpack.c.l.b16 %v6226
  %v6403 = vunpack.c.l.b16 %v6227
  %v6404 = vunpack.c.l.b16 %v6228
  %v6405 = vunpack.c.l.b16 %v6229
  %v6406 = vunpack.c.l.b16 %v6230
  %v6407 = vunpack.c.l.b16 %v6231
  %v6408 = vunpack.c.l.b16 %v6232
  %v6409 = vunpack.c.l.b16 %v6233
  %v6410 = vunpack.c.l.b16 %v6234
  %v6411 = vunpack.c.l.b16 %v6235
  %v6412 = vunpack.c.l.b16 %v6236
  %v6413 = vunpack.c.l.b16 %v6237
  %v6414 = vunpack.c.l.b16 %v6238
  %v6415 = vunpack.c.l.b16 %v6239
  %v6416 = vunpack.c.l.b16 %v6240
  %v6417 = vunpack.c.l.b16 %v6241
  %v6418 = vunpack.c.l.b16 %v6242
  %v6419 = vunpack.c.l.b16 %v6243
  %v6420 = vunpack.c.l.b16 %v6244
  %v6421 = vunpack.c.l.b16 %v6245
  %v6422 = vunpack.c.l.b16 %v6246
  %v6423 = vunpack.c.l.b16 %v6247
  %v6424 = vunpack.c.l.b16 %v6255
  %v6425 = vunpack.c.l.b16 %v6256
  %v6426 = vunpack.c.l.b16 %v6257
  %v6427 = vpack.c.b16 %v6347, %v6346
  %v6428 = vpack.c.b16 %v6349, %v6348
  %v6429 = vpack.c.b16 %v6351, %v6350
  %v6430 = vpack.c.b16 %v6353, %v6352
  %v6431 = vpack.c.b16 %v6355, %v6354
  %v6432 = vpack.c.b16 %v6357, %v6356
  %v6433 = vpack.c.b16 %v6359, %v6358
  %v6434 = vpack.c.b16 %v6361, %v6360
  %v6435 = vpack.c.b16 %v6363, %v6362
  %v6436 = vpack.c.b16 %v6365, %v6364
  %v6437 = vpack.c.b16 %v6367, %v6366
  %v6438 = vpack.c.b16 %v6369, %v6368
  %v6439 = vpack.c.b16 %v6371, %v6370
  %v6440 = vpack.c.b16 %v6373, %v6372
  %v6441 = vpack.c.b16 %v6375, %v6374
  %v6442 = vpack.c.b16 %v6377, %v6376
  %v6443 = vpack.c.b16 %v6379, %v6378
  %v6444 = vpack.c.b16 %v6381, %v6380
  %v6445 = vpack.c.b16 %v6383, %v6382
  %v6446 = vpack.c.b16 %v6385, %v6384
  %v6447 = vpack.c.b16 %v6387, %v6386
  %v6448 = vpack.c.b16 %v6389, %v6388
  %v6449 = vpack.c.b16 %v6391, %v6390
  %v6450 = vpack.c.b16 %v6393, %v6392
  %v6451 = vpack.c.b16 %v6395, %v6394
  %v6452 = vpack.c.b16 %v6397, %v6396
  %v6453 = vpack.c.b16 %v6399, %v6398
  %v6454 = vpack.c.b16 %v6401, %v6400
  %v6455 = vpack.c.b16 %v6403, %v6402
  %v6456 = vpack.c.b16 %v6405, %v6404
  %v6457 = vpack.c.b16 %v6407, %v6406
  %v6458 = vpack.c.b16 %v6409, %v6408
  %v6459 = vpack.c.b16 %v6411, %v6410
  %v6460 = vpack.c.b16 %v6413, %v6412
  %v6461 = vpack.c.b16 %v6415, %v6414
  %v6462 = vpack.c.b16 %v6417, %v6416
  %v6463 = vpack.c.b16 %v6419, %v6418
  %v6464 = vpack.c.b16 %v6421, %v6420
  %v6465 = vpack.c.b16 %v6423, %v6422
  %v6466 = vpack.c.b16 %v6425, %v6424
  %v6467 = vpack.c.b16 %v6426, %v6426
  %v6474 = vunpack.c.l.b16 %v6259
  %v6475 = vunpack.c.l.b16 %v6260
  %v6476 = vunpack.c.l.b16 %v6261
  %v6477 = vunpack.c.l.b16 %v6262
  %v6478 = vunpack.c.l.b16 %v6263
  %v6479 = vunpack.c.l.b16 %v6264
  %v6480 = vpack.c.b16 %v6475, %v6474
  %v6481 = vpack.c.b16 %v6477, %v6476
  %v6482 = vpack.c.b16 %v6479, %v6478
  %v6487 = vsel %vm439, %v6427, 0
  %v6490 = vsel %vm439, %v6428, 0
  %v6493 = vsel %vm439, %v6429, 0
  %v6496 = vsel %vm439, %v6430, 0
  %v6499 = vsel %vm439, %v6431, 0
  %v6502 = vsel %vm439, %v6432, 0
  %v6505 = vsel %vm439, %v6433, 0
  %v6508 = vsel %vm439, %v6434, 0
  %v6511 = vsel %vm439, %v6435, 0
  %v6514 = vsel %vm439, %v6436, 0
  %v6517 = vsel %vm439, %v6437, 0
  %v6520 = vsel %vm439, %v6438, 0
  %v6523 = vsel %vm439, %v6439, 0
  %v6526 = vsel %vm439, %v6440, 0
  %v6529 = vsel %vm439, %v6441, 0
  %v6532 = vsel %vm439, %v6442, 0
  %v6535 = vsel %vm439, %v6443, 0
  %v6538 = vsel %vm439, %v6444, 0
  %v6541 = vsel %vm439, %v6445, 0
  %v6544 = vsel %vm439, %v6446, 0
  %v6547 = vsel %vm439, %v6447, 0
  %v6550 = vsel %vm439, %v6448, 0
  %v6553 = vsel %vm439, %v6449, 0
  %v6556 = vsel %vm439, %v6450, 0
  %v6559 = vsel %vm439, %v6451, 0
  %v6562 = vsel %vm439, %v6452, 0
  %v6565 = vsel %vm439, %v6453, 0
  %v6568 = vsel %vm439, %v6454, 0
  %v6571 = vsel %vm439, %v6455, 0
  %v6574 = vsel %vm439, %v6456, 0
  %v6577 = vsel %vm439, %v6457, 0
  %v6580 = vsel %vm439, %v6458, 0
  %v6583 = vsel %vm439, %v6459, 0
  %v6586 = vsel %vm439, %v6460, 0
  %v6589 = vsel %vm439, %v6461, 0
  %v6592 = vsel %vm439, %v6462, 0
  %v6595 = vsel %vm439, %v6463, 0
  %v6598 = vsel %vm439, %v6464, 0
  %v6601 = vsel %vm439, %v6465, 0
  %v6604 = vsel %vm439, %v6466, 0
  %v6607 = vsel %vm439, %v6467, 0
  %6609 = vmatprep.subr.bf16.mxu0 0
  %6610 = vmatpush1.bf16.msra.mxu0 %v6480
  %6611 = vmatprep.subr.bf16.mxu0 0
  %6612 = vmatpush1.bf16.msra.mxu0 %v6481
  %6613 = vmatprep.subr.bf16.mxu0 0
  %6614 = vmatpush1.bf16.msra.mxu0 %v6482
  %6615 = vmatprep.subr.bf16.mxu0 0
  %6616 = vmatpush1.bf16.msra.mxu0 0
  %6617 = vmatprep.subr.bf16.mxu0 0
  %6618 = vmatpush1.bf16.msra.mxu0 0
  %6619 = vmatprep.subr.bf16.mxu0 0
  %6620 = vmatpush1.bf16.msra.mxu0 0
  %6621 = vmatprep.subr.bf16.mxu0 0
  %6622 = vmatpush1.bf16.msra.mxu0 0
  %6623 = vmatprep.subr.bf16.mxu0 0
  %6624 = vmatpush1.bf16.msra.mxu0 0
  %6625 = vmatprep.subr.bf16.mxu0 0
  %6626 = vmatpush1.bf16.msra.mxu0 0
  %6627 = vmatprep.subr.bf16.mxu0 0
  %6628 = vmatpush1.bf16.msra.mxu0 0
  %6629 = vmatprep.subr.bf16.mxu0 0
  %6630 = vmatpush1.bf16.msra.mxu0 0
  %6631 = vmatprep.subr.bf16.mxu0 0
  %6632 = vmatpush1.bf16.msra.mxu0 0
  %6633 = vmatprep.subr.bf16.mxu0 0
  %6634 = vmatpush1.bf16.msra.mxu0 0
  %6635 = vmatprep.subr.bf16.mxu0 0
  %6636 = vmatpush1.bf16.msra.mxu0 0
  %6637 = vmatprep.subr.bf16.mxu0 0
  %6638 = vmatpush1.bf16.msra.mxu0 0
  %6639 = vmatprep.subr.bf16.mxu0 0
  %6640 = vmatpush1.bf16.msra.mxu0 0
  %6641 = vmatprep.mubr.bf16.mxu0 0
  %6642 = vmatmul.mubr.bf16.gmra.mrb[0].mxu0 %v6487
  %v6643 = vpop.f32.mrb[0].mxu0
  %v6644 = vadd.f32 0.0, %v6643
  %v6645 = vpop.f32.mrb[0].mxu0
  %v6646 = vpop.f32.mrb[0].mxu0
  %v6647 = vadd.f32 0.0, %v6646
  %v6648 = vpop.f32.mrb[0].mxu0
  %6649 = vmatprep.mubr.bf16.mxu0 0
  %6650 = vmatmul.mubr.bf16.gmra.mrb[0].mxu0 %v6490
  %v6651 = vpop.f32.mrb[0].mxu0
  %v6652 = vadd.f32 0.0, %v6651
  %v6653 = vpop.f32.mrb[0].mxu0
  %v6654 = vpop.f32.mrb[0].mxu0
  %v6655 = vadd.f32 0.0, %v6654
  %v6656 = vpop.f32.mrb[0].mxu0
  %6657 = vmatprep.mubr.bf16.mxu0 0
  %6658 = vmatmul.mubr.bf16.gmra.mrb[0].mxu0 %v6493
  %v6659 = vpop.f32.mrb[0].mxu0
  %v6660 = vadd.f32 0.0, %v6659
  %v6661 = vpop.f32.mrb[0].mxu0
  %v6662 = vpop.f32.mrb[0].mxu0
  %v6663 = vadd.f32 0.0, %v6662
  %v6664 = vpop.f32.mrb[0].mxu0
  %6665 = vmatprep.mubr.bf16.mxu0 0
  %6666 = vmatmul.mubr.bf16.gmra.mrb[0].mxu0 %v6496
  %v6667 = vpop.f32.mrb[0].mxu0
  %v6668 = vadd.f32 0.0, %v6667
  %v6669 = vpop.f32.mrb[0].mxu0
  %v6670 = vpop.f32.mrb[0].mxu0
  %v6671 = vadd.f32 0.0, %v6670
  %v6672 = vpop.f32.mrb[0].mxu0
  %6673 = vmatprep.mubr.bf16.mxu0 0
  %6674 = vmatmul.mubr.bf16.gmra.mrb[0].mxu0 %v6499
  %v6675 = vpop.f32.mrb[0].mxu0
  %v6676 = vadd.f32 0.0, %v6675
  %v6677 = vpop.f32.mrb[0].mxu0
  %v6678 = vpop.f32.mrb[0].mxu0
  %v6679 = vadd.f32 0.0, %v6678
  %v6680 = vpop.f32.mrb[0].mxu0
  %6681 = vmatprep.mubr.bf16.mxu0 0
  %6682 = vmatmul.mubr.bf16.gmra.mrb[0].mxu0 %v6502
  %v6683 = vpop.f32.mrb[0].mxu0
  %v6684 = vadd.f32 0.0, %v6683
  %v6685 = vpop.f32.mrb[0].mxu0
  %v6686 = vpop.f32.mrb[0].mxu0
  %v6687 = vadd.f32 0.0, %v6686
  %v6688 = vpop.f32.mrb[0].mxu0
  %6689 = vmatprep.mubr.bf16.mxu0 0
  %6690 = vmatmul.mubr.bf16.gmra.mrb[0].mxu0 %v6505
  %v6691 = vpop.f32.mrb[0].mxu0
  %v6692 = vadd.f32 0.0, %v6691
  %v6693 = vpop.f32.mrb[0].mxu0
  %v6694 = vpop.f32.mrb[0].mxu0
  %v6695 = vadd.f32 0.0, %v6694
  %v6696 = vpop.f32.mrb[0].mxu0
  %6697 = vmatprep.mubr.bf16.mxu0 0
  %6698 = vmatmul.mubr.bf16.gmra.mrb[0].mxu0 %v6508
  %v6699 = vpop.f32.mrb[0].mxu0
  %v6700 = vadd.f32 0.0, %v6699
  %v6701 = vpop.f32.mrb[0].mxu0
  %v6702 = vpop.f32.mrb[0].mxu0
  %v6703 = vadd.f32 0.0, %v6702
  %v6704 = vpop.f32.mrb[0].mxu0
  %6705 = vmatprep.mubr.bf16.mxu0 0
  %6706 = vmatmul.mubr.bf16.gmra.mrb[0].mxu0 %v6511
  %v6707 = vpop.f32.mrb[0].mxu0
  %v6708 = vadd.f32 0.0, %v6707
  %v6709 = vpop.f32.mrb[0].mxu0
  %v6710 = vpop.f32.mrb[0].mxu0
  %v6711 = vadd.f32 0.0, %v6710
  %v6712 = vpop.f32.mrb[0].mxu0
  %6713 = vmatprep.mubr.bf16.mxu0 0
  %6714 = vmatmul.mubr.bf16.gmra.mrb[0].mxu0 %v6514
  %v6715 = vpop.f32.mrb[0].mxu0
  %v6716 = vadd.f32 0.0, %v6715
  %v6717 = vpop.f32.mrb[0].mxu0
  %v6718 = vpop.f32.mrb[0].mxu0
  %v6719 = vadd.f32 0.0, %v6718
  %v6720 = vpop.f32.mrb[0].mxu0
  %6721 = vmatprep.mubr.bf16.mxu0 0
  %6722 = vmatmul.mubr.bf16.gmra.mrb[0].mxu0 %v6517
  %v6723 = vpop.f32.mrb[0].mxu0
  %v6724 = vadd.f32 0.0, %v6723
  %v6725 = vpop.f32.mrb[0].mxu0
  %v6726 = vpop.f32.mrb[0].mxu0
  %v6727 = vadd.f32 0.0, %v6726
  %v6728 = vpop.f32.mrb[0].mxu0
  %6729 = vmatprep.mubr.bf16.mxu0 0
  %6730 = vmatmul.mubr.bf16.gmra.mrb[0].mxu0 %v6520
  %v6731 = vpop.f32.mrb[0].mxu0
  %v6732 = vadd.f32 0.0, %v6731
  %v6733 = vpop.f32.mrb[0].mxu0
  %v6734 = vpop.f32.mrb[0].mxu0
  %v6735 = vadd.f32 0.0, %v6734
  %v6736 = vpop.f32.mrb[0].mxu0
  %6737 = vmatprep.mubr.bf16.mxu0 0
  %6738 = vmatmul.mubr.bf16.gmra.mrb[0].mxu0 %v6523
  %v6739 = vpop.f32.mrb[0].mxu0
  %v6740 = vadd.f32 0.0, %v6739
  %v6741 = vpop.f32.mrb[0].mxu0
  %v6742 = vpop.f32.mrb[0].mxu0
  %v6743 = vadd.f32 0.0, %v6742
  %v6744 = vpop.f32.mrb[0].mxu0
  %6745 = vmatprep.mubr.bf16.mxu0 0
  %6746 = vmatmul.mubr.bf16.gmra.mrb[0].mxu0 %v6526
  %v6747 = vpop.f32.mrb[0].mxu0
  %v6748 = vadd.f32 0.0, %v6747
  %v6749 = vpop.f32.mrb[0].mxu0
  %v6750 = vpop.f32.mrb[0].mxu0
  %v6751 = vadd.f32 0.0, %v6750
  %v6752 = vpop.f32.mrb[0].mxu0
  %6753 = vmatprep.mubr.bf16.mxu0 0
  %6754 = vmatmul.mubr.bf16.gmra.mrb[0].mxu0 %v6529
  %v6755 = vpop.f32.mrb[0].mxu0
  %v6756 = vadd.f32 0.0, %v6755
  %v6757 = vpop.f32.mrb[0].mxu0
  %v6758 = vpop.f32.mrb[0].mxu0
  %v6759 = vadd.f32 0.0, %v6758
  %v6760 = vpop.f32.mrb[0].mxu0
  %6761 = vmatprep.mubr.bf16.mxu0 0
  %6762 = vmatmul.mubr.bf16.gmra.mrb[0].mxu0 %v6532
  %v6763 = vpop.f32.mrb[0].mxu0
  %v6764 = vadd.f32 0.0, %v6763
  %v6765 = vpop.f32.mrb[0].mxu0
  %v6766 = vpop.f32.mrb[0].mxu0
  %v6767 = vadd.f32 0.0, %v6766
  %v6768 = vpop.f32.mrb[0].mxu0
  %6769 = vmatprep.mubr.bf16.mxu0 0
  %6770 = vmatmul.mubr.bf16.gmra.mrb[0].mxu0 %v6535
  %v6771 = vpop.f32.mrb[0].mxu0
  %v6772 = vadd.f32 0.0, %v6771
  %v6773 = vpop.f32.mrb[0].mxu0
  %v6774 = vpop.f32.mrb[0].mxu0
  %v6775 = vadd.f32 0.0, %v6774
  %v6776 = vpop.f32.mrb[0].mxu0
  %6777 = vmatprep.mubr.bf16.mxu0 0
  %6778 = vmatmul.mubr.bf16.gmra.mrb[0].mxu0 %v6538
  %v6779 = vpop.f32.mrb[0].mxu0
  %v6780 = vadd.f32 0.0, %v6779
  %v6781 = vpop.f32.mrb[0].mxu0
  %v6782 = vpop.f32.mrb[0].mxu0
  %v6783 = vadd.f32 0.0, %v6782
  %v6784 = vpop.f32.mrb[0].mxu0
  %6785 = vmatprep.mubr.bf16.mxu0 0
  %6786 = vmatmul.mubr.bf16.gmra.mrb[0].mxu0 %v6541
  %v6787 = vpop.f32.mrb[0].mxu0
  %v6788 = vadd.f32 0.0, %v6787
  %v6789 = vpop.f32.mrb[0].mxu0
  %v6790 = vpop.f32.mrb[0].mxu0
  %v6791 = vadd.f32 0.0, %v6790
  %v6792 = vpop.f32.mrb[0].mxu0
  %6793 = vmatprep.mubr.bf16.mxu0 0
  %6794 = vmatmul.mubr.bf16.gmra.mrb[0].mxu0 %v6544
  %v6795 = vpop.f32.mrb[0].mxu0
  %v6796 = vadd.f32 0.0, %v6795
  %v6797 = vpop.f32.mrb[0].mxu0
  %v6798 = vpop.f32.mrb[0].mxu0
  %v6799 = vadd.f32 0.0, %v6798
  %v6800 = vpop.f32.mrb[0].mxu0
  %6801 = vmatprep.mubr.bf16.mxu0 0
  %6802 = vmatmul.mubr.bf16.gmra.mrb[0].mxu0 %v6547
  %v6803 = vpop.f32.mrb[0].mxu0
  %v6804 = vadd.f32 0.0, %v6803
  %v6805 = vpop.f32.mrb[0].mxu0
  %v6806 = vpop.f32.mrb[0].mxu0
  %v6807 = vadd.f32 0.0, %v6806
  %v6808 = vpop.f32.mrb[0].mxu0
  %6809 = vmatprep.mubr.bf16.mxu0 0
  %6810 = vmatmul.mubr.bf16.gmra.mrb[0].mxu0 %v6550
  %v6811 = vpop.f32.mrb[0].mxu0
  %v6812 = vadd.f32 0.0, %v6811
  %v6813 = vpop.f32.mrb[0].mxu0
  %v6814 = vpop.f32.mrb[0].mxu0
  %v6815 = vadd.f32 0.0, %v6814
  %v6816 = vpop.f32.mrb[0].mxu0
  %6817 = vmatprep.mubr.bf16.mxu0 0
  %6818 = vmatmul.mubr.bf16.gmra.mrb[0].mxu0 %v6553
  %v6819 = vpop.f32.mrb[0].mxu0
  %v6820 = vadd.f32 0.0, %v6819
  %v6821 = vpop.f32.mrb[0].mxu0
  %v6822 = vpop.f32.mrb[0].mxu0
  %v6823 = vadd.f32 0.0, %v6822
  %v6824 = vpop.f32.mrb[0].mxu0
  %6825 = vmatprep.mubr.bf16.mxu0 0
  %6826 = vmatmul.mubr.bf16.gmra.mrb[0].mxu0 %v6556
  %v6827 = vpop.f32.mrb[0].mxu0
  %v6828 = vadd.f32 0.0, %v6827
  %v6829 = vpop.f32.mrb[0].mxu0
  %v6830 = vpop.f32.mrb[0].mxu0
  %v6831 = vadd.f32 0.0, %v6830
  %v6832 = vpop.f32.mrb[0].mxu0
  %6833 = vmatprep.mubr.bf16.mxu0 0
  %6834 = vmatmul.mubr.bf16.gmra.mrb[0].mxu0 %v6559
  %v6835 = vpop.f32.mrb[0].mxu0
  %v6836 = vadd.f32 0.0, %v6835
  %v6837 = vpop.f32.mrb[0].mxu0
  %v6838 = vpop.f32.mrb[0].mxu0
  %v6839 = vadd.f32 0.0, %v6838
  %v6840 = vpop.f32.mrb[0].mxu0
  %6841 = vmatprep.mubr.bf16.mxu0 0
  %6842 = vmatmul.mubr.bf16.gmra.mrb[0].mxu0 %v6562
  %v6843 = vpop.f32.mrb[0].mxu0
  %v6844 = vadd.f32 0.0, %v6843
  %v6845 = vpop.f32.mrb[0].mxu0
  %v6846 = vpop.f32.mrb[0].mxu0
  %v6847 = vadd.f32 0.0, %v6846
  %v6848 = vpop.f32.mrb[0].mxu0
  %6849 = vmatprep.mubr.bf16.mxu0 0
  %6850 = vmatmul.mubr.bf16.gmra.mrb[0].mxu0 %v6565
  %v6851 = vpop.f32.mrb[0].mxu0
  %v6852 = vadd.f32 0.0, %v6851
  %v6853 = vpop.f32.mrb[0].mxu0
  %v6854 = vpop.f32.mrb[0].mxu0
  %v6855 = vadd.f32 0.0, %v6854
  %v6856 = vpop.f32.mrb[0].mxu0
  %6857 = vmatprep.mubr.bf16.mxu0 0
  %6858 = vmatmul.mubr.bf16.gmra.mrb[0].mxu0 %v6568
  %v6859 = vpop.f32.mrb[0].mxu0
  %v6860 = vadd.f32 0.0, %v6859
  %v6861 = vpop.f32.mrb[0].mxu0
  %v6862 = vpop.f32.mrb[0].mxu0
  %v6863 = vadd.f32 0.0, %v6862
  %v6864 = vpop.f32.mrb[0].mxu0
  %6865 = vmatprep.mubr.bf16.mxu0 0
  %6866 = vmatmul.mubr.bf16.gmra.mrb[0].mxu0 %v6571
  %v6867 = vpop.f32.mrb[0].mxu0
  %v6868 = vadd.f32 0.0, %v6867
  %v6869 = vpop.f32.mrb[0].mxu0
  %v6870 = vpop.f32.mrb[0].mxu0
  %v6871 = vadd.f32 0.0, %v6870
  %v6872 = vpop.f32.mrb[0].mxu0
  %6873 = vmatprep.mubr.bf16.mxu0 0
  %6874 = vmatmul.mubr.bf16.gmra.mrb[0].mxu0 %v6574
  %v6875 = vpop.f32.mrb[0].mxu0
  %v6876 = vadd.f32 0.0, %v6875
  %v6877 = vpop.f32.mrb[0].mxu0
  %v6878 = vpop.f32.mrb[0].mxu0
  %v6879 = vadd.f32 0.0, %v6878
  %v6880 = vpop.f32.mrb[0].mxu0
  %6881 = vmatprep.mubr.bf16.mxu0 0
  %6882 = vmatmul.mubr.bf16.gmra.mrb[0].mxu0 %v6577
  %v6883 = vpop.f32.mrb[0].mxu0
  %v6884 = vadd.f32 0.0, %v6883
  %v6885 = vpop.f32.mrb[0].mxu0
  %v6886 = vpop.f32.mrb[0].mxu0
  %v6887 = vadd.f32 0.0, %v6886
  %v6888 = vpop.f32.mrb[0].mxu0
  %6889 = vmatprep.mubr.bf16.mxu0 0
  %6890 = vmatmul.mubr.bf16.gmra.mrb[0].mxu0 %v6580
  %v6891 = vpop.f32.mrb[0].mxu0
  %v6892 = vadd.f32 0.0, %v6891
  %v6893 = vpop.f32.mrb[0].mxu0
  %v6894 = vpop.f32.mrb[0].mxu0
  %v6895 = vadd.f32 0.0, %v6894
  %v6896 = vpop.f32.mrb[0].mxu0
  %6897 = vmatprep.mubr.bf16.mxu0 0
  %6898 = vmatmul.mubr.bf16.gmra.mrb[0].mxu0 %v6583
  %v6899 = vpop.f32.mrb[0].mxu0
  %v6900 = vadd.f32 0.0, %v6899
  %v6901 = vpop.f32.mrb[0].mxu0
  %v6902 = vpop.f32.mrb[0].mxu0
  %v6903 = vadd.f32 0.0, %v6902
  %v6904 = vpop.f32.mrb[0].mxu0
  %6905 = vmatprep.mubr.bf16.mxu0 0
  %6906 = vmatmul.mubr.bf16.gmra.mrb[0].mxu0 %v6586
  %v6907 = vpop.f32.mrb[0].mxu0
  %v6908 = vadd.f32 0.0, %v6907
  %v6909 = vpop.f32.mrb[0].mxu0
  %v6910 = vpop.f32.mrb[0].mxu0
  %v6911 = vadd.f32 0.0, %v6910
  %v6912 = vpop.f32.mrb[0].mxu0
  %6913 = vmatprep.mubr.bf16.mxu0 0
  %6914 = vmatmul.mubr.bf16.gmra.mrb[0].mxu0 %v6589
  %v6915 = vpop.f32.mrb[0].mxu0
  %v6916 = vadd.f32 0.0, %v6915
  %v6917 = vpop.f32.mrb[0].mxu0
  %v6918 = vpop.f32.mrb[0].mxu0
  %v6919 = vadd.f32 0.0, %v6918
  %v6920 = vpop.f32.mrb[0].mxu0
  %6921 = vmatprep.mubr.bf16.mxu0 0
  %6922 = vmatmul.mubr.bf16.gmra.mrb[0].mxu0 %v6592
  %v6923 = vpop.f32.mrb[0].mxu0
  %v6924 = vadd.f32 0.0, %v6923
  %v6925 = vpop.f32.mrb[0].mxu0
  %v6926 = vpop.f32.mrb[0].mxu0
  %v6927 = vadd.f32 0.0, %v6926
  %v6928 = vpop.f32.mrb[0].mxu0
  %6929 = vmatprep.mubr.bf16.mxu0 0
  %6930 = vmatmul.mubr.bf16.gmra.mrb[0].mxu0 %v6595
  %v6931 = vpop.f32.mrb[0].mxu0
  %v6932 = vadd.f32 0.0, %v6931
  %v6933 = vpop.f32.mrb[0].mxu0
  %v6934 = vpop.f32.mrb[0].mxu0
  %v6935 = vadd.f32 0.0, %v6934
  %v6936 = vpop.f32.mrb[0].mxu0
  %6937 = vmatprep.mubr.bf16.mxu0 0
  %6938 = vmatmul.mubr.bf16.gmra.mrb[0].mxu0 %v6598
  %v6939 = vpop.f32.mrb[0].mxu0
  %v6940 = vadd.f32 0.0, %v6939
  %v6941 = vpop.f32.mrb[0].mxu0
  %v6942 = vpop.f32.mrb[0].mxu0
  %v6943 = vadd.f32 0.0, %v6942
  %v6944 = vpop.f32.mrb[0].mxu0
  %6945 = vmatprep.mubr.bf16.mxu0 0
  %6946 = vmatmul.mubr.bf16.gmra.mrb[0].mxu0 %v6601
  %v6947 = vpop.f32.mrb[0].mxu0
  %v6948 = vadd.f32 0.0, %v6947
  %v6949 = vpop.f32.mrb[0].mxu0
  %v6950 = vpop.f32.mrb[0].mxu0
  %v6951 = vadd.f32 0.0, %v6950
  %v6952 = vpop.f32.mrb[0].mxu0
  %6953 = vmatprep.mubr.bf16.mxu0 0
  %6954 = vmatmul.mubr.bf16.gmra.mrb[0].mxu0 %v6604
  %v6955 = vpop.f32.mrb[0].mxu0
  %v6956 = vadd.f32 0.0, %v6955
  %v6957 = vpop.f32.mrb[0].mxu0
  %v6958 = vpop.f32.mrb[0].mxu0
  %v6959 = vadd.f32 0.0, %v6958
  %v6960 = vpop.f32.mrb[0].mxu0
  %6961 = vmatprep.mubr.bf16.mxu0 0
  %6962 = vmatmul.mubr.bf16.gmra.mrb[0].mxu0 %v6607
  %v6963 = vpop.f32.mrb[0].mxu0
  %v6964 = vadd.f32 0.0, %v6963
  %v6965 = vpop.f32.mrb[0].mxu0
  %v6966 = vpop.f32.mrb[0].mxu0
  %v6967 = vpop.f32.mrb[0].mxu0
  %6968 = vdwg.mxu0
  %v6973 = vunpack.c.l.b16 %v6167
  %v6974 = vunpack.c.l.b16 %v6168
  %v6975 = vunpack.c.l.b16 %v6169
  %v6976 = vunpack.c.l.b16 %v6248
  %v6977 = vpack.c.b16 %v6974, %v6973
  %v6978 = vpack.c.b16 %v6346, %v6975
  %v6979 = vpack.c.b16 %v6348, %v6347
  %v6980 = vpack.c.b16 %v6350, %v6349
  %v6981 = vpack.c.b16 %v6352, %v6351
  %v6982 = vpack.c.b16 %v6354, %v6353
  %v6983 = vpack.c.b16 %v6356, %v6355
  %v6984 = vpack.c.b16 %v6358, %v6357
  %v6985 = vpack.c.b16 %v6360, %v6359
  %v6986 = vpack.c.b16 %v6362, %v6361
  %v6987 = vpack.c.b16 %v6364, %v6363
  %v6988 = vpack.c.b16 %v6366, %v6365
  %v6989 = vpack.c.b16 %v6368, %v6367
  %v6990 = vpack.c.b16 %v6370, %v6369
  %v6991 = vpack.c.b16 %v6372, %v6371
  %v6992 = vpack.c.b16 %v6374, %v6373
  %v6993 = vpack.c.b16 %v6376, %v6375
  %v6994 = vpack.c.b16 %v6378, %v6377
  %v6995 = vpack.c.b16 %v6380, %v6379
  %v6996 = vpack.c.b16 %v6382, %v6381
  %v6997 = vpack.c.b16 %v6384, %v6383
  %v6998 = vpack.c.b16 %v6386, %v6385
  %v6999 = vpack.c.b16 %v6388, %v6387
  %v7000 = vpack.c.b16 %v6390, %v6389
  %v7001 = vpack.c.b16 %v6392, %v6391
  %v7002 = vpack.c.b16 %v6394, %v6393
  %v7003 = vpack.c.b16 %v6396, %v6395
  %v7004 = vpack.c.b16 %v6398, %v6397
  %v7005 = vpack.c.b16 %v6400, %v6399
  %v7006 = vpack.c.b16 %v6402, %v6401
  %v7007 = vpack.c.b16 %v6404, %v6403
  %v7008 = vpack.c.b16 %v6406, %v6405
  %v7009 = vpack.c.b16 %v6408, %v6407
  %v7010 = vpack.c.b16 %v6410, %v6409
  %v7011 = vpack.c.b16 %v6412, %v6411
  %v7012 = vpack.c.b16 %v6414, %v6413
  %v7013 = vpack.c.b16 %v6416, %v6415
  %v7014 = vpack.c.b16 %v6418, %v6417
  %v7015 = vpack.c.b16 %v6420, %v6419
  %v7016 = vpack.c.b16 %v6422, %v6421
  %v7017 = vpack.c.b16 %v6976, %v6423
  %v7018 = vrot.slane %v6977, 3
  %v7019 = vrot.slane %v6978, 3
  %v7020 = vsel %vm972, %v7018, %v7019
  %v7021 = vrot.slane %v6979, 3
  %v7022 = vsel %vm972, %v7019, %v7021
  %v7023 = vrot.slane %v6980, 3
  %v7024 = vsel %vm972, %v7021, %v7023
  %v7025 = vrot.slane %v6981, 3
  %v7026 = vsel %vm972, %v7023, %v7025
  %v7027 = vrot.slane %v6982, 3
  %v7028 = vsel %vm972, %v7025, %v7027
  %v7029 = vrot.slane %v6983, 3
  %v7030 = vsel %vm972, %v7027, %v7029
  %v7031 = vrot.slane %v6984, 3
  %v7032 = vsel %vm972, %v7029, %v7031
  %v7033 = vrot.slane %v6985, 3
  %v7034 = vsel %vm972, %v7031, %v7033
  %v7035 = vrot.slane %v6986, 3
  %v7036 = vsel %vm972, %v7033, %v7035
  %v7037 = vrot.slane %v6987, 3
  %v7038 = vsel %vm972, %v7035, %v7037
  %v7039 = vrot.slane %v6988, 3
  %v7040 = vsel %vm972, %v7037, %v7039
  %v7041 = vrot.slane %v6989, 3
  %v7042 = vsel %vm972, %v7039, %v7041
  %v7043 = vrot.slane %v6990, 3
  %v7044 = vsel %vm972, %v7041, %v7043
  %v7045 = vrot.slane %v6991, 3
  %v7046 = vsel %vm972, %v7043, %v7045
  %v7047 = vrot.slane %v6992, 3
  %v7048 = vsel %vm972, %v7045, %v7047
  %v7049 = vrot.slane %v6993, 3
  %v7050 = vsel %vm972, %v7047, %v7049
  %v7051 = vrot.slane %v6994, 3
  %v7052 = vsel %vm972, %v7049, %v7051
  %v7053 = vrot.slane %v6995, 3
  %v7054 = vsel %vm972, %v7051, %v7053
  %v7055 = vrot.slane %v6996, 3
  %v7056 = vsel %vm972, %v7053, %v7055
  %v7057 = vrot.slane %v6997, 3
  %v7058 = vsel %vm972, %v7055, %v7057
  %v7059 = vrot.slane %v6998, 3
  %v7060 = vsel %vm972, %v7057, %v7059
  %v7061 = vrot.slane %v6999, 3
  %v7062 = vsel %vm972, %v7059, %v7061
  %v7063 = vrot.slane %v7000, 3
  %v7064 = vsel %vm972, %v7061, %v7063
  %v7065 = vrot.slane %v7001, 3
  %v7066 = vsel %vm972, %v7063, %v7065
  %v7067 = vrot.slane %v7002, 3
  %v7068 = vsel %vm972, %v7065, %v7067
  %v7069 = vrot.slane %v7003, 3
  %v7070 = vsel %vm972, %v7067, %v7069
  %v7071 = vrot.slane %v7004, 3
  %v7072 = vsel %vm972, %v7069, %v7071
  %v7073 = vrot.slane %v7005, 3
  %v7074 = vsel %vm972, %v7071, %v7073
  %v7075 = vrot.slane %v7006, 3
  %v7076 = vsel %vm972, %v7073, %v7075
  %v7077 = vrot.slane %v7007, 3
  %v7078 = vsel %vm972, %v7075, %v7077
  %v7079 = vrot.slane %v7008, 3
  %v7080 = vsel %vm972, %v7077, %v7079
  %v7081 = vrot.slane %v7009, 3
  %v7082 = vsel %vm972, %v7079, %v7081
  %v7083 = vrot.slane %v7010, 3
  %v7084 = vsel %vm972, %v7081, %v7083
  %v7085 = vrot.slane %v7011, 3
  %v7086 = vsel %vm972, %v7083, %v7085
  %v7087 = vrot.slane %v7012, 3
  %v7088 = vsel %vm972, %v7085, %v7087
  %v7089 = vrot.slane %v7013, 3
  %v7090 = vsel %vm972, %v7087, %v7089
  %v7091 = vrot.slane %v7014, 3
  %v7092 = vsel %vm972, %v7089, %v7091
  %v7093 = vrot.slane %v7015, 3
  %v7094 = vsel %vm972, %v7091, %v7093
  %v7095 = vrot.slane %v7016, 3
  %v7096 = vsel %vm972, %v7093, %v7095
  %v7097 = vrot.slane %v7017, 3
  %v7098 = vsel %vm972, %v7095, %v7097
  %v7105 = vunpack.c.l.b16 %v6249
  %v7106 = vunpack.c.l.b16 %v6250
  %v7107 = vunpack.c.l.b16 %v6251
  %v7108 = vunpack.c.l.b16 %v6252
  %v7109 = vunpack.c.l.b16 %v6253
  %v7110 = vunpack.c.l.b16 %v6254
  %v7111 = vpack.c.b16 %v7106, %v7105
  %v7112 = vpack.c.b16 %v7108, %v7107
  %v7113 = vpack.c.b16 %v7110, %v7109
  %v7118 = vsel %vm439, %v7020, 0
  %v7121 = vsel %vm439, %v7022, 0
  %v7124 = vsel %vm439, %v7024, 0
  %v7127 = vsel %vm439, %v7026, 0
  %v7130 = vsel %vm439, %v7028, 0
  %v7133 = vsel %vm439, %v7030, 0
  %v7136 = vsel %vm439, %v7032, 0
  %v7139 = vsel %vm439, %v7034, 0
  %v7142 = vsel %vm439, %v7036, 0
  %v7145 = vsel %vm439, %v7038, 0
  %v7148 = vsel %vm439, %v7040, 0
  %v7151 = vsel %vm439, %v7042, 0
  %v7154 = vsel %vm439, %v7044, 0
  %v7157 = vsel %vm439, %v7046, 0
  %v7160 = vsel %vm439, %v7048, 0
  %v7163 = vsel %vm439, %v7050, 0
  %v7166 = vsel %vm439, %v7052, 0
  %v7169 = vsel %vm439, %v7054, 0
  %v7172 = vsel %vm439, %v7056, 0
  %v7175 = vsel %vm439, %v7058, 0
  %v7178 = vsel %vm439, %v7060, 0
  %v7181 = vsel %vm439, %v7062, 0
  %v7184 = vsel %vm439, %v7064, 0
  %v7187 = vsel %vm439, %v7066, 0
  %v7190 = vsel %vm439, %v7068, 0
  %v7193 = vsel %vm439, %v7070, 0
  %v7196 = vsel %vm439, %v7072, 0
  %v7199 = vsel %vm439, %v7074, 0
  %v7202 = vsel %vm439, %v7076, 0
  %v7205 = vsel %vm439, %v7078, 0
  %v7208 = vsel %vm439, %v7080, 0
  %v7211 = vsel %vm439, %v7082, 0
  %v7214 = vsel %vm439, %v7084, 0
  %v7217 = vsel %vm439, %v7086, 0
  %v7220 = vsel %vm439, %v7088, 0
  %v7223 = vsel %vm439, %v7090, 0
  %v7226 = vsel %vm439, %v7092, 0
  %v7229 = vsel %vm439, %v7094, 0
  %v7232 = vsel %vm439, %v7096, 0
  %v7235 = vsel %vm439, %v7098, 0
  %v7238 = vsel %vm439, %v7097, 0
  %7240 = vmatprep.subr.bf16.mxu0 0
  %7241 = vmatpush1.bf16.msra.mxu0 %v7111
  %7242 = vmatprep.subr.bf16.mxu0 0
  %7243 = vmatpush1.bf16.msra.mxu0 %v7112
  %7244 = vmatprep.subr.bf16.mxu0 0
  %7245 = vmatpush1.bf16.msra.mxu0 %v7113
  %7246 = vmatprep.subr.bf16.mxu0 0
  %7247 = vmatpush1.bf16.msra.mxu0 0
  %7248 = vmatprep.subr.bf16.mxu0 0
  %7249 = vmatpush1.bf16.msra.mxu0 0
  %7250 = vmatprep.subr.bf16.mxu0 0
  %7251 = vmatpush1.bf16.msra.mxu0 0
  %7252 = vmatprep.subr.bf16.mxu0 0
  %7253 = vmatpush1.bf16.msra.mxu0 0
  %7254 = vmatprep.subr.bf16.mxu0 0
  %7255 = vmatpush1.bf16.msra.mxu0 0
  %7256 = vmatprep.subr.bf16.mxu0 0
  %7257 = vmatpush1.bf16.msra.mxu0 0
  %7258 = vmatprep.subr.bf16.mxu0 0
  %7259 = vmatpush1.bf16.msra.mxu0 0
  %7260 = vmatprep.subr.bf16.mxu0 0
  %7261 = vmatpush1.bf16.msra.mxu0 0
  %7262 = vmatprep.subr.bf16.mxu0 0
  %7263 = vmatpush1.bf16.msra.mxu0 0
  %7264 = vmatprep.subr.bf16.mxu0 0
  %7265 = vmatpush1.bf16.msra.mxu0 0
  %7266 = vmatprep.subr.bf16.mxu0 0
  %7267 = vmatpush1.bf16.msra.mxu0 0
  %7268 = vmatprep.subr.bf16.mxu0 0
  %7269 = vmatpush1.bf16.msra.mxu0 0
  %7270 = vmatprep.subr.bf16.mxu0 0
  %7271 = vmatpush1.bf16.msra.mxu0 0
  %7272 = vmatprep.mubr.bf16.mxu0 0
  %7273 = vmatmul.mubr.bf16.gmra.mrb[0].mxu0 %v7118
  %v7274 = vpop.f32.mrb[0].mxu0
  %v7275 = vadd.f32 %v6644, %v7274
  %v7276 = vpop.f32.mrb[0].mxu0
  %v7277 = vpop.f32.mrb[0].mxu0
  %v7278 = vadd.f32 %v6647, %v7277
  %v7279 = vpop.f32.mrb[0].mxu0
  %7280 = vmatprep.mubr.bf16.mxu0 0
  %7281 = vmatmul.mubr.bf16.gmra.mrb[0].mxu0 %v7121
  %v7282 = vpop.f32.mrb[0].mxu0
  %v7283 = vadd.f32 %v6652, %v7282
  %v7284 = vpop.f32.mrb[0].mxu0
  %v7285 = vpop.f32.mrb[0].mxu0
  %v7286 = vadd.f32 %v6655, %v7285
  %v7287 = vpop.f32.mrb[0].mxu0
  %7288 = vmatprep.mubr.bf16.mxu0 0
  %7289 = vmatmul.mubr.bf16.gmra.mrb[0].mxu0 %v7124
  %v7290 = vpop.f32.mrb[0].mxu0
  %v7291 = vadd.f32 %v6660, %v7290
  %v7292 = vpop.f32.mrb[0].mxu0
  %v7293 = vpop.f32.mrb[0].mxu0
  %v7294 = vadd.f32 %v6663, %v7293
  %v7295 = vpop.f32.mrb[0].mxu0
  %7296 = vmatprep.mubr.bf16.mxu0 0
  %7297 = vmatmul.mubr.bf16.gmra.mrb[0].mxu0 %v7127
  %v7298 = vpop.f32.mrb[0].mxu0
  %v7299 = vadd.f32 %v6668, %v7298
  %v7300 = vpop.f32.mrb[0].mxu0
  %v7301 = vpop.f32.mrb[0].mxu0
  %v7302 = vadd.f32 %v6671, %v7301
  %v7303 = vpop.f32.mrb[0].mxu0
  %7304 = vmatprep.mubr.bf16.mxu0 0
  %7305 = vmatmul.mubr.bf16.gmra.mrb[0].mxu0 %v7130
  %v7306 = vpop.f32.mrb[0].mxu0
  %v7307 = vadd.f32 %v6676, %v7306
  %v7308 = vpop.f32.mrb[0].mxu0
  %v7309 = vpop.f32.mrb[0].mxu0
  %v7310 = vadd.f32 %v6679, %v7309
  %v7311 = vpop.f32.mrb[0].mxu0
  %7312 = vmatprep.mubr.bf16.mxu0 0
  %7313 = vmatmul.mubr.bf16.gmra.mrb[0].mxu0 %v7133
  %v7314 = vpop.f32.mrb[0].mxu0
  %v7315 = vadd.f32 %v6684, %v7314
  %v7316 = vpop.f32.mrb[0].mxu0
  %v7317 = vpop.f32.mrb[0].mxu0
  %v7318 = vadd.f32 %v6687, %v7317
  %v7319 = vpop.f32.mrb[0].mxu0
  %7320 = vmatprep.mubr.bf16.mxu0 0
  %7321 = vmatmul.mubr.bf16.gmra.mrb[0].mxu0 %v7136
  %v7322 = vpop.f32.mrb[0].mxu0
  %v7323 = vadd.f32 %v6692, %v7322
  %v7324 = vpop.f32.mrb[0].mxu0
  %v7325 = vpop.f32.mrb[0].mxu0
  %v7326 = vadd.f32 %v6695, %v7325
  %v7327 = vpop.f32.mrb[0].mxu0
  %7328 = vmatprep.mubr.bf16.mxu0 0
  %7329 = vmatmul.mubr.bf16.gmra.mrb[0].mxu0 %v7139
  %v7330 = vpop.f32.mrb[0].mxu0
  %v7331 = vadd.f32 %v6700, %v7330
  %v7332 = vpop.f32.mrb[0].mxu0
  %v7333 = vpop.f32.mrb[0].mxu0
  %v7334 = vadd.f32 %v6703, %v7333
  %v7335 = vpop.f32.mrb[0].mxu0
  %7336 = vmatprep.mubr.bf16.mxu0 0
  %7337 = vmatmul.mubr.bf16.gmra.mrb[0].mxu0 %v7142
  %v7338 = vpop.f32.mrb[0].mxu0
  %v7339 = vadd.f32 %v6708, %v7338
  %v7340 = vpop.f32.mrb[0].mxu0
  %v7341 = vpop.f32.mrb[0].mxu0
  %v7342 = vadd.f32 %v6711, %v7341
  %v7343 = vpop.f32.mrb[0].mxu0
  %7344 = vmatprep.mubr.bf16.mxu0 0
  %7345 = vmatmul.mubr.bf16.gmra.mrb[0].mxu0 %v7145
  %v7346 = vpop.f32.mrb[0].mxu0
  %v7347 = vadd.f32 %v6716, %v7346
  %v7348 = vpop.f32.mrb[0].mxu0
  %v7349 = vpop.f32.mrb[0].mxu0
  %v7350 = vadd.f32 %v6719, %v7349
  %v7351 = vpop.f32.mrb[0].mxu0
  %7352 = vmatprep.mubr.bf16.mxu0 0
  %7353 = vmatmul.mubr.bf16.gmra.mrb[0].mxu0 %v7148
  %v7354 = vpop.f32.mrb[0].mxu0
  %v7355 = vadd.f32 %v6724, %v7354
  %v7356 = vpop.f32.mrb[0].mxu0
  %v7357 = vpop.f32.mrb[0].mxu0
  %v7358 = vadd.f32 %v6727, %v7357
  %v7359 = vpop.f32.mrb[0].mxu0
  %7360 = vmatprep.mubr.bf16.mxu0 0
  %7361 = vmatmul.mubr.bf16.gmra.mrb[0].mxu0 %v7151
  %v7362 = vpop.f32.mrb[0].mxu0
  %v7363 = vadd.f32 %v6732, %v7362
  %v7364 = vpop.f32.mrb[0].mxu0
  %v7365 = vpop.f32.mrb[0].mxu0
  %v7366 = vadd.f32 %v6735, %v7365
  %v7367 = vpop.f32.mrb[0].mxu0
  %7368 = vmatprep.mubr.bf16.mxu0 0
  %7369 = vmatmul.mubr.bf16.gmra.mrb[0].mxu0 %v7154
  %v7370 = vpop.f32.mrb[0].mxu0
  %v7371 = vadd.f32 %v6740, %v7370
  %v7372 = vpop.f32.mrb[0].mxu0
  %v7373 = vpop.f32.mrb[0].mxu0
  %v7374 = vadd.f32 %v6743, %v7373
  %v7375 = vpop.f32.mrb[0].mxu0
  %7376 = vmatprep.mubr.bf16.mxu0 0
  %7377 = vmatmul.mubr.bf16.gmra.mrb[0].mxu0 %v7157
  %v7378 = vpop.f32.mrb[0].mxu0
  %v7379 = vadd.f32 %v6748, %v7378
  %v7380 = vpop.f32.mrb[0].mxu0
  %v7381 = vpop.f32.mrb[0].mxu0
  %v7382 = vadd.f32 %v6751, %v7381
  %v7383 = vpop.f32.mrb[0].mxu0
  %7384 = vmatprep.mubr.bf16.mxu0 0
  %7385 = vmatmul.mubr.bf16.gmra.mrb[0].mxu0 %v7160
  %v7386 = vpop.f32.mrb[0].mxu0
  %v7387 = vadd.f32 %v6756, %v7386
  %v7388 = vpop.f32.mrb[0].mxu0
  %v7389 = vpop.f32.mrb[0].mxu0
  %v7390 = vadd.f32 %v6759, %v7389
  %v7391 = vpop.f32.mrb[0].mxu0
  %7392 = vmatprep.mubr.bf16.mxu0 0
  %7393 = vmatmul.mubr.bf16.gmra.mrb[0].mxu0 %v7163
  %v7394 = vpop.f32.mrb[0].mxu0
  %v7395 = vadd.f32 %v6764, %v7394
  %v7396 = vpop.f32.mrb[0].mxu0
  %v7397 = vpop.f32.mrb[0].mxu0
  %v7398 = vadd.f32 %v6767, %v7397
  %v7399 = vpop.f32.mrb[0].mxu0
  %7400 = vmatprep.mubr.bf16.mxu0 0
  %7401 = vmatmul.mubr.bf16.gmra.mrb[0].mxu0 %v7166
  %v7402 = vpop.f32.mrb[0].mxu0
  %v7403 = vadd.f32 %v6772, %v7402
  %v7404 = vpop.f32.mrb[0].mxu0
  %v7405 = vpop.f32.mrb[0].mxu0
  %v7406 = vadd.f32 %v6775, %v7405
  %v7407 = vpop.f32.mrb[0].mxu0
  %7408 = vmatprep.mubr.bf16.mxu0 0
  %7409 = vmatmul.mubr.bf16.gmra.mrb[0].mxu0 %v7169
  %v7410 = vpop.f32.mrb[0].mxu0
  %v7411 = vadd.f32 %v6780, %v7410
  %v7412 = vpop.f32.mrb[0].mxu0
  %v7413 = vpop.f32.mrb[0].mxu0
  %v7414 = vadd.f32 %v6783, %v7413
  %v7415 = vpop.f32.mrb[0].mxu0
  %7416 = vmatprep.mubr.bf16.mxu0 0
  %7417 = vmatmul.mubr.bf16.gmra.mrb[0].mxu0 %v7172
  %v7418 = vpop.f32.mrb[0].mxu0
  %v7419 = vadd.f32 %v6788, %v7418
  %v7420 = vpop.f32.mrb[0].mxu0
  %v7421 = vpop.f32.mrb[0].mxu0
  %v7422 = vadd.f32 %v6791, %v7421
  %v7423 = vpop.f32.mrb[0].mxu0
  %7424 = vmatprep.mubr.bf16.mxu0 0
  %7425 = vmatmul.mubr.bf16.gmra.mrb[0].mxu0 %v7175
  %v7426 = vpop.f32.mrb[0].mxu0
  %v7427 = vadd.f32 %v6796, %v7426
  %v7428 = vpop.f32.mrb[0].mxu0
  %v7429 = vpop.f32.mrb[0].mxu0
  %v7430 = vadd.f32 %v6799, %v7429
  %v7431 = vpop.f32.mrb[0].mxu0
  %7432 = vmatprep.mubr.bf16.mxu0 0
  %7433 = vmatmul.mubr.bf16.gmra.mrb[0].mxu0 %v7178
  %v7434 = vpop.f32.mrb[0].mxu0
  %v7435 = vadd.f32 %v6804, %v7434
  %v7436 = vpop.f32.mrb[0].mxu0
  %v7437 = vpop.f32.mrb[0].mxu0
  %v7438 = vadd.f32 %v6807, %v7437
  %v7439 = vpop.f32.mrb[0].mxu0
  %7440 = vmatprep.mubr.bf16.mxu0 0
  %7441 = vmatmul.mubr.bf16.gmra.mrb[0].mxu0 %v7181
  %v7442 = vpop.f32.mrb[0].mxu0
  %v7443 = vadd.f32 %v6812, %v7442
  %v7444 = vpop.f32.mrb[0].mxu0
  %v7445 = vpop.f32.mrb[0].mxu0
  %v7446 = vadd.f32 %v6815, %v7445
  %v7447 = vpop.f32.mrb[0].mxu0
  %7448 = vmatprep.mubr.bf16.mxu0 0
  %7449 = vmatmul.mubr.bf16.gmra.mrb[0].mxu0 %v7184
  %v7450 = vpop.f32.mrb[0].mxu0
  %v7451 = vadd.f32 %v6820, %v7450
  %v7452 = vpop.f32.mrb[0].mxu0
  %v7453 = vpop.f32.mrb[0].mxu0
  %v7454 = vadd.f32 %v6823, %v7453
  %v7455 = vpop.f32.mrb[0].mxu0
  %7456 = vmatprep.mubr.bf16.mxu0 0
  %7457 = vmatmul.mubr.bf16.gmra.mrb[0].mxu0 %v7187
  %v7458 = vpop.f32.mrb[0].mxu0
  %v7459 = vadd.f32 %v6828, %v7458
  %v7460 = vpop.f32.mrb[0].mxu0
  %v7461 = vpop.f32.mrb[0].mxu0
  %v7462 = vadd.f32 %v6831, %v7461
  %v7463 = vpop.f32.mrb[0].mxu0
  %7464 = vmatprep.mubr.bf16.mxu0 0
  %7465 = vmatmul.mubr.bf16.gmra.mrb[0].mxu0 %v7190
  %v7466 = vpop.f32.mrb[0].mxu0
  %v7467 = vadd.f32 %v6836, %v7466
  %v7468 = vpop.f32.mrb[0].mxu0
  %v7469 = vpop.f32.mrb[0].mxu0
  %v7470 = vadd.f32 %v6839, %v7469
  %v7471 = vpop.f32.mrb[0].mxu0
  %7472 = vmatprep.mubr.bf16.mxu0 0
  %7473 = vmatmul.mubr.bf16.gmra.mrb[0].mxu0 %v7193
  %v7474 = vpop.f32.mrb[0].mxu0
  %v7475 = vadd.f32 %v6844, %v7474
  %v7476 = vpop.f32.mrb[0].mxu0
  %v7477 = vpop.f32.mrb[0].mxu0
  %v7478 = vadd.f32 %v6847, %v7477
  %v7479 = vpop.f32.mrb[0].mxu0
  %7480 = vmatprep.mubr.bf16.mxu0 0
  %7481 = vmatmul.mubr.bf16.gmra.mrb[0].mxu0 %v7196
  %v7482 = vpop.f32.mrb[0].mxu0
  %v7483 = vadd.f32 %v6852, %v7482
  %v7484 = vpop.f32.mrb[0].mxu0
  %v7485 = vpop.f32.mrb[0].mxu0
  %v7486 = vadd.f32 %v6855, %v7485
  %v7487 = vpop.f32.mrb[0].mxu0
  %7488 = vmatprep.mubr.bf16.mxu0 0
  %7489 = vmatmul.mubr.bf16.gmra.mrb[0].mxu0 %v7199
  %v7490 = vpop.f32.mrb[0].mxu0
  %v7491 = vadd.f32 %v6860, %v7490
  %v7492 = vpop.f32.mrb[0].mxu0
  %v7493 = vpop.f32.mrb[0].mxu0
  %v7494 = vadd.f32 %v6863, %v7493
  %v7495 = vpop.f32.mrb[0].mxu0
  %7496 = vmatprep.mubr.bf16.mxu0 0
  %7497 = vmatmul.mubr.bf16.gmra.mrb[0].mxu0 %v7202
  %v7498 = vpop.f32.mrb[0].mxu0
  %v7499 = vadd.f32 %v6868, %v7498
  %v7500 = vpop.f32.mrb[0].mxu0
  %v7501 = vpop.f32.mrb[0].mxu0
  %v7502 = vadd.f32 %v6871, %v7501
  %v7503 = vpop.f32.mrb[0].mxu0
  %7504 = vmatprep.mubr.bf16.mxu0 0
  %7505 = vmatmul.mubr.bf16.gmra.mrb[0].mxu0 %v7205
  %v7506 = vpop.f32.mrb[0].mxu0
  %v7507 = vadd.f32 %v6876, %v7506
  %v7508 = vpop.f32.mrb[0].mxu0
  %v7509 = vpop.f32.mrb[0].mxu0
  %v7510 = vadd.f32 %v6879, %v7509
  %v7511 = vpop.f32.mrb[0].mxu0
  %7512 = vmatprep.mubr.bf16.mxu0 0
  %7513 = vmatmul.mubr.bf16.gmra.mrb[0].mxu0 %v7208
  %v7514 = vpop.f32.mrb[0].mxu0
  %v7515 = vadd.f32 %v6884, %v7514
  %v7516 = vpop.f32.mrb[0].mxu0
  %v7517 = vpop.f32.mrb[0].mxu0
  %v7518 = vadd.f32 %v6887, %v7517
  %v7519 = vpop.f32.mrb[0].mxu0
  %7520 = vmatprep.mubr.bf16.mxu0 0
  %7521 = vmatmul.mubr.bf16.gmra.mrb[0].mxu0 %v7211
  %v7522 = vpop.f32.mrb[0].mxu0
  %v7523 = vadd.f32 %v6892, %v7522
  %v7524 = vpop.f32.mrb[0].mxu0
  %v7525 = vpop.f32.mrb[0].mxu0
  %v7526 = vadd.f32 %v6895, %v7525
  %v7527 = vpop.f32.mrb[0].mxu0
  %7528 = vmatprep.mubr.bf16.mxu0 0
  %7529 = vmatmul.mubr.bf16.gmra.mrb[0].mxu0 %v7214
  %v7530 = vpop.f32.mrb[0].mxu0
  %v7531 = vadd.f32 %v6900, %v7530
  %v7532 = vpop.f32.mrb[0].mxu0
  %v7533 = vpop.f32.mrb[0].mxu0
  %v7534 = vadd.f32 %v6903, %v7533
  %v7535 = vpop.f32.mrb[0].mxu0
  %7536 = vmatprep.mubr.bf16.mxu0 0
  %7537 = vmatmul.mubr.bf16.gmra.mrb[0].mxu0 %v7217
  %v7538 = vpop.f32.mrb[0].mxu0
  %v7539 = vadd.f32 %v6908, %v7538
  %v7540 = vpop.f32.mrb[0].mxu0
  %v7541 = vpop.f32.mrb[0].mxu0
  %v7542 = vadd.f32 %v6911, %v7541
  %v7543 = vpop.f32.mrb[0].mxu0
  %7544 = vmatprep.mubr.bf16.mxu0 0
  %7545 = vmatmul.mubr.bf16.gmra.mrb[0].mxu0 %v7220
  %v7546 = vpop.f32.mrb[0].mxu0
  %v7547 = vadd.f32 %v6916, %v7546
  %v7548 = vpop.f32.mrb[0].mxu0
  %v7549 = vpop.f32.mrb[0].mxu0
  %v7550 = vadd.f32 %v6919, %v7549
  %v7551 = vpop.f32.mrb[0].mxu0
  %7552 = vmatprep.mubr.bf16.mxu0 0
  %7553 = vmatmul.mubr.bf16.gmra.mrb[0].mxu0 %v7223
  %v7554 = vpop.f32.mrb[0].mxu0
  %v7555 = vadd.f32 %v6924, %v7554
  %v7556 = vpop.f32.mrb[0].mxu0
  %v7557 = vpop.f32.mrb[0].mxu0
  %v7558 = vadd.f32 %v6927, %v7557
  %v7559 = vpop.f32.mrb[0].mxu0
  %7560 = vmatprep.mubr.bf16.mxu0 0
  %7561 = vmatmul.mubr.bf16.gmra.mrb[0].mxu0 %v7226
  %v7562 = vpop.f32.mrb[0].mxu0
  %v7563 = vadd.f32 %v6932, %v7562
  %v7564 = vpop.f32.mrb[0].mxu0
  %v7565 = vpop.f32.mrb[0].mxu0
  %v7566 = vadd.f32 %v6935, %v7565
  %v7567 = vpop.f32.mrb[0].mxu0
  %7568 = vmatprep.mubr.bf16.mxu0 0
  %7569 = vmatmul.mubr.bf16.gmra.mrb[0].mxu0 %v7229
  %v7570 = vpop.f32.mrb[0].mxu0
  %v7571 = vadd.f32 %v6940, %v7570
  %v7572 = vpop.f32.mrb[0].mxu0
  %v7573 = vpop.f32.mrb[0].mxu0
  %v7574 = vadd.f32 %v6943, %v7573
  %v7575 = vpop.f32.mrb[0].mxu0
  %7576 = vmatprep.mubr.bf16.mxu0 0
  %7577 = vmatmul.mubr.bf16.gmra.mrb[0].mxu0 %v7232
  %v7578 = vpop.f32.mrb[0].mxu0
  %v7579 = vadd.f32 %v6948, %v7578
  %v7580 = vpop.f32.mrb[0].mxu0
  %v7581 = vpop.f32.mrb[0].mxu0
  %v7582 = vadd.f32 %v6951, %v7581
  %v7583 = vpop.f32.mrb[0].mxu0
  %7584 = vmatprep.mubr.bf16.mxu0 0
  %7585 = vmatmul.mubr.bf16.gmra.mrb[0].mxu0 %v7235
  %v7586 = vpop.f32.mrb[0].mxu0
  %v7587 = vadd.f32 %v6956, %v7586
  %v7588 = vpop.f32.mrb[0].mxu0
  %v7589 = vpop.f32.mrb[0].mxu0
  %v7590 = vadd.f32 %v6959, %v7589
  %v7591 = vpop.f32.mrb[0].mxu0
  %7592 = vmatprep.mubr.bf16.mxu0 0
  %7593 = vmatmul.mubr.bf16.gmra.mrb[0].mxu0 %v7238
  %v7594 = vpop.f32.mrb[0].mxu0
  %v7595 = vadd.f32 %v6964, %v7594
  %v7596 = vpop.f32.mrb[0].mxu0
  %v7597 = vpop.f32.mrb[0].mxu0
  %v7598 = vpop.f32.mrb[0].mxu0
  %7599 = vdwg.mxu0
  %v7600 = vld [vmem:[#allocation2 + $0x18] sm:$0xe]
  %v7601 = vld [vmem:[#allocation2 + $0x1c] sm:$0xf]
  %v7602 = vld [vmem:[#allocation2 + $0x20] sm:$0xf]
  %v7603 = vld [vmem:[#allocation2 + $0x24] sm:$0xf]
  %v7604 = vld [vmem:[#allocation2 + $0x28] sm:$0xf]
  %v7605 = vld [vmem:[#allocation2 + $0x2c] sm:$0xf]
  %v7606 = vld [vmem:[#allocation2 + $0x30] sm:$0xf]
  %v7607 = vld [vmem:[#allocation2 + $0x34] sm:$0xf]
  %v7608 = vld [vmem:[#allocation2 + $0x38] sm:$0xf]
  %v7609 = vld [vmem:[#allocation2 + $0x3c] sm:$0xf]
  %v7610 = vld [vmem:[#allocation2 + $0x40] sm:$0xf]
  %v7611 = vld [vmem:[#allocation2 + $0x44] sm:$0xf]
  %v7612 = vld [vmem:[#allocation2 + $0x48] sm:$0xf]
  %v7613 = vld [vmem:[#allocation2 + $0x4c] sm:$0xf]
  %v7614 = vld [vmem:[#allocation2 + $0x50] sm:$0xf]
  %v7615 = vld [vmem:[#allocation2 + $0x54] sm:$0xf]
  %v7616 = vld [vmem:[#allocation2 + $0x58] sm:$0xf]
  %v7617 = vld [vmem:[#allocation2 + $0x5c] sm:$0xf]
  %v7618 = vld [vmem:[#allocation2 + $0x60] sm:$0xf]
  %v7619 = vld [vmem:[#allocation2 + $0x64] sm:$0xf]
  %v7620 = vld [vmem:[#allocation2 + $0x68] sm:$0xf]
  %v7621 = vld [vmem:[#allocation2 + $0x6c] sm:$0xf]
  %v7622 = vld [vmem:[#allocation2 + $0x70] sm:$0xf]
  %v7623 = vld [vmem:[#allocation2 + $0x74] sm:$0xf]
  %v7624 = vld [vmem:[#allocation2 + $0x78] sm:$0xf]
  %v7625 = vld [vmem:[#allocation2 + $0x7c] sm:$0xf]
  %v7626 = vld [vmem:[#allocation2 + $0x80] sm:$0xf]
  %v7627 = vld [vmem:[#allocation2 + $0x84] sm:$0xf]
  %v7628 = vld [vmem:[#allocation2 + $0x88] sm:$0xf]
  %v7629 = vld [vmem:[#allocation2 + $0x8c] sm:$0xf]
  %v7630 = vld [vmem:[#allocation2 + $0x90] sm:$0xf]
  %v7631 = vld [vmem:[#allocation2 + $0x94] sm:$0xf]
  %v7632 = vld [vmem:[#allocation2 + $0x98] sm:$0xf]
  %v7633 = vld [vmem:[#allocation2 + $0x9c] sm:$0xf]
  %v7634 = vld [vmem:[#allocation2 + $0xa0] sm:$0xf]
  %v7635 = vld [vmem:[#allocation2 + $0xa4] sm:$0xf]
  %v7636 = vld [vmem:[#allocation2 + $0xa8] sm:$0xf]
  %v7637 = vld [vmem:[#allocation2 + $0xac] sm:$0xf]
  %v7638 = vld [vmem:[#allocation2 + $0xb0] sm:$0xf]
  %v7639 = vld [vmem:[#allocation2 + $0xb4] sm:$0xf]
  %v7640 = vld [vmem:[#allocation2 + $0xb8] sm:$0xf]
  %v7641 = vld [vmem:[#allocation2 + $0xbc] sm:$0xf]
  %v7642 = vld [vmem:[#allocation2 + $0xc0] sm:$0xf]
  %v7643 = vld [vmem:[#allocation2 + $0xc4] sm:$0xf]
  %v7644 = vld [vmem:[#allocation2 + $0xc8] sm:$0xf]
  %v7645 = vld [vmem:[#allocation2 + $0xcc] sm:$0xf]
  %v7646 = vld [vmem:[#allocation2 + $0xd0] sm:$0xf]
  %v7647 = vld [vmem:[#allocation2 + $0xd4] sm:$0xf]
  %v7648 = vld [vmem:[#allocation2 + $0xd8] sm:$0xf]
  %v7649 = vld [vmem:[#allocation2 + $0xdc] sm:$0xf]
  %v7650 = vld [vmem:[#allocation2 + $0xe0] sm:$0xf]
  %v7651 = vld [vmem:[#allocation2 + $0xe4] sm:$0xf]
  %v7652 = vld [vmem:[#allocation2 + $0xe8] sm:$0xf]
  %v7653 = vld [vmem:[#allocation2 + $0xec] sm:$0xf]
  %v7654 = vld [vmem:[#allocation2 + $0xf0] sm:$0xf]
  %v7655 = vld [vmem:[#allocation2 + $0xf4] sm:$0xf]
  %v7656 = vld [vmem:[#allocation2 + $0xf8] sm:$0xf]
  %v7657 = vld [vmem:[#allocation2 + $0xfc] sm:$0xf]
  %v7658 = vld [vmem:[#allocation2 + $0x100] sm:$0xf]
  %v7659 = vld [vmem:[#allocation2 + $0x104] sm:$0xf]
  %v7660 = vld [vmem:[#allocation2 + $0x108] sm:$0xf]
  %v7661 = vld [vmem:[#allocation2 + $0x10c] sm:$0xf]
  %v7662 = vld [vmem:[#allocation2 + $0x110] sm:$0xf]
  %v7663 = vld [vmem:[#allocation2 + $0x114] sm:$0xf]
  %v7664 = vld [vmem:[#allocation2 + $0x118] sm:$0xf]
  %v7665 = vld [vmem:[#allocation2 + $0x11c] sm:$0xf]
  %v7666 = vld [vmem:[#allocation2 + $0x120] sm:$0xf]
  %v7667 = vld [vmem:[#allocation2 + $0x124] sm:$0xf]
  %v7668 = vld [vmem:[#allocation2 + $0x128] sm:$0xf]
  %v7669 = vld [vmem:[#allocation2 + $0x12c] sm:$0xf]
  %v7670 = vld [vmem:[#allocation2 + $0x130] sm:$0xf]
  %v7671 = vld [vmem:[#allocation2 + $0x134] sm:$0xf]
  %v7672 = vld [vmem:[#allocation2 + $0x138] sm:$0xf]
  %v7673 = vld [vmem:[#allocation2 + $0x13c] sm:$0xf]
  %v7674 = vld [vmem:[#allocation2 + $0x140] sm:$0xf]
  %v7675 = vld [vmem:[#allocation2 + $0x144] sm:$0xf]
  %v7676 = vld [vmem:[#allocation2 + $0x148] sm:$0xf]
  %v7677 = vld [vmem:[#allocation2 + $0x14c] sm:$0xf]
  %v7678 = vld [vmem:[#allocation2 + $0x150] sm:$0xf]
  %v7679 = vld [vmem:[#allocation2 + $0x154] sm:$0xf]
  %v7680 = vld [vmem:[#allocation2 + $0x158] sm:$0xf]
  %v7681 = vld [vmem:[#allocation2 + $0x15c] sm:$0x1]
  %s7682 = scalar_lea.vmem %s7, 48
  %v7683 = vld [vmem:[%s7682] sm:$0xf]
  %v7684 = vld [vmem:[%s7682 + $0x4] sm:$0xf]
  %v7685 = vld [vmem:[%s7682 + $0x8] sm:$0xf]
  %v7686 = vld [vmem:[%s7682 + $0xc] sm:$0xf]
  %v7687 = vld [vmem:[%s7682 + $0x10] sm:$0xf]
  %v7688 = vld [vmem:[%s7682 + $0x14] sm:$0xf]
  %v7771 = vunpack.c.l.b16 %v7600
  %v7772 = vunpack.c.l.b16 %v7601
  %v7773 = vunpack.c.l.b16 %v7602
  %v7774 = vunpack.c.l.b16 %v7603
  %v7775 = vunpack.c.l.b16 %v7604
  %v7776 = vunpack.c.l.b16 %v7605
  %v7777 = vunpack.c.l.b16 %v7606
  %v7778 = vunpack.c.l.b16 %v7607
  %v7779 = vunpack.c.l.b16 %v7608
  %v7780 = vunpack.c.l.b16 %v7609
  %v7781 = vunpack.c.l.b16 %v7610
  %v7782 = vunpack.c.l.b16 %v7611
  %v7783 = vunpack.c.l.b16 %v7612
  %v7784 = vunpack.c.l.b16 %v7613
  %v7785 = vunpack.c.l.b16 %v7614
  %v7786 = vunpack.c.l.b16 %v7615
  %v7787 = vunpack.c.l.b16 %v7616
  %v7788 = vunpack.c.l.b16 %v7617
  %v7789 = vunpack.c.l.b16 %v7618
  %v7790 = vunpack.c.l.b16 %v7619
  %v7791 = vunpack.c.l.b16 %v7620
  %v7792 = vunpack.c.l.b16 %v7621
  %v7793 = vunpack.c.l.b16 %v7622
  %v7794 = vunpack.c.l.b16 %v7623
  %v7795 = vunpack.c.l.b16 %v7624
  %v7796 = vunpack.c.l.b16 %v7625
  %v7797 = vunpack.c.l.b16 %v7626
  %v7798 = vunpack.c.l.b16 %v7627
  %v7799 = vunpack.c.l.b16 %v7628
  %v7800 = vunpack.c.l.b16 %v7629
  %v7801 = vunpack.c.l.b16 %v7630
  %v7802 = vunpack.c.l.b16 %v7631
  %v7803 = vunpack.c.l.b16 %v7632
  %v7804 = vunpack.c.l.b16 %v7633
  %v7805 = vunpack.c.l.b16 %v7634
  %v7806 = vunpack.c.l.b16 %v7635
  %v7807 = vunpack.c.l.b16 %v7636
  %v7808 = vunpack.c.l.b16 %v7637
  %v7809 = vunpack.c.l.b16 %v7638
  %v7810 = vunpack.c.l.b16 %v7639
  %v7811 = vunpack.c.l.b16 %v7640
  %v7812 = vunpack.c.l.b16 %v7641
  %v7813 = vunpack.c.l.b16 %v7642
  %v7814 = vunpack.c.l.b16 %v7643
  %v7815 = vunpack.c.l.b16 %v7644
  %v7816 = vunpack.c.l.b16 %v7645
  %v7817 = vunpack.c.l.b16 %v7646
  %v7818 = vunpack.c.l.b16 %v7647
  %v7819 = vunpack.c.l.b16 %v7648
  %v7820 = vunpack.c.l.b16 %v7649
  %v7821 = vunpack.c.l.b16 %v7650
  %v7822 = vunpack.c.l.b16 %v7651
  %v7823 = vunpack.c.l.b16 %v7652
  %v7824 = vunpack.c.l.b16 %v7653
  %v7825 = vunpack.c.l.b16 %v7654
  %v7826 = vunpack.c.l.b16 %v7655
  %v7827 = vunpack.c.l.b16 %v7656
  %v7828 = vunpack.c.l.b16 %v7657
  %v7829 = vunpack.c.l.b16 %v7658
  %v7830 = vunpack.c.l.b16 %v7659
  %v7831 = vunpack.c.l.b16 %v7660
  %v7832 = vunpack.c.l.b16 %v7661
  %v7833 = vunpack.c.l.b16 %v7662
  %v7834 = vunpack.c.l.b16 %v7663
  %v7835 = vunpack.c.l.b16 %v7664
  %v7836 = vunpack.c.l.b16 %v7665
  %v7837 = vunpack.c.l.b16 %v7666
  %v7838 = vunpack.c.l.b16 %v7667
  %v7839 = vunpack.c.l.b16 %v7668
  %v7840 = vunpack.c.l.b16 %v7669
  %v7841 = vunpack.c.l.b16 %v7670
  %v7842 = vunpack.c.l.b16 %v7671
  %v7843 = vunpack.c.l.b16 %v7672
  %v7844 = vunpack.c.l.b16 %v7673
  %v7845 = vunpack.c.l.b16 %v7674
  %v7846 = vunpack.c.l.b16 %v7675
  %v7847 = vunpack.c.l.b16 %v7676
  %v7848 = vunpack.c.l.b16 %v7677
  %v7849 = vunpack.c.l.b16 %v7678
  %v7850 = vunpack.c.l.b16 %v7679
  %v7851 = vunpack.c.l.b16 %v7680
  %v7852 = vunpack.c.l.b16 %v7681
  %v7853 = vpack.c.b16 %v7772, %v7771
  %v7854 = vpack.c.b16 %v7774, %v7773
  %v7855 = vpack.c.b16 %v7776, %v7775
  %v7856 = vpack.c.b16 %v7778, %v7777
  %v7857 = vpack.c.b16 %v7780, %v7779
  %v7858 = vpack.c.b16 %v7782, %v7781
  %v7859 = vpack.c.b16 %v7784, %v7783
  %v7860 = vpack.c.b16 %v7786, %v7785
  %v7861 = vpack.c.b16 %v7788, %v7787
  %v7862 = vpack.c.b16 %v7790, %v7789
  %v7863 = vpack.c.b16 %v7792, %v7791
  %v7864 = vpack.c.b16 %v7794, %v7793
  %v7865 = vpack.c.b16 %v7796, %v7795
  %v7866 = vpack.c.b16 %v7798, %v7797
  %v7867 = vpack.c.b16 %v7800, %v7799
  %v7868 = vpack.c.b16 %v7802, %v7801
  %v7869 = vpack.c.b16 %v7804, %v7803
  %v7870 = vpack.c.b16 %v7806, %v7805
  %v7871 = vpack.c.b16 %v7808, %v7807
  %v7872 = vpack.c.b16 %v7810, %v7809
  %v7873 = vpack.c.b16 %v7812, %v7811
  %v7874 = vpack.c.b16 %v7814, %v7813
  %v7875 = vpack.c.b16 %v7816, %v7815
  %v7876 = vpack.c.b16 %v7818, %v7817
  %v7877 = vpack.c.b16 %v7820, %v7819
  %v7878 = vpack.c.b16 %v7822, %v7821
  %v7879 = vpack.c.b16 %v7824, %v7823
  %v7880 = vpack.c.b16 %v7826, %v7825
  %v7881 = vpack.c.b16 %v7828, %v7827
  %v7882 = vpack.c.b16 %v7830, %v7829
  %v7883 = vpack.c.b16 %v7832, %v7831
  %v7884 = vpack.c.b16 %v7834, %v7833
  %v7885 = vpack.c.b16 %v7836, %v7835
  %v7886 = vpack.c.b16 %v7838, %v7837
  %v7887 = vpack.c.b16 %v7840, %v7839
  %v7888 = vpack.c.b16 %v7842, %v7841
  %v7889 = vpack.c.b16 %v7844, %v7843
  %v7890 = vpack.c.b16 %v7846, %v7845
  %v7891 = vpack.c.b16 %v7848, %v7847
  %v7892 = vpack.c.b16 %v7850, %v7849
  %v7893 = vpack.c.b16 %v7852, %v7851
  %v7894 = vrot.slane %v7853, 1
  %v7895 = vrot.slane %v7854, 1
  %v7896 = vsel %vm1849, %v7894, %v7895
  %v7897 = vrot.slane %v7855, 1
  %v7898 = vsel %vm1849, %v7895, %v7897
  %v7899 = vrot.slane %v7856, 1
  %v7900 = vsel %vm1849, %v7897, %v7899
  %v7901 = vrot.slane %v7857, 1
  %v7902 = vsel %vm1849, %v7899, %v7901
  %v7903 = vrot.slane %v7858, 1
  %v7904 = vsel %vm1849, %v7901, %v7903
  %v7905 = vrot.slane %v7859, 1
  %v7906 = vsel %vm1849, %v7903, %v7905
  %v7907 = vrot.slane %v7860, 1
  %v7908 = vsel %vm1849, %v7905, %v7907
  %v7909 = vrot.slane %v7861, 1
  %v7910 = vsel %vm1849, %v7907, %v7909
  %v7911 = vrot.slane %v7862, 1
  %v7912 = vsel %vm1849, %v7909, %v7911
  %v7913 = vrot.slane %v7863, 1
  %v7914 = vsel %vm1849, %v7911, %v7913
  %v7915 = vrot.slane %v7864, 1
  %v7916 = vsel %vm1849, %v7913, %v7915
  %v7917 = vrot.slane %v7865, 1
  %v7918 = vsel %vm1849, %v7915, %v7917
  %v7919 = vrot.slane %v7866, 1
  %v7920 = vsel %vm1849, %v7917, %v7919
  %v7921 = vrot.slane %v7867, 1
  %v7922 = vsel %vm1849, %v7919, %v7921
  %v7923 = vrot.slane %v7868, 1
  %v7924 = vsel %vm1849, %v7921, %v7923
  %v7925 = vrot.slane %v7869, 1
  %v7926 = vsel %vm1849, %v7923, %v7925
  %v7927 = vrot.slane %v7870, 1
  %v7928 = vsel %vm1849, %v7925, %v7927
  %v7929 = vrot.slane %v7871, 1
  %v7930 = vsel %vm1849, %v7927, %v7929
  %v7931 = vrot.slane %v7872, 1
  %v7932 = vsel %vm1849, %v7929, %v7931
  %v7933 = vrot.slane %v7873, 1
  %v7934 = vsel %vm1849, %v7931, %v7933
  %v7935 = vrot.slane %v7874, 1
  %v7936 = vsel %vm1849, %v7933, %v7935
  %v7937 = vrot.slane %v7875, 1
  %v7938 = vsel %vm1849, %v7935, %v7937
  %v7939 = vrot.slane %v7876, 1
  %v7940 = vsel %vm1849, %v7937, %v7939
  %v7941 = vrot.slane %v7877, 1
  %v7942 = vsel %vm1849, %v7939, %v7941
  %v7943 = vrot.slane %v7878, 1
  %v7944 = vsel %vm1849, %v7941, %v7943
  %v7945 = vrot.slane %v7879, 1
  %v7946 = vsel %vm1849, %v7943, %v7945
  %v7947 = vrot.slane %v7880, 1
  %v7948 = vsel %vm1849, %v7945, %v7947
  %v7949 = vrot.slane %v7881, 1
  %v7950 = vsel %vm1849, %v7947, %v7949
  %v7951 = vrot.slane %v7882, 1
  %v7952 = vsel %vm1849, %v7949, %v7951
  %v7953 = vrot.slane %v7883, 1
  %v7954 = vsel %vm1849, %v7951, %v7953
  %v7955 = vrot.slane %v7884, 1
  %v7956 = vsel %vm1849, %v7953, %v7955
  %v7957 = vrot.slane %v7885, 1
  %v7958 = vsel %vm1849, %v7955, %v7957
  %v7959 = vrot.slane %v7886, 1
  %v7960 = vsel %vm1849, %v7957, %v7959
  %v7961 = vrot.slane %v7887, 1
  %v7962 = vsel %vm1849, %v7959, %v7961
  %v7963 = vrot.slane %v7888, 1
  %v7964 = vsel %vm1849, %v7961, %v7963
  %v7965 = vrot.slane %v7889, 1
  %v7966 = vsel %vm1849, %v7963, %v7965
  %v7967 = vrot.slane %v7890, 1
  %v7968 = vsel %vm1849, %v7965, %v7967
  %v7969 = vrot.slane %v7891, 1
  %v7970 = vsel %vm1849, %v7967, %v7969
  %v7971 = vrot.slane %v7892, 1
  %v7972 = vsel %vm1849, %v7969, %v7971
  %v7973 = vrot.slane %v7893, 1
  %v7974 = vsel %vm1849, %v7971, %v7973
  %v7981 = vunpack.c.l.b16 %v7683
  %v7982 = vunpack.c.l.b16 %v7684
  %v7983 = vunpack.c.l.b16 %v7685
  %v7984 = vunpack.c.l.b16 %v7686
  %v7985 = vunpack.c.l.b16 %v7687
  %v7986 = vunpack.c.l.b16 %v7688
  %v7987 = vpack.c.b16 %v7982, %v7981
  %v7988 = vpack.c.b16 %v7984, %v7983
  %v7989 = vpack.c.b16 %v7986, %v7985
  %v7994 = vsel %vm439, %v7896, 0
  %v7997 = vsel %vm439, %v7898, 0
  %v8000 = vsel %vm439, %v7900, 0
  %v8003 = vsel %vm439, %v7902, 0
  %v8006 = vsel %vm439, %v7904, 0
  %v8009 = vsel %vm439, %v7906, 0
  %v8012 = vsel %vm439, %v7908, 0
  %v8015 = vsel %vm439, %v7910, 0
  %v8018 = vsel %vm439, %v7912, 0
  %v8021 = vsel %vm439, %v7914, 0
  %v8024 = vsel %vm439, %v7916, 0
  %v8027 = vsel %vm439, %v7918, 0
  %v8030 = vsel %vm439, %v7920, 0
  %v8033 = vsel %vm439, %v7922, 0
  %v8036 = vsel %vm439, %v7924, 0
  %v8039 = vsel %vm439, %v7926, 0
  %v8042 = vsel %vm439, %v7928, 0
  %v8045 = vsel %vm439, %v7930, 0
  %v8048 = vsel %vm439, %v7932, 0
  %v8051 = vsel %vm439, %v7934, 0
  %v8054 = vsel %vm439, %v7936, 0
  %v8057 = vsel %vm439, %v7938, 0
  %v8060 = vsel %vm439, %v7940, 0
  %v8063 = vsel %vm439, %v7942, 0
  %v8066 = vsel %vm439, %v7944, 0
  %v8069 = vsel %vm439, %v7946, 0
  %v8072 = vsel %vm439, %v7948, 0
  %v8075 = vsel %vm439, %v7950, 0
  %v8078 = vsel %vm439, %v7952, 0
  %v8081 = vsel %vm439, %v7954, 0
  %v8084 = vsel %vm439, %v7956, 0
  %v8087 = vsel %vm439, %v7958, 0
  %v8090 = vsel %vm439, %v7960, 0
  %v8093 = vsel %vm439, %v7962, 0
  %v8096 = vsel %vm439, %v7964, 0
  %v8099 = vsel %vm439, %v7966, 0
  %v8102 = vsel %vm439, %v7968, 0
  %v8105 = vsel %vm439, %v7970, 0
  %v8108 = vsel %vm439, %v7972, 0
  %v8111 = vsel %vm439, %v7974, 0
  %v8114 = vsel %vm439, %v7973, 0
  %8116 = vmatprep.subr.bf16.mxu0 0
  %8117 = vmatpush1.bf16.msra.mxu0 %v7987
  %8118 = vmatprep.subr.bf16.mxu0 0
  %8119 = vmatpush1.bf16.msra.mxu0 %v7988
  %8120 = vmatprep.subr.bf16.mxu0 0
  %8121 = vmatpush1.bf16.msra.mxu0 %v7989
  %8122 = vmatprep.subr.bf16.mxu0 0
  %8123 = vmatpush1.bf16.msra.mxu0 0
  %8124 = vmatprep.subr.bf16.mxu0 0
  %8125 = vmatpush1.bf16.msra.mxu0 0
  %8126 = vmatprep.subr.bf16.mxu0 0
  %8127 = vmatpush1.bf16.msra.mxu0 0
  %8128 = vmatprep.subr.bf16.mxu0 0
  %8129 = vmatpush1.bf16.msra.mxu0 0
  %8130 = vmatprep.subr.bf16.mxu0 0
  %8131 = vmatpush1.bf16.msra.mxu0 0
  %8132 = vmatprep.subr.bf16.mxu0 0
  %8133 = vmatpush1.bf16.msra.mxu0 0
  %8134 = vmatprep.subr.bf16.mxu0 0
  %8135 = vmatpush1.bf16.msra.mxu0 0
  %8136 = vmatprep.subr.bf16.mxu0 0
  %8137 = vmatpush1.bf16.msra.mxu0 0
  %8138 = vmatprep.subr.bf16.mxu0 0
  %8139 = vmatpush1.bf16.msra.mxu0 0
  %8140 = vmatprep.subr.bf16.mxu0 0
  %8141 = vmatpush1.bf16.msra.mxu0 0
  %8142 = vmatprep.subr.bf16.mxu0 0
  %8143 = vmatpush1.bf16.msra.mxu0 0
  %8144 = vmatprep.subr.bf16.mxu0 0
  %8145 = vmatpush1.bf16.msra.mxu0 0
  %8146 = vmatprep.subr.bf16.mxu0 0
  %8147 = vmatpush1.bf16.msra.mxu0 0
  %8148 = vmatprep.mubr.bf16.mxu0 0
  %8149 = vmatmul.mubr.bf16.gmra.mrb[0].mxu0 %v7994
  %v8150 = vpop.f32.mrb[0].mxu0
  %v8151 = vadd.f32 0.0, %v8150
  %v8152 = vpop.f32.mrb[0].mxu0
  %v8153 = vpop.f32.mrb[0].mxu0
  %v8154 = vadd.f32 0.0, %v8153
  %v8155 = vpop.f32.mrb[0].mxu0
  %8156 = vmatprep.mubr.bf16.mxu0 0
  %8157 = vmatmul.mubr.bf16.gmra.mrb[0].mxu0 %v7997
  %v8158 = vpop.f32.mrb[0].mxu0
  %v8159 = vadd.f32 0.0, %v8158
  %v8160 = vpop.f32.mrb[0].mxu0
  %v8161 = vpop.f32.mrb[0].mxu0
  %v8162 = vadd.f32 0.0, %v8161
  %v8163 = vpop.f32.mrb[0].mxu0
  %8164 = vmatprep.mubr.bf16.mxu0 0
  %8165 = vmatmul.mubr.bf16.gmra.mrb[0].mxu0 %v8000
  %v8166 = vpop.f32.mrb[0].mxu0
  %v8167 = vadd.f32 0.0, %v8166
  %v8168 = vpop.f32.mrb[0].mxu0
  %v8169 = vpop.f32.mrb[0].mxu0
  %v8170 = vadd.f32 0.0, %v8169
  %v8171 = vpop.f32.mrb[0].mxu0
  %8172 = vmatprep.mubr.bf16.mxu0 0
  %8173 = vmatmul.mubr.bf16.gmra.mrb[0].mxu0 %v8003
  %v8174 = vpop.f32.mrb[0].mxu0
  %v8175 = vadd.f32 0.0, %v8174
  %v8176 = vpop.f32.mrb[0].mxu0
  %v8177 = vpop.f32.mrb[0].mxu0
  %v8178 = vadd.f32 0.0, %v8177
  %v8179 = vpop.f32.mrb[0].mxu0
  %8180 = vmatprep.mubr.bf16.mxu0 0
  %8181 = vmatmul.mubr.bf16.gmra.mrb[0].mxu0 %v8006
  %v8182 = vpop.f32.mrb[0].mxu0
  %v8183 = vadd.f32 0.0, %v8182
  %v8184 = vpop.f32.mrb[0].mxu0
  %v8185 = vpop.f32.mrb[0].mxu0
  %v8186 = vadd.f32 0.0, %v8185
  %v8187 = vpop.f32.mrb[0].mxu0
  %8188 = vmatprep.mubr.bf16.mxu0 0
  %8189 = vmatmul.mubr.bf16.gmra.mrb[0].mxu0 %v8009
  %v8190 = vpop.f32.mrb[0].mxu0
  %v8191 = vadd.f32 0.0, %v8190
  %v8192 = vpop.f32.mrb[0].mxu0
  %v8193 = vpop.f32.mrb[0].mxu0
  %v8194 = vadd.f32 0.0, %v8193
  %v8195 = vpop.f32.mrb[0].mxu0
  %8196 = vmatprep.mubr.bf16.mxu0 0
  %8197 = vmatmul.mubr.bf16.gmra.mrb[0].mxu0 %v8012
  %v8198 = vpop.f32.mrb[0].mxu0
  %v8199 = vadd.f32 0.0, %v8198
  %v8200 = vpop.f32.mrb[0].mxu0
  %v8201 = vpop.f32.mrb[0].mxu0
  %v8202 = vadd.f32 0.0, %v8201
  %v8203 = vpop.f32.mrb[0].mxu0
  %8204 = vmatprep.mubr.bf16.mxu0 0
  %8205 = vmatmul.mubr.bf16.gmra.mrb[0].mxu0 %v8015
  %v8206 = vpop.f32.mrb[0].mxu0
  %v8207 = vadd.f32 0.0, %v8206
  %v8208 = vpop.f32.mrb[0].mxu0
  %v8209 = vpop.f32.mrb[0].mxu0
  %v8210 = vadd.f32 0.0, %v8209
  %v8211 = vpop.f32.mrb[0].mxu0
  %8212 = vmatprep.mubr.bf16.mxu0 0
  %8213 = vmatmul.mubr.bf16.gmra.mrb[0].mxu0 %v8018
  %v8214 = vpop.f32.mrb[0].mxu0
  %v8215 = vadd.f32 0.0, %v8214
  %v8216 = vpop.f32.mrb[0].mxu0
  %v8217 = vpop.f32.mrb[0].mxu0
  %v8218 = vadd.f32 0.0, %v8217
  %v8219 = vpop.f32.mrb[0].mxu0
  %8220 = vmatprep.mubr.bf16.mxu0 0
  %8221 = vmatmul.mubr.bf16.gmra.mrb[0].mxu0 %v8021
  %v8222 = vpop.f32.mrb[0].mxu0
  %v8223 = vadd.f32 0.0, %v8222
  %v8224 = vpop.f32.mrb[0].mxu0
  %v8225 = vpop.f32.mrb[0].mxu0
  %v8226 = vadd.f32 0.0, %v8225
  %v8227 = vpop.f32.mrb[0].mxu0
  %8228 = vmatprep.mubr.bf16.mxu0 0
  %8229 = vmatmul.mubr.bf16.gmra.mrb[0].mxu0 %v8024
  %v8230 = vpop.f32.mrb[0].mxu0
  %v8231 = vadd.f32 0.0, %v8230
  %v8232 = vpop.f32.mrb[0].mxu0
  %v8233 = vpop.f32.mrb[0].mxu0
  %v8234 = vadd.f32 0.0, %v8233
  %v8235 = vpop.f32.mrb[0].mxu0
  %8236 = vmatprep.mubr.bf16.mxu0 0
  %8237 = vmatmul.mubr.bf16.gmra.mrb[0].mxu0 %v8027
  %v8238 = vpop.f32.mrb[0].mxu0
  %v8239 = vadd.f32 0.0, %v8238
  %v8240 = vpop.f32.mrb[0].mxu0
  %v8241 = vpop.f32.mrb[0].mxu0
  %v8242 = vadd.f32 0.0, %v8241
  %v8243 = vpop.f32.mrb[0].mxu0
  %8244 = vmatprep.mubr.bf16.mxu0 0
  %8245 = vmatmul.mubr.bf16.gmra.mrb[0].mxu0 %v8030
  %v8246 = vpop.f32.mrb[0].mxu0
  %v8247 = vadd.f32 0.0, %v8246
  %v8248 = vpop.f32.mrb[0].mxu0
  %v8249 = vpop.f32.mrb[0].mxu0
  %v8250 = vadd.f32 0.0, %v8249
  %v8251 = vpop.f32.mrb[0].mxu0
  %8252 = vmatprep.mubr.bf16.mxu0 0
  %8253 = vmatmul.mubr.bf16.gmra.mrb[0].mxu0 %v8033
  %v8254 = vpop.f32.mrb[0].mxu0
  %v8255 = vadd.f32 0.0, %v8254
  %v8256 = vpop.f32.mrb[0].mxu0
  %v8257 = vpop.f32.mrb[0].mxu0
  %v8258 = vadd.f32 0.0, %v8257
  %v8259 = vpop.f32.mrb[0].mxu0
  %8260 = vmatprep.mubr.bf16.mxu0 0
  %8261 = vmatmul.mubr.bf16.gmra.mrb[0].mxu0 %v8036
  %v8262 = vpop.f32.mrb[0].mxu0
  %v8263 = vadd.f32 0.0, %v8262
  %v8264 = vpop.f32.mrb[0].mxu0
  %v8265 = vpop.f32.mrb[0].mxu0
  %v8266 = vadd.f32 0.0, %v8265
  %v8267 = vpop.f32.mrb[0].mxu0
  %8268 = vmatprep.mubr.bf16.mxu0 0
  %8269 = vmatmul.mubr.bf16.gmra.mrb[0].mxu0 %v8039
  %v8270 = vpop.f32.mrb[0].mxu0
  %v8271 = vadd.f32 0.0, %v8270
  %v8272 = vpop.f32.mrb[0].mxu0
  %v8273 = vpop.f32.mrb[0].mxu0
  %v8274 = vadd.f32 0.0, %v8273
  %v8275 = vpop.f32.mrb[0].mxu0
  %8276 = vmatprep.mubr.bf16.mxu0 0
  %8277 = vmatmul.mubr.bf16.gmra.mrb[0].mxu0 %v8042
  %v8278 = vpop.f32.mrb[0].mxu0
  %v8279 = vadd.f32 0.0, %v8278
  %v8280 = vpop.f32.mrb[0].mxu0
  %v8281 = vpop.f32.mrb[0].mxu0
  %v8282 = vadd.f32 0.0, %v8281
  %v8283 = vpop.f32.mrb[0].mxu0
  %8284 = vmatprep.mubr.bf16.mxu0 0
  %8285 = vmatmul.mubr.bf16.gmra.mrb[0].mxu0 %v8045
  %v8286 = vpop.f32.mrb[0].mxu0
  %v8287 = vadd.f32 0.0, %v8286
  %v8288 = vpop.f32.mrb[0].mxu0
  %v8289 = vpop.f32.mrb[0].mxu0
  %v8290 = vadd.f32 0.0, %v8289
  %v8291 = vpop.f32.mrb[0].mxu0
  %8292 = vmatprep.mubr.bf16.mxu0 0
  %8293 = vmatmul.mubr.bf16.gmra.mrb[0].mxu0 %v8048
  %v8294 = vpop.f32.mrb[0].mxu0
  %v8295 = vadd.f32 0.0, %v8294
  %v8296 = vpop.f32.mrb[0].mxu0
  %v8297 = vpop.f32.mrb[0].mxu0
  %v8298 = vadd.f32 0.0, %v8297
  %v8299 = vpop.f32.mrb[0].mxu0
  %8300 = vmatprep.mubr.bf16.mxu0 0
  %8301 = vmatmul.mubr.bf16.gmra.mrb[0].mxu0 %v8051
  %v8302 = vpop.f32.mrb[0].mxu0
  %v8303 = vadd.f32 0.0, %v8302
  %v8304 = vpop.f32.mrb[0].mxu0
  %v8305 = vpop.f32.mrb[0].mxu0
  %v8306 = vadd.f32 0.0, %v8305
  %v8307 = vpop.f32.mrb[0].mxu0
  %8308 = vmatprep.mubr.bf16.mxu0 0
  %8309 = vmatmul.mubr.bf16.gmra.mrb[0].mxu0 %v8054
  %v8310 = vpop.f32.mrb[0].mxu0
  %v8311 = vadd.f32 0.0, %v8310
  %v8312 = vpop.f32.mrb[0].mxu0
  %v8313 = vpop.f32.mrb[0].mxu0
  %v8314 = vadd.f32 0.0, %v8313
  %v8315 = vpop.f32.mrb[0].mxu0
  %8316 = vmatprep.mubr.bf16.mxu0 0
  %8317 = vmatmul.mubr.bf16.gmra.mrb[0].mxu0 %v8057
  %v8318 = vpop.f32.mrb[0].mxu0
  %v8319 = vadd.f32 0.0, %v8318
  %v8320 = vpop.f32.mrb[0].mxu0
  %v8321 = vpop.f32.mrb[0].mxu0
  %v8322 = vadd.f32 0.0, %v8321
  %v8323 = vpop.f32.mrb[0].mxu0
  %8324 = vmatprep.mubr.bf16.mxu0 0
  %8325 = vmatmul.mubr.bf16.gmra.mrb[0].mxu0 %v8060
  %v8326 = vpop.f32.mrb[0].mxu0
  %v8327 = vadd.f32 0.0, %v8326
  %v8328 = vpop.f32.mrb[0].mxu0
  %v8329 = vpop.f32.mrb[0].mxu0
  %v8330 = vadd.f32 0.0, %v8329
  %v8331 = vpop.f32.mrb[0].mxu0
  %8332 = vmatprep.mubr.bf16.mxu0 0
  %8333 = vmatmul.mubr.bf16.gmra.mrb[0].mxu0 %v8063
  %v8334 = vpop.f32.mrb[0].mxu0
  %v8335 = vadd.f32 0.0, %v8334
  %v8336 = vpop.f32.mrb[0].mxu0
  %v8337 = vpop.f32.mrb[0].mxu0
  %v8338 = vadd.f32 0.0, %v8337
  %v8339 = vpop.f32.mrb[0].mxu0
  %8340 = vmatprep.mubr.bf16.mxu0 0
  %8341 = vmatmul.mubr.bf16.gmra.mrb[0].mxu0 %v8066
  %v8342 = vpop.f32.mrb[0].mxu0
  %v8343 = vadd.f32 0.0, %v8342
  %v8344 = vpop.f32.mrb[0].mxu0
  %v8345 = vpop.f32.mrb[0].mxu0
  %v8346 = vadd.f32 0.0, %v8345
  %v8347 = vpop.f32.mrb[0].mxu0
  %8348 = vmatprep.mubr.bf16.mxu0 0
  %8349 = vmatmul.mubr.bf16.gmra.mrb[0].mxu0 %v8069
  %v8350 = vpop.f32.mrb[0].mxu0
  %v8351 = vadd.f32 0.0, %v8350
  %v8352 = vpop.f32.mrb[0].mxu0
  %v8353 = vpop.f32.mrb[0].mxu0
  %v8354 = vadd.f32 0.0, %v8353
  %v8355 = vpop.f32.mrb[0].mxu0
  %8356 = vmatprep.mubr.bf16.mxu0 0
  %8357 = vmatmul.mubr.bf16.gmra.mrb[0].mxu0 %v8072
  %v8358 = vpop.f32.mrb[0].mxu0
  %v8359 = vadd.f32 0.0, %v8358
  %v8360 = vpop.f32.mrb[0].mxu0
  %v8361 = vpop.f32.mrb[0].mxu0
  %v8362 = vadd.f32 0.0, %v8361
  %v8363 = vpop.f32.mrb[0].mxu0
  %8364 = vmatprep.mubr.bf16.mxu0 0
  %8365 = vmatmul.mubr.bf16.gmra.mrb[0].mxu0 %v8075
  %v8366 = vpop.f32.mrb[0].mxu0
  %v8367 = vadd.f32 0.0, %v8366
  %v8368 = vpop.f32.mrb[0].mxu0
  %v8369 = vpop.f32.mrb[0].mxu0
  %v8370 = vadd.f32 0.0, %v8369
  %v8371 = vpop.f32.mrb[0].mxu0
  %8372 = vmatprep.mubr.bf16.mxu0 0
  %8373 = vmatmul.mubr.bf16.gmra.mrb[0].mxu0 %v8078
  %v8374 = vpop.f32.mrb[0].mxu0
  %v8375 = vadd.f32 0.0, %v8374
  %v8376 = vpop.f32.mrb[0].mxu0
  %v8377 = vpop.f32.mrb[0].mxu0
  %v8378 = vadd.f32 0.0, %v8377
  %v8379 = vpop.f32.mrb[0].mxu0
  %8380 = vmatprep.mubr.bf16.mxu0 0
  %8381 = vmatmul.mubr.bf16.gmra.mrb[0].mxu0 %v8081
  %v8382 = vpop.f32.mrb[0].mxu0
  %v8383 = vadd.f32 0.0, %v8382
  %v8384 = vpop.f32.mrb[0].mxu0
  %v8385 = vpop.f32.mrb[0].mxu0
  %v8386 = vadd.f32 0.0, %v8385
  %v8387 = vpop.f32.mrb[0].mxu0
  %8388 = vmatprep.mubr.bf16.mxu0 0
  %8389 = vmatmul.mubr.bf16.gmra.mrb[0].mxu0 %v8084
  %v8390 = vpop.f32.mrb[0].mxu0
  %v8391 = vadd.f32 0.0, %v8390
  %v8392 = vpop.f32.mrb[0].mxu0
  %v8393 = vpop.f32.mrb[0].mxu0
  %v8394 = vadd.f32 0.0, %v8393
  %v8395 = vpop.f32.mrb[0].mxu0
  %8396 = vmatprep.mubr.bf16.mxu0 0
  %8397 = vmatmul.mubr.bf16.gmra.mrb[0].mxu0 %v8087
  %v8398 = vpop.f32.mrb[0].mxu0
  %v8399 = vadd.f32 0.0, %v8398
  %v8400 = vpop.f32.mrb[0].mxu0
  %v8401 = vpop.f32.mrb[0].mxu0
  %v8402 = vadd.f32 0.0, %v8401
  %v8403 = vpop.f32.mrb[0].mxu0
  %8404 = vmatprep.mubr.bf16.mxu0 0
  %8405 = vmatmul.mubr.bf16.gmra.mrb[0].mxu0 %v8090
  %v8406 = vpop.f32.mrb[0].mxu0
  %v8407 = vadd.f32 0.0, %v8406
  %v8408 = vpop.f32.mrb[0].mxu0
  %v8409 = vpop.f32.mrb[0].mxu0
  %v8410 = vadd.f32 0.0, %v8409
  %v8411 = vpop.f32.mrb[0].mxu0
  %8412 = vmatprep.mubr.bf16.mxu0 0
  %8413 = vmatmul.mubr.bf16.gmra.mrb[0].mxu0 %v8093
  %v8414 = vpop.f32.mrb[0].mxu0
  %v8415 = vadd.f32 0.0, %v8414
  %v8416 = vpop.f32.mrb[0].mxu0
  %v8417 = vpop.f32.mrb[0].mxu0
  %v8418 = vadd.f32 0.0, %v8417
  %v8419 = vpop.f32.mrb[0].mxu0
  %8420 = vmatprep.mubr.bf16.mxu0 0
  %8421 = vmatmul.mubr.bf16.gmra.mrb[0].mxu0 %v8096
  %v8422 = vpop.f32.mrb[0].mxu0
  %v8423 = vadd.f32 0.0, %v8422
  %v8424 = vpop.f32.mrb[0].mxu0
  %v8425 = vpop.f32.mrb[0].mxu0
  %v8426 = vadd.f32 0.0, %v8425
  %v8427 = vpop.f32.mrb[0].mxu0
  %8428 = vmatprep.mubr.bf16.mxu0 0
  %8429 = vmatmul.mubr.bf16.gmra.mrb[0].mxu0 %v8099
  %v8430 = vpop.f32.mrb[0].mxu0
  %v8431 = vadd.f32 0.0, %v8430
  %v8432 = vpop.f32.mrb[0].mxu0
  %v8433 = vpop.f32.mrb[0].mxu0
  %v8434 = vadd.f32 0.0, %v8433
  %v8435 = vpop.f32.mrb[0].mxu0
  %8436 = vmatprep.mubr.bf16.mxu0 0
  %8437 = vmatmul.mubr.bf16.gmra.mrb[0].mxu0 %v8102
  %v8438 = vpop.f32.mrb[0].mxu0
  %v8439 = vadd.f32 0.0, %v8438
  %v8440 = vpop.f32.mrb[0].mxu0
  %v8441 = vpop.f32.mrb[0].mxu0
  %v8442 = vadd.f32 0.0, %v8441
  %v8443 = vpop.f32.mrb[0].mxu0
  %8444 = vmatprep.mubr.bf16.mxu0 0
  %8445 = vmatmul.mubr.bf16.gmra.mrb[0].mxu0 %v8105
  %v8446 = vpop.f32.mrb[0].mxu0
  %v8447 = vadd.f32 0.0, %v8446
  %v8448 = vpop.f32.mrb[0].mxu0
  %v8449 = vpop.f32.mrb[0].mxu0
  %v8450 = vadd.f32 0.0, %v8449
  %v8451 = vpop.f32.mrb[0].mxu0
  %8452 = vmatprep.mubr.bf16.mxu0 0
  %8453 = vmatmul.mubr.bf16.gmra.mrb[0].mxu0 %v8108
  %v8454 = vpop.f32.mrb[0].mxu0
  %v8455 = vadd.f32 0.0, %v8454
  %v8456 = vpop.f32.mrb[0].mxu0
  %v8457 = vpop.f32.mrb[0].mxu0
  %v8458 = vadd.f32 0.0, %v8457
  %v8459 = vpop.f32.mrb[0].mxu0
  %8460 = vmatprep.mubr.bf16.mxu0 0
  %8461 = vmatmul.mubr.bf16.gmra.mrb[0].mxu0 %v8111
  %v8462 = vpop.f32.mrb[0].mxu0
  %v8463 = vadd.f32 0.0, %v8462
  %v8464 = vpop.f32.mrb[0].mxu0
  %v8465 = vpop.f32.mrb[0].mxu0
  %v8466 = vadd.f32 0.0, %v8465
  %v8467 = vpop.f32.mrb[0].mxu0
  %8468 = vmatprep.mubr.bf16.mxu0 0
  %8469 = vmatmul.mubr.bf16.gmra.mrb[0].mxu0 %v8114
  %v8470 = vpop.f32.mrb[0].mxu0
  %v8471 = vadd.f32 0.0, %v8470
  %v8472 = vpop.f32.mrb[0].mxu0
  %v8473 = vpop.f32.mrb[0].mxu0
  %v8474 = vpop.f32.mrb[0].mxu0
  %8475 = vdwg.mxu0
  %v8476 = vadd.f32 %v7275, %v8151
  %v8477 = vadd.f32 %v7278, %v8154
  %v8478 = vadd.f32 %v7283, %v8159
  %v8479 = vadd.f32 %v7286, %v8162
  %v8480 = vadd.f32 %v7291, %v8167
  %v8481 = vadd.f32 %v7294, %v8170
  %v8482 = vadd.f32 %v7299, %v8175
  %v8483 = vadd.f32 %v7302, %v8178
  %v8484 = vadd.f32 %v7307, %v8183
  %v8485 = vadd.f32 %v7310, %v8186
  %v8486 = vadd.f32 %v7315, %v8191
  %v8487 = vadd.f32 %v7318, %v8194
  %v8488 = vadd.f32 %v7323, %v8199
  %v8489 = vadd.f32 %v7326, %v8202
  %v8490 = vadd.f32 %v7331, %v8207
  %v8491 = vadd.f32 %v7334, %v8210
  %v8492 = vadd.f32 %v7339, %v8215
  %v8493 = vadd.f32 %v7342, %v8218
  %v8494 = vadd.f32 %v7347, %v8223
  %v8495 = vadd.f32 %v7350, %v8226
  %v8496 = vadd.f32 %v7355, %v8231
  %v8497 = vadd.f32 %v7358, %v8234
  %v8498 = vadd.f32 %v7363, %v8239
  %v8499 = vadd.f32 %v7366, %v8242
  %v8500 = vadd.f32 %v7371, %v8247
  %v8501 = vadd.f32 %v7374, %v8250
  %v8502 = vadd.f32 %v7379, %v8255
  %v8503 = vadd.f32 %v7382, %v8258
  %v8504 = vadd.f32 %v7387, %v8263
  %v8505 = vadd.f32 %v7390, %v8266
  %v8506 = vadd.f32 %v7395, %v8271
  %v8507 = vadd.f32 %v7398, %v8274
  %v8508 = vadd.f32 %v7403, %v8279
  %v8509 = vadd.f32 %v7406, %v8282
  %v8510 = vadd.f32 %v7411, %v8287
  %v8511 = vadd.f32 %v7414, %v8290
  %v8512 = vadd.f32 %v7419, %v8295
  %v8513 = vadd.f32 %v7422, %v8298
  %v8514 = vadd.f32 %v7427, %v8303
  %v8515 = vadd.f32 %v7430, %v8306
  %v8516 = vadd.f32 %v7435, %v8311
  %v8517 = vadd.f32 %v7438, %v8314
  %v8518 = vadd.f32 %v7443, %v8319
  %v8519 = vadd.f32 %v7446, %v8322
  %v8520 = vadd.f32 %v7451, %v8327
  %v8521 = vadd.f32 %v7454, %v8330
  %v8522 = vadd.f32 %v7459, %v8335
  %v8523 = vadd.f32 %v7462, %v8338
  %v8524 = vadd.f32 %v7467, %v8343
  %v8525 = vadd.f32 %v7470, %v8346
  %v8526 = vadd.f32 %v7475, %v8351
  %v8527 = vadd.f32 %v7478, %v8354
  %v8528 = vadd.f32 %v7483, %v8359
  %v8529 = vadd.f32 %v7486, %v8362
  %v8530 = vadd.f32 %v7491, %v8367
  %v8531 = vadd.f32 %v7494, %v8370
  %v8532 = vadd.f32 %v7499, %v8375
  %v8533 = vadd.f32 %v7502, %v8378
  %v8534 = vadd.f32 %v7507, %v8383
  %v8535 = vadd.f32 %v7510, %v8386
  %v8536 = vadd.f32 %v7515, %v8391
  %v8537 = vadd.f32 %v7518, %v8394
  %v8538 = vadd.f32 %v7523, %v8399
  %v8539 = vadd.f32 %v7526, %v8402
  %v8540 = vadd.f32 %v7531, %v8407
  %v8541 = vadd.f32 %v7534, %v8410
  %v8542 = vadd.f32 %v7539, %v8415
  %v8543 = vadd.f32 %v7542, %v8418
  %v8544 = vadd.f32 %v7547, %v8423
  %v8545 = vadd.f32 %v7550, %v8426
  %v8546 = vadd.f32 %v7555, %v8431
  %v8547 = vadd.f32 %v7558, %v8434
  %v8548 = vadd.f32 %v7563, %v8439
  %v8549 = vadd.f32 %v7566, %v8442
  %v8550 = vadd.f32 %v7571, %v8447
  %v8551 = vadd.f32 %v7574, %v8450
  %v8552 = vadd.f32 %v7579, %v8455
  %v8553 = vadd.f32 %v7582, %v8458
  %v8554 = vadd.f32 %v7587, %v8463
  %v8555 = vadd.f32 %v7590, %v8466
  %v8556 = vadd.f32 %v7595, %v8471
  %v8557 = vld [vmem:[%s8] sm:$0x1]
  %v8559 = vlaneseq
  %v8560 = vshrl.u32 %v8559, 7
  %v8561 = vsub.s32 0, %v8560
  %v8562 = vrot.slane %v8557, %v8561
  %v8564 = vadd.f32 %v8476, %v8562
  %v8565 = vadd.f32 %v8477, %v8562
  %v8566 = vadd.f32 %v8478, %v8562
  %v8567 = vadd.f32 %v8479, %v8562
  %v8568 = vadd.f32 %v8480, %v8562
  %v8569 = vadd.f32 %v8481, %v8562
  %v8570 = vadd.f32 %v8482, %v8562
  %v8571 = vadd.f32 %v8483, %v8562
  %v8572 = vadd.f32 %v8484, %v8562
  %v8573 = vadd.f32 %v8485, %v8562
  %v8574 = vadd.f32 %v8486, %v8562
  %v8575 = vadd.f32 %v8487, %v8562
  %v8576 = vadd.f32 %v8488, %v8562
  %v8577 = vadd.f32 %v8489, %v8562
  %v8578 = vadd.f32 %v8490, %v8562
  %v8579 = vadd.f32 %v8491, %v8562
  %v8580 = vadd.f32 %v8492, %v8562
  %v8581 = vadd.f32 %v8493, %v8562
  %v8582 = vadd.f32 %v8494, %v8562
  %v8583 = vadd.f32 %v8495, %v8562
  %v8584 = vadd.f32 %v8496, %v8562
  %v8585 = vadd.f32 %v8497, %v8562
  %v8586 = vadd.f32 %v8498, %v8562
  %v8587 = vadd.f32 %v8499, %v8562
  %v8588 = vadd.f32 %v8500, %v8562
  %v8589 = vadd.f32 %v8501, %v8562
  %v8590 = vadd.f32 %v8502, %v8562
  %v8591 = vadd.f32 %v8503, %v8562
  %v8592 = vadd.f32 %v8504, %v8562
  %v8593 = vadd.f32 %v8505, %v8562
  %v8594 = vadd.f32 %v8506, %v8562
  %v8595 = vadd.f32 %v8507, %v8562
  %v8596 = vadd.f32 %v8508, %v8562
  %v8597 = vadd.f32 %v8509, %v8562
  %v8598 = vadd.f32 %v8510, %v8562
  %v8599 = vadd.f32 %v8511, %v8562
  %v8600 = vadd.f32 %v8512, %v8562
  %v8601 = vadd.f32 %v8513, %v8562
  %v8602 = vadd.f32 %v8514, %v8562
  %v8603 = vadd.f32 %v8515, %v8562
  %v8604 = vadd.f32 %v8516, %v8562
  %v8605 = vadd.f32 %v8517, %v8562
  %v8606 = vadd.f32 %v8518, %v8562
  %v8607 = vadd.f32 %v8519, %v8562
  %v8608 = vadd.f32 %v8520, %v8562
  %v8609 = vadd.f32 %v8521, %v8562
  %v8610 = vadd.f32 %v8522, %v8562
  %v8611 = vadd.f32 %v8523, %v8562
  %v8612 = vadd.f32 %v8524, %v8562
  %v8613 = vadd.f32 %v8525, %v8562
  %v8614 = vadd.f32 %v8526, %v8562
  %v8615 = vadd.f32 %v8527, %v8562
  %v8616 = vadd.f32 %v8528, %v8562
  %v8617 = vadd.f32 %v8529, %v8562
  %v8618 = vadd.f32 %v8530, %v8562
  %v8619 = vadd.f32 %v8531, %v8562
  %v8620 = vadd.f32 %v8532, %v8562
  %v8621 = vadd.f32 %v8533, %v8562
  %v8622 = vadd.f32 %v8534, %v8562
  %v8623 = vadd.f32 %v8535, %v8562
  %v8624 = vadd.f32 %v8536, %v8562
  %v8625 = vadd.f32 %v8537, %v8562
  %v8626 = vadd.f32 %v8538, %v8562
  %v8627 = vadd.f32 %v8539, %v8562
  %v8628 = vadd.f32 %v8540, %v8562
  %v8629 = vadd.f32 %v8541, %v8562
  %v8630 = vadd.f32 %v8542, %v8562
  %v8631 = vadd.f32 %v8543, %v8562
  %v8632 = vadd.f32 %v8544, %v8562
  %v8633 = vadd.f32 %v8545, %v8562
  %v8634 = vadd.f32 %v8546, %v8562
  %v8635 = vadd.f32 %v8547, %v8562
  %v8636 = vadd.f32 %v8548, %v8562
  %v8637 = vadd.f32 %v8549, %v8562
  %v8638 = vadd.f32 %v8550, %v8562
  %v8639 = vadd.f32 %v8551, %v8562
  %v8640 = vadd.f32 %v8552, %v8562
  %v8641 = vadd.f32 %v8553, %v8562
  %v8642 = vadd.f32 %v8554, %v8562
  %v8643 = vadd.f32 %v8555, %v8562
  %v8644 = vadd.f32 %v8556, %v8562
  %v8645 = vmul.f32 %v8564, %v2604
  %v8646 = vmul.f32 %v8565, %v2609
  %v8647 = vmul.f32 %v8566, %v2614
  %v8648 = vmul.f32 %v8567, %v2619
  %v8649 = vmul.f32 %v8568, %v2624
  %v8650 = vmul.f32 %v8569, %v2629
  %v8651 = vmul.f32 %v8570, %v2634
  %v8652 = vmul.f32 %v8571, %v2639
  %v8653 = vmul.f32 %v8572, %v2644
  %v8654 = vmul.f32 %v8573, %v2649
  %v8655 = vmul.f32 %v8574, %v2654
  %v8656 = vmul.f32 %v8575, %v2659
  %v8657 = vmul.f32 %v8576, %v2664
  %v8658 = vmul.f32 %v8577, %v2669
  %v8659 = vmul.f32 %v8578, %v2674
  %v8660 = vmul.f32 %v8579, %v2679
  %v8661 = vmul.f32 %v8580, %v2684
  %v8662 = vmul.f32 %v8581, %v2689
  %v8663 = vmul.f32 %v8582, %v2694
  %v8664 = vmul.f32 %v8583, %v2699
  %v8665 = vmul.f32 %v8584, %v2704
  %v8666 = vmul.f32 %v8585, %v2709
  %v8667 = vmul.f32 %v8586, %v2714
  %v8668 = vmul.f32 %v8587, %v2719
  %v8669 = vmul.f32 %v8588, %v2724
  %v8670 = vmul.f32 %v8589, %v2729
  %v8671 = vmul.f32 %v8590, %v2734
  %v8672 = vmul.f32 %v8591, %v2739
  %v8673 = vmul.f32 %v8592, %v2744
  %v8674 = vmul.f32 %v8593, %v2749
  %v8675 = vmul.f32 %v8594, %v2754
  %v8676 = vmul.f32 %v8595, %v2759
  %v8677 = vmul.f32 %v8596, %v2764
  %v8678 = vmul.f32 %v8597, %v2769
  %v8679 = vmul.f32 %v8598, %v2774
  %v8680 = vmul.f32 %v8599, %v2779
  %v8681 = vmul.f32 %v8600, %v2784
  %v8682 = vmul.f32 %v8601, %v2789
  %v8683 = vmul.f32 %v8602, %v2794
  %v8684 = vmul.f32 %v8603, %v2799
  %v8685 = vmul.f32 %v8604, %v2804
  %v8686 = vmul.f32 %v8605, %v2809
  %v8687 = vmul.f32 %v8606, %v2814
  %v8688 = vmul.f32 %v8607, %v2819
  %v8689 = vmul.f32 %v8608, %v2824
  %v8690 = vmul.f32 %v8609, %v2829
  %v8691 = vmul.f32 %v8610, %v2834
  %v8692 = vmul.f32 %v8611, %v2839
  %v8693 = vmul.f32 %v8612, %v2844
  %v8694 = vmul.f32 %v8613, %v2849
  %v8695 = vmul.f32 %v8614, %v2854
  %v8696 = vmul.f32 %v8615, %v2859
  %v8697 = vmul.f32 %v8616, %v2864
  %v8698 = vmul.f32 %v8617, %v2869
  %v8699 = vmul.f32 %v8618, %v2874
  %v8700 = vmul.f32 %v8619, %v2879
  %v8701 = vmul.f32 %v8620, %v2884
  %v8702 = vmul.f32 %v8621, %v2889
  %v8703 = vmul.f32 %v8622, %v2894
  %v8704 = vmul.f32 %v8623, %v2899
  %v8705 = vmul.f32 %v8624, %v2904
  %v8706 = vmul.f32 %v8625, %v2909
  %v8707 = vmul.f32 %v8626, %v2914
  %v8708 = vmul.f32 %v8627, %v2919
  %v8709 = vmul.f32 %v8628, %v2924
  %v8710 = vmul.f32 %v8629, %v2929
  %v8711 = vmul.f32 %v8630, %v2934
  %v8712 = vmul.f32 %v8631, %v2939
  %v8713 = vmul.f32 %v8632, %v2944
  %v8714 = vmul.f32 %v8633, %v2949
  %v8715 = vmul.f32 %v8634, %v2954
  %v8716 = vmul.f32 %v8635, %v2959
  %v8717 = vmul.f32 %v8636, %v2964
  %v8718 = vmul.f32 %v8637, %v2969
  %v8719 = vmul.f32 %v8638, %v2974
  %v8720 = vmul.f32 %v8639, %v2979
  %v8721 = vmul.f32 %v8640, %v2984
  %v8722 = vmul.f32 %v8641, %v2989
  %v8723 = vmul.f32 %v8642, %v2994
  %v8724 = vmul.f32 %v8643, %v2999
  %v8725 = vmul.f32 %v8644, %v3004
  %v8726 = vsel %vm3087, %v8645, 0.0
  %v8727 = vsel %vm3087, %v8646, 0.0
  %v8728 = vadd.f32 %v8726, %v8727
  %v8729 = vsel %vm3087, %v8647, 0.0
  %v8730 = vadd.f32 %v8728, %v8729
  %v8731 = vsel %vm3087, %v8648, 0.0
  %v8732 = vadd.f32 %v8730, %v8731
  %v8733 = vsel %vm3087, %v8649, 0.0
  %v8734 = vadd.f32 %v8732, %v8733
  %v8735 = vsel %vm3087, %v8650, 0.0
  %v8736 = vadd.f32 %v8734, %v8735
  %v8737 = vsel %vm3087, %v8651, 0.0
  %v8738 = vadd.f32 %v8736, %v8737
  %v8739 = vsel %vm3087, %v8652, 0.0
  %v8740 = vadd.f32 %v8738, %v8739
  %v8741 = vsel %vm3087, %v8653, 0.0
  %v8742 = vadd.f32 %v8740, %v8741
  %v8743 = vsel %vm3087, %v8654, 0.0
  %v8744 = vadd.f32 %v8742, %v8743
  %v8745 = vsel %vm3087, %v8655, 0.0
  %v8746 = vadd.f32 %v8744, %v8745
  %v8747 = vsel %vm3087, %v8656, 0.0
  %v8748 = vadd.f32 %v8746, %v8747
  %v8749 = vsel %vm3087, %v8657, 0.0
  %v8750 = vadd.f32 %v8748, %v8749
  %v8751 = vsel %vm3087, %v8658, 0.0
  %v8752 = vadd.f32 %v8750, %v8751
  %v8753 = vsel %vm3087, %v8659, 0.0
  %v8754 = vadd.f32 %v8752, %v8753
  %v8755 = vsel %vm3087, %v8660, 0.0
  %v8756 = vadd.f32 %v8754, %v8755
  %v8757 = vsel %vm3087, %v8661, 0.0
  %v8758 = vadd.f32 %v8756, %v8757
  %v8759 = vsel %vm3087, %v8662, 0.0
  %v8760 = vadd.f32 %v8758, %v8759
  %v8761 = vsel %vm3087, %v8663, 0.0
  %v8762 = vadd.f32 %v8760, %v8761
  %v8763 = vsel %vm3087, %v8664, 0.0
  %v8764 = vadd.f32 %v8762, %v8763
  %v8765 = vsel %vm3087, %v8665, 0.0
  %v8766 = vadd.f32 %v8764, %v8765
  %v8767 = vsel %vm3087, %v8666, 0.0
  %v8768 = vadd.f32 %v8766, %v8767
  %v8769 = vsel %vm3087, %v8667, 0.0
  %v8770 = vadd.f32 %v8768, %v8769
  %v8771 = vsel %vm3087, %v8668, 0.0
  %v8772 = vadd.f32 %v8770, %v8771
  %v8773 = vsel %vm3087, %v8669, 0.0
  %v8774 = vadd.f32 %v8772, %v8773
  %v8775 = vsel %vm3087, %v8670, 0.0
  %v8776 = vadd.f32 %v8774, %v8775
  %v8777 = vsel %vm3087, %v8671, 0.0
  %v8778 = vadd.f32 %v8776, %v8777
  %v8779 = vsel %vm3087, %v8672, 0.0
  %v8780 = vadd.f32 %v8778, %v8779
  %v8781 = vsel %vm3087, %v8673, 0.0
  %v8782 = vadd.f32 %v8780, %v8781
  %v8783 = vsel %vm3087, %v8674, 0.0
  %v8784 = vadd.f32 %v8782, %v8783
  %v8785 = vsel %vm3087, %v8675, 0.0
  %v8786 = vadd.f32 %v8784, %v8785
  %v8787 = vsel %vm3087, %v8676, 0.0
  %v8788 = vadd.f32 %v8786, %v8787
  %v8789 = vsel %vm3087, %v8677, 0.0
  %v8790 = vadd.f32 %v8788, %v8789
  %v8791 = vsel %vm3087, %v8678, 0.0
  %v8792 = vadd.f32 %v8790, %v8791
  %v8793 = vsel %vm3087, %v8679, 0.0
  %v8794 = vadd.f32 %v8792, %v8793
  %v8795 = vsel %vm3087, %v8680, 0.0
  %v8796 = vadd.f32 %v8794, %v8795
  %v8797 = vsel %vm3087, %v8681, 0.0
  %v8798 = vadd.f32 %v8796, %v8797
  %v8799 = vsel %vm3087, %v8682, 0.0
  %v8800 = vadd.f32 %v8798, %v8799
  %v8801 = vsel %vm3087, %v8683, 0.0
  %v8802 = vadd.f32 %v8800, %v8801
  %v8803 = vsel %vm3087, %v8684, 0.0
  %v8804 = vadd.f32 %v8802, %v8803
  %v8805 = vsel %vm3087, %v8685, 0.0
  %v8806 = vadd.f32 %v8804, %v8805
  %v8807 = vsel %vm3087, %v8686, 0.0
  %v8808 = vadd.f32 %v8806, %v8807
  %v8809 = vsel %vm3087, %v8687, 0.0
  %v8810 = vadd.f32 %v8808, %v8809
  %v8811 = vsel %vm3087, %v8688, 0.0
  %v8812 = vadd.f32 %v8810, %v8811
  %v8813 = vsel %vm3087, %v8689, 0.0
  %v8814 = vadd.f32 %v8812, %v8813
  %v8815 = vsel %vm3087, %v8690, 0.0
  %v8816 = vadd.f32 %v8814, %v8815
  %v8817 = vsel %vm3087, %v8691, 0.0
  %v8818 = vadd.f32 %v8816, %v8817
  %v8819 = vsel %vm3087, %v8692, 0.0
  %v8820 = vadd.f32 %v8818, %v8819
  %v8821 = vsel %vm3087, %v8693, 0.0
  %v8822 = vadd.f32 %v8820, %v8821
  %v8823 = vsel %vm3087, %v8694, 0.0
  %v8824 = vadd.f32 %v8822, %v8823
  %v8825 = vsel %vm3087, %v8695, 0.0
  %v8826 = vadd.f32 %v8824, %v8825
  %v8827 = vsel %vm3087, %v8696, 0.0
  %v8828 = vadd.f32 %v8826, %v8827
  %v8829 = vsel %vm3087, %v8697, 0.0
  %v8830 = vadd.f32 %v8828, %v8829
  %v8831 = vsel %vm3087, %v8698, 0.0
  %v8832 = vadd.f32 %v8830, %v8831
  %v8833 = vsel %vm3087, %v8699, 0.0
  %v8834 = vadd.f32 %v8832, %v8833
  %v8835 = vsel %vm3087, %v8700, 0.0
  %v8836 = vadd.f32 %v8834, %v8835
  %v8837 = vsel %vm3087, %v8701, 0.0
  %v8838 = vadd.f32 %v8836, %v8837
  %v8839 = vsel %vm3087, %v8702, 0.0
  %v8840 = vadd.f32 %v8838, %v8839
  %v8841 = vsel %vm3087, %v8703, 0.0
  %v8842 = vadd.f32 %v8840, %v8841
  %v8843 = vsel %vm3087, %v8704, 0.0
  %v8844 = vadd.f32 %v8842, %v8843
  %v8845 = vsel %vm3087, %v8705, 0.0
  %v8846 = vadd.f32 %v8844, %v8845
  %v8847 = vsel %vm3087, %v8706, 0.0
  %v8848 = vadd.f32 %v8846, %v8847
  %v8849 = vsel %vm3087, %v8707, 0.0
  %v8850 = vadd.f32 %v8848, %v8849
  %v8851 = vsel %vm3087, %v8708, 0.0
  %v8852 = vadd.f32 %v8850, %v8851
  %v8853 = vsel %vm3087, %v8709, 0.0
  %v8854 = vadd.f32 %v8852, %v8853
  %v8855 = vsel %vm3087, %v8710, 0.0
  %v8856 = vadd.f32 %v8854, %v8855
  %v8857 = vsel %vm3087, %v8711, 0.0
  %v8858 = vadd.f32 %v8856, %v8857
  %v8859 = vsel %vm3087, %v8712, 0.0
  %v8860 = vadd.f32 %v8858, %v8859
  %v8861 = vsel %vm3087, %v8713, 0.0
  %v8862 = vadd.f32 %v8860, %v8861
  %v8863 = vsel %vm3087, %v8714, 0.0
  %v8864 = vadd.f32 %v8862, %v8863
  %v8865 = vsel %vm3087, %v8715, 0.0
  %v8866 = vadd.f32 %v8864, %v8865
  %v8867 = vsel %vm3087, %v8716, 0.0
  %v8868 = vadd.f32 %v8866, %v8867
  %v8869 = vsel %vm3087, %v8717, 0.0
  %v8870 = vadd.f32 %v8868, %v8869
  %v8871 = vsel %vm3087, %v8718, 0.0
  %v8872 = vadd.f32 %v8870, %v8871
  %v8873 = vsel %vm3087, %v8719, 0.0
  %v8874 = vadd.f32 %v8872, %v8873
  %v8875 = vsel %vm3087, %v8720, 0.0
  %v8876 = vadd.f32 %v8874, %v8875
  %v8877 = vsel %vm3087, %v8721, 0.0
  %v8878 = vadd.f32 %v8876, %v8877
  %v8879 = vsel %vm3087, %v8722, 0.0
  %v8880 = vadd.f32 %v8878, %v8879
  %v8881 = vsel %vm3087, %v8723, 0.0
  %v8882 = vadd.f32 %v8880, %v8881
  %v8883 = vsel %vm3087, %v8724, 0.0
  %v8884 = vadd.f32 %v8882, %v8883
  %v8885 = vsel %vm3087, %v8725, 0.0
  %v8886 = vadd.f32 %v8884, %v8885
  %v8887 = vrot.slane %v8886, 4
  %v8888 = vadd.f32 %v8886, %v8887
  %v8889 = vrot.slane %v8888, 2
  %v8890 = vadd.f32 %v8888, %v8889
  %v8891 = vrot.slane %v8890, 1
  %v8892 = vadd.f32 %v8890, %v8891
  %v8893 = vmul.f32 %v8645, %v8645
  %v8894 = vmul.f32 %v8646, %v8646
  %v8895 = vmul.f32 %v8647, %v8647
  %v8896 = vmul.f32 %v8648, %v8648
  %v8897 = vmul.f32 %v8649, %v8649
  %v8898 = vmul.f32 %v8650, %v8650
  %v8899 = vmul.f32 %v8651, %v8651
  %v8900 = vmul.f32 %v8652, %v8652
  %v8901 = vmul.f32 %v8653, %v8653
  %v8902 = vmul.f32 %v8654, %v8654
  %v8903 = vmul.f32 %v8655, %v8655
  %v8904 = vmul.f32 %v8656, %v8656
  %v8905 = vmul.f32 %v8657, %v8657
  %v8906 = vmul.f32 %v8658, %v8658
  %v8907 = vmul.f32 %v8659, %v8659
  %v8908 = vmul.f32 %v8660, %v8660
  %v8909 = vmul.f32 %v8661, %v8661
  %v8910 = vmul.f32 %v8662, %v8662
  %v8911 = vmul.f32 %v8663, %v8663
  %v8912 = vmul.f32 %v8664, %v8664
  %v8913 = vmul.f32 %v8665, %v8665
  %v8914 = vmul.f32 %v8666, %v8666
  %v8915 = vmul.f32 %v8667, %v8667
  %v8916 = vmul.f32 %v8668, %v8668
  %v8917 = vmul.f32 %v8669, %v8669
  %v8918 = vmul.f32 %v8670, %v8670
  %v8919 = vmul.f32 %v8671, %v8671
  %v8920 = vmul.f32 %v8672, %v8672
  %v8921 = vmul.f32 %v8673, %v8673
  %v8922 = vmul.f32 %v8674, %v8674
  %v8923 = vmul.f32 %v8675, %v8675
  %v8924 = vmul.f32 %v8676, %v8676
  %v8925 = vmul.f32 %v8677, %v8677
  %v8926 = vmul.f32 %v8678, %v8678
  %v8927 = vmul.f32 %v8679, %v8679
  %v8928 = vmul.f32 %v8680, %v8680
  %v8929 = vmul.f32 %v8681, %v8681
  %v8930 = vmul.f32 %v8682, %v8682
  %v8931 = vmul.f32 %v8683, %v8683
  %v8932 = vmul.f32 %v8684, %v8684
  %v8933 = vmul.f32 %v8685, %v8685
  %v8934 = vmul.f32 %v8686, %v8686
  %v8935 = vmul.f32 %v8687, %v8687
  %v8936 = vmul.f32 %v8688, %v8688
  %v8937 = vmul.f32 %v8689, %v8689
  %v8938 = vmul.f32 %v8690, %v8690
  %v8939 = vmul.f32 %v8691, %v8691
  %v8940 = vmul.f32 %v8692, %v8692
  %v8941 = vmul.f32 %v8693, %v8693
  %v8942 = vmul.f32 %v8694, %v8694
  %v8943 = vmul.f32 %v8695, %v8695
  %v8944 = vmul.f32 %v8696, %v8696
  %v8945 = vmul.f32 %v8697, %v8697
  %v8946 = vmul.f32 %v8698, %v8698
  %v8947 = vmul.f32 %v8699, %v8699
  %v8948 = vmul.f32 %v8700, %v8700
  %v8949 = vmul.f32 %v8701, %v8701
  %v8950 = vmul.f32 %v8702, %v8702
  %v8951 = vmul.f32 %v8703, %v8703
  %v8952 = vmul.f32 %v8704, %v8704
  %v8953 = vmul.f32 %v8705, %v8705
  %v8954 = vmul.f32 %v8706, %v8706
  %v8955 = vmul.f32 %v8707, %v8707
  %v8956 = vmul.f32 %v8708, %v8708
  %v8957 = vmul.f32 %v8709, %v8709
  %v8958 = vmul.f32 %v8710, %v8710
  %v8959 = vmul.f32 %v8711, %v8711
  %v8960 = vmul.f32 %v8712, %v8712
  %v8961 = vmul.f32 %v8713, %v8713
  %v8962 = vmul.f32 %v8714, %v8714
  %v8963 = vmul.f32 %v8715, %v8715
  %v8964 = vmul.f32 %v8716, %v8716
  %v8965 = vmul.f32 %v8717, %v8717
  %v8966 = vmul.f32 %v8718, %v8718
  %v8967 = vmul.f32 %v8719, %v8719
  %v8968 = vmul.f32 %v8720, %v8720
  %v8969 = vmul.f32 %v8721, %v8721
  %v8970 = vmul.f32 %v8722, %v8722
  %v8971 = vmul.f32 %v8723, %v8723
  %v8972 = vmul.f32 %v8724, %v8724
  %v8973 = vmul.f32 %v8725, %v8725
  %v8974 = vsel %vm3087, %v8893, 0.0
  %v8975 = vsel %vm3087, %v8894, 0.0
  %v8976 = vadd.f32 %v8974, %v8975
  %v8977 = vsel %vm3087, %v8895, 0.0
  %v8978 = vadd.f32 %v8976, %v8977
  %v8979 = vsel %vm3087, %v8896, 0.0
  %v8980 = vadd.f32 %v8978, %v8979
  %v8981 = vsel %vm3087, %v8897, 0.0
  %v8982 = vadd.f32 %v8980, %v8981
  %v8983 = vsel %vm3087, %v8898, 0.0
  %v8984 = vadd.f32 %v8982, %v8983
  %v8985 = vsel %vm3087, %v8899, 0.0
  %v8986 = vadd.f32 %v8984, %v8985
  %v8987 = vsel %vm3087, %v8900, 0.0
  %v8988 = vadd.f32 %v8986, %v8987
  %v8989 = vsel %vm3087, %v8901, 0.0
  %v8990 = vadd.f32 %v8988, %v8989
  %v8991 = vsel %vm3087, %v8902, 0.0
  %v8992 = vadd.f32 %v8990, %v8991
  %v8993 = vsel %vm3087, %v8903, 0.0
  %v8994 = vadd.f32 %v8992, %v8993
  %v8995 = vsel %vm3087, %v8904, 0.0
  %v8996 = vadd.f32 %v8994, %v8995
  %v8997 = vsel %vm3087, %v8905, 0.0
  %v8998 = vadd.f32 %v8996, %v8997
  %v8999 = vsel %vm3087, %v8906, 0.0
  %v9000 = vadd.f32 %v8998, %v8999
  %v9001 = vsel %vm3087, %v8907, 0.0
  %v9002 = vadd.f32 %v9000, %v9001
  %v9003 = vsel %vm3087, %v8908, 0.0
  %v9004 = vadd.f32 %v9002, %v9003
  %v9005 = vsel %vm3087, %v8909, 0.0
  %v9006 = vadd.f32 %v9004, %v9005
  %v9007 = vsel %vm3087, %v8910, 0.0
  %v9008 = vadd.f32 %v9006, %v9007
  %v9009 = vsel %vm3087, %v8911, 0.0
  %v9010 = vadd.f32 %v9008, %v9009
  %v9011 = vsel %vm3087, %v8912, 0.0
  %v9012 = vadd.f32 %v9010, %v9011
  %v9013 = vsel %vm3087, %v8913, 0.0
  %v9014 = vadd.f32 %v9012, %v9013
  %v9015 = vsel %vm3087, %v8914, 0.0
  %v9016 = vadd.f32 %v9014, %v9015
  %v9017 = vsel %vm3087, %v8915, 0.0
  %v9018 = vadd.f32 %v9016, %v9017
  %v9019 = vsel %vm3087, %v8916, 0.0
  %v9020 = vadd.f32 %v9018, %v9019
  %v9021 = vsel %vm3087, %v8917, 0.0
  %v9022 = vadd.f32 %v9020, %v9021
  %v9023 = vsel %vm3087, %v8918, 0.0
  %v9024 = vadd.f32 %v9022, %v9023
  %v9025 = vsel %vm3087, %v8919, 0.0
  %v9026 = vadd.f32 %v9024, %v9025
  %v9027 = vsel %vm3087, %v8920, 0.0
  %v9028 = vadd.f32 %v9026, %v9027
  %v9029 = vsel %vm3087, %v8921, 0.0
  %v9030 = vadd.f32 %v9028, %v9029
  %v9031 = vsel %vm3087, %v8922, 0.0
  %v9032 = vadd.f32 %v9030, %v9031
  %v9033 = vsel %vm3087, %v8923, 0.0
  %v9034 = vadd.f32 %v9032, %v9033
  %v9035 = vsel %vm3087, %v8924, 0.0
  %v9036 = vadd.f32 %v9034, %v9035
  %v9037 = vsel %vm3087, %v8925, 0.0
  %v9038 = vadd.f32 %v9036, %v9037
  %v9039 = vsel %vm3087, %v8926, 0.0
  %v9040 = vadd.f32 %v9038, %v9039
  %v9041 = vsel %vm3087, %v8927, 0.0
  %v9042 = vadd.f32 %v9040, %v9041
  %v9043 = vsel %vm3087, %v8928, 0.0
  %v9044 = vadd.f32 %v9042, %v9043
  %v9045 = vsel %vm3087, %v8929, 0.0
  %v9046 = vadd.f32 %v9044, %v9045
  %v9047 = vsel %vm3087, %v8930, 0.0
  %v9048 = vadd.f32 %v9046, %v9047
  %v9049 = vsel %vm3087, %v8931, 0.0
  %v9050 = vadd.f32 %v9048, %v9049
  %v9051 = vsel %vm3087, %v8932, 0.0
  %v9052 = vadd.f32 %v9050, %v9051
  %v9053 = vsel %vm3087, %v8933, 0.0
  %v9054 = vadd.f32 %v9052, %v9053
  %v9055 = vsel %vm3087, %v8934, 0.0
  %v9056 = vadd.f32 %v9054, %v9055
  %v9057 = vsel %vm3087, %v8935, 0.0
  %v9058 = vadd.f32 %v9056, %v9057
  %v9059 = vsel %vm3087, %v8936, 0.0
  %v9060 = vadd.f32 %v9058, %v9059
  %v9061 = vsel %vm3087, %v8937, 0.0
  %v9062 = vadd.f32 %v9060, %v9061
  %v9063 = vsel %vm3087, %v8938, 0.0
  %v9064 = vadd.f32 %v9062, %v9063
  %v9065 = vsel %vm3087, %v8939, 0.0
  %v9066 = vadd.f32 %v9064, %v9065
  %v9067 = vsel %vm3087, %v8940, 0.0
  %v9068 = vadd.f32 %v9066, %v9067
  %v9069 = vsel %vm3087, %v8941, 0.0
  %v9070 = vadd.f32 %v9068, %v9069
  %v9071 = vsel %vm3087, %v8942, 0.0
  %v9072 = vadd.f32 %v9070, %v9071
  %v9073 = vsel %vm3087, %v8943, 0.0
  %v9074 = vadd.f32 %v9072, %v9073
  %v9075 = vsel %vm3087, %v8944, 0.0
  %v9076 = vadd.f32 %v9074, %v9075
  %v9077 = vsel %vm3087, %v8945, 0.0
  %v9078 = vadd.f32 %v9076, %v9077
  %v9079 = vsel %vm3087, %v8946, 0.0
  %v9080 = vadd.f32 %v9078, %v9079
  %v9081 = vsel %vm3087, %v8947, 0.0
  %v9082 = vadd.f32 %v9080, %v9081
  %v9083 = vsel %vm3087, %v8948, 0.0
  %v9084 = vadd.f32 %v9082, %v9083
  %v9085 = vsel %vm3087, %v8949, 0.0
  %v9086 = vadd.f32 %v9084, %v9085
  %v9087 = vsel %vm3087, %v8950, 0.0
  %v9088 = vadd.f32 %v9086, %v9087
  %v9089 = vsel %vm3087, %v8951, 0.0
  %v9090 = vadd.f32 %v9088, %v9089
  %v9091 = vsel %vm3087, %v8952, 0.0
  %v9092 = vadd.f32 %v9090, %v9091
  %v9093 = vsel %vm3087, %v8953, 0.0
  %v9094 = vadd.f32 %v9092, %v9093
  %v9095 = vsel %vm3087, %v8954, 0.0
  %v9096 = vadd.f32 %v9094, %v9095
  %v9097 = vsel %vm3087, %v8955, 0.0
  %v9098 = vadd.f32 %v9096, %v9097
  %v9099 = vsel %vm3087, %v8956, 0.0
  %v9100 = vadd.f32 %v9098, %v9099
  %v9101 = vsel %vm3087, %v8957, 0.0
  %v9102 = vadd.f32 %v9100, %v9101
  %v9103 = vsel %vm3087, %v8958, 0.0
  %v9104 = vadd.f32 %v9102, %v9103
  %v9105 = vsel %vm3087, %v8959, 0.0
  %v9106 = vadd.f32 %v9104, %v9105
  %v9107 = vsel %vm3087, %v8960, 0.0
  %v9108 = vadd.f32 %v9106, %v9107
  %v9109 = vsel %vm3087, %v8961, 0.0
  %v9110 = vadd.f32 %v9108, %v9109
  %v9111 = vsel %vm3087, %v8962, 0.0
  %v9112 = vadd.f32 %v9110, %v9111
  %v9113 = vsel %vm3087, %v8963, 0.0
  %v9114 = vadd.f32 %v9112, %v9113
  %v9115 = vsel %vm3087, %v8964, 0.0
  %v9116 = vadd.f32 %v9114, %v9115
  %v9117 = vsel %vm3087, %v8965, 0.0
  %v9118 = vadd.f32 %v9116, %v9117
  %v9119 = vsel %vm3087, %v8966, 0.0
  %v9120 = vadd.f32 %v9118, %v9119
  %v9121 = vsel %vm3087, %v8967, 0.0
  %v9122 = vadd.f32 %v9120, %v9121
  %v9123 = vsel %vm3087, %v8968, 0.0
  %v9124 = vadd.f32 %v9122, %v9123
  %v9125 = vsel %vm3087, %v8969, 0.0
  %v9126 = vadd.f32 %v9124, %v9125
  %v9127 = vsel %vm3087, %v8970, 0.0
  %v9128 = vadd.f32 %v9126, %v9127
  %v9129 = vsel %vm3087, %v8971, 0.0
  %v9130 = vadd.f32 %v9128, %v9129
  %v9131 = vsel %vm3087, %v8972, 0.0
  %v9132 = vadd.f32 %v9130, %v9131
  %v9133 = vsel %vm3087, %v8973, 0.0
  %v9134 = vadd.f32 %v9132, %v9133
  %v9135 = vrot.slane %v9134, 4
  %v9136 = vadd.f32 %v9134, %v9135
  %v9137 = vrot.slane %v9136, 2
  %v9138 = vadd.f32 %v9136, %v9137
  %v9139 = vrot.slane %v9138, 1
  %v9140 = vadd.f32 %v9138, %v9139
  %v9141 = vmul.f32 %v8892, 0.001953125
  %v9142 = vmul.f32 %v9140, 0.001953125
  %v9143 = vmul.f32 %v9141, %v9141
  %v9144 = vsub.f32 %v9142, %v9143
  %v9145 = vld [vmem:[%s9] sm:$0x1]
  %v9146 = vadd.f32 %v9144, 1e-05
  %v9147 = vrsqrt.pop %v9146
  %v9148 = vmul.f32 %v9145, %v9147
  %v9149 = vsub.f32 %v8564, %v9141
  %v9150 = vsub.f32 %v8565, %v9141
  %v9151 = vsub.f32 %v8566, %v9141
  %v9152 = vsub.f32 %v8567, %v9141
  %v9153 = vsub.f32 %v8568, %v9141
  %v9154 = vsub.f32 %v8569, %v9141
  %v9155 = vsub.f32 %v8570, %v9141
  %v9156 = vsub.f32 %v8571, %v9141
  %v9157 = vsub.f32 %v8572, %v9141
  %v9158 = vsub.f32 %v8573, %v9141
  %v9159 = vsub.f32 %v8574, %v9141
  %v9160 = vsub.f32 %v8575, %v9141
  %v9161 = vsub.f32 %v8576, %v9141
  %v9162 = vsub.f32 %v8577, %v9141
  %v9163 = vsub.f32 %v8578, %v9141
  %v9164 = vsub.f32 %v8579, %v9141
  %v9165 = vsub.f32 %v8580, %v9141
  %v9166 = vsub.f32 %v8581, %v9141
  %v9167 = vsub.f32 %v8582, %v9141
  %v9168 = vsub.f32 %v8583, %v9141
  %v9169 = vsub.f32 %v8584, %v9141
  %v9170 = vsub.f32 %v8585, %v9141
  %v9171 = vsub.f32 %v8586, %v9141
  %v9172 = vsub.f32 %v8587, %v9141
  %v9173 = vsub.f32 %v8588, %v9141
  %v9174 = vsub.f32 %v8589, %v9141
  %v9175 = vsub.f32 %v8590, %v9141
  %v9176 = vsub.f32 %v8591, %v9141
  %v9177 = vsub.f32 %v8592, %v9141
  %v9178 = vsub.f32 %v8593, %v9141
  %v9179 = vsub.f32 %v8594, %v9141
  %v9180 = vsub.f32 %v8595, %v9141
  %v9181 = vsub.f32 %v8596, %v9141
  %v9182 = vsub.f32 %v8597, %v9141
  %v9183 = vsub.f32 %v8598, %v9141
  %v9184 = vsub.f32 %v8599, %v9141
  %v9185 = vsub.f32 %v8600, %v9141
  %v9186 = vsub.f32 %v8601, %v9141
  %v9187 = vsub.f32 %v8602, %v9141
  %v9188 = vsub.f32 %v8603, %v9141
  %v9189 = vsub.f32 %v8604, %v9141
  %v9190 = vsub.f32 %v8605, %v9141
  %v9191 = vsub.f32 %v8606, %v9141
  %v9192 = vsub.f32 %v8607, %v9141
  %v9193 = vsub.f32 %v8608, %v9141
  %v9194 = vsub.f32 %v8609, %v9141
  %v9195 = vsub.f32 %v8610, %v9141
  %v9196 = vsub.f32 %v8611, %v9141
  %v9197 = vsub.f32 %v8612, %v9141
  %v9198 = vsub.f32 %v8613, %v9141
  %v9199 = vsub.f32 %v8614, %v9141
  %v9200 = vsub.f32 %v8615, %v9141
  %v9201 = vsub.f32 %v8616, %v9141
  %v9202 = vsub.f32 %v8617, %v9141
  %v9203 = vsub.f32 %v8618, %v9141
  %v9204 = vsub.f32 %v8619, %v9141
  %v9205 = vsub.f32 %v8620, %v9141
  %v9206 = vsub.f32 %v8621, %v9141
  %v9207 = vsub.f32 %v8622, %v9141
  %v9208 = vsub.f32 %v8623, %v9141
  %v9209 = vsub.f32 %v8624, %v9141
  %v9210 = vsub.f32 %v8625, %v9141
  %v9211 = vsub.f32 %v8626, %v9141
  %v9212 = vsub.f32 %v8627, %v9141
  %v9213 = vsub.f32 %v8628, %v9141
  %v9214 = vsub.f32 %v8629, %v9141
  %v9215 = vsub.f32 %v8630, %v9141
  %v9216 = vsub.f32 %v8631, %v9141
  %v9217 = vsub.f32 %v8632, %v9141
  %v9218 = vsub.f32 %v8633, %v9141
  %v9219 = vsub.f32 %v8634, %v9141
  %v9220 = vsub.f32 %v8635, %v9141
  %v9221 = vsub.f32 %v8636, %v9141
  %v9222 = vsub.f32 %v8637, %v9141
  %v9223 = vsub.f32 %v8638, %v9141
  %v9224 = vsub.f32 %v8639, %v9141
  %v9225 = vsub.f32 %v8640, %v9141
  %v9226 = vsub.f32 %v8641, %v9141
  %v9227 = vsub.f32 %v8642, %v9141
  %v9228 = vsub.f32 %v8643, %v9141
  %v9229 = vsub.f32 %v8644, %v9141
  %v9231 = vlaneseq
  %v9232 = vshrl.u32 %v9231, 7
  %v9233 = vsub.s32 0, %v9232
  %v9234 = vrot.slane %v9148, %v9233
  %v9236 = vmul.f32 %v9149, %v9234
  %v9237 = vmul.f32 %v9150, %v9234
  %v9238 = vmul.f32 %v9151, %v9234
  %v9239 = vmul.f32 %v9152, %v9234
  %v9240 = vmul.f32 %v9153, %v9234
  %v9241 = vmul.f32 %v9154, %v9234
  %v9242 = vmul.f32 %v9155, %v9234
  %v9243 = vmul.f32 %v9156, %v9234
  %v9244 = vmul.f32 %v9157, %v9234
  %v9245 = vmul.f32 %v9158, %v9234
  %v9246 = vmul.f32 %v9159, %v9234
  %v9247 = vmul.f32 %v9160, %v9234
  %v9248 = vmul.f32 %v9161, %v9234
  %v9249 = vmul.f32 %v9162, %v9234
  %v9250 = vmul.f32 %v9163, %v9234
  %v9251 = vmul.f32 %v9164, %v9234
  %v9252 = vmul.f32 %v9165, %v9234
  %v9253 = vmul.f32 %v9166, %v9234
  %v9254 = vmul.f32 %v9167, %v9234
  %v9255 = vmul.f32 %v9168, %v9234
  %v9256 = vmul.f32 %v9169, %v9234
  %v9257 = vmul.f32 %v9170, %v9234
  %v9258 = vmul.f32 %v9171, %v9234
  %v9259 = vmul.f32 %v9172, %v9234
  %v9260 = vmul.f32 %v9173, %v9234
  %v9261 = vmul.f32 %v9174, %v9234
  %v9262 = vmul.f32 %v9175, %v9234
  %v9263 = vmul.f32 %v9176, %v9234
  %v9264 = vmul.f32 %v9177, %v9234
  %v9265 = vmul.f32 %v9178, %v9234
  %v9266 = vmul.f32 %v9179, %v9234
  %v9267 = vmul.f32 %v9180, %v9234
  %v9268 = vmul.f32 %v9181, %v9234
  %v9269 = vmul.f32 %v9182, %v9234
  %v9270 = vmul.f32 %v9183, %v9234
  %v9271 = vmul.f32 %v9184, %v9234
  %v9272 = vmul.f32 %v9185, %v9234
  %v9273 = vmul.f32 %v9186, %v9234
  %v9274 = vmul.f32 %v9187, %v9234
  %v9275 = vmul.f32 %v9188, %v9234
  %v9276 = vmul.f32 %v9189, %v9234
  %v9277 = vmul.f32 %v9190, %v9234
  %v9278 = vmul.f32 %v9191, %v9234
  %v9279 = vmul.f32 %v9192, %v9234
  %v9280 = vmul.f32 %v9193, %v9234
  %v9281 = vmul.f32 %v9194, %v9234
  %v9282 = vmul.f32 %v9195, %v9234
  %v9283 = vmul.f32 %v9196, %v9234
  %v9284 = vmul.f32 %v9197, %v9234
  %v9285 = vmul.f32 %v9198, %v9234
  %v9286 = vmul.f32 %v9199, %v9234
  %v9287 = vmul.f32 %v9200, %v9234
  %v9288 = vmul.f32 %v9201, %v9234
  %v9289 = vmul.f32 %v9202, %v9234
  %v9290 = vmul.f32 %v9203, %v9234
  %v9291 = vmul.f32 %v9204, %v9234
  %v9292 = vmul.f32 %v9205, %v9234
  %v9293 = vmul.f32 %v9206, %v9234
  %v9294 = vmul.f32 %v9207, %v9234
  %v9295 = vmul.f32 %v9208, %v9234
  %v9296 = vmul.f32 %v9209, %v9234
  %v9297 = vmul.f32 %v9210, %v9234
  %v9298 = vmul.f32 %v9211, %v9234
  %v9299 = vmul.f32 %v9212, %v9234
  %v9300 = vmul.f32 %v9213, %v9234
  %v9301 = vmul.f32 %v9214, %v9234
  %v9302 = vmul.f32 %v9215, %v9234
  %v9303 = vmul.f32 %v9216, %v9234
  %v9304 = vmul.f32 %v9217, %v9234
  %v9305 = vmul.f32 %v9218, %v9234
  %v9306 = vmul.f32 %v9219, %v9234
  %v9307 = vmul.f32 %v9220, %v9234
  %v9308 = vmul.f32 %v9221, %v9234
  %v9309 = vmul.f32 %v9222, %v9234
  %v9310 = vmul.f32 %v9223, %v9234
  %v9311 = vmul.f32 %v9224, %v9234
  %v9312 = vmul.f32 %v9225, %v9234
  %v9313 = vmul.f32 %v9226, %v9234
  %v9314 = vmul.f32 %v9227, %v9234
  %v9315 = vmul.f32 %v9228, %v9234
  %v9316 = vmul.f32 %v9229, %v9234
  %v9317 = vld [vmem:[%s10] sm:$0x1]
  %v9319 = vlaneseq
  %v9320 = vshrl.u32 %v9319, 7
  %v9321 = vsub.s32 0, %v9320
  %v9322 = vrot.slane %v9317, %v9321
  %v9324 = vadd.f32 %v9236, %v9322
  %v9325 = vadd.f32 %v9237, %v9322
  %v9326 = vadd.f32 %v9238, %v9322
  %v9327 = vadd.f32 %v9239, %v9322
  %v9328 = vadd.f32 %v9240, %v9322
  %v9329 = vadd.f32 %v9241, %v9322
  %v9330 = vadd.f32 %v9242, %v9322
  %v9331 = vadd.f32 %v9243, %v9322
  %v9332 = vadd.f32 %v9244, %v9322
  %v9333 = vadd.f32 %v9245, %v9322
  %v9334 = vadd.f32 %v9246, %v9322
  %v9335 = vadd.f32 %v9247, %v9322
  %v9336 = vadd.f32 %v9248, %v9322
  %v9337 = vadd.f32 %v9249, %v9322
  %v9338 = vadd.f32 %v9250, %v9322
  %v9339 = vadd.f32 %v9251, %v9322
  %v9340 = vadd.f32 %v9252, %v9322
  %v9341 = vadd.f32 %v9253, %v9322
  %v9342 = vadd.f32 %v9254, %v9322
  %v9343 = vadd.f32 %v9255, %v9322
  %v9344 = vadd.f32 %v9256, %v9322
  %v9345 = vadd.f32 %v9257, %v9322
  %v9346 = vadd.f32 %v9258, %v9322
  %v9347 = vadd.f32 %v9259, %v9322
  %v9348 = vadd.f32 %v9260, %v9322
  %v9349 = vadd.f32 %v9261, %v9322
  %v9350 = vadd.f32 %v9262, %v9322
  %v9351 = vadd.f32 %v9263, %v9322
  %v9352 = vadd.f32 %v9264, %v9322
  %v9353 = vadd.f32 %v9265, %v9322
  %v9354 = vadd.f32 %v9266, %v9322
  %v9355 = vadd.f32 %v9267, %v9322
  %v9356 = vadd.f32 %v9268, %v9322
  %v9357 = vadd.f32 %v9269, %v9322
  %v9358 = vadd.f32 %v9270, %v9322
  %v9359 = vadd.f32 %v9271, %v9322
  %v9360 = vadd.f32 %v9272, %v9322
  %v9361 = vadd.f32 %v9273, %v9322
  %v9362 = vadd.f32 %v9274, %v9322
  %v9363 = vadd.f32 %v9275, %v9322
  %v9364 = vadd.f32 %v9276, %v9322
  %v9365 = vadd.f32 %v9277, %v9322
  %v9366 = vadd.f32 %v9278, %v9322
  %v9367 = vadd.f32 %v9279, %v9322
  %v9368 = vadd.f32 %v9280, %v9322
  %v9369 = vadd.f32 %v9281, %v9322
  %v9370 = vadd.f32 %v9282, %v9322
  %v9371 = vadd.f32 %v9283, %v9322
  %v9372 = vadd.f32 %v9284, %v9322
  %v9373 = vadd.f32 %v9285, %v9322
  %v9374 = vadd.f32 %v9286, %v9322
  %v9375 = vadd.f32 %v9287, %v9322
  %v9376 = vadd.f32 %v9288, %v9322
  %v9377 = vadd.f32 %v9289, %v9322
  %v9378 = vadd.f32 %v9290, %v9322
  %v9379 = vadd.f32 %v9291, %v9322
  %v9380 = vadd.f32 %v9292, %v9322
  %v9381 = vadd.f32 %v9293, %v9322
  %v9382 = vadd.f32 %v9294, %v9322
  %v9383 = vadd.f32 %v9295, %v9322
  %v9384 = vadd.f32 %v9296, %v9322
  %v9385 = vadd.f32 %v9297, %v9322
  %v9386 = vadd.f32 %v9298, %v9322
  %v9387 = vadd.f32 %v9299, %v9322
  %v9388 = vadd.f32 %v9300, %v9322
  %v9389 = vadd.f32 %v9301, %v9322
  %v9390 = vadd.f32 %v9302, %v9322
  %v9391 = vadd.f32 %v9303, %v9322
  %v9392 = vadd.f32 %v9304, %v9322
  %v9393 = vadd.f32 %v9305, %v9322
  %v9394 = vadd.f32 %v9306, %v9322
  %v9395 = vadd.f32 %v9307, %v9322
  %v9396 = vadd.f32 %v9308, %v9322
  %v9397 = vadd.f32 %v9309, %v9322
  %v9398 = vadd.f32 %v9310, %v9322
  %v9399 = vadd.f32 %v9311, %v9322
  %v9400 = vadd.f32 %v9312, %v9322
  %v9401 = vadd.f32 %v9313, %v9322
  %v9402 = vadd.f32 %v9314, %v9322
  %v9403 = vadd.f32 %v9315, %v9322
  %v9404 = vadd.f32 %v9316, %v9322
  %v9405 = vld [vmem:[%s1] sm:$0xff]
  %v9406 = vld [vmem:[%s1 + $0x8] sm:$0xff]
  %v9407 = vld [vmem:[%s1 + $0x10] sm:$0xff]
  %v9408 = vld [vmem:[%s1 + $0x18] sm:$0xff]
  %v9409 = vld [vmem:[%s1 + $0x20] sm:$0xff]
  %v9410 = vld [vmem:[%s1 + $0x28] sm:$0xff]
  %v9411 = vld [vmem:[%s1 + $0x30] sm:$0xff]
  %v9412 = vld [vmem:[%s1 + $0x38] sm:$0xff]
  %v9413 = vld [vmem:[%s1 + $0x40] sm:$0xff]
  %v9414 = vld [vmem:[%s1 + $0x48] sm:$0xff]
  %v9415 = vld [vmem:[%s1 + $0x50] sm:$0xff]
  %v9416 = vld [vmem:[%s1 + $0x58] sm:$0xff]
  %v9417 = vld [vmem:[%s1 + $0x60] sm:$0xff]
  %v9418 = vld [vmem:[%s1 + $0x68] sm:$0xff]
  %v9419 = vld [vmem:[%s1 + $0x70] sm:$0xff]
  %v9420 = vld [vmem:[%s1 + $0x78] sm:$0xff]
  %v9421 = vld [vmem:[%s1 + $0x80] sm:$0xff]
  %v9422 = vld [vmem:[%s1 + $0x88] sm:$0xff]
  %v9423 = vld [vmem:[%s1 + $0x90] sm:$0xff]
  %v9424 = vld [vmem:[%s1 + $0x98] sm:$0xff]
  %v9425 = vld [vmem:[%s1 + $0xa0] sm:$0xff]
  %v9426 = vld [vmem:[%s1 + $0xa8] sm:$0xff]
  %v9427 = vld [vmem:[%s1 + $0xb0] sm:$0xff]
  %v9428 = vld [vmem:[%s1 + $0xb8] sm:$0xff]
  %v9429 = vld [vmem:[%s1 + $0xc0] sm:$0xff]
  %v9430 = vld [vmem:[%s1 + $0xc8] sm:$0xff]
  %v9431 = vld [vmem:[%s1 + $0xd0] sm:$0xff]
  %v9432 = vld [vmem:[%s1 + $0xd8] sm:$0xff]
  %v9433 = vld [vmem:[%s1 + $0xe0] sm:$0xff]
  %v9434 = vld [vmem:[%s1 + $0xe8] sm:$0xff]
  %v9435 = vld [vmem:[%s1 + $0xf0] sm:$0xff]
  %v9436 = vld [vmem:[%s1 + $0xf8] sm:$0xff]
  %v9437 = vld [vmem:[%s1 + $0x100] sm:$0xff]
  %v9438 = vld [vmem:[%s1 + $0x108] sm:$0xff]
  %v9439 = vld [vmem:[%s1 + $0x110] sm:$0xff]
  %v9440 = vld [vmem:[%s1 + $0x118] sm:$0xff]
  %v9441 = vld [vmem:[%s1 + $0x120] sm:$0xff]
  %v9442 = vld [vmem:[%s1 + $0x128] sm:$0xff]
  %v9443 = vld [vmem:[%s1 + $0x130] sm:$0xff]
  %v9444 = vld [vmem:[%s1 + $0x138] sm:$0xff]
  %v9445 = vld [vmem:[%s1 + $0x140] sm:$0xff]
  %v9446 = vld [vmem:[%s1 + $0x148] sm:$0xff]
  %v9447 = vld [vmem:[%s1 + $0x150] sm:$0xff]
  %v9448 = vld [vmem:[%s1 + $0x158] sm:$0xff]
  %v9449 = vld [vmem:[%s1 + $0x160] sm:$0xff]
  %v9450 = vld [vmem:[%s1 + $0x168] sm:$0xff]
  %v9451 = vld [vmem:[%s1 + $0x170] sm:$0xff]
  %v9452 = vld [vmem:[%s1 + $0x178] sm:$0xff]
  %v9453 = vld [vmem:[%s1 + $0x180] sm:$0xff]
  %v9454 = vld [vmem:[%s1 + $0x188] sm:$0xff]
  %v9455 = vld [vmem:[%s1 + $0x190] sm:$0xff]
  %v9456 = vld [vmem:[%s1 + $0x198] sm:$0xff]
  %v9457 = vld [vmem:[%s1 + $0x1a0] sm:$0xff]
  %v9458 = vld [vmem:[%s1 + $0x1a8] sm:$0xff]
  %v9459 = vld [vmem:[%s1 + $0x1b0] sm:$0xff]
  %v9460 = vld [vmem:[%s1 + $0x1b8] sm:$0xff]
  %v9461 = vld [vmem:[%s1 + $0x1c0] sm:$0xff]
  %v9462 = vld [vmem:[%s1 + $0x1c8] sm:$0xff]
  %v9463 = vld [vmem:[%s1 + $0x1d0] sm:$0xff]
  %v9464 = vld [vmem:[%s1 + $0x1d8] sm:$0xff]
  %v9465 = vld [vmem:[%s1 + $0x1e0] sm:$0xff]
  %v9466 = vld [vmem:[%s1 + $0x1e8] sm:$0xff]
  %v9467 = vld [vmem:[%s1 + $0x1f0] sm:$0xff]
  %v9468 = vld [vmem:[%s1 + $0x1f8] sm:$0xff]
  %v9469 = vld [vmem:[%s1 + $0x200] sm:$0xff]
  %v9470 = vld [vmem:[%s1 + $0x208] sm:$0xff]
  %v9471 = vld [vmem:[%s1 + $0x210] sm:$0xff]
  %v9472 = vld [vmem:[%s1 + $0x218] sm:$0xff]
  %v9473 = vld [vmem:[%s1 + $0x220] sm:$0xff]
  %v9474 = vld [vmem:[%s1 + $0x228] sm:$0xff]
  %v9475 = vld [vmem:[%s1 + $0x230] sm:$0xff]
  %v9476 = vld [vmem:[%s1 + $0x238] sm:$0xff]
  %v9477 = vld [vmem:[%s1 + $0x240] sm:$0xff]
  %v9478 = vld [vmem:[%s1 + $0x248] sm:$0xff]
  %v9479 = vld [vmem:[%s1 + $0x250] sm:$0xff]
  %v9480 = vld [vmem:[%s1 + $0x258] sm:$0xff]
  %v9481 = vld [vmem:[%s1 + $0x260] sm:$0xff]
  %v9482 = vld [vmem:[%s1 + $0x268] sm:$0xff]
  %v9483 = vld [vmem:[%s1 + $0x270] sm:$0xff]
  %v9484 = vld [vmem:[%s1 + $0x278] sm:$0xff]
  %v9485 = vld [vmem:[%s1 + $0x280] sm:$0xff]
  %v9486 = vadd.f32 %v9324, %v9405
  %v9487 = vadd.f32 %v9325, %v9406
  %v9488 = vadd.f32 %v9326, %v9407
  %v9489 = vadd.f32 %v9327, %v9408
  %v9490 = vadd.f32 %v9328, %v9409
  %v9491 = vadd.f32 %v9329, %v9410
  %v9492 = vadd.f32 %v9330, %v9411
  %v9493 = vadd.f32 %v9331, %v9412
  %v9494 = vadd.f32 %v9332, %v9413
  %v9495 = vadd.f32 %v9333, %v9414
  %v9496 = vadd.f32 %v9334, %v9415
  %v9497 = vadd.f32 %v9335, %v9416
  %v9498 = vadd.f32 %v9336, %v9417
  %v9499 = vadd.f32 %v9337, %v9418
  %v9500 = vadd.f32 %v9338, %v9419
  %v9501 = vadd.f32 %v9339, %v9420
  %v9502 = vadd.f32 %v9340, %v9421
  %v9503 = vadd.f32 %v9341, %v9422
  %v9504 = vadd.f32 %v9342, %v9423
  %v9505 = vadd.f32 %v9343, %v9424
  %v9506 = vadd.f32 %v9344, %v9425
  %v9507 = vadd.f32 %v9345, %v9426
  %v9508 = vadd.f32 %v9346, %v9427
  %v9509 = vadd.f32 %v9347, %v9428
  %v9510 = vadd.f32 %v9348, %v9429
  %v9511 = vadd.f32 %v9349, %v9430
  %v9512 = vadd.f32 %v9350, %v9431
  %v9513 = vadd.f32 %v9351, %v9432
  %v9514 = vadd.f32 %v9352, %v9433
  %v9515 = vadd.f32 %v9353, %v9434
  %v9516 = vadd.f32 %v9354, %v9435
  %v9517 = vadd.f32 %v9355, %v9436
  %v9518 = vadd.f32 %v9356, %v9437
  %v9519 = vadd.f32 %v9357, %v9438
  %v9520 = vadd.f32 %v9358, %v9439
  %v9521 = vadd.f32 %v9359, %v9440
  %v9522 = vadd.f32 %v9360, %v9441
  %v9523 = vadd.f32 %v9361, %v9442
  %v9524 = vadd.f32 %v9362, %v9443
  %v9525 = vadd.f32 %v9363, %v9444
  %v9526 = vadd.f32 %v9364, %v9445
  %v9527 = vadd.f32 %v9365, %v9446
  %v9528 = vadd.f32 %v9366, %v9447
  %v9529 = vadd.f32 %v9367, %v9448
  %v9530 = vadd.f32 %v9368, %v9449
  %v9531 = vadd.f32 %v9369, %v9450
  %v9532 = vadd.f32 %v9370, %v9451
  %v9533 = vadd.f32 %v9371, %v9452
  %v9534 = vadd.f32 %v9372, %v9453
  %v9535 = vadd.f32 %v9373, %v9454
  %v9536 = vadd.f32 %v9374, %v9455
  %v9537 = vadd.f32 %v9375, %v9456
  %v9538 = vadd.f32 %v9376, %v9457
  %v9539 = vadd.f32 %v9377, %v9458
  %v9540 = vadd.f32 %v9378, %v9459
  %v9541 = vadd.f32 %v9379, %v9460
  %v9542 = vadd.f32 %v9380, %v9461
  %v9543 = vadd.f32 %v9381, %v9462
  %v9544 = vadd.f32 %v9382, %v9463
  %v9545 = vadd.f32 %v9383, %v9464
  %v9546 = vadd.f32 %v9384, %v9465
  %v9547 = vadd.f32 %v9385, %v9466
  %v9548 = vadd.f32 %v9386, %v9467
  %v9549 = vadd.f32 %v9387, %v9468
  %v9550 = vadd.f32 %v9388, %v9469
  %v9551 = vadd.f32 %v9389, %v9470
  %v9552 = vadd.f32 %v9390, %v9471
  %v9553 = vadd.f32 %v9391, %v9472
  %v9554 = vadd.f32 %v9392, %v9473
  %v9555 = vadd.f32 %v9393, %v9474
  %v9556 = vadd.f32 %v9394, %v9475
  %v9557 = vadd.f32 %v9395, %v9476
  %v9558 = vadd.f32 %v9396, %v9477
  %v9559 = vadd.f32 %v9397, %v9478
  %v9560 = vadd.f32 %v9398, %v9479
  %v9561 = vadd.f32 %v9399, %v9480
  %v9562 = vadd.f32 %v9400, %v9481
  %v9563 = vadd.f32 %v9401, %v9482
  %v9564 = vadd.f32 %v9402, %v9483
  %v9565 = vadd.f32 %v9403, %v9484
  %v9566 = vadd.f32 %v9404, %v9485
  %v9567 = vmax.f32 %v9486, 0.0
  %v9568 = vmax.f32 %v9487, 0.0
  %v9569 = vmax.f32 %v9488, 0.0
  %v9570 = vmax.f32 %v9489, 0.0
  %v9571 = vmax.f32 %v9490, 0.0
  %v9572 = vmax.f32 %v9491, 0.0
  %v9573 = vmax.f32 %v9492, 0.0
  %v9574 = vmax.f32 %v9493, 0.0
  %v9575 = vmax.f32 %v9494, 0.0
  %v9576 = vmax.f32 %v9495, 0.0
  %v9577 = vmax.f32 %v9496, 0.0
  %v9578 = vmax.f32 %v9497, 0.0
  %v9579 = vmax.f32 %v9498, 0.0
  %v9580 = vmax.f32 %v9499, 0.0
  %v9581 = vmax.f32 %v9500, 0.0
  %v9582 = vmax.f32 %v9501, 0.0
  %v9583 = vmax.f32 %v9502, 0.0
  %v9584 = vmax.f32 %v9503, 0.0
  %v9585 = vmax.f32 %v9504, 0.0
  %v9586 = vmax.f32 %v9505, 0.0
  %v9587 = vmax.f32 %v9506, 0.0
  %v9588 = vmax.f32 %v9507, 0.0
  %v9589 = vmax.f32 %v9508, 0.0
  %v9590 = vmax.f32 %v9509, 0.0
  %v9591 = vmax.f32 %v9510, 0.0
  %v9592 = vmax.f32 %v9511, 0.0
  %v9593 = vmax.f32 %v9512, 0.0
  %v9594 = vmax.f32 %v9513, 0.0
  %v9595 = vmax.f32 %v9514, 0.0
  %v9596 = vmax.f32 %v9515, 0.0
  %v9597 = vmax.f32 %v9516, 0.0
  %v9598 = vmax.f32 %v9517, 0.0
  %v9599 = vmax.f32 %v9518, 0.0
  %v9600 = vmax.f32 %v9519, 0.0
  %v9601 = vmax.f32 %v9520, 0.0
  %v9602 = vmax.f32 %v9521, 0.0
  %v9603 = vmax.f32 %v9522, 0.0
  %v9604 = vmax.f32 %v9523, 0.0
  %v9605 = vmax.f32 %v9524, 0.0
  %v9606 = vmax.f32 %v9525, 0.0
  %v9607 = vmax.f32 %v9526, 0.0
  %v9608 = vmax.f32 %v9527, 0.0
  %v9609 = vmax.f32 %v9528, 0.0
  %v9610 = vmax.f32 %v9529, 0.0
  %v9611 = vmax.f32 %v9530, 0.0
  %v9612 = vmax.f32 %v9531, 0.0
  %v9613 = vmax.f32 %v9532, 0.0
  %v9614 = vmax.f32 %v9533, 0.0
  %v9615 = vmax.f32 %v9534, 0.0
  %v9616 = vmax.f32 %v9535, 0.0
  %v9617 = vmax.f32 %v9536, 0.0
  %v9618 = vmax.f32 %v9537, 0.0
  %v9619 = vmax.f32 %v9538, 0.0
  %v9620 = vmax.f32 %v9539, 0.0
  %v9621 = vmax.f32 %v9540, 0.0
  %v9622 = vmax.f32 %v9541, 0.0
  %v9623 = vmax.f32 %v9542, 0.0
  %v9624 = vmax.f32 %v9543, 0.0
  %v9625 = vmax.f32 %v9544, 0.0
  %v9626 = vmax.f32 %v9545, 0.0
  %v9627 = vmax.f32 %v9546, 0.0
  %v9628 = vmax.f32 %v9547, 0.0
  %v9629 = vmax.f32 %v9548, 0.0
  %v9630 = vmax.f32 %v9549, 0.0
  %v9631 = vmax.f32 %v9550, 0.0
  %v9632 = vmax.f32 %v9551, 0.0
  %v9633 = vmax.f32 %v9552, 0.0
  %v9634 = vmax.f32 %v9553, 0.0
  %v9635 = vmax.f32 %v9554, 0.0
  %v9636 = vmax.f32 %v9555, 0.0
  %v9637 = vmax.f32 %v9556, 0.0
  %v9638 = vmax.f32 %v9557, 0.0
  %v9639 = vmax.f32 %v9558, 0.0
  %v9640 = vmax.f32 %v9559, 0.0
  %v9641 = vmax.f32 %v9560, 0.0
  %v9642 = vmax.f32 %v9561, 0.0
  %v9643 = vmax.f32 %v9562, 0.0
  %v9644 = vmax.f32 %v9563, 0.0
  %v9645 = vmax.f32 %v9564, 0.0
  %v9646 = vmax.f32 %v9565, 0.0
  %v9647 = vmax.f32 %v9566, 0.0
  %9648 = vst.msk [vmem:[%s11] sm:$0xff] %vm3087, %v9567
  %9649 = vst.msk [vmem:[%s11 + $0x8] sm:$0xff] %vm3087, %v9568
  %9650 = vst.msk [vmem:[%s11 + $0x10] sm:$0xff] %vm3087, %v9569
  %9651 = vst.msk [vmem:[%s11 + $0x18] sm:$0xff] %vm3087, %v9570
  %9652 = vst.msk [vmem:[%s11 + $0x20] sm:$0xff] %vm3087, %v9571
  %9653 = vst.msk [vmem:[%s11 + $0x28] sm:$0xff] %vm3087, %v9572
  %9654 = vst.msk [vmem:[%s11 + $0x30] sm:$0xff] %vm3087, %v9573
  %9655 = vst.msk [vmem:[%s11 + $0x38] sm:$0xff] %vm3087, %v9574
  %9656 = vst.msk [vmem:[%s11 + $0x40] sm:$0xff] %vm3087, %v9575
  %9657 = vst.msk [vmem:[%s11 + $0x48] sm:$0xff] %vm3087, %v9576
  %9658 = vst.msk [vmem:[%s11 + $0x50] sm:$0xff] %vm3087, %v9577
  %9659 = vst.msk [vmem:[%s11 + $0x58] sm:$0xff] %vm3087, %v9578
  %9660 = vst.msk [vmem:[%s11 + $0x60] sm:$0xff] %vm3087, %v9579
  %9661 = vst.msk [vmem:[%s11 + $0x68] sm:$0xff] %vm3087, %v9580
  %9662 = vst.msk [vmem:[%s11 + $0x70] sm:$0xff] %vm3087, %v9581
  %9663 = vst.msk [vmem:[%s11 + $0x78] sm:$0xff] %vm3087, %v9582
  %9664 = vst.msk [vmem:[%s11 + $0x80] sm:$0xff] %vm3087, %v9583
  %9665 = vst.msk [vmem:[%s11 + $0x88] sm:$0xff] %vm3087, %v9584
  %9666 = vst.msk [vmem:[%s11 + $0x90] sm:$0xff] %vm3087, %v9585
  %9667 = vst.msk [vmem:[%s11 + $0x98] sm:$0xff] %vm3087, %v9586
  %9668 = vst.msk [vmem:[%s11 + $0xa0] sm:$0xff] %vm3087, %v9587
  %9669 = vst.msk [vmem:[%s11 + $0xa8] sm:$0xff] %vm3087, %v9588
  %9670 = vst.msk [vmem:[%s11 + $0xb0] sm:$0xff] %vm3087, %v9589
  %9671 = vst.msk [vmem:[%s11 + $0xb8] sm:$0xff] %vm3087, %v9590
  %9672 = vst.msk [vmem:[%s11 + $0xc0] sm:$0xff] %vm3087, %v9591
  %9673 = vst.msk [vmem:[%s11 + $0xc8] sm:$0xff] %vm3087, %v9592
  %9674 = vst.msk [vmem:[%s11 + $0xd0] sm:$0xff] %vm3087, %v9593
  %9675 = vst.msk [vmem:[%s11 + $0xd8] sm:$0xff] %vm3087, %v9594
  %9676 = vst.msk [vmem:[%s11 + $0xe0] sm:$0xff] %vm3087, %v9595
  %9677 = vst.msk [vmem:[%s11 + $0xe8] sm:$0xff] %vm3087, %v9596
  %9678 = vst.msk [vmem:[%s11 + $0xf0] sm:$0xff] %vm3087, %v9597
  %9679 = vst.msk [vmem:[%s11 + $0xf8] sm:$0xff] %vm3087, %v9598
  %9680 = vst.msk [vmem:[%s11 + $0x100] sm:$0xff] %vm3087, %v9599
  %9681 = vst.msk [vmem:[%s11 + $0x108] sm:$0xff] %vm3087, %v9600
  %9682 = vst.msk [vmem:[%s11 + $0x110] sm:$0xff] %vm3087, %v9601
  %9683 = vst.msk [vmem:[%s11 + $0x118] sm:$0xff] %vm3087, %v9602
  %9684 = vst.msk [vmem:[%s11 + $0x120] sm:$0xff] %vm3087, %v9603
  %9685 = vst.msk [vmem:[%s11 + $0x128] sm:$0xff] %vm3087, %v9604
  %9686 = vst.msk [vmem:[%s11 + $0x130] sm:$0xff] %vm3087, %v9605
  %9687 = vst.msk [vmem:[%s11 + $0x138] sm:$0xff] %vm3087, %v9606
  %9688 = vst.msk [vmem:[%s11 + $0x140] sm:$0xff] %vm3087, %v9607
  %9689 = vst.msk [vmem:[%s11 + $0x148] sm:$0xff] %vm3087, %v9608
  %9690 = vst.msk [vmem:[%s11 + $0x150] sm:$0xff] %vm3087, %v9609
  %9691 = vst.msk [vmem:[%s11 + $0x158] sm:$0xff] %vm3087, %v9610
  %9692 = vst.msk [vmem:[%s11 + $0x160] sm:$0xff] %vm3087, %v9611
  %9693 = vst.msk [vmem:[%s11 + $0x168] sm:$0xff] %vm3087, %v9612
  %9694 = vst.msk [vmem:[%s11 + $0x170] sm:$0xff] %vm3087, %v9613
  %9695 = vst.msk [vmem:[%s11 + $0x178] sm:$0xff] %vm3087, %v9614
  %9696 = vst.msk [vmem:[%s11 + $0x180] sm:$0xff] %vm3087, %v9615
  %9697 = vst.msk [vmem:[%s11 + $0x188] sm:$0xff] %vm3087, %v9616
  %9698 = vst.msk [vmem:[%s11 + $0x190] sm:$0xff] %vm3087, %v9617
  %9699 = vst.msk [vmem:[%s11 + $0x198] sm:$0xff] %vm3087, %v9618
  %9700 = vst.msk [vmem:[%s11 + $0x1a0] sm:$0xff] %vm3087, %v9619
  %9701 = vst.msk [vmem:[%s11 + $0x1a8] sm:$0xff] %vm3087, %v9620
  %9702 = vst.msk [vmem:[%s11 + $0x1b0] sm:$0xff] %vm3087, %v9621
  %9703 = vst.msk [vmem:[%s11 + $0x1b8] sm:$0xff] %vm3087, %v9622
  %9704 = vst.msk [vmem:[%s11 + $0x1c0] sm:$0xff] %vm3087, %v9623
  %9705 = vst.msk [vmem:[%s11 + $0x1c8] sm:$0xff] %vm3087, %v9624
  %9706 = vst.msk [vmem:[%s11 + $0x1d0] sm:$0xff] %vm3087, %v9625
  %9707 = vst.msk [vmem:[%s11 + $0x1d8] sm:$0xff] %vm3087, %v9626
  %9708 = vst.msk [vmem:[%s11 + $0x1e0] sm:$0xff] %vm3087, %v9627
  %9709 = vst.msk [vmem:[%s11 + $0x1e8] sm:$0xff] %vm3087, %v9628
  %9710 = vst.msk [vmem:[%s11 + $0x1f0] sm:$0xff] %vm3087, %v9629
  %9711 = vst.msk [vmem:[%s11 + $0x1f8] sm:$0xff] %vm3087, %v9630
  %9712 = vst.msk [vmem:[%s11 + $0x200] sm:$0xff] %vm3087, %v9631
  %9713 = vst.msk [vmem:[%s11 + $0x208] sm:$0xff] %vm3087, %v9632
  %9714 = vst.msk [vmem:[%s11 + $0x210] sm:$0xff] %vm3087, %v9633
  %9715 = vst.msk [vmem:[%s11 + $0x218] sm:$0xff] %vm3087, %v9634
  %9716 = vst.msk [vmem:[%s11 + $0x220] sm:$0xff] %vm3087, %v9635
  %9717 = vst.msk [vmem:[%s11 + $0x228] sm:$0xff] %vm3087, %v9636
  %9718 = vst.msk [vmem:[%s11 + $0x230] sm:$0xff] %vm3087, %v9637
  %9719 = vst.msk [vmem:[%s11 + $0x238] sm:$0xff] %vm3087, %v9638
  %9720 = vst.msk [vmem:[%s11 + $0x240] sm:$0xff] %vm3087, %v9639
  %9721 = vst.msk [vmem:[%s11 + $0x248] sm:$0xff] %vm3087, %v9640
  %9722 = vst.msk [vmem:[%s11 + $0x250] sm:$0xff] %vm3087, %v9641
  %9723 = vst.msk [vmem:[%s11 + $0x258] sm:$0xff] %vm3087, %v9642
  %9724 = vst.msk [vmem:[%s11 + $0x260] sm:$0xff] %vm3087, %v9643
  %9725 = vst.msk [vmem:[%s11 + $0x268] sm:$0xff] %vm3087, %v9644
  %9726 = vst.msk [vmem:[%s11 + $0x270] sm:$0xff] %vm3087, %v9645
  %9727 = vst.msk [vmem:[%s11 + $0x278] sm:$0xff] %vm3087, %v9646
  %9728 = vst.msk [vmem:[%s11 + $0x280] sm:$0xff] %vm3087, %v9647
  // Predicated region
  $region46: #{unet_res_block.1} parent=0 // pred_check
    _
  $region47: #{unet_res_block.1} parent=0 // pred_check_branch
    %9730 = sbr.rel (0) target = $region49
  $region48: #{unet_res_block.1} parent=0 // pred_region
    _
  $region49: #{unet_res_block.1} parent=0 // pred_fallthru
    _
  // Predicated region
  $region50: #{unet_res_block.1} parent=0 // pred_check
    _
  $region51: #{unet_res_block.1} parent=0 // pred_check_branch
    %9732 = sbr.rel (0) target = $region53
  $region52: #{unet_res_block.1} parent=0 // pred_region
    _
  $region53: #{unet_res_block.1} parent=0 // pred_fallthru
    _

</llo_original>
